<compile_context>
chip_gen: v7x
topology: tpu7x:2x2x1
jax: 0.10.0
libtpu: 0.0.40
codegen_flags: <defaults>
</compile_context>

<pallas_src>
import math
from functools import partial

import jax
import jax.numpy as jnp
import numpy as np
from jax.experimental import pallas as pl
from jax.experimental.pallas import tpu as pltpu


# ----------------------------- small math helpers (pure jnp, usable in-kernel) ------

def _gelu_exact(x):
    # matches torch.nn.GELU() default (erf formulation)
    return 0.5 * x * (1.0 + jax.lax.erf(x * (1.0 / math.sqrt(2.0))))


def _layer_norm(x, g, b, eps=1e-5):
    mu = jnp.mean(x, axis=-1, keepdims=True)
    var = jnp.mean((x - mu) ** 2, axis=-1, keepdims=True)
    return (x - mu) * jax.lax.rsqrt(var + eps) * g + b


# ----------------------------------- Pallas kernel ----------------------------------

def text_encoder_kernel(num_heads, head_dim, nb, seq_len,
                        x_ref, w_emb_ref, b_emb_ref,
                        qw_ref, wvo_ref, b_out_ref,
                        ln1_g_ref, ln1_b_ref,
                        w_ff1_ref, b_ff1_ref, w_ff2_ref, b_ff2_ref,
                        ln2_g_ref, ln2_b_ref,
                        o_ref):
    """One block of `nb` batch elements per grid step.

    x_ref   : (nb, T, in_dim)  bf16
    qw_ref  : (E, E)  bf16   stacked per-head query weights (cols head-major)
    wvo_ref : (E, E)  bf16   stacked (qw_h^T vw_h) w_out_h / sqrt(Hd) (rows head-major)
    o_ref   : (nb, T, E)  f32
    """
    in_dim = x_ref.shape[-1]
    E = w_emb_ref.shape[-1]
    rows = nb * seq_len
    Hd = head_dim
    inv_sqrt_d = 1.0 / math.sqrt(Hd)
    f32 = jnp.float32
    bf16 = jnp.bfloat16

    # ---------------- embedding Linear on the fused (nb*T, in_dim) slab --------------
    x2 = x_ref[...].reshape(rows, in_dim)                                   # bf16
    e = jnp.dot(x2, w_emb_ref[...], preferred_element_type=f32) + b_emb_ref[...]
    e_bf = e.astype(bf16)

    # ------------------- L2 multi-head attention (Kim et al.) ------------------------
    # Merged q-projection: one (rows,E)x(E,E) bf16 matmul for all heads.
    q = jnp.dot(e_bf, qw_ref[...], preferred_element_type=f32)              # (rows, E)
    q_bf = q.astype(bf16)

    # Per head: logits = -|q_t - q_s|^2 / sqrt(Hd) <= 0, diagonal exactly 0 -> exp is
    # overflow-free with no max subtraction; normalization applied after the PV matmul.
    head_ctx = []
    for h in range(num_heads):                                              # static loop:
        # per-head big intermediates are dead after each iteration; only the small
        # (nb,T,Hd) pv pieces stay live (they are the ctx we need anyway).
        qh = q_bf[:, h * Hd:(h + 1) * Hd].reshape(nb, seq_len, Hd)          # (nb,T,Hd)
        dots = jnp.einsum("btd,bsd->bts", qh, qh,
                          preferred_element_type=f32)                       # (nb,T,T)
        qhf = qh.astype(f32)
        ksq = jnp.sum(qhf * qhf, axis=-1)                                   # (nb,T)
        logits = (2.0 * dots - ksq[:, None, :] - ksq[:, :, None]) * inv_sqrt_d
        p = jnp.exp(logits)                                                 # <= 1
        denom = jnp.sum(p, axis=-1, keepdims=True)                          # >= 1
        pv = jnp.einsum("bts,bsd->btd", p.astype(bf16), qh,
                        preferred_element_type=f32)                         # (nb,T,Hd)
        head_ctx.append(pv * pl.reciprocal(denom, approx=True))

    # Merged out-projection: one (rows,E)x(E,E) bf16 matmul against stacked wvo.
    ctx = jnp.concatenate(head_ctx, axis=-1).reshape(rows, E).astype(bf16)
    attn_out = jnp.dot(ctx, wvo_ref[...], preferred_element_type=f32) + b_out_ref[...]

    # residual + LN1  (f32)
    out1 = _layer_norm(attn_out + e, ln1_g_ref[...], ln1_b_ref[...])

    # feed-forward: GELU -> Linear -> GELU -> Linear   (bf16 matmuls, f32 acc)
    h1 = jnp.dot(_gelu_exact(out1).astype(bf16), w_ff1_ref[...],
                 preferred_element_type=f32) + b_ff1_ref[...]
    h2 = jnp.dot(_gelu_exact(h1).astype(bf16), w_ff2_ref[...],
                 preferred_element_type=f32) + b_ff2_ref[...]

    # residual + LN2  (f32)
    out = _layer_norm(h2 + out1, ln2_g_ref[...], ln2_b_ref[...])
    o_ref[...] = out.reshape(nb, seq_len, E).astype(o_ref.dtype)


# ------------------------------------- wrapper ---------------------------------------

def _device_info():
    """Generation-dependent VMEM cap / TensorCore count."""
    try:
        kind = jax.devices()[0].device_kind.lower()
    except Exception:
        kind = ""
    if "v7" in kind:
        # 64 MiB physical VMEM per TC -> leave headroom for compiler scratch; 2 TCs.
        return {"vmem_cap": 48 * 1024 * 1024, "num_tc": 2}
    # v5e / v6e: 128 MiB VMEM, single TensorCore.
    return {"vmem_cap": 100 * 1024 * 1024, "num_tc": 1}


def _choose_batch_block(N, T, num_tc):
    """Batch elements fused per grid step.

    Targets NB*T rows <= 256 (MXU-friendly M).  On single-TC chips (v5e/v6e) pick the
    largest fitting NB even if the grid collapses to 1 step; keep >= num_tc grid steps
    only on multi-TC chips (v7x) so every TensorCore gets work.
    """
    divisors = [d for d in range(1, N + 1) if N % d == 0]
    target_rows = 256
    fitting = [d for d in divisors if d * T <= target_rows] or [1]
    nb = max(fitting)
    if num_tc >= 2:
        split = [d for d in fitting if N // d >= num_tc]
        if split:
            nb = max(split)
    return nb


def prepare_params(params, num_heads):
    """Param-only preprocessing (hoisted out of the per-call path).

    Folds A (= qw_h qw_h^T / sqrt(Hd)), the V projection and the output projection into
    one stacked (E,E) matrix, stacks the per-head query weights into (E,E), and stores
    all matmul weights in bf16 (MXU peak dtype, half the VMEM footprint).
    """
    E = params["w_emb"].shape[1]
    Hd = E // num_heads
    qw3 = params["q_weight"]                                 # (E, H, Hd)
    vw3 = params["v_weight"]                                 # (E, H, Hd)
    w_out = params["w_out"]                                  # (E, E), rows head-major

    wv = jnp.einsum("mhd,mhe->hde", qw3, vw3)                # (H, Hd, Hd)
    w_out_h = w_out.reshape(num_heads, Hd, E)                # (H, Hd, E)
    wvo = jnp.einsum("hde,heo->hdo", wv, w_out_h) / math.sqrt(Hd)   # (H, Hd, E)

    bf16 = jnp.bfloat16
    f32 = jnp.float32
    return dict(
        w_emb=params["w_emb"].astype(bf16),
        b_emb=params["b_emb"].reshape(1, E).astype(f32),
        qw_all=qw3.reshape(E, E).astype(bf16),               # cols (h,d) head-major
        wvo_all=wvo.reshape(E, E).astype(bf16),              # rows (h,d) head-major
        b_out=params["b_out"].reshape(1, E).astype(f32),
        ln1_g=params["ln1_g"].reshape(1, E).astype(f32),
        ln1_b=params["ln1_b"].reshape(1, E).astype(f32),
        w_ff1=params["w_ff1"].astype(bf16),
        b_ff1=params["b_ff1"].reshape(1, E).astype(f32),
        w_ff2=params["w_ff2"].astype(bf16),
        b_ff2=params["b_ff2"].reshape(1, E).astype(f32),
        ln2_g=params["ln2_g"].reshape(1, E).astype(f32),
        ln2_b=params["ln2_b"].reshape(1, E).astype(f32),
    )


@partial(jax.jit, static_argnums=(2, 3, 4))
def _forward_impl(text_embeds, prepared, num_heads, use_buffered, batch_block):
    T, N, in_dim = text_embeds.shape
    E = prepared["w_emb"].shape[1]
    Hd = E // num_heads
    dev = _device_info()
    NB = batch_block if batch_block is not None else _choose_batch_block(N, T, dev["num_tc"])
    assert N % NB == 0, (N, NB)
    grid = N // NB

    # One HBM pass to make the batch axis leading (keeps batch-leading in-kernel
    # einsums); cast to bf16 in the same pass to halve the kernel's input DMA.
    x = jnp.transpose(text_embeds, (1, 0, 2)).astype(jnp.bfloat16)   # (N, T, in_dim)

    weight_names = ["w_emb", "b_emb", "qw_all", "wvo_all", "b_out",
                    "ln1_g", "ln1_b", "w_ff1", "b_ff1", "w_ff2", "b_ff2",
                    "ln2_g", "ln2_b"]
    weights = [prepared[k] for k in weight_names]

    def const_spec(a):
        nd = a.ndim
        idx = lambda b, _nd=nd: (0,) * _nd
        if use_buffered:
            # Constant index map -> double buffering buys nothing; keep one buffer.
            return pl.BlockSpec(a.shape, idx, pipeline_mode=pl.Buffered(1))
        return pl.BlockSpec(a.shape, idx)

    in_specs = [pl.BlockSpec((NB, T, in_dim), lambda b: (b, 0, 0))]
    in_specs += [const_spec(a) for a in weights]
    out_spec = pl.BlockSpec((NB, T, E), lambda b: (b, 0, 0))

    # ----- VMEM budget: resident weights (x buffer count), double-buffered I/O blocks,
    # in-kernel intermediates + headroom; capped per generation. -----
    buf_mult = 1 if use_buffered else 2
    weight_bytes = sum(int(a.size) * a.dtype.itemsize for a in weights) * buf_mult
    io_block_bytes = 2 * (NB * T * in_dim * 2 + NB * T * E * 4)
    inter_bytes = 14 * NB * T * E * 4 + 3 * NB * num_heads * T * T * 4
    vmem_limit = int(min(dev["vmem_cap"],
                         max(32 * 1024 * 1024,
                             weight_bytes + io_block_bytes + inter_bytes + 8 * 1024 * 1024)))

    # ----- advisory cost estimate for the XLA scheduler -----
    flops = int(2 * N * T * (in_dim * E + 4 * E * E + 2 * E * T))
    transcendentals = int(N * T * (num_heads * T + 2 * E + 8))
    bytes_accessed = int(x.size * x.dtype.itemsize + N * T * E * 4
                         + sum(int(a.size) * a.dtype.itemsize for a in weights))

    out = pl.pallas_call(
        partial(text_encoder_kernel, num_heads, Hd, NB, T),
        out_shape=jax.ShapeDtypeStruct((N, T, E), jnp.float32),
        grid_spec=pltpu.PrefetchScalarGridSpec(
            num_scalar_prefetch=0,
            grid=(grid,),
            in_specs=in_specs,
            out_specs=out_spec,
        ),
        compiler_params=pltpu.CompilerParams(
            dimension_semantics=("parallel",),
            vmem_limit_bytes=vmem_limit,
        ),
        cost_estimate=pl.CostEstimate(flops=flops,
                                      transcendentals=transcendentals,
                                      bytes_accessed=bytes_accessed),
    )(x, *weights)

    return jnp.transpose(out, (1, 0, 2))                     # back to (T, N, E)


_BUFFERED_SUPPORTED = None   # runtime-detected support for pipeline_mode=pl.Buffered(1)


def text_encoder_forward(text_embeds, params=None, num_heads=8, prepared=None,
                         batch_block=None):
    """text_embeds: (T, N, in_dim) as in the PyTorch module. Returns (T, N, out_dim)."""
    global _BUFFERED_SUPPORTED
    if prepared is None:
        prepared = prepare_params(params, num_heads)
    if _BUFFERED_SUPPORTED is not False:
        try:
            out = _forward_impl(text_embeds, prepared, num_heads, True, batch_block)
            _BUFFERED_SUPPORTED = True
            return out
        except Exception:
            _BUFFERED_SUPPORTED = False   # fall back to default double-buffered weights
    return _forward_impl(text_embeds, prepared, num_heads, False, batch_block)


# ------------------------------ pure-JAX reference -----------------------------------
# Faithful f32 transcription of the PyTorch module (materializes A) — used only to
# check the kernel.

def reference_forward(text_embeds, params, num_heads):
    E = params["w_emb"].shape[1]
    Hd = E // num_heads
    e = jnp.einsum("tnm,mo->tno", text_embeds, params["w_emb"]) + params["b_emb"]
    qw = params["q_weight"]
    vw = params["v_weight"]
    q = jnp.einsum("tbm,mhd->tbhd", e, qw)
    k = q
    sq = (jnp.einsum("tbhd,tbhd->tbh", q, q)[:, None]
          + jnp.einsum("sbhd,sbhd->sbh", k, k)[None, :]
          - 2.0 * jnp.einsum("tbhd,sbhd->tsbh", q, k))
    logits = -sq / math.sqrt(Hd)
    attn = jax.nn.softmax(logits, axis=1)
    A = jnp.einsum("mhd,nhd->hmn", qw, qw) / math.sqrt(Hd)
    XA = jnp.einsum("tbm,hmn->tbhn", e, A)
    PXA = jnp.einsum("tsbh,sbhm->tbhm", attn, XA)
    T, N = e.shape[0], e.shape[1]
    PXAV = jnp.einsum("tbhm,mhd->tbhd", PXA, vw).reshape(T, N, E)
    attn_out = PXAV @ params["w_out"] + params["b_out"]
    out1 = _layer_norm(attn_out + e, params["ln1_g"], params["ln1_b"])
    h1 = _gelu_exact(out1) @ params["w_ff1"] + params["b_ff1"]
    h2 = _gelu_exact(h1) @ params["w_ff2"] + params["b_ff2"]
    return _layer_norm(h2 + out1, params["ln2_g"], params["ln2_b"])


# ----------------------------------- params init -------------------------------------

def init_params(key, in_dim, out_dim, num_heads):
    Hd = out_dim // num_heads
    ks = jax.random.split(key, 6)

    def xavier(k, shape, fan_in, fan_out):
        bound = math.sqrt(6.0 / (fan_in + fan_out))
        return jax.random.uniform(k, shape, jnp.float32, -bound, bound)

    def lin(k, fi, fo):
        kw, kb = jax.random.split(k)
        bound = 1.0 / math.sqrt(fi)
        w = jax.random.uniform(kw, (fi, fo), jnp.float32, -bound, bound)
        b = jax.random.uniform(kb, (fo,), jnp.float32, -bound, bound)
        return w, b

    w_emb, b_emb = lin(ks[0], in_dim, out_dim)
    q_weight = xavier(ks[1], (out_dim, num_heads, Hd), out_dim, out_dim)
    v_weight = xavier(ks[2], (out_dim, num_heads, Hd), out_dim, out_dim)
    w_out, b_out = lin(ks[3], out_dim, out_dim)
    w_ff1, b_ff1 = lin(ks[4], out_dim, out_dim)
    w_ff2, b_ff2 = lin(ks[5], out_dim, out_dim)

    return dict(
        w_emb=w_emb, b_emb=b_emb,
        q_weight=q_weight, v_weight=v_weight,
        w_out=w_out, b_out=b_out,
        ln1_g=jnp.ones((out_dim,), jnp.float32), ln1_b=jnp.zeros((out_dim,), jnp.float32),
        w_ff1=w_ff1, b_ff1=b_ff1, w_ff2=w_ff2, b_ff2=b_ff2,
        ln2_g=jnp.ones((out_dim,), jnp.float32), ln2_b=jnp.zeros((out_dim,), jnp.float32),
    )


# --------------------------------------- main -----------------------------------------

if __name__ == "__main__":
    T, N, IN_DIM, OUT_DIM, NUM_HEADS = 8, 2, 16, 32, 8

    key = jax.random.PRNGKey(0)
    k_x, k_p, k_x2, k_x3 = jax.random.split(key, 4)
    text_embeds = jax.random.normal(k_x, (T, N, IN_DIM), jnp.float32)
    params = init_params(k_p, IN_DIM, OUT_DIM, NUM_HEADS)
    prepared = prepare_params(params, NUM_HEADS)   # hoisted, param-only

    # bf16 MXU matmuls (f32 accumulation) vs the all-f32 reference -> ~1e-2 level
    # differences are expected; test at 3e-2.
    TOL = dict(atol=3e-2, rtol=3e-2)

    # Module-sized run.
    out = jax.block_until_ready(
        text_encoder_forward(text_embeds, params, NUM_HEADS, prepared=prepared))
    ref = jax.block_until_ready(reference_forward(text_embeds, params, NUM_HEADS))
    assert out.shape == (T, N, OUT_DIM), out.shape
    np.testing.assert_allclose(np.asarray(out), np.asarray(ref), **TOL)

    # Larger batch: exercises the batch-fused slab path.
    N2 = 8
    text_embeds2 = jax.random.normal(k_x2, (T, N2, IN_DIM), jnp.float32)
    out2 = jax.block_until_ready(
        text_encoder_forward(text_embeds2, params, NUM_HEADS, prepared=prepared))
    ref2 = reference_forward(text_embeds2, params, NUM_HEADS)
    np.testing.assert_allclose(np.asarray(out2), np.asarray(ref2), **TOL)

    # Multi-step grid path (explicit batch_block=8 -> 2 grid steps, batched index_map).
    N3 = 16
    text_embeds3 = jax.random.normal(k_x3, (T, N3, IN_DIM), jnp.float32)
    out3 = jax.block_until_ready(
        text_encoder_forward(text_embeds3, params, NUM_HEADS, prepared=prepared,
                             batch_block=8))
    ref3 = reference_forward(text_embeds3, params, NUM_HEADS)
    np.testing.assert_allclose(np.asarray(out3), np.asarray(ref3), **TOL)

    print("KERNEL_OK")
</pallas_src>

<mosaic_0001>
module attributes {stable_mosaic.version = 11 : i64} {
  func.func @text_encoder_kernel(%arg0: i32, %arg1: memref<2x8x16xbf16, #tpu.memory_space<vmem>>, %arg2: memref<16x32xbf16, #tpu.memory_space<vmem>>, %arg3: memref<1x32xf32, #tpu.memory_space<vmem>>, %arg4: memref<32x32xbf16, #tpu.memory_space<vmem>>, %arg5: memref<32x32xbf16, #tpu.memory_space<vmem>>, %arg6: memref<1x32xf32, #tpu.memory_space<vmem>>, %arg7: memref<1x32xf32, #tpu.memory_space<vmem>>, %arg8: memref<1x32xf32, #tpu.memory_space<vmem>>, %arg9: memref<32x32xbf16, #tpu.memory_space<vmem>>, %arg10: memref<1x32xf32, #tpu.memory_space<vmem>>, %arg11: memref<32x32xbf16, #tpu.memory_space<vmem>>, %arg12: memref<1x32xf32, #tpu.memory_space<vmem>>, %arg13: memref<1x32xf32, #tpu.memory_space<vmem>>, %arg14: memref<1x32xf32, #tpu.memory_space<vmem>>, %arg15: memref<2x8x32xf32, #tpu.memory_space<vmem>>) attributes {dimension_semantics = [#tpu.dimension_semantics<parallel>], iteration_bounds = array<i64: 1>, scalar_prefetch = 0 : i64, scratch_operands = 0 : i64, tpu.core_type = #tpu.core_type<tc>, window_params = [{transform_indices = @transform_0, window_bounds = array<i64: 2, 8, 16>}, {pipeline_mode = #tpu.pipeline_mode<synchronous>, transform_indices = @transform_1, window_bounds = array<i64: 16, 32>}, {pipeline_mode = #tpu.pipeline_mode<synchronous>, transform_indices = @transform_2, window_bounds = array<i64: 1, 32>}, {pipeline_mode = #tpu.pipeline_mode<synchronous>, transform_indices = @transform_3, window_bounds = array<i64: 32, 32>}, {pipeline_mode = #tpu.pipeline_mode<synchronous>, transform_indices = @transform_4, window_bounds = array<i64: 32, 32>}, {pipeline_mode = #tpu.pipeline_mode<synchronous>, transform_indices = @transform_5, window_bounds = array<i64: 1, 32>}, {pipeline_mode = #tpu.pipeline_mode<synchronous>, transform_indices = @transform_6, window_bounds = array<i64: 1, 32>}, {pipeline_mode = #tpu.pipeline_mode<synchronous>, transform_indices = @transform_7, window_bounds = array<i64: 1, 32>}, {pipeline_mode = #tpu.pipeline_mode<synchronous>, transform_indices = @transform_8, window_bounds = array<i64: 32, 32>}, {pipeline_mode = #tpu.pipeline_mode<synchronous>, transform_indices = @transform_9, window_bounds = array<i64: 1, 32>}, {pipeline_mode = #tpu.pipeline_mode<synchronous>, transform_indices = @transform_10, window_bounds = array<i64: 32, 32>}, {pipeline_mode = #tpu.pipeline_mode<synchronous>, transform_indices = @transform_11, window_bounds = array<i64: 1, 32>}, {pipeline_mode = #tpu.pipeline_mode<synchronous>, transform_indices = @transform_12, window_bounds = array<i64: 1, 32>}, {pipeline_mode = #tpu.pipeline_mode<synchronous>, transform_indices = @transform_13, window_bounds = array<i64: 1, 32>}, {transform_indices = @transform_14, window_bounds = array<i64: 2, 8, 32>}]} {
    %c0 = arith.constant 0 : index
    %c0_0 = arith.constant 0 : index
    %c0_1 = arith.constant 0 : index
    %0 = vector.load %arg1[%c0, %c0_0, %c0_1] : memref<2x8x16xbf16, #tpu.memory_space<vmem>>, vector<2x8x16xbf16>
    %1 = vector.shape_cast %0 : vector<2x8x16xbf16> to vector<16x16xbf16>
    %c0_2 = arith.constant 0 : index
    %c0_3 = arith.constant 0 : index
    %2 = vector.load %arg2[%c0_2, %c0_3] : memref<16x32xbf16, #tpu.memory_space<vmem>>, vector<16x32xbf16>
    %cst = arith.constant dense<0.000000e+00> : vector<16x32xf32>
    %3 = tpu.matmul %1, %2, %cst {dimension_numbers = #tpu.dot_dimension_numbers<[1], [0], [0], [1], [0, 0, 1, 1], [], []>} : vector<16x16xbf16>, vector<16x32xbf16>, vector<16x32xf32> -> vector<16x32xf32>
    %c0_4 = arith.constant 0 : index
    %c0_5 = arith.constant 0 : index
    %4 = vector.load %arg3[%c0_4, %c0_5] : memref<1x32xf32, #tpu.memory_space<vmem>>, vector<1x32xf32>
    %5 = vector.broadcast %4 : vector<1x32xf32> to vector<16x32xf32>
    %6 = arith.addf %3, %5 : vector<16x32xf32>
    %7 = arith.truncf %6 : vector<16x32xf32> to vector<16x32xbf16>
    %c0_6 = arith.constant 0 : index
    %c0_7 = arith.constant 0 : index
    %8 = vector.load %arg4[%c0_6, %c0_7] : memref<32x32xbf16, #tpu.memory_space<vmem>>, vector<32x32xbf16>
    %cst_8 = arith.constant dense<0.000000e+00> : vector<16x32xf32>
    %9 = tpu.matmul %7, %8, %cst_8 {dimension_numbers = #tpu.dot_dimension_numbers<[1], [0], [0], [1], [0, 0, 1, 1], [], []>} : vector<16x32xbf16>, vector<32x32xbf16>, vector<16x32xf32> -> vector<16x32xf32>
    %10 = arith.truncf %9 : vector<16x32xf32> to vector<16x32xbf16>
    %11 = vector.extract_strided_slice %10 {offsets = [0, 0], sizes = [16, 4], strides = [1, 1]} : vector<16x32xbf16> to vector<16x4xbf16>
    %12 = vector.shape_cast %11 : vector<16x4xbf16> to vector<2x8x4xbf16>
    "tpu.trace_start"() <{level = 10 : i32, message = "btd,bsd->bts"}> : () -> ()
    %cst_9 = arith.constant dense<0.000000e+00> : vector<2x8x8xf32>
    %13 = tpu.matmul %12, %12, %cst_9 {dimension_numbers = #tpu.dot_dimension_numbers<[2], [2], [1], [1], [0, 0, 0, 1, 1, 1], [0], [0]>} : vector<2x8x4xbf16>, vector<2x8x4xbf16>, vector<2x8x8xf32> -> vector<2x8x8xf32>
    "tpu.trace_stop"() : () -> ()
    %14 = arith.extf %12 : vector<2x8x4xbf16> to vector<2x8x4xf32>
    %15 = arith.mulf %14, %14 : vector<2x8x4xf32>
    %cst_10 = arith.constant dense<0.000000e+00> : vector<2x8xf32>
    %16 = vector.multi_reduction <add>, %15, %cst_10 [2] : vector<2x8x4xf32> to vector<2x8xf32>
    %cst_11 = arith.constant 2.000000e+00 : f32
    %17 = vector.broadcast %cst_11 : f32 to vector<2x8x8xf32>
    %18 = arith.mulf %17, %13 : vector<2x8x8xf32>
    %19 = vector.shape_cast %16 : vector<2x8xf32> to vector<2x1x8xf32>
    %20 = vector.broadcast %19 : vector<2x1x8xf32> to vector<2x8x8xf32>
    %21 = arith.subf %18, %20 : vector<2x8x8xf32>
    %22 = vector.shape_cast %16 : vector<2x8xf32> to vector<2x8x1xf32>
    %23 = vector.broadcast %22 : vector<2x8x1xf32> to vector<2x8x8xf32>
    %24 = arith.subf %21, %23 : vector<2x8x8xf32>
    %cst_12 = arith.constant 5.000000e-01 : f32
    %25 = vector.broadcast %cst_12 : f32 to vector<2x8x8xf32>
    %26 = arith.mulf %24, %25 : vector<2x8x8xf32>
    %27 = math.exp %26 : vector<2x8x8xf32>
    %cst_13 = arith.constant dense<0.000000e+00> : vector<2x8xf32>
    %28 = vector.multi_reduction <add>, %27, %cst_13 [2] : vector<2x8x8xf32> to vector<2x8xf32>
    %29 = vector.shape_cast %28 : vector<2x8xf32> to vector<2x8x1xf32>
    %30 = arith.truncf %27 : vector<2x8x8xf32> to vector<2x8x8xbf16>
    "tpu.trace_start"() <{level = 10 : i32, message = "bts,bsd->btd"}> : () -> ()
    %cst_14 = arith.constant dense<0.000000e+00> : vector<2x8x4xf32>
    %31 = tpu.matmul %30, %12, %cst_14 {dimension_numbers = #tpu.dot_dimension_numbers<[2], [1], [1], [2], [0, 0, 0, 1, 1, 2], [0], [0]>} : vector<2x8x8xbf16>, vector<2x8x4xbf16>, vector<2x8x4xf32> -> vector<2x8x4xf32>
    "tpu.trace_stop"() : () -> ()
    %32 = tpu.reciprocal %29 {approx = true} : vector<2x8x1xf32> -> vector<2x8x1xf32>
    %33 = vector.broadcast %32 : vector<2x8x1xf32> to vector<2x8x4xf32>
    %34 = arith.mulf %31, %33 : vector<2x8x4xf32>
    %35 = vector.extract_strided_slice %10 {offsets = [0, 4], sizes = [16, 4], strides = [1, 1]} : vector<16x32xbf16> to vector<16x4xbf16>
    %36 = vector.shape_cast %35 : vector<16x4xbf16> to vector<2x8x4xbf16>
    "tpu.trace_start"() <{level = 10 : i32, message = "btd,bsd->bts"}> : () -> ()
    %cst_15 = arith.constant dense<0.000000e+00> : vector<2x8x8xf32>
    %37 = tpu.matmul %36, %36, %cst_15 {dimension_numbers = #tpu.dot_dimension_numbers<[2], [2], [1], [1], [0, 0, 0, 1, 1, 1], [0], [0]>} : vector<2x8x4xbf16>, vector<2x8x4xbf16>, vector<2x8x8xf32> -> vector<2x8x8xf32>
    "tpu.trace_stop"() : () -> ()
    %38 = arith.extf %36 : vector<2x8x4xbf16> to vector<2x8x4xf32>
    %39 = arith.mulf %38, %38 : vector<2x8x4xf32>
    %cst_16 = arith.constant dense<0.000000e+00> : vector<2x8xf32>
    %40 = vector.multi_reduction <add>, %39, %cst_16 [2] : vector<2x8x4xf32> to vector<2x8xf32>
    %cst_17 = arith.constant 2.000000e+00 : f32
    %41 = vector.broadcast %cst_17 : f32 to vector<2x8x8xf32>
    %42 = arith.mulf %41, %37 : vector<2x8x8xf32>
    %43 = vector.shape_cast %40 : vector<2x8xf32> to vector<2x1x8xf32>
    %44 = vector.broadcast %43 : vector<2x1x8xf32> to vector<2x8x8xf32>
    %45 = arith.subf %42, %44 : vector<2x8x8xf32>
    %46 = vector.shape_cast %40 : vector<2x8xf32> to vector<2x8x1xf32>
    %47 = vector.broadcast %46 : vector<2x8x1xf32> to vector<2x8x8xf32>
    %48 = arith.subf %45, %47 : vector<2x8x8xf32>
    %cst_18 = arith.constant 5.000000e-01 : f32
    %49 = vector.broadcast %cst_18 : f32 to vector<2x8x8xf32>
    %50 = arith.mulf %48, %49 : vector<2x8x8xf32>
    %51 = math.exp %50 : vector<2x8x8xf32>
    %cst_19 = arith.constant dense<0.000000e+00> : vector<2x8xf32>
    %52 = vector.multi_reduction <add>, %51, %cst_19 [2] : vector<2x8x8xf32> to vector<2x8xf32>
    %53 = vector.shape_cast %52 : vector<2x8xf32> to vector<2x8x1xf32>
    %54 = arith.truncf %51 : vector<2x8x8xf32> to vector<2x8x8xbf16>
    "tpu.trace_start"() <{level = 10 : i32, message = "bts,bsd->btd"}> : () -> ()
    %cst_20 = arith.constant dense<0.000000e+00> : vector<2x8x4xf32>
    %55 = tpu.matmul %54, %36, %cst_20 {dimension_numbers = #tpu.dot_dimension_numbers<[2], [1], [1], [2], [0, 0, 0, 1, 1, 2], [0], [0]>} : vector<2x8x8xbf16>, vector<2x8x4xbf16>, vector<2x8x4xf32> -> vector<2x8x4xf32>
    "tpu.trace_stop"() : () -> ()
    %56 = tpu.reciprocal %53 {approx = true} : vector<2x8x1xf32> -> vector<2x8x1xf32>
    %57 = vector.broadcast %56 : vector<2x8x1xf32> to vector<2x8x4xf32>
    %58 = arith.mulf %55, %57 : vector<2x8x4xf32>
    %59 = vector.extract_strided_slice %10 {offsets = [0, 8], sizes = [16, 4], strides = [1, 1]} : vector<16x32xbf16> to vector<16x4xbf16>
    %60 = vector.shape_cast %59 : vector<16x4xbf16> to vector<2x8x4xbf16>
    "tpu.trace_start"() <{level = 10 : i32, message = "btd,bsd->bts"}> : () -> ()
    %cst_21 = arith.constant dense<0.000000e+00> : vector<2x8x8xf32>
    %61 = tpu.matmul %60, %60, %cst_21 {dimension_numbers = #tpu.dot_dimension_numbers<[2], [2], [1], [1], [0, 0, 0, 1, 1, 1], [0], [0]>} : vector<2x8x4xbf16>, vector<2x8x4xbf16>, vector<2x8x8xf32> -> vector<2x8x8xf32>
    "tpu.trace_stop"() : () -> ()
    %62 = arith.extf %60 : vector<2x8x4xbf16> to vector<2x8x4xf32>
    %63 = arith.mulf %62, %62 : vector<2x8x4xf32>
    %cst_22 = arith.constant dense<0.000000e+00> : vector<2x8xf32>
    %64 = vector.multi_reduction <add>, %63, %cst_22 [2] : vector<2x8x4xf32> to vector<2x8xf32>
    %cst_23 = arith.constant 2.000000e+00 : f32
    %65 = vector.broadcast %cst_23 : f32 to vector<2x8x8xf32>
    %66 = arith.mulf %65, %61 : vector<2x8x8xf32>
    %67 = vector.shape_cast %64 : vector<2x8xf32> to vector<2x1x8xf32>
    %68 = vector.broadcast %67 : vector<2x1x8xf32> to vector<2x8x8xf32>
    %69 = arith.subf %66, %68 : vector<2x8x8xf32>
    %70 = vector.shape_cast %64 : vector<2x8xf32> to vector<2x8x1xf32>
    %71 = vector.broadcast %70 : vector<2x8x1xf32> to vector<2x8x8xf32>
    %72 = arith.subf %69, %71 : vector<2x8x8xf32>
    %cst_24 = arith.constant 5.000000e-01 : f32
    %73 = vector.broadcast %cst_24 : f32 to vector<2x8x8xf32>
    %74 = arith.mulf %72, %73 : vector<2x8x8xf32>
    %75 = math.exp %74 : vector<2x8x8xf32>
    %cst_25 = arith.constant dense<0.000000e+00> : vector<2x8xf32>
    %76 = vector.multi_reduction <add>, %75, %cst_25 [2] : vector<2x8x8xf32> to vector<2x8xf32>
    %77 = vector.shape_cast %76 : vector<2x8xf32> to vector<2x8x1xf32>
    %78 = arith.truncf %75 : vector<2x8x8xf32> to vector<2x8x8xbf16>
    "tpu.trace_start"() <{level = 10 : i32, message = "bts,bsd->btd"}> : () -> ()
    %cst_26 = arith.constant dense<0.000000e+00> : vector<2x8x4xf32>
    %79 = tpu.matmul %78, %60, %cst_26 {dimension_numbers = #tpu.dot_dimension_numbers<[2], [1], [1], [2], [0, 0, 0, 1, 1, 2], [0], [0]>} : vector<2x8x8xbf16>, vector<2x8x4xbf16>, vector<2x8x4xf32> -> vector<2x8x4xf32>
    "tpu.trace_stop"() : () -> ()
    %80 = tpu.reciprocal %77 {approx = true} : vector<2x8x1xf32> -> vector<2x8x1xf32>
    %81 = vector.broadcast %80 : vector<2x8x1xf32> to vector<2x8x4xf32>
    %82 = arith.mulf %79, %81 : vector<2x8x4xf32>
    %83 = vector.extract_strided_slice %10 {offsets = [0, 12], sizes = [16, 4], strides = [1, 1]} : vector<16x32xbf16> to vector<16x4xbf16>
    %84 = vector.shape_cast %83 : vector<16x4xbf16> to vector<2x8x4xbf16>
    "tpu.trace_start"() <{level = 10 : i32, message = "btd,bsd->bts"}> : () -> ()
    %cst_27 = arith.constant dense<0.000000e+00> : vector<2x8x8xf32>
    %85 = tpu.matmul %84, %84, %cst_27 {dimension_numbers = #tpu.dot_dimension_numbers<[2], [2], [1], [1], [0, 0, 0, 1, 1, 1], [0], [0]>} : vector<2x8x4xbf16>, vector<2x8x4xbf16>, vector<2x8x8xf32> -> vector<2x8x8xf32>
    "tpu.trace_stop"() : () -> ()
    %86 = arith.extf %84 : vector<2x8x4xbf16> to vector<2x8x4xf32>
    %87 = arith.mulf %86, %86 : vector<2x8x4xf32>
    %cst_28 = arith.constant dense<0.000000e+00> : vector<2x8xf32>
    %88 = vector.multi_reduction <add>, %87, %cst_28 [2] : vector<2x8x4xf32> to vector<2x8xf32>
    %cst_29 = arith.constant 2.000000e+00 : f32
    %89 = vector.broadcast %cst_29 : f32 to vector<2x8x8xf32>
    %90 = arith.mulf %89, %85 : vector<2x8x8xf32>
    %91 = vector.shape_cast %88 : vector<2x8xf32> to vector<2x1x8xf32>
    %92 = vector.broadcast %91 : vector<2x1x8xf32> to vector<2x8x8xf32>
    %93 = arith.subf %90, %92 : vector<2x8x8xf32>
    %94 = vector.shape_cast %88 : vector<2x8xf32> to vector<2x8x1xf32>
    %95 = vector.broadcast %94 : vector<2x8x1xf32> to vector<2x8x8xf32>
    %96 = arith.subf %93, %95 : vector<2x8x8xf32>
    %cst_30 = arith.constant 5.000000e-01 : f32
    %97 = vector.broadcast %cst_30 : f32 to vector<2x8x8xf32>
    %98 = arith.mulf %96, %97 : vector<2x8x8xf32>
    %99 = math.exp %98 : vector<2x8x8xf32>
    %cst_31 = arith.constant dense<0.000000e+00> : vector<2x8xf32>
    %100 = vector.multi_reduction <add>, %99, %cst_31 [2] : vector<2x8x8xf32> to vector<2x8xf32>
    %101 = vector.shape_cast %100 : vector<2x8xf32> to vector<2x8x1xf32>
    %102 = arith.truncf %99 : vector<2x8x8xf32> to vector<2x8x8xbf16>
    "tpu.trace_start"() <{level = 10 : i32, message = "bts,bsd->btd"}> : () -> ()
    %cst_32 = arith.constant dense<0.000000e+00> : vector<2x8x4xf32>
    %103 = tpu.matmul %102, %84, %cst_32 {dimension_numbers = #tpu.dot_dimension_numbers<[2], [1], [1], [2], [0, 0, 0, 1, 1, 2], [0], [0]>} : vector<2x8x8xbf16>, vector<2x8x4xbf16>, vector<2x8x4xf32> -> vector<2x8x4xf32>
    "tpu.trace_stop"() : () -> ()
    %104 = tpu.reciprocal %101 {approx = true} : vector<2x8x1xf32> -> vector<2x8x1xf32>
    %105 = vector.broadcast %104 : vector<2x8x1xf32> to vector<2x8x4xf32>
    %106 = arith.mulf %103, %105 : vector<2x8x4xf32>
    %107 = vector.extract_strided_slice %10 {offsets = [0, 16], sizes = [16, 4], strides = [1, 1]} : vector<16x32xbf16> to vector<16x4xbf16>
    %108 = vector.shape_cast %107 : vector<16x4xbf16> to vector<2x8x4xbf16>
    "tpu.trace_start"() <{level = 10 : i32, message = "btd,bsd->bts"}> : () -> ()
    %cst_33 = arith.constant dense<0.000000e+00> : vector<2x8x8xf32>
    %109 = tpu.matmul %108, %108, %cst_33 {dimension_numbers = #tpu.dot_dimension_numbers<[2], [2], [1], [1], [0, 0, 0, 1, 1, 1], [0], [0]>} : vector<2x8x4xbf16>, vector<2x8x4xbf16>, vector<2x8x8xf32> -> vector<2x8x8xf32>
    "tpu.trace_stop"() : () -> ()
    %110 = arith.extf %108 : vector<2x8x4xbf16> to vector<2x8x4xf32>
    %111 = arith.mulf %110, %110 : vector<2x8x4xf32>
    %cst_34 = arith.constant dense<0.000000e+00> : vector<2x8xf32>
    %112 = vector.multi_reduction <add>, %111, %cst_34 [2] : vector<2x8x4xf32> to vector<2x8xf32>
    %cst_35 = arith.constant 2.000000e+00 : f32
    %113 = vector.broadcast %cst_35 : f32 to vector<2x8x8xf32>
    %114 = arith.mulf %113, %109 : vector<2x8x8xf32>
    %115 = vector.shape_cast %112 : vector<2x8xf32> to vector<2x1x8xf32>
    %116 = vector.broadcast %115 : vector<2x1x8xf32> to vector<2x8x8xf32>
    %117 = arith.subf %114, %116 : vector<2x8x8xf32>
    %118 = vector.shape_cast %112 : vector<2x8xf32> to vector<2x8x1xf32>
    %119 = vector.broadcast %118 : vector<2x8x1xf32> to vector<2x8x8xf32>
    %120 = arith.subf %117, %119 : vector<2x8x8xf32>
    %cst_36 = arith.constant 5.000000e-01 : f32
    %121 = vector.broadcast %cst_36 : f32 to vector<2x8x8xf32>
    %122 = arith.mulf %120, %121 : vector<2x8x8xf32>
    %123 = math.exp %122 : vector<2x8x8xf32>
    %cst_37 = arith.constant dense<0.000000e+00> : vector<2x8xf32>
    %124 = vector.multi_reduction <add>, %123, %cst_37 [2] : vector<2x8x8xf32> to vector<2x8xf32>
    %125 = vector.shape_cast %124 : vector<2x8xf32> to vector<2x8x1xf32>
    %126 = arith.truncf %123 : vector<2x8x8xf32> to vector<2x8x8xbf16>
    "tpu.trace_start"() <{level = 10 : i32, message = "bts,bsd->btd"}> : () -> ()
    %cst_38 = arith.constant dense<0.000000e+00> : vector<2x8x4xf32>
    %127 = tpu.matmul %126, %108, %cst_38 {dimension_numbers = #tpu.dot_dimension_numbers<[2], [1], [1], [2], [0, 0, 0, 1, 1, 2], [0], [0]>} : vector<2x8x8xbf16>, vector<2x8x4xbf16>, vector<2x8x4xf32> -> vector<2x8x4xf32>
    "tpu.trace_stop"() : () -> ()
    %128 = tpu.reciprocal %125 {approx = true} : vector<2x8x1xf32> -> vector<2x8x1xf32>
    %129 = vector.broadcast %128 : vector<2x8x1xf32> to vector<2x8x4xf32>
    %130 = arith.mulf %127, %129 : vector<2x8x4xf32>
    %131 = vector.extract_strided_slice %10 {offsets = [0, 20], sizes = [16, 4], strides = [1, 1]} : vector<16x32xbf16> to vector<16x4xbf16>
    %132 = vector.shape_cast %131 : vector<16x4xbf16> to vector<2x8x4xbf16>
    "tpu.trace_start"() <{level = 10 : i32, message = "btd,bsd->bts"}> : () -> ()
    %cst_39 = arith.constant dense<0.000000e+00> : vector<2x8x8xf32>
    %133 = tpu.matmul %132, %132, %cst_39 {dimension_numbers = #tpu.dot_dimension_numbers<[2], [2], [1], [1], [0, 0, 0, 1, 1, 1], [0], [0]>} : vector<2x8x4xbf16>, vector<2x8x4xbf16>, vector<2x8x8xf32> -> vector<2x8x8xf32>
    "tpu.trace_stop"() : () -> ()
    %134 = arith.extf %132 : vector<2x8x4xbf16> to vector<2x8x4xf32>
    %135 = arith.mulf %134, %134 : vector<2x8x4xf32>
    %cst_40 = arith.constant dense<0.000000e+00> : vector<2x8xf32>
    %136 = vector.multi_reduction <add>, %135, %cst_40 [2] : vector<2x8x4xf32> to vector<2x8xf32>
    %cst_41 = arith.constant 2.000000e+00 : f32
    %137 = vector.broadcast %cst_41 : f32 to vector<2x8x8xf32>
    %138 = arith.mulf %137, %133 : vector<2x8x8xf32>
    %139 = vector.shape_cast %136 : vector<2x8xf32> to vector<2x1x8xf32>
    %140 = vector.broadcast %139 : vector<2x1x8xf32> to vector<2x8x8xf32>
    %141 = arith.subf %138, %140 : vector<2x8x8xf32>
    %142 = vector.shape_cast %136 : vector<2x8xf32> to vector<2x8x1xf32>
    %143 = vector.broadcast %142 : vector<2x8x1xf32> to vector<2x8x8xf32>
    %144 = arith.subf %141, %143 : vector<2x8x8xf32>
    %cst_42 = arith.constant 5.000000e-01 : f32
    %145 = vector.broadcast %cst_42 : f32 to vector<2x8x8xf32>
    %146 = arith.mulf %144, %145 : vector<2x8x8xf32>
    %147 = math.exp %146 : vector<2x8x8xf32>
    %cst_43 = arith.constant dense<0.000000e+00> : vector<2x8xf32>
    %148 = vector.multi_reduction <add>, %147, %cst_43 [2] : vector<2x8x8xf32> to vector<2x8xf32>
    %149 = vector.shape_cast %148 : vector<2x8xf32> to vector<2x8x1xf32>
    %150 = arith.truncf %147 : vector<2x8x8xf32> to vector<2x8x8xbf16>
    "tpu.trace_start"() <{level = 10 : i32, message = "bts,bsd->btd"}> : () -> ()
    %cst_44 = arith.constant dense<0.000000e+00> : vector<2x8x4xf32>
    %151 = tpu.matmul %150, %132, %cst_44 {dimension_numbers = #tpu.dot_dimension_numbers<[2], [1], [1], [2], [0, 0, 0, 1, 1, 2], [0], [0]>} : vector<2x8x8xbf16>, vector<2x8x4xbf16>, vector<2x8x4xf32> -> vector<2x8x4xf32>
    "tpu.trace_stop"() : () -> ()
    %152 = tpu.reciprocal %149 {approx = true} : vector<2x8x1xf32> -> vector<2x8x1xf32>
    %153 = vector.broadcast %152 : vector<2x8x1xf32> to vector<2x8x4xf32>
    %154 = arith.mulf %151, %153 : vector<2x8x4xf32>
    %155 = vector.extract_strided_slice %10 {offsets = [0, 24], sizes = [16, 4], strides = [1, 1]} : vector<16x32xbf16> to vector<16x4xbf16>
    %156 = vector.shape_cast %155 : vector<16x4xbf16> to vector<2x8x4xbf16>
    "tpu.trace_start"() <{level = 10 : i32, message = "btd,bsd->bts"}> : () -> ()
    %cst_45 = arith.constant dense<0.000000e+00> : vector<2x8x8xf32>
    %157 = tpu.matmul %156, %156, %cst_45 {dimension_numbers = #tpu.dot_dimension_numbers<[2], [2], [1], [1], [0, 0, 0, 1, 1, 1], [0], [0]>} : vector<2x8x4xbf16>, vector<2x8x4xbf16>, vector<2x8x8xf32> -> vector<2x8x8xf32>
    "tpu.trace_stop"() : () -> ()
    %158 = arith.extf %156 : vector<2x8x4xbf16> to vector<2x8x4xf32>
    %159 = arith.mulf %158, %158 : vector<2x8x4xf32>
    %cst_46 = arith.constant dense<0.000000e+00> : vector<2x8xf32>
    %160 = vector.multi_reduction <add>, %159, %cst_46 [2] : vector<2x8x4xf32> to vector<2x8xf32>
    %cst_47 = arith.constant 2.000000e+00 : f32
    %161 = vector.broadcast %cst_47 : f32 to vector<2x8x8xf32>
    %162 = arith.mulf %161, %157 : vector<2x8x8xf32>
    %163 = vector.shape_cast %160 : vector<2x8xf32> to vector<2x1x8xf32>
    %164 = vector.broadcast %163 : vector<2x1x8xf32> to vector<2x8x8xf32>
    %165 = arith.subf %162, %164 : vector<2x8x8xf32>
    %166 = vector.shape_cast %160 : vector<2x8xf32> to vector<2x8x1xf32>
    %167 = vector.broadcast %166 : vector<2x8x1xf32> to vector<2x8x8xf32>
    %168 = arith.subf %165, %167 : vector<2x8x8xf32>
    %cst_48 = arith.constant 5.000000e-01 : f32
    %169 = vector.broadcast %cst_48 : f32 to vector<2x8x8xf32>
    %170 = arith.mulf %168, %169 : vector<2x8x8xf32>
    %171 = math.exp %170 : vector<2x8x8xf32>
    %cst_49 = arith.constant dense<0.000000e+00> : vector<2x8xf32>
    %172 = vector.multi_reduction <add>, %171, %cst_49 [2] : vector<2x8x8xf32> to vector<2x8xf32>
    %173 = vector.shape_cast %172 : vector<2x8xf32> to vector<2x8x1xf32>
    %174 = arith.truncf %171 : vector<2x8x8xf32> to vector<2x8x8xbf16>
    "tpu.trace_start"() <{level = 10 : i32, message = "bts,bsd->btd"}> : () -> ()
    %cst_50 = arith.constant dense<0.000000e+00> : vector<2x8x4xf32>
    %175 = tpu.matmul %174, %156, %cst_50 {dimension_numbers = #tpu.dot_dimension_numbers<[2], [1], [1], [2], [0, 0, 0, 1, 1, 2], [0], [0]>} : vector<2x8x8xbf16>, vector<2x8x4xbf16>, vector<2x8x4xf32> -> vector<2x8x4xf32>
    "tpu.trace_stop"() : () -> ()
    %176 = tpu.reciprocal %173 {approx = true} : vector<2x8x1xf32> -> vector<2x8x1xf32>
    %177 = vector.broadcast %176 : vector<2x8x1xf32> to vector<2x8x4xf32>
    %178 = arith.mulf %175, %177 : vector<2x8x4xf32>
    %179 = vector.extract_strided_slice %10 {offsets = [0, 28], sizes = [16, 4], strides = [1, 1]} : vector<16x32xbf16> to vector<16x4xbf16>
    %180 = vector.shape_cast %179 : vector<16x4xbf16> to vector<2x8x4xbf16>
    "tpu.trace_start"() <{level = 10 : i32, message = "btd,bsd->bts"}> : () -> ()
    %cst_51 = arith.constant dense<0.000000e+00> : vector<2x8x8xf32>
    %181 = tpu.matmul %180, %180, %cst_51 {dimension_numbers = #tpu.dot_dimension_numbers<[2], [2], [1], [1], [0, 0, 0, 1, 1, 1], [0], [0]>} : vector<2x8x4xbf16>, vector<2x8x4xbf16>, vector<2x8x8xf32> -> vector<2x8x8xf32>
    "tpu.trace_stop"() : () -> ()
    %182 = arith.extf %180 : vector<2x8x4xbf16> to vector<2x8x4xf32>
    %183 = arith.mulf %182, %182 : vector<2x8x4xf32>
    %cst_52 = arith.constant dense<0.000000e+00> : vector<2x8xf32>
    %184 = vector.multi_reduction <add>, %183, %cst_52 [2] : vector<2x8x4xf32> to vector<2x8xf32>
    %cst_53 = arith.constant 2.000000e+00 : f32
    %185 = vector.broadcast %cst_53 : f32 to vector<2x8x8xf32>
    %186 = arith.mulf %185, %181 : vector<2x8x8xf32>
    %187 = vector.shape_cast %184 : vector<2x8xf32> to vector<2x1x8xf32>
    %188 = vector.broadcast %187 : vector<2x1x8xf32> to vector<2x8x8xf32>
    %189 = arith.subf %186, %188 : vector<2x8x8xf32>
    %190 = vector.shape_cast %184 : vector<2x8xf32> to vector<2x8x1xf32>
    %191 = vector.broadcast %190 : vector<2x8x1xf32> to vector<2x8x8xf32>
    %192 = arith.subf %189, %191 : vector<2x8x8xf32>
    %cst_54 = arith.constant 5.000000e-01 : f32
    %193 = vector.broadcast %cst_54 : f32 to vector<2x8x8xf32>
    %194 = arith.mulf %192, %193 : vector<2x8x8xf32>
    %195 = math.exp %194 : vector<2x8x8xf32>
    %cst_55 = arith.constant dense<0.000000e+00> : vector<2x8xf32>
    %196 = vector.multi_reduction <add>, %195, %cst_55 [2] : vector<2x8x8xf32> to vector<2x8xf32>
    %197 = vector.shape_cast %196 : vector<2x8xf32> to vector<2x8x1xf32>
    %198 = arith.truncf %195 : vector<2x8x8xf32> to vector<2x8x8xbf16>
    "tpu.trace_start"() <{level = 10 : i32, message = "bts,bsd->btd"}> : () -> ()
    %cst_56 = arith.constant dense<0.000000e+00> : vector<2x8x4xf32>
    %199 = tpu.matmul %198, %180, %cst_56 {dimension_numbers = #tpu.dot_dimension_numbers<[2], [1], [1], [2], [0, 0, 0, 1, 1, 2], [0], [0]>} : vector<2x8x8xbf16>, vector<2x8x4xbf16>, vector<2x8x4xf32> -> vector<2x8x4xf32>
    "tpu.trace_stop"() : () -> ()
    %200 = tpu.reciprocal %197 {approx = true} : vector<2x8x1xf32> -> vector<2x8x1xf32>
    %201 = vector.broadcast %200 : vector<2x8x1xf32> to vector<2x8x4xf32>
    %202 = arith.mulf %199, %201 : vector<2x8x4xf32>
    %203 = tpu.concatenate %34, %58, %82, %106, %130, %154, %178, %202 in 2 : vector<2x8x4xf32>, vector<2x8x4xf32>, vector<2x8x4xf32>, vector<2x8x4xf32>, vector<2x8x4xf32>, vector<2x8x4xf32>, vector<2x8x4xf32>, vector<2x8x4xf32> -> vector<2x8x32xf32>
    %204 = vector.shape_cast %203 : vector<2x8x32xf32> to vector<16x32xf32>
    %205 = arith.truncf %204 : vector<16x32xf32> to vector<16x32xbf16>
    %c0_57 = arith.constant 0 : index
    %c0_58 = arith.constant 0 : index
    %206 = vector.load %arg5[%c0_57, %c0_58] : memref<32x32xbf16, #tpu.memory_space<vmem>>, vector<32x32xbf16>
    %cst_59 = arith.constant dense<0.000000e+00> : vector<16x32xf32>
    %207 = tpu.matmul %205, %206, %cst_59 {dimension_numbers = #tpu.dot_dimension_numbers<[1], [0], [0], [1], [0, 0, 1, 1], [], []>} : vector<16x32xbf16>, vector<32x32xbf16>, vector<16x32xf32> -> vector<16x32xf32>
    %c0_60 = arith.constant 0 : index
    %c0_61 = arith.constant 0 : index
    %208 = vector.load %arg6[%c0_60, %c0_61] : memref<1x32xf32, #tpu.memory_space<vmem>>, vector<1x32xf32>
    %209 = vector.broadcast %208 : vector<1x32xf32> to vector<16x32xf32>
    %210 = arith.addf %207, %209 : vector<16x32xf32>
    %211 = arith.addf %210, %6 : vector<16x32xf32>
    %c0_62 = arith.constant 0 : index
    %c0_63 = arith.constant 0 : index
    %212 = vector.load %arg7[%c0_62, %c0_63] : memref<1x32xf32, #tpu.memory_space<vmem>>, vector<1x32xf32>
    %c0_64 = arith.constant 0 : index
    %c0_65 = arith.constant 0 : index
    %213 = vector.load %arg8[%c0_64, %c0_65] : memref<1x32xf32, #tpu.memory_space<vmem>>, vector<1x32xf32>
    %cst_66 = arith.constant dense<0.000000e+00> : vector<16xf32>
    %214 = vector.multi_reduction <add>, %211, %cst_66 [1] : vector<16x32xf32> to vector<16xf32>
    %215 = vector.shape_cast %214 : vector<16xf32> to vector<16x1xf32>
    %cst_67 = arith.constant 3.200000e+01 : f32
    %216 = vector.broadcast %cst_67 : f32 to vector<16x1xf32>
    %217 = arith.divf %215, %216 : vector<16x1xf32>
    %218 = vector.broadcast %217 : vector<16x1xf32> to vector<16x32xf32>
    %219 = arith.subf %211, %218 : vector<16x32xf32>
    %220 = arith.mulf %219, %219 : vector<16x32xf32>
    %cst_68 = arith.constant dense<0.000000e+00> : vector<16xf32>
    %221 = vector.multi_reduction <add>, %220, %cst_68 [1] : vector<16x32xf32> to vector<16xf32>
    %222 = vector.shape_cast %221 : vector<16xf32> to vector<16x1xf32>
    %cst_69 = arith.constant 3.200000e+01 : f32
    %223 = vector.broadcast %cst_69 : f32 to vector<16x1xf32>
    %224 = arith.divf %222, %223 : vector<16x1xf32>
    %225 = vector.broadcast %217 : vector<16x1xf32> to vector<16x32xf32>
    %226 = arith.subf %211, %225 : vector<16x32xf32>
    %cst_70 = arith.constant 9.99999974E-6 : f32
    %227 = vector.broadcast %cst_70 : f32 to vector<16x1xf32>
    %228 = arith.addf %224, %227 : vector<16x1xf32>
    %229 = math.rsqrt %228 : vector<16x1xf32>
    %230 = vector.broadcast %229 : vector<16x1xf32> to vector<16x32xf32>
    %231 = arith.mulf %226, %230 : vector<16x32xf32>
    %232 = vector.broadcast %212 : vector<1x32xf32> to vector<16x32xf32>
    %233 = arith.mulf %231, %232 : vector<16x32xf32>
    %234 = vector.broadcast %213 : vector<1x32xf32> to vector<16x32xf32>
    %235 = arith.addf %233, %234 : vector<16x32xf32>
    %cst_71 = arith.constant 5.000000e-01 : f32
    %236 = vector.broadcast %cst_71 : f32 to vector<16x32xf32>
    %237 = arith.mulf %236, %235 : vector<16x32xf32>
    %cst_72 = arith.constant 0.707106769 : f32
    %238 = vector.broadcast %cst_72 : f32 to vector<16x32xf32>
    %239 = arith.mulf %235, %238 : vector<16x32xf32>
    %240 = math.erf %239 : vector<16x32xf32>
    %cst_73 = arith.constant 1.000000e+00 : f32
    %241 = vector.broadcast %cst_73 : f32 to vector<16x32xf32>
    %242 = arith.addf %241, %240 : vector<16x32xf32>
    %243 = arith.mulf %237, %242 : vector<16x32xf32>
    %244 = arith.truncf %243 : vector<16x32xf32> to vector<16x32xbf16>
    %c0_74 = arith.constant 0 : index
    %c0_75 = arith.constant 0 : index
    %245 = vector.load %arg9[%c0_74, %c0_75] : memref<32x32xbf16, #tpu.memory_space<vmem>>, vector<32x32xbf16>
    %cst_76 = arith.constant dense<0.000000e+00> : vector<16x32xf32>
    %246 = tpu.matmul %244, %245, %cst_76 {dimension_numbers = #tpu.dot_dimension_numbers<[1], [0], [0], [1], [0, 0, 1, 1], [], []>} : vector<16x32xbf16>, vector<32x32xbf16>, vector<16x32xf32> -> vector<16x32xf32>
    %c0_77 = arith.constant 0 : index
    %c0_78 = arith.constant 0 : index
    %247 = vector.load %arg10[%c0_77, %c0_78] : memref<1x32xf32, #tpu.memory_space<vmem>>, vector<1x32xf32>
    %248 = vector.broadcast %247 : vector<1x32xf32> to vector<16x32xf32>
    %249 = arith.addf %246, %248 : vector<16x32xf32>
    %cst_79 = arith.constant 5.000000e-01 : f32
    %250 = vector.broadcast %cst_79 : f32 to vector<16x32xf32>
    %251 = arith.mulf %250, %249 : vector<16x32xf32>
    %cst_80 = arith.constant 0.707106769 : f32
    %252 = vector.broadcast %cst_80 : f32 to vector<16x32xf32>
    %253 = arith.mulf %249, %252 : vector<16x32xf32>
    %254 = math.erf %253 : vector<16x32xf32>
    %cst_81 = arith.constant 1.000000e+00 : f32
    %255 = vector.broadcast %cst_81 : f32 to vector<16x32xf32>
    %256 = arith.addf %255, %254 : vector<16x32xf32>
    %257 = arith.mulf %251, %256 : vector<16x32xf32>
    %258 = arith.truncf %257 : vector<16x32xf32> to vector<16x32xbf16>
    %c0_82 = arith.constant 0 : index
    %c0_83 = arith.constant 0 : index
    %259 = vector.load %arg11[%c0_82, %c0_83] : memref<32x32xbf16, #tpu.memory_space<vmem>>, vector<32x32xbf16>
    %cst_84 = arith.constant dense<0.000000e+00> : vector<16x32xf32>
    %260 = tpu.matmul %258, %259, %cst_84 {dimension_numbers = #tpu.dot_dimension_numbers<[1], [0], [0], [1], [0, 0, 1, 1], [], []>} : vector<16x32xbf16>, vector<32x32xbf16>, vector<16x32xf32> -> vector<16x32xf32>
    %c0_85 = arith.constant 0 : index
    %c0_86 = arith.constant 0 : index
    %261 = vector.load %arg12[%c0_85, %c0_86] : memref<1x32xf32, #tpu.memory_space<vmem>>, vector<1x32xf32>
    %262 = vector.broadcast %261 : vector<1x32xf32> to vector<16x32xf32>
    %263 = arith.addf %260, %262 : vector<16x32xf32>
    %264 = arith.addf %263, %235 : vector<16x32xf32>
    %c0_87 = arith.constant 0 : index
    %c0_88 = arith.constant 0 : index
    %265 = vector.load %arg13[%c0_87, %c0_88] : memref<1x32xf32, #tpu.memory_space<vmem>>, vector<1x32xf32>
    %c0_89 = arith.constant 0 : index
    %c0_90 = arith.constant 0 : index
    %266 = vector.load %arg14[%c0_89, %c0_90] : memref<1x32xf32, #tpu.memory_space<vmem>>, vector<1x32xf32>
    %cst_91 = arith.constant dense<0.000000e+00> : vector<16xf32>
    %267 = vector.multi_reduction <add>, %264, %cst_91 [1] : vector<16x32xf32> to vector<16xf32>
    %268 = vector.shape_cast %267 : vector<16xf32> to vector<16x1xf32>
    %cst_92 = arith.constant 3.200000e+01 : f32
    %269 = vector.broadcast %cst_92 : f32 to vector<16x1xf32>
    %270 = arith.divf %268, %269 : vector<16x1xf32>
    %271 = vector.broadcast %270 : vector<16x1xf32> to vector<16x32xf32>
    %272 = arith.subf %264, %271 : vector<16x32xf32>
    %273 = arith.mulf %272, %272 : vector<16x32xf32>
    %cst_93 = arith.constant dense<0.000000e+00> : vector<16xf32>
    %274 = vector.multi_reduction <add>, %273, %cst_93 [1] : vector<16x32xf32> to vector<16xf32>
    %275 = vector.shape_cast %274 : vector<16xf32> to vector<16x1xf32>
    %cst_94 = arith.constant 3.200000e+01 : f32
    %276 = vector.broadcast %cst_94 : f32 to vector<16x1xf32>
    %277 = arith.divf %275, %276 : vector<16x1xf32>
    %278 = vector.broadcast %270 : vector<16x1xf32> to vector<16x32xf32>
    %279 = arith.subf %264, %278 : vector<16x32xf32>
    %cst_95 = arith.constant 9.99999974E-6 : f32
    %280 = vector.broadcast %cst_95 : f32 to vector<16x1xf32>
    %281 = arith.addf %277, %280 : vector<16x1xf32>
    %282 = math.rsqrt %281 : vector<16x1xf32>
    %283 = vector.broadcast %282 : vector<16x1xf32> to vector<16x32xf32>
    %284 = arith.mulf %279, %283 : vector<16x32xf32>
    %285 = vector.broadcast %265 : vector<1x32xf32> to vector<16x32xf32>
    %286 = arith.mulf %284, %285 : vector<16x32xf32>
    %287 = vector.broadcast %266 : vector<1x32xf32> to vector<16x32xf32>
    %288 = arith.addf %286, %287 : vector<16x32xf32>
    %289 = vector.shape_cast %288 : vector<16x32xf32> to vector<2x8x32xf32>
    %c0_96 = arith.constant 0 : index
    %c0_97 = arith.constant 0 : index
    %c0_98 = arith.constant 0 : index
    %290 = vector.load %arg15[%c0_96, %c0_97, %c0_98] : memref<2x8x32xf32, #tpu.memory_space<vmem>>, vector<2x8x32xf32>
    tpu.vector_store %arg15[%c0_96, %c0_97, %c0_98], %289 {strides = array<i32>} : memref<2x8x32xf32, #tpu.memory_space<vmem>>, vector<2x8x32xf32>,
    return
  }
  func.func @transform_0(%arg0: i32) -> (i32, i32, i32) {
    %c0_i32 = arith.constant 0 : i32
    %c0_i32_0 = arith.constant 0 : i32
    %c0_i32_1 = arith.constant 0 : i32
    return %arg0, %c0_i32, %c0_i32_0 : i32, i32, i32
  }
  func.func @transform_1(%arg0: i32) -> (i32, i32) {
    %c0_i32 = arith.constant 0 : i32
    %c0_i32_0 = arith.constant 0 : i32
    %c0_i32_1 = arith.constant 0 : i32
    return %c0_i32, %c0_i32_0 : i32, i32
  }
  func.func @transform_2(%arg0: i32) -> (i32, i32) {
    %c0_i32 = arith.constant 0 : i32
    %c0_i32_0 = arith.constant 0 : i32
    %c0_i32_1 = arith.constant 0 : i32
    return %c0_i32, %c0_i32_0 : i32, i32
  }
  func.func @transform_3(%arg0: i32) -> (i32, i32) {
    %c0_i32 = arith.constant 0 : i32
    %c0_i32_0 = arith.constant 0 : i32
    %c0_i32_1 = arith.constant 0 : i32
    return %c0_i32, %c0_i32_0 : i32, i32
  }
  func.func @transform_4(%arg0: i32) -> (i32, i32) {
    %c0_i32 = arith.constant 0 : i32
    %c0_i32_0 = arith.constant 0 : i32
    %c0_i32_1 = arith.constant 0 : i32
    return %c0_i32, %c0_i32_0 : i32, i32
  }
  func.func @transform_5(%arg0: i32) -> (i32, i32) {
    %c0_i32 = arith.constant 0 : i32
    %c0_i32_0 = arith.constant 0 : i32
    %c0_i32_1 = arith.constant 0 : i32
    return %c0_i32, %c0_i32_0 : i32, i32
  }
  func.func @transform_6(%arg0: i32) -> (i32, i32) {
    %c0_i32 = arith.constant 0 : i32
    %c0_i32_0 = arith.constant 0 : i32
    %c0_i32_1 = arith.constant 0 : i32
    return %c0_i32, %c0_i32_0 : i32, i32
  }
  func.func @transform_7(%arg0: i32) -> (i32, i32) {
    %c0_i32 = arith.constant 0 : i32
    %c0_i32_0 = arith.constant 0 : i32
    %c0_i32_1 = arith.constant 0 : i32
    return %c0_i32, %c0_i32_0 : i32, i32
  }
  func.func @transform_8(%arg0: i32) -> (i32, i32) {
    %c0_i32 = arith.constant 0 : i32
    %c0_i32_0 = arith.constant 0 : i32
    %c0_i32_1 = arith.constant 0 : i32
    return %c0_i32, %c0_i32_0 : i32, i32
  }
  func.func @transform_9(%arg0: i32) -> (i32, i32) {
    %c0_i32 = arith.constant 0 : i32
    %c0_i32_0 = arith.constant 0 : i32
    %c0_i32_1 = arith.constant 0 : i32
    return %c0_i32, %c0_i32_0 : i32, i32
  }
  func.func @transform_10(%arg0: i32) -> (i32, i32) {
    %c0_i32 = arith.constant 0 : i32
    %c0_i32_0 = arith.constant 0 : i32
    %c0_i32_1 = arith.constant 0 : i32
    return %c0_i32, %c0_i32_0 : i32, i32
  }
  func.func @transform_11(%arg0: i32) -> (i32, i32) {
    %c0_i32 = arith.constant 0 : i32
    %c0_i32_0 = arith.constant 0 : i32
    %c0_i32_1 = arith.constant 0 : i32
    return %c0_i32, %c0_i32_0 : i32, i32
  }
  func.func @transform_12(%arg0: i32) -> (i32, i32) {
    %c0_i32 = arith.constant 0 : i32
    %c0_i32_0 = arith.constant 0 : i32
    %c0_i32_1 = arith.constant 0 : i32
    return %c0_i32, %c0_i32_0 : i32, i32
  }
  func.func @transform_13(%arg0: i32) -> (i32, i32) {
    %c0_i32 = arith.constant 0 : i32
    %c0_i32_0 = arith.constant 0 : i32
    %c0_i32_1 = arith.constant 0 : i32
    return %c0_i32, %c0_i32_0 : i32, i32
  }
  func.func @transform_14(%arg0: i32) -> (i32, i32, i32) {
    %c0_i32 = arith.constant 0 : i32
    %c0_i32_0 = arith.constant 0 : i32
    %c0_i32_1 = arith.constant 0 : i32
    return %arg0, %c0_i32, %c0_i32_0 : i32, i32, i32
  }
}

module attributes {stable_mosaic.version = 11 : i64} {
  func.func @text_encoder_kernel(%arg0: i32, %arg1: memref<2x8x16xbf16, #tpu.memory_space<vmem>>, %arg2: memref<16x32xbf16, #tpu.memory_space<vmem>>, %arg3: memref<1x32xf32, #tpu.memory_space<vmem>>, %arg4: memref<32x32xbf16, #tpu.memory_space<vmem>>, %arg5: memref<32x32xbf16, #tpu.memory_space<vmem>>, %arg6: memref<1x32xf32, #tpu.memory_space<vmem>>, %arg7: memref<1x32xf32, #tpu.memory_space<vmem>>, %arg8: memref<1x32xf32, #tpu.memory_space<vmem>>, %arg9: memref<32x32xbf16, #tpu.memory_space<vmem>>, %arg10: memref<1x32xf32, #tpu.memory_space<vmem>>, %arg11: memref<32x32xbf16, #tpu.memory_space<vmem>>, %arg12: memref<1x32xf32, #tpu.memory_space<vmem>>, %arg13: memref<1x32xf32, #tpu.memory_space<vmem>>, %arg14: memref<1x32xf32, #tpu.memory_space<vmem>>, %arg15: memref<2x8x32xf32, #tpu.memory_space<vmem>>) attributes {dimension_semantics = [#tpu.dimension_semantics<parallel>], iteration_bounds = array<i64: 1>, scalar_prefetch = 0 : i64, scratch_operands = 0 : i64, tpu.core_type = #tpu.core_type<tc>, window_params = [{transform_indices = @transform_0, window_bounds = array<i64: 2, 8, 16>}, {pipeline_mode = #tpu.pipeline_mode<synchronous>, transform_indices = @transform_1, window_bounds = array<i64: 16, 32>}, {pipeline_mode = #tpu.pipeline_mode<synchronous>, transform_indices = @transform_2, window_bounds = array<i64: 1, 32>}, {pipeline_mode = #tpu.pipeline_mode<synchronous>, transform_indices = @transform_3, window_bounds = array<i64: 32, 32>}, {pipeline_mode = #tpu.pipeline_mode<synchronous>, transform_indices = @transform_4, window_bounds = array<i64: 32, 32>}, {pipeline_mode = #tpu.pipeline_mode<synchronous>, transform_indices = @transform_5, window_bounds = array<i64: 1, 32>}, {pipeline_mode = #tpu.pipeline_mode<synchronous>, transform_indices = @transform_6, window_bounds = array<i64: 1, 32>}, {pipeline_mode = #tpu.pipeline_mode<synchronous>, transform_indices = @transform_7, window_bounds = array<i64: 1, 32>}, {pipeline_mode = #tpu.pipeline_mode<synchronous>, transform_indices = @transform_8, window_bounds = array<i64: 32, 32>}, {pipeline_mode = #tpu.pipeline_mode<synchronous>, transform_indices = @transform_9, window_bounds = array<i64: 1, 32>}, {pipeline_mode = #tpu.pipeline_mode<synchronous>, transform_indices = @transform_10, window_bounds = array<i64: 32, 32>}, {pipeline_mode = #tpu.pipeline_mode<synchronous>, transform_indices = @transform_11, window_bounds = array<i64: 1, 32>}, {pipeline_mode = #tpu.pipeline_mode<synchronous>, transform_indices = @transform_12, window_bounds = array<i64: 1, 32>}, {pipeline_mode = #tpu.pipeline_mode<synchronous>, transform_indices = @transform_13, window_bounds = array<i64: 1, 32>}, {transform_indices = @transform_14, window_bounds = array<i64: 2, 8, 32>}]} {
    %c0 = arith.constant 0 : index
    %c0_0 = arith.constant 0 : index
    %c0_1 = arith.constant 0 : index
    %0 = vector.load %arg1[%c0, %c0_0, %c0_1] : memref<2x8x16xbf16, #tpu.memory_space<vmem>>, vector<2x8x16xbf16>
    %1 = vector.shape_cast %0 : vector<2x8x16xbf16> to vector<16x16xbf16>
    %c0_2 = arith.constant 0 : index
    %c0_3 = arith.constant 0 : index
    %2 = vector.load %arg2[%c0_2, %c0_3] : memref<16x32xbf16, #tpu.memory_space<vmem>>, vector<16x32xbf16>
    %cst = arith.constant dense<0.000000e+00> : vector<16x32xf32>
    %3 = tpu.matmul %1, %2, %cst {dimension_numbers = #tpu.dot_dimension_numbers<[1], [0], [0], [1], [0, 0, 1, 1], [], []>} : vector<16x16xbf16>, vector<16x32xbf16>, vector<16x32xf32> -> vector<16x32xf32>
    %c0_4 = arith.constant 0 : index
    %c0_5 = arith.constant 0 : index
    %4 = vector.load %arg3[%c0_4, %c0_5] : memref<1x32xf32, #tpu.memory_space<vmem>>, vector<1x32xf32>
    %5 = vector.broadcast %4 : vector<1x32xf32> to vector<16x32xf32>
    %6 = arith.addf %3, %5 : vector<16x32xf32>
    %7 = arith.truncf %6 : vector<16x32xf32> to vector<16x32xbf16>
    %c0_6 = arith.constant 0 : index
    %c0_7 = arith.constant 0 : index
    %8 = vector.load %arg4[%c0_6, %c0_7] : memref<32x32xbf16, #tpu.memory_space<vmem>>, vector<32x32xbf16>
    %cst_8 = arith.constant dense<0.000000e+00> : vector<16x32xf32>
    %9 = tpu.matmul %7, %8, %cst_8 {dimension_numbers = #tpu.dot_dimension_numbers<[1], [0], [0], [1], [0, 0, 1, 1], [], []>} : vector<16x32xbf16>, vector<32x32xbf16>, vector<16x32xf32> -> vector<16x32xf32>
    %10 = arith.truncf %9 : vector<16x32xf32> to vector<16x32xbf16>
    %11 = vector.extract_strided_slice %10 {offsets = [0, 0], sizes = [16, 4], strides = [1, 1]} : vector<16x32xbf16> to vector<16x4xbf16>
    %12 = vector.shape_cast %11 : vector<16x4xbf16> to vector<2x8x4xbf16>
    "tpu.trace_start"() <{level = 10 : i32, message = "btd,bsd->bts"}> : () -> ()
    %cst_9 = arith.constant dense<0.000000e+00> : vector<2x8x8xf32>
    %13 = tpu.matmul %12, %12, %cst_9 {dimension_numbers = #tpu.dot_dimension_numbers<[2], [2], [1], [1], [0, 0, 0, 1, 1, 1], [0], [0]>} : vector<2x8x4xbf16>, vector<2x8x4xbf16>, vector<2x8x8xf32> -> vector<2x8x8xf32>
    "tpu.trace_stop"() : () -> ()
    %14 = arith.extf %12 : vector<2x8x4xbf16> to vector<2x8x4xf32>
    %15 = arith.mulf %14, %14 : vector<2x8x4xf32>
    %cst_10 = arith.constant dense<0.000000e+00> : vector<2x8xf32>
    %16 = vector.multi_reduction <add>, %15, %cst_10 [2] : vector<2x8x4xf32> to vector<2x8xf32>
    %cst_11 = arith.constant 2.000000e+00 : f32
    %17 = vector.broadcast %cst_11 : f32 to vector<2x8x8xf32>
    %18 = arith.mulf %17, %13 : vector<2x8x8xf32>
    %19 = vector.shape_cast %16 : vector<2x8xf32> to vector<2x1x8xf32>
    %20 = vector.broadcast %19 : vector<2x1x8xf32> to vector<2x8x8xf32>
    %21 = arith.subf %18, %20 : vector<2x8x8xf32>
    %22 = vector.shape_cast %16 : vector<2x8xf32> to vector<2x8x1xf32>
    %23 = vector.broadcast %22 : vector<2x8x1xf32> to vector<2x8x8xf32>
    %24 = arith.subf %21, %23 : vector<2x8x8xf32>
    %cst_12 = arith.constant 5.000000e-01 : f32
    %25 = vector.broadcast %cst_12 : f32 to vector<2x8x8xf32>
    %26 = arith.mulf %24, %25 : vector<2x8x8xf32>
    %27 = math.exp %26 : vector<2x8x8xf32>
    %cst_13 = arith.constant dense<0.000000e+00> : vector<2x8xf32>
    %28 = vector.multi_reduction <add>, %27, %cst_13 [2] : vector<2x8x8xf32> to vector<2x8xf32>
    %29 = vector.shape_cast %28 : vector<2x8xf32> to vector<2x8x1xf32>
    %30 = arith.truncf %27 : vector<2x8x8xf32> to vector<2x8x8xbf16>
    "tpu.trace_start"() <{level = 10 : i32, message = "bts,bsd->btd"}> : () -> ()
    %cst_14 = arith.constant dense<0.000000e+00> : vector<2x8x4xf32>
    %31 = tpu.matmul %30, %12, %cst_14 {dimension_numbers = #tpu.dot_dimension_numbers<[2], [1], [1], [2], [0, 0, 0, 1, 1, 2], [0], [0]>} : vector<2x8x8xbf16>, vector<2x8x4xbf16>, vector<2x8x4xf32> -> vector<2x8x4xf32>
    "tpu.trace_stop"() : () -> ()
    %32 = tpu.reciprocal %29 {approx = true} : vector<2x8x1xf32> -> vector<2x8x1xf32>
    %33 = vector.broadcast %32 : vector<2x8x1xf32> to vector<2x8x4xf32>
    %34 = arith.mulf %31, %33 : vector<2x8x4xf32>
    %35 = vector.extract_strided_slice %10 {offsets = [0, 4], sizes = [16, 4], strides = [1, 1]} : vector<16x32xbf16> to vector<16x4xbf16>
    %36 = vector.shape_cast %35 : vector<16x4xbf16> to vector<2x8x4xbf16>
    "tpu.trace_start"() <{level = 10 : i32, message = "btd,bsd->bts"}> : () -> ()
    %cst_15 = arith.constant dense<0.000000e+00> : vector<2x8x8xf32>
    %37 = tpu.matmul %36, %36, %cst_15 {dimension_numbers = #tpu.dot_dimension_numbers<[2], [2], [1], [1], [0, 0, 0, 1, 1, 1], [0], [0]>} : vector<2x8x4xbf16>, vector<2x8x4xbf16>, vector<2x8x8xf32> -> vector<2x8x8xf32>
    "tpu.trace_stop"() : () -> ()
    %38 = arith.extf %36 : vector<2x8x4xbf16> to vector<2x8x4xf32>
    %39 = arith.mulf %38, %38 : vector<2x8x4xf32>
    %cst_16 = arith.constant dense<0.000000e+00> : vector<2x8xf32>
    %40 = vector.multi_reduction <add>, %39, %cst_16 [2] : vector<2x8x4xf32> to vector<2x8xf32>
    %cst_17 = arith.constant 2.000000e+00 : f32
    %41 = vector.broadcast %cst_17 : f32 to vector<2x8x8xf32>
    %42 = arith.mulf %41, %37 : vector<2x8x8xf32>
    %43 = vector.shape_cast %40 : vector<2x8xf32> to vector<2x1x8xf32>
    %44 = vector.broadcast %43 : vector<2x1x8xf32> to vector<2x8x8xf32>
    %45 = arith.subf %42, %44 : vector<2x8x8xf32>
    %46 = vector.shape_cast %40 : vector<2x8xf32> to vector<2x8x1xf32>
    %47 = vector.broadcast %46 : vector<2x8x1xf32> to vector<2x8x8xf32>
    %48 = arith.subf %45, %47 : vector<2x8x8xf32>
    %cst_18 = arith.constant 5.000000e-01 : f32
    %49 = vector.broadcast %cst_18 : f32 to vector<2x8x8xf32>
    %50 = arith.mulf %48, %49 : vector<2x8x8xf32>
    %51 = math.exp %50 : vector<2x8x8xf32>
    %cst_19 = arith.constant dense<0.000000e+00> : vector<2x8xf32>
    %52 = vector.multi_reduction <add>, %51, %cst_19 [2] : vector<2x8x8xf32> to vector<2x8xf32>
    %53 = vector.shape_cast %52 : vector<2x8xf32> to vector<2x8x1xf32>
    %54 = arith.truncf %51 : vector<2x8x8xf32> to vector<2x8x8xbf16>
    "tpu.trace_start"() <{level = 10 : i32, message = "bts,bsd->btd"}> : () -> ()
    %cst_20 = arith.constant dense<0.000000e+00> : vector<2x8x4xf32>
    %55 = tpu.matmul %54, %36, %cst_20 {dimension_numbers = #tpu.dot_dimension_numbers<[2], [1], [1], [2], [0, 0, 0, 1, 1, 2], [0], [0]>} : vector<2x8x8xbf16>, vector<2x8x4xbf16>, vector<2x8x4xf32> -> vector<2x8x4xf32>
    "tpu.trace_stop"() : () -> ()
    %56 = tpu.reciprocal %53 {approx = true} : vector<2x8x1xf32> -> vector<2x8x1xf32>
    %57 = vector.broadcast %56 : vector<2x8x1xf32> to vector<2x8x4xf32>
    %58 = arith.mulf %55, %57 : vector<2x8x4xf32>
    %59 = vector.extract_strided_slice %10 {offsets = [0, 8], sizes = [16, 4], strides = [1, 1]} : vector<16x32xbf16> to vector<16x4xbf16>
    %60 = vector.shape_cast %59 : vector<16x4xbf16> to vector<2x8x4xbf16>
    "tpu.trace_start"() <{level = 10 : i32, message = "btd,bsd->bts"}> : () -> ()
    %cst_21 = arith.constant dense<0.000000e+00> : vector<2x8x8xf32>
    %61 = tpu.matmul %60, %60, %cst_21 {dimension_numbers = #tpu.dot_dimension_numbers<[2], [2], [1], [1], [0, 0, 0, 1, 1, 1], [0], [0]>} : vector<2x8x4xbf16>, vector<2x8x4xbf16>, vector<2x8x8xf32> -> vector<2x8x8xf32>
    "tpu.trace_stop"() : () -> ()
    %62 = arith.extf %60 : vector<2x8x4xbf16> to vector<2x8x4xf32>
    %63 = arith.mulf %62, %62 : vector<2x8x4xf32>
    %cst_22 = arith.constant dense<0.000000e+00> : vector<2x8xf32>
    %64 = vector.multi_reduction <add>, %63, %cst_22 [2] : vector<2x8x4xf32> to vector<2x8xf32>
    %cst_23 = arith.constant 2.000000e+00 : f32
    %65 = vector.broadcast %cst_23 : f32 to vector<2x8x8xf32>
    %66 = arith.mulf %65, %61 : vector<2x8x8xf32>
    %67 = vector.shape_cast %64 : vector<2x8xf32> to vector<2x1x8xf32>
    %68 = vector.broadcast %67 : vector<2x1x8xf32> to vector<2x8x8xf32>
    %69 = arith.subf %66, %68 : vector<2x8x8xf32>
    %70 = vector.shape_cast %64 : vector<2x8xf32> to vector<2x8x1xf32>
    %71 = vector.broadcast %70 : vector<2x8x1xf32> to vector<2x8x8xf32>
    %72 = arith.subf %69, %71 : vector<2x8x8xf32>
    %cst_24 = arith.constant 5.000000e-01 : f32
    %73 = vector.broadcast %cst_24 : f32 to vector<2x8x8xf32>
    %74 = arith.mulf %72, %73 : vector<2x8x8xf32>
    %75 = math.exp %74 : vector<2x8x8xf32>
    %cst_25 = arith.constant dense<0.000000e+00> : vector<2x8xf32>
    %76 = vector.multi_reduction <add>, %75, %cst_25 [2] : vector<2x8x8xf32> to vector<2x8xf32>
    %77 = vector.shape_cast %76 : vector<2x8xf32> to vector<2x8x1xf32>
    %78 = arith.truncf %75 : vector<2x8x8xf32> to vector<2x8x8xbf16>
    "tpu.trace_start"() <{level = 10 : i32, message = "bts,bsd->btd"}> : () -> ()
    %cst_26 = arith.constant dense<0.000000e+00> : vector<2x8x4xf32>
    %79 = tpu.matmul %78, %60, %cst_26 {dimension_numbers = #tpu.dot_dimension_numbers<[2], [1], [1], [2], [0, 0, 0, 1, 1, 2], [0], [0]>} : vector<2x8x8xbf16>, vector<2x8x4xbf16>, vector<2x8x4xf32> -> vector<2x8x4xf32>
    "tpu.trace_stop"() : () -> ()
    %80 = tpu.reciprocal %77 {approx = true} : vector<2x8x1xf32> -> vector<2x8x1xf32>
    %81 = vector.broadcast %80 : vector<2x8x1xf32> to vector<2x8x4xf32>
    %82 = arith.mulf %79, %81 : vector<2x8x4xf32>
    %83 = vector.extract_strided_slice %10 {offsets = [0, 12], sizes = [16, 4], strides = [1, 1]} : vector<16x32xbf16> to vector<16x4xbf16>
    %84 = vector.shape_cast %83 : vector<16x4xbf16> to vector<2x8x4xbf16>
    "tpu.trace_start"() <{level = 10 : i32, message = "btd,bsd->bts"}> : () -> ()
    %cst_27 = arith.constant dense<0.000000e+00> : vector<2x8x8xf32>
    %85 = tpu.matmul %84, %84, %cst_27 {dimension_numbers = #tpu.dot_dimension_numbers<[2], [2], [1], [1], [0, 0, 0, 1, 1, 1], [0], [0]>} : vector<2x8x4xbf16>, vector<2x8x4xbf16>, vector<2x8x8xf32> -> vector<2x8x8xf32>
    "tpu.trace_stop"() : () -> ()
    %86 = arith.extf %84 : vector<2x8x4xbf16> to vector<2x8x4xf32>
    %87 = arith.mulf %86, %86 : vector<2x8x4xf32>
    %cst_28 = arith.constant dense<0.000000e+00> : vector<2x8xf32>
    %88 = vector.multi_reduction <add>, %87, %cst_28 [2] : vector<2x8x4xf32> to vector<2x8xf32>
    %cst_29 = arith.constant 2.000000e+00 : f32
    %89 = vector.broadcast %cst_29 : f32 to vector<2x8x8xf32>
    %90 = arith.mulf %89, %85 : vector<2x8x8xf32>
    %91 = vector.shape_cast %88 : vector<2x8xf32> to vector<2x1x8xf32>
    %92 = vector.broadcast %91 : vector<2x1x8xf32> to vector<2x8x8xf32>
    %93 = arith.subf %90, %92 : vector<2x8x8xf32>
    %94 = vector.shape_cast %88 : vector<2x8xf32> to vector<2x8x1xf32>
    %95 = vector.broadcast %94 : vector<2x8x1xf32> to vector<2x8x8xf32>
    %96 = arith.subf %93, %95 : vector<2x8x8xf32>
    %cst_30 = arith.constant 5.000000e-01 : f32
    %97 = vector.broadcast %cst_30 : f32 to vector<2x8x8xf32>
    %98 = arith.mulf %96, %97 : vector<2x8x8xf32>
    %99 = math.exp %98 : vector<2x8x8xf32>
    %cst_31 = arith.constant dense<0.000000e+00> : vector<2x8xf32>
    %100 = vector.multi_reduction <add>, %99, %cst_31 [2] : vector<2x8x8xf32> to vector<2x8xf32>
    %101 = vector.shape_cast %100 : vector<2x8xf32> to vector<2x8x1xf32>
    %102 = arith.truncf %99 : vector<2x8x8xf32> to vector<2x8x8xbf16>
    "tpu.trace_start"() <{level = 10 : i32, message = "bts,bsd->btd"}> : () -> ()
    %cst_32 = arith.constant dense<0.000000e+00> : vector<2x8x4xf32>
    %103 = tpu.matmul %102, %84, %cst_32 {dimension_numbers = #tpu.dot_dimension_numbers<[2], [1], [1], [2], [0, 0, 0, 1, 1, 2], [0], [0]>} : vector<2x8x8xbf16>, vector<2x8x4xbf16>, vector<2x8x4xf32> -> vector<2x8x4xf32>
    "tpu.trace_stop"() : () -> ()
    %104 = tpu.reciprocal %101 {approx = true} : vector<2x8x1xf32> -> vector<2x8x1xf32>
    %105 = vector.broadcast %104 : vector<2x8x1xf32> to vector<2x8x4xf32>
    %106 = arith.mulf %103, %105 : vector<2x8x4xf32>
    %107 = vector.extract_strided_slice %10 {offsets = [0, 16], sizes = [16, 4], strides = [1, 1]} : vector<16x32xbf16> to vector<16x4xbf16>
    %108 = vector.shape_cast %107 : vector<16x4xbf16> to vector<2x8x4xbf16>
    "tpu.trace_start"() <{level = 10 : i32, message = "btd,bsd->bts"}> : () -> ()
    %cst_33 = arith.constant dense<0.000000e+00> : vector<2x8x8xf32>
    %109 = tpu.matmul %108, %108, %cst_33 {dimension_numbers = #tpu.dot_dimension_numbers<[2], [2], [1], [1], [0, 0, 0, 1, 1, 1], [0], [0]>} : vector<2x8x4xbf16>, vector<2x8x4xbf16>, vector<2x8x8xf32> -> vector<2x8x8xf32>
    "tpu.trace_stop"() : () -> ()
    %110 = arith.extf %108 : vector<2x8x4xbf16> to vector<2x8x4xf32>
    %111 = arith.mulf %110, %110 : vector<2x8x4xf32>
    %cst_34 = arith.constant dense<0.000000e+00> : vector<2x8xf32>
    %112 = vector.multi_reduction <add>, %111, %cst_34 [2] : vector<2x8x4xf32> to vector<2x8xf32>
    %cst_35 = arith.constant 2.000000e+00 : f32
    %113 = vector.broadcast %cst_35 : f32 to vector<2x8x8xf32>
    %114 = arith.mulf %113, %109 : vector<2x8x8xf32>
    %115 = vector.shape_cast %112 : vector<2x8xf32> to vector<2x1x8xf32>
    %116 = vector.broadcast %115 : vector<2x1x8xf32> to vector<2x8x8xf32>
    %117 = arith.subf %114, %116 : vector<2x8x8xf32>
    %118 = vector.shape_cast %112 : vector<2x8xf32> to vector<2x8x1xf32>
    %119 = vector.broadcast %118 : vector<2x8x1xf32> to vector<2x8x8xf32>
    %120 = arith.subf %117, %119 : vector<2x8x8xf32>
    %cst_36 = arith.constant 5.000000e-01 : f32
    %121 = vector.broadcast %cst_36 : f32 to vector<2x8x8xf32>
    %122 = arith.mulf %120, %121 : vector<2x8x8xf32>
    %123 = math.exp %122 : vector<2x8x8xf32>
    %cst_37 = arith.constant dense<0.000000e+00> : vector<2x8xf32>
    %124 = vector.multi_reduction <add>, %123, %cst_37 [2] : vector<2x8x8xf32> to vector<2x8xf32>
    %125 = vector.shape_cast %124 : vector<2x8xf32> to vector<2x8x1xf32>
    %126 = arith.truncf %123 : vector<2x8x8xf32> to vector<2x8x8xbf16>
    "tpu.trace_start"() <{level = 10 : i32, message = "bts,bsd->btd"}> : () -> ()
    %cst_38 = arith.constant dense<0.000000e+00> : vector<2x8x4xf32>
    %127 = tpu.matmul %126, %108, %cst_38 {dimension_numbers = #tpu.dot_dimension_numbers<[2], [1], [1], [2], [0, 0, 0, 1, 1, 2], [0], [0]>} : vector<2x8x8xbf16>, vector<2x8x4xbf16>, vector<2x8x4xf32> -> vector<2x8x4xf32>
    "tpu.trace_stop"() : () -> ()
    %128 = tpu.reciprocal %125 {approx = true} : vector<2x8x1xf32> -> vector<2x8x1xf32>
    %129 = vector.broadcast %128 : vector<2x8x1xf32> to vector<2x8x4xf32>
    %130 = arith.mulf %127, %129 : vector<2x8x4xf32>
    %131 = vector.extract_strided_slice %10 {offsets = [0, 20], sizes = [16, 4], strides = [1, 1]} : vector<16x32xbf16> to vector<16x4xbf16>
    %132 = vector.shape_cast %131 : vector<16x4xbf16> to vector<2x8x4xbf16>
    "tpu.trace_start"() <{level = 10 : i32, message = "btd,bsd->bts"}> : () -> ()
    %cst_39 = arith.constant dense<0.000000e+00> : vector<2x8x8xf32>
    %133 = tpu.matmul %132, %132, %cst_39 {dimension_numbers = #tpu.dot_dimension_numbers<[2], [2], [1], [1], [0, 0, 0, 1, 1, 1], [0], [0]>} : vector<2x8x4xbf16>, vector<2x8x4xbf16>, vector<2x8x8xf32> -> vector<2x8x8xf32>
    "tpu.trace_stop"() : () -> ()
    %134 = arith.extf %132 : vector<2x8x4xbf16> to vector<2x8x4xf32>
    %135 = arith.mulf %134, %134 : vector<2x8x4xf32>
    %cst_40 = arith.constant dense<0.000000e+00> : vector<2x8xf32>
    %136 = vector.multi_reduction <add>, %135, %cst_40 [2] : vector<2x8x4xf32> to vector<2x8xf32>
    %cst_41 = arith.constant 2.000000e+00 : f32
    %137 = vector.broadcast %cst_41 : f32 to vector<2x8x8xf32>
    %138 = arith.mulf %137, %133 : vector<2x8x8xf32>
    %139 = vector.shape_cast %136 : vector<2x8xf32> to vector<2x1x8xf32>
    %140 = vector.broadcast %139 : vector<2x1x8xf32> to vector<2x8x8xf32>
    %141 = arith.subf %138, %140 : vector<2x8x8xf32>
    %142 = vector.shape_cast %136 : vector<2x8xf32> to vector<2x8x1xf32>
    %143 = vector.broadcast %142 : vector<2x8x1xf32> to vector<2x8x8xf32>
    %144 = arith.subf %141, %143 : vector<2x8x8xf32>
    %cst_42 = arith.constant 5.000000e-01 : f32
    %145 = vector.broadcast %cst_42 : f32 to vector<2x8x8xf32>
    %146 = arith.mulf %144, %145 : vector<2x8x8xf32>
    %147 = math.exp %146 : vector<2x8x8xf32>
    %cst_43 = arith.constant dense<0.000000e+00> : vector<2x8xf32>
    %148 = vector.multi_reduction <add>, %147, %cst_43 [2] : vector<2x8x8xf32> to vector<2x8xf32>
    %149 = vector.shape_cast %148 : vector<2x8xf32> to vector<2x8x1xf32>
    %150 = arith.truncf %147 : vector<2x8x8xf32> to vector<2x8x8xbf16>
    "tpu.trace_start"() <{level = 10 : i32, message = "bts,bsd->btd"}> : () -> ()
    %cst_44 = arith.constant dense<0.000000e+00> : vector<2x8x4xf32>
    %151 = tpu.matmul %150, %132, %cst_44 {dimension_numbers = #tpu.dot_dimension_numbers<[2], [1], [1], [2], [0, 0, 0, 1, 1, 2], [0], [0]>} : vector<2x8x8xbf16>, vector<2x8x4xbf16>, vector<2x8x4xf32> -> vector<2x8x4xf32>
    "tpu.trace_stop"() : () -> ()
    %152 = tpu.reciprocal %149 {approx = true} : vector<2x8x1xf32> -> vector<2x8x1xf32>
    %153 = vector.broadcast %152 : vector<2x8x1xf32> to vector<2x8x4xf32>
    %154 = arith.mulf %151, %153 : vector<2x8x4xf32>
    %155 = vector.extract_strided_slice %10 {offsets = [0, 24], sizes = [16, 4], strides = [1, 1]} : vector<16x32xbf16> to vector<16x4xbf16>
    %156 = vector.shape_cast %155 : vector<16x4xbf16> to vector<2x8x4xbf16>
    "tpu.trace_start"() <{level = 10 : i32, message = "btd,bsd->bts"}> : () -> ()
    %cst_45 = arith.constant dense<0.000000e+00> : vector<2x8x8xf32>
    %157 = tpu.matmul %156, %156, %cst_45 {dimension_numbers = #tpu.dot_dimension_numbers<[2], [2], [1], [1], [0, 0, 0, 1, 1, 1], [0], [0]>} : vector<2x8x4xbf16>, vector<2x8x4xbf16>, vector<2x8x8xf32> -> vector<2x8x8xf32>
    "tpu.trace_stop"() : () -> ()
    %158 = arith.extf %156 : vector<2x8x4xbf16> to vector<2x8x4xf32>
    %159 = arith.mulf %158, %158 : vector<2x8x4xf32>
    %cst_46 = arith.constant dense<0.000000e+00> : vector<2x8xf32>
    %160 = vector.multi_reduction <add>, %159, %cst_46 [2] : vector<2x8x4xf32> to vector<2x8xf32>
    %cst_47 = arith.constant 2.000000e+00 : f32
    %161 = vector.broadcast %cst_47 : f32 to vector<2x8x8xf32>
    %162 = arith.mulf %161, %157 : vector<2x8x8xf32>
    %163 = vector.shape_cast %160 : vector<2x8xf32> to vector<2x1x8xf32>
    %164 = vector.broadcast %163 : vector<2x1x8xf32> to vector<2x8x8xf32>
    %165 = arith.subf %162, %164 : vector<2x8x8xf32>
    %166 = vector.shape_cast %160 : vector<2x8xf32> to vector<2x8x1xf32>
    %167 = vector.broadcast %166 : vector<2x8x1xf32> to vector<2x8x8xf32>
    %168 = arith.subf %165, %167 : vector<2x8x8xf32>
    %cst_48 = arith.constant 5.000000e-01 : f32
    %169 = vector.broadcast %cst_48 : f32 to vector<2x8x8xf32>
    %170 = arith.mulf %168, %169 : vector<2x8x8xf32>
    %171 = math.exp %170 : vector<2x8x8xf32>
    %cst_49 = arith.constant dense<0.000000e+00> : vector<2x8xf32>
    %172 = vector.multi_reduction <add>, %171, %cst_49 [2] : vector<2x8x8xf32> to vector<2x8xf32>
    %173 = vector.shape_cast %172 : vector<2x8xf32> to vector<2x8x1xf32>
    %174 = arith.truncf %171 : vector<2x8x8xf32> to vector<2x8x8xbf16>
    "tpu.trace_start"() <{level = 10 : i32, message = "bts,bsd->btd"}> : () -> ()
    %cst_50 = arith.constant dense<0.000000e+00> : vector<2x8x4xf32>
    %175 = tpu.matmul %174, %156, %cst_50 {dimension_numbers = #tpu.dot_dimension_numbers<[2], [1], [1], [2], [0, 0, 0, 1, 1, 2], [0], [0]>} : vector<2x8x8xbf16>, vector<2x8x4xbf16>, vector<2x8x4xf32> -> vector<2x8x4xf32>
    "tpu.trace_stop"() : () -> ()
    %176 = tpu.reciprocal %173 {approx = true} : vector<2x8x1xf32> -> vector<2x8x1xf32>
    %177 = vector.broadcast %176 : vector<2x8x1xf32> to vector<2x8x4xf32>
    %178 = arith.mulf %175, %177 : vector<2x8x4xf32>
    %179 = vector.extract_strided_slice %10 {offsets = [0, 28], sizes = [16, 4], strides = [1, 1]} : vector<16x32xbf16> to vector<16x4xbf16>
    %180 = vector.shape_cast %179 : vector<16x4xbf16> to vector<2x8x4xbf16>
    "tpu.trace_start"() <{level = 10 : i32, message = "btd,bsd->bts"}> : () -> ()
    %cst_51 = arith.constant dense<0.000000e+00> : vector<2x8x8xf32>
    %181 = tpu.matmul %180, %180, %cst_51 {dimension_numbers = #tpu.dot_dimension_numbers<[2], [2], [1], [1], [0, 0, 0, 1, 1, 1], [0], [0]>} : vector<2x8x4xbf16>, vector<2x8x4xbf16>, vector<2x8x8xf32> -> vector<2x8x8xf32>
    "tpu.trace_stop"() : () -> ()
    %182 = arith.extf %180 : vector<2x8x4xbf16> to vector<2x8x4xf32>
    %183 = arith.mulf %182, %182 : vector<2x8x4xf32>
    %cst_52 = arith.constant dense<0.000000e+00> : vector<2x8xf32>
    %184 = vector.multi_reduction <add>, %183, %cst_52 [2] : vector<2x8x4xf32> to vector<2x8xf32>
    %cst_53 = arith.constant 2.000000e+00 : f32
    %185 = vector.broadcast %cst_53 : f32 to vector<2x8x8xf32>
    %186 = arith.mulf %185, %181 : vector<2x8x8xf32>
    %187 = vector.shape_cast %184 : vector<2x8xf32> to vector<2x1x8xf32>
    %188 = vector.broadcast %187 : vector<2x1x8xf32> to vector<2x8x8xf32>
    %189 = arith.subf %186, %188 : vector<2x8x8xf32>
    %190 = vector.shape_cast %184 : vector<2x8xf32> to vector<2x8x1xf32>
    %191 = vector.broadcast %190 : vector<2x8x1xf32> to vector<2x8x8xf32>
    %192 = arith.subf %189, %191 : vector<2x8x8xf32>
    %cst_54 = arith.constant 5.000000e-01 : f32
    %193 = vector.broadcast %cst_54 : f32 to vector<2x8x8xf32>
    %194 = arith.mulf %192, %193 : vector<2x8x8xf32>
    %195 = math.exp %194 : vector<2x8x8xf32>
    %cst_55 = arith.constant dense<0.000000e+00> : vector<2x8xf32>
    %196 = vector.multi_reduction <add>, %195, %cst_55 [2] : vector<2x8x8xf32> to vector<2x8xf32>
    %197 = vector.shape_cast %196 : vector<2x8xf32> to vector<2x8x1xf32>
    %198 = arith.truncf %195 : vector<2x8x8xf32> to vector<2x8x8xbf16>
    "tpu.trace_start"() <{level = 10 : i32, message = "bts,bsd->btd"}> : () -> ()
    %cst_56 = arith.constant dense<0.000000e+00> : vector<2x8x4xf32>
    %199 = tpu.matmul %198, %180, %cst_56 {dimension_numbers = #tpu.dot_dimension_numbers<[2], [1], [1], [2], [0, 0, 0, 1, 1, 2], [0], [0]>} : vector<2x8x8xbf16>, vector<2x8x4xbf16>, vector<2x8x4xf32> -> vector<2x8x4xf32>
    "tpu.trace_stop"() : () -> ()
    %200 = tpu.reciprocal %197 {approx = true} : vector<2x8x1xf32> -> vector<2x8x1xf32>
    %201 = vector.broadcast %200 : vector<2x8x1xf32> to vector<2x8x4xf32>
    %202 = arith.mulf %199, %201 : vector<2x8x4xf32>
    %203 = tpu.concatenate %34, %58, %82, %106, %130, %154, %178, %202 in 2 : vector<2x8x4xf32>, vector<2x8x4xf32>, vector<2x8x4xf32>, vector<2x8x4xf32>, vector<2x8x4xf32>, vector<2x8x4xf32>, vector<2x8x4xf32>, vector<2x8x4xf32> -> vector<2x8x32xf32>
    %204 = vector.shape_cast %203 : vector<2x8x32xf32> to vector<16x32xf32>
    %205 = arith.truncf %204 : vector<16x32xf32> to vector<16x32xbf16>
    %c0_57 = arith.constant 0 : index
    %c0_58 = arith.constant 0 : index
    %206 = vector.load %arg5[%c0_57, %c0_58] : memref<32x32xbf16, #tpu.memory_space<vmem>>, vector<32x32xbf16>
    %cst_59 = arith.constant dense<0.000000e+00> : vector<16x32xf32>
    %207 = tpu.matmul %205, %206, %cst_59 {dimension_numbers = #tpu.dot_dimension_numbers<[1], [0], [0], [1], [0, 0, 1, 1], [], []>} : vector<16x32xbf16>, vector<32x32xbf16>, vector<16x32xf32> -> vector<16x32xf32>
    %c0_60 = arith.constant 0 : index
    %c0_61 = arith.constant 0 : index
    %208 = vector.load %arg6[%c0_60, %c0_61] : memref<1x32xf32, #tpu.memory_space<vmem>>, vector<1x32xf32>
    %209 = vector.broadcast %208 : vector<1x32xf32> to vector<16x32xf32>
    %210 = arith.addf %207, %209 : vector<16x32xf32>
    %211 = arith.addf %210, %6 : vector<16x32xf32>
    %c0_62 = arith.constant 0 : index
    %c0_63 = arith.constant 0 : index
    %212 = vector.load %arg7[%c0_62, %c0_63] : memref<1x32xf32, #tpu.memory_space<vmem>>, vector<1x32xf32>
    %c0_64 = arith.constant 0 : index
    %c0_65 = arith.constant 0 : index
    %213 = vector.load %arg8[%c0_64, %c0_65] : memref<1x32xf32, #tpu.memory_space<vmem>>, vector<1x32xf32>
    %cst_66 = arith.constant dense<0.000000e+00> : vector<16xf32>
    %214 = vector.multi_reduction <add>, %211, %cst_66 [1] : vector<16x32xf32> to vector<16xf32>
    %215 = vector.shape_cast %214 : vector<16xf32> to vector<16x1xf32>
    %cst_67 = arith.constant 3.200000e+01 : f32
    %216 = vector.broadcast %cst_67 : f32 to vector<16x1xf32>
    %217 = arith.divf %215, %216 : vector<16x1xf32>
    %218 = vector.broadcast %217 : vector<16x1xf32> to vector<16x32xf32>
    %219 = arith.subf %211, %218 : vector<16x32xf32>
    %220 = arith.mulf %219, %219 : vector<16x32xf32>
    %cst_68 = arith.constant dense<0.000000e+00> : vector<16xf32>
    %221 = vector.multi_reduction <add>, %220, %cst_68 [1] : vector<16x32xf32> to vector<16xf32>
    %222 = vector.shape_cast %221 : vector<16xf32> to vector<16x1xf32>
    %cst_69 = arith.constant 3.200000e+01 : f32
    %223 = vector.broadcast %cst_69 : f32 to vector<16x1xf32>
    %224 = arith.divf %222, %223 : vector<16x1xf32>
    %225 = vector.broadcast %217 : vector<16x1xf32> to vector<16x32xf32>
    %226 = arith.subf %211, %225 : vector<16x32xf32>
    %cst_70 = arith.constant 9.99999974E-6 : f32
    %227 = vector.broadcast %cst_70 : f32 to vector<16x1xf32>
    %228 = arith.addf %224, %227 : vector<16x1xf32>
    %229 = math.rsqrt %228 : vector<16x1xf32>
    %230 = vector.broadcast %229 : vector<16x1xf32> to vector<16x32xf32>
    %231 = arith.mulf %226, %230 : vector<16x32xf32>
    %232 = vector.broadcast %212 : vector<1x32xf32> to vector<16x32xf32>
    %233 = arith.mulf %231, %232 : vector<16x32xf32>
    %234 = vector.broadcast %213 : vector<1x32xf32> to vector<16x32xf32>
    %235 = arith.addf %233, %234 : vector<16x32xf32>
    %cst_71 = arith.constant 5.000000e-01 : f32
    %236 = vector.broadcast %cst_71 : f32 to vector<16x32xf32>
    %237 = arith.mulf %236, %235 : vector<16x32xf32>
    %cst_72 = arith.constant 0.707106769 : f32
    %238 = vector.broadcast %cst_72 : f32 to vector<16x32xf32>
    %239 = arith.mulf %235, %238 : vector<16x32xf32>
    %240 = math.erf %239 : vector<16x32xf32>
    %cst_73 = arith.constant 1.000000e+00 : f32
    %241 = vector.broadcast %cst_73 : f32 to vector<16x32xf32>
    %242 = arith.addf %241, %240 : vector<16x32xf32>
    %243 = arith.mulf %237, %242 : vector<16x32xf32>
    %244 = arith.truncf %243 : vector<16x32xf32> to vector<16x32xbf16>
    %c0_74 = arith.constant 0 : index
    %c0_75 = arith.constant 0 : index
    %245 = vector.load %arg9[%c0_74, %c0_75] : memref<32x32xbf16, #tpu.memory_space<vmem>>, vector<32x32xbf16>
    %cst_76 = arith.constant dense<0.000000e+00> : vector<16x32xf32>
    %246 = tpu.matmul %244, %245, %cst_76 {dimension_numbers = #tpu.dot_dimension_numbers<[1], [0], [0], [1], [0, 0, 1, 1], [], []>} : vector<16x32xbf16>, vector<32x32xbf16>, vector<16x32xf32> -> vector<16x32xf32>
    %c0_77 = arith.constant 0 : index
    %c0_78 = arith.constant 0 : index
    %247 = vector.load %arg10[%c0_77, %c0_78] : memref<1x32xf32, #tpu.memory_space<vmem>>, vector<1x32xf32>
    %248 = vector.broadcast %247 : vector<1x32xf32> to vector<16x32xf32>
    %249 = arith.addf %246, %248 : vector<16x32xf32>
    %cst_79 = arith.constant 5.000000e-01 : f32
    %250 = vector.broadcast %cst_79 : f32 to vector<16x32xf32>
    %251 = arith.mulf %250, %249 : vector<16x32xf32>
    %cst_80 = arith.constant 0.707106769 : f32
    %252 = vector.broadcast %cst_80 : f32 to vector<16x32xf32>
    %253 = arith.mulf %249, %252 : vector<16x32xf32>
    %254 = math.erf %253 : vector<16x32xf32>
    %cst_81 = arith.constant 1.000000e+00 : f32
    %255 = vector.broadcast %cst_81 : f32 to vector<16x32xf32>
    %256 = arith.addf %255, %254 : vector<16x32xf32>
    %257 = arith.mulf %251, %256 : vector<16x32xf32>
    %258 = arith.truncf %257 : vector<16x32xf32> to vector<16x32xbf16>
    %c0_82 = arith.constant 0 : index
    %c0_83 = arith.constant 0 : index
    %259 = vector.load %arg11[%c0_82, %c0_83] : memref<32x32xbf16, #tpu.memory_space<vmem>>, vector<32x32xbf16>
    %cst_84 = arith.constant dense<0.000000e+00> : vector<16x32xf32>
    %260 = tpu.matmul %258, %259, %cst_84 {dimension_numbers = #tpu.dot_dimension_numbers<[1], [0], [0], [1], [0, 0, 1, 1], [], []>} : vector<16x32xbf16>, vector<32x32xbf16>, vector<16x32xf32> -> vector<16x32xf32>
    %c0_85 = arith.constant 0 : index
    %c0_86 = arith.constant 0 : index
    %261 = vector.load %arg12[%c0_85, %c0_86] : memref<1x32xf32, #tpu.memory_space<vmem>>, vector<1x32xf32>
    %262 = vector.broadcast %261 : vector<1x32xf32> to vector<16x32xf32>
    %263 = arith.addf %260, %262 : vector<16x32xf32>
    %264 = arith.addf %263, %235 : vector<16x32xf32>
    %c0_87 = arith.constant 0 : index
    %c0_88 = arith.constant 0 : index
    %265 = vector.load %arg13[%c0_87, %c0_88] : memref<1x32xf32, #tpu.memory_space<vmem>>, vector<1x32xf32>
    %c0_89 = arith.constant 0 : index
    %c0_90 = arith.constant 0 : index
    %266 = vector.load %arg14[%c0_89, %c0_90] : memref<1x32xf32, #tpu.memory_space<vmem>>, vector<1x32xf32>
    %cst_91 = arith.constant dense<0.000000e+00> : vector<16xf32>
    %267 = vector.multi_reduction <add>, %264, %cst_91 [1] : vector<16x32xf32> to vector<16xf32>
    %268 = vector.shape_cast %267 : vector<16xf32> to vector<16x1xf32>
    %cst_92 = arith.constant 3.200000e+01 : f32
    %269 = vector.broadcast %cst_92 : f32 to vector<16x1xf32>
    %270 = arith.divf %268, %269 : vector<16x1xf32>
    %271 = vector.broadcast %270 : vector<16x1xf32> to vector<16x32xf32>
    %272 = arith.subf %264, %271 : vector<16x32xf32>
    %273 = arith.mulf %272, %272 : vector<16x32xf32>
    %cst_93 = arith.constant dense<0.000000e+00> : vector<16xf32>
    %274 = vector.multi_reduction <add>, %273, %cst_93 [1] : vector<16x32xf32> to vector<16xf32>
    %275 = vector.shape_cast %274 : vector<16xf32> to vector<16x1xf32>
    %cst_94 = arith.constant 3.200000e+01 : f32
    %276 = vector.broadcast %cst_94 : f32 to vector<16x1xf32>
    %277 = arith.divf %275, %276 : vector<16x1xf32>
    %278 = vector.broadcast %270 : vector<16x1xf32> to vector<16x32xf32>
    %279 = arith.subf %264, %278 : vector<16x32xf32>
    %cst_95 = arith.constant 9.99999974E-6 : f32
    %280 = vector.broadcast %cst_95 : f32 to vector<16x1xf32>
    %281 = arith.addf %277, %280 : vector<16x1xf32>
    %282 = math.rsqrt %281 : vector<16x1xf32>
    %283 = vector.broadcast %282 : vector<16x1xf32> to vector<16x32xf32>
    %284 = arith.mulf %279, %283 : vector<16x32xf32>
    %285 = vector.broadcast %265 : vector<1x32xf32> to vector<16x32xf32>
    %286 = arith.mulf %284, %285 : vector<16x32xf32>
    %287 = vector.broadcast %266 : vector<1x32xf32> to vector<16x32xf32>
    %288 = arith.addf %286, %287 : vector<16x32xf32>
    %289 = vector.shape_cast %288 : vector<16x32xf32> to vector<2x8x32xf32>
    %c0_96 = arith.constant 0 : index
    %c0_97 = arith.constant 0 : index
    %c0_98 = arith.constant 0 : index
    %290 = vector.load %arg15[%c0_96, %c0_97, %c0_98] : memref<2x8x32xf32, #tpu.memory_space<vmem>>, vector<2x8x32xf32>
    tpu.vector_store %arg15[%c0_96, %c0_97, %c0_98], %289 {strides = array<i32>} : memref<2x8x32xf32, #tpu.memory_space<vmem>>, vector<2x8x32xf32>,
    return
  }
  func.func @transform_0(%arg0: i32) -> (i32, i32, i32) {
    %c0_i32 = arith.constant 0 : i32
    %c0_i32_0 = arith.constant 0 : i32
    %c0_i32_1 = arith.constant 0 : i32
    return %arg0, %c0_i32, %c0_i32_0 : i32, i32, i32
  }
  func.func @transform_1(%arg0: i32) -> (i32, i32) {
    %c0_i32 = arith.constant 0 : i32
    %c0_i32_0 = arith.constant 0 : i32
    %c0_i32_1 = arith.constant 0 : i32
    return %c0_i32, %c0_i32_0 : i32, i32
  }
  func.func @transform_2(%arg0: i32) -> (i32, i32) {
    %c0_i32 = arith.constant 0 : i32
    %c0_i32_0 = arith.constant 0 : i32
    %c0_i32_1 = arith.constant 0 : i32
    return %c0_i32, %c0_i32_0 : i32, i32
  }
  func.func @transform_3(%arg0: i32) -> (i32, i32) {
    %c0_i32 = arith.constant 0 : i32
    %c0_i32_0 = arith.constant 0 : i32
    %c0_i32_1 = arith.constant 0 : i32
    return %c0_i32, %c0_i32_0 : i32, i32
  }
  func.func @transform_4(%arg0: i32) -> (i32, i32) {
    %c0_i32 = arith.constant 0 : i32
    %c0_i32_0 = arith.constant 0 : i32
    %c0_i32_1 = arith.constant 0 : i32
    return %c0_i32, %c0_i32_0 : i32, i32
  }
  func.func @transform_5(%arg0: i32) -> (i32, i32) {
    %c0_i32 = arith.constant 0 : i32
    %c0_i32_0 = arith.constant 0 : i32
    %c0_i32_1 = arith.constant 0 : i32
    return %c0_i32, %c0_i32_0 : i32, i32
  }
  func.func @transform_6(%arg0: i32) -> (i32, i32) {
    %c0_i32 = arith.constant 0 : i32
    %c0_i32_0 = arith.constant 0 : i32
    %c0_i32_1 = arith.constant 0 : i32
    return %c0_i32, %c0_i32_0 : i32, i32
  }
  func.func @transform_7(%arg0: i32) -> (i32, i32) {
    %c0_i32 = arith.constant 0 : i32
    %c0_i32_0 = arith.constant 0 : i32
    %c0_i32_1 = arith.constant 0 : i32
    return %c0_i32, %c0_i32_0 : i32, i32
  }
  func.func @transform_8(%arg0: i32) -> (i32, i32) {
    %c0_i32 = arith.constant 0 : i32
    %c0_i32_0 = arith.constant 0 : i32
    %c0_i32_1 = arith.constant 0 : i32
    return %c0_i32, %c0_i32_0 : i32, i32
  }
  func.func @transform_9(%arg0: i32) -> (i32, i32) {
    %c0_i32 = arith.constant 0 : i32
    %c0_i32_0 = arith.constant 0 : i32
    %c0_i32_1 = arith.constant 0 : i32
    return %c0_i32, %c0_i32_0 : i32, i32
  }
  func.func @transform_10(%arg0: i32) -> (i32, i32) {
    %c0_i32 = arith.constant 0 : i32
    %c0_i32_0 = arith.constant 0 : i32
    %c0_i32_1 = arith.constant 0 : i32
    return %c0_i32, %c0_i32_0 : i32, i32
  }
  func.func @transform_11(%arg0: i32) -> (i32, i32) {
    %c0_i32 = arith.constant 0 : i32
    %c0_i32_0 = arith.constant 0 : i32
    %c0_i32_1 = arith.constant 0 : i32
    return %c0_i32, %c0_i32_0 : i32, i32
  }
  func.func @transform_12(%arg0: i32) -> (i32, i32) {
    %c0_i32 = arith.constant 0 : i32
    %c0_i32_0 = arith.constant 0 : i32
    %c0_i32_1 = arith.constant 0 : i32
    return %c0_i32, %c0_i32_0 : i32, i32
  }
  func.func @transform_13(%arg0: i32) -> (i32, i32) {
    %c0_i32 = arith.constant 0 : i32
    %c0_i32_0 = arith.constant 0 : i32
    %c0_i32_1 = arith.constant 0 : i32
    return %c0_i32, %c0_i32_0 : i32, i32
  }
  func.func @transform_14(%arg0: i32) -> (i32, i32, i32) {
    %c0_i32 = arith.constant 0 : i32
    %c0_i32_0 = arith.constant 0 : i32
    %c0_i32_1 = arith.constant 0 : i32
    return %arg0, %c0_i32, %c0_i32_0 : i32, i32, i32
  }
}

</mosaic_0001>

<llo_original>
// kernel: _forward_impl.1
$region0: #{_forward_impl.1}
  #allocation0 [shape = 'u32[]', space=smem, size = 0x4, offset = 0x4, fixed_abs, tag = 'smem constant byte address 0x4 - core index']
  #allocation1 [shape = 'u32[144,128]{1,0:T(1,128)}', space=vmem, size = 0x12000, scoped, tag = 'internal scratch']
  %s0 = inlined_call_operand.vmem [shape: bf16[2,8,16], index: 0, kind: input, shape index: {}]
  %s1 = inlined_call_operand.hbm [shape: bf16[16,32], index: 1, kind: input, shape index: {}]
  %s2 = inlined_call_operand.vmem [shape: f32[1,32], index: 2, kind: input, shape index: {}]
  %s3 = inlined_call_operand.vmem [shape: bf16[32,32], index: 3, kind: input, shape index: {}]
  %s4 = inlined_call_operand.vmem [shape: bf16[32,32], index: 4, kind: input, shape index: {}]
  %s5 = inlined_call_operand.hbm [shape: f32[1,32], index: 5, kind: input, shape index: {}]
  %s6 = inlined_call_operand.hbm [shape: f32[1,32], index: 6, kind: input, shape index: {}]
  %s7 = inlined_call_operand.hbm [shape: f32[1,32], index: 7, kind: input, shape index: {}]
  %s8 = inlined_call_operand.vmem [shape: bf16[32,32], index: 8, kind: input, shape index: {}]
  %s9 = inlined_call_operand.hbm [shape: f32[1,32], index: 9, kind: input, shape index: {}]
  %s10 = inlined_call_operand.vmem [shape: bf16[32,32], index: 10, kind: input, shape index: {}]
  %s11 = inlined_call_operand.hbm [shape: f32[1,32], index: 11, kind: input, shape index: {}]
  %s12 = inlined_call_operand.hbm [shape: f32[1,32], index: 12, kind: input, shape index: {}]
  %s13 = inlined_call_operand.hbm [shape: f32[1,32], index: 13, kind: input, shape index: {}]
  %s14 = inlined_call_operand.vmem [shape: f32[2,8,32], index: 14, kind: output, shape index: {}]
  %s15 = sld [smem:[#allocation0]]
  $region98: #{_forward_impl.1} parent=0
    _
  %s17 = ssub.s32 1, %s15
  %s18 = scalar_select 0, %s17, %s15
  $region1: #{_forward_impl.1} parent=0
    #allocation2 [shape = 'u8[4096]{0}', space=vmem, size = 0x1000, scoped, tag = 'input window, operand 1, single buffered']
    #allocation3 [shape = 's32[1]{0}', space=sflag, size = 0x4, scoped, tag = 'scoped memory for _forward_impl.1']
    #allocation4 [shape = 'u8[512]{0}', space=vmem, size = 0x400, scoped, tag = 'input window, operand 5, single buffered']
    #allocation5 [shape = 's32[1]{0}', space=sflag, size = 0x4, scoped, tag = 'scoped memory for _forward_impl.1']
    #allocation6 [shape = 'u8[512]{0}', space=vmem, size = 0x400, scoped, tag = 'input window, operand 6, single buffered']
    #allocation7 [shape = 'u8[512]{0}', space=vmem, size = 0x400, scoped, tag = 'input window, operand 7, single buffered']
    #allocation8 [shape = 's32[1]{0}', space=sflag, size = 0x4, scoped, tag = 'scoped memory for _forward_impl.1']
    #allocation9 [shape = 'u8[512]{0}', space=vmem, size = 0x400, scoped, tag = 'input window, operand 9, single buffered']
    #allocation10 [shape = 'u8[512]{0}', space=vmem, size = 0x400, scoped, tag = 'input window, operand 11, single buffered']
    #allocation11 [shape = 's32[1]{0}', space=sflag, size = 0x4, scoped, tag = 'scoped memory for _forward_impl.1']
    #allocation12 [shape = 'u8[512]{0}', space=vmem, size = 0x400, scoped, tag = 'input window, operand 12, single buffered']
    #allocation13 [shape = 'u8[512]{0}', space=vmem, size = 0x400, scoped, tag = 'input window, operand 13, single buffered']
    #allocation14 [shape = 's32[1]{0}', space=sflag, size = 0x4, scoped, tag = 'scoped memory for _forward_impl.1']
    %19 = vsyncpa [#allocation3], 0
    %20 = vsyncpa [#allocation5], 0
    %21 = vsyncpa [#allocation8], 0
    %22 = vsyncpa [#allocation11], 0
    %23 = vsyncpa [#allocation14], 0
    // Predicated region
    $region2: #{_forward_impl.1} parent=1 // pred_check
      _
    $region3: #{_forward_impl.1} parent=1 // pred_check_branch
      %25 = sbr.rel (0) target = $region5
    $region4: #{_forward_impl.1} parent=1 // pred_region
      _
    $region5: #{_forward_impl.1} parent=1 // pred_fallthru
      _
    // Predicated region
    $region6: #{_forward_impl.1} parent=1 // pred_check
      _
    $region7: #{_forward_impl.1} parent=1 // pred_check_branch
      %27 = sbr.rel (0) target = $region9
    $region8: #{_forward_impl.1} parent=1 // pred_region
      %s29 = ssub.s32 128, 128
      %30 = vsyncadd [#allocation3], %s29
      %s31 = sshll.u32 [#allocation2], 4
      %s32 = int_to_ptr.vmem [resolvable:$true] %s31
      %37 = dma.hbm_to_vmem [thread:$0]  %s1, 128, %s32, [#allocation3], 64, 64, 4
    $region9: #{_forward_impl.1} parent=1 // pred_fallthru
      _
    // Predicated region
    $region10: #{_forward_impl.1} parent=1 // pred_check
      _
    $region11: #{_forward_impl.1} parent=1 // pred_check_branch
      %39 = sbr.rel (0) target = $region13
    $region12: #{_forward_impl.1} parent=1 // pred_region
      _
    $region13: #{_forward_impl.1} parent=1 // pred_fallthru
      _
    // Predicated region
    $region14: #{_forward_impl.1} parent=1 // pred_check
      _
    $region15: #{_forward_impl.1} parent=1 // pred_check_branch
      %41 = sbr.rel (0) target = $region17
    $region16: #{_forward_impl.1} parent=1 // pred_region
      _
    $region17: #{_forward_impl.1} parent=1 // pred_fallthru
      _
    // Predicated region
    $region18: #{_forward_impl.1} parent=1 // pred_check
      _
    $region19: #{_forward_impl.1} parent=1 // pred_check_branch
      %43 = sbr.rel (0) target = $region21
    $region20: #{_forward_impl.1} parent=1 // pred_region
      _
    $region21: #{_forward_impl.1} parent=1 // pred_fallthru
      _
    // Predicated region
    $region22: #{_forward_impl.1} parent=1 // pred_check
      _
    $region23: #{_forward_impl.1} parent=1 // pred_check_branch
      %45 = sbr.rel (0) target = $region25
    $region24: #{_forward_impl.1} parent=1 // pred_region
      %s47 = ssub.s32 16, 16
      %48 = vsyncadd [#allocation5], %s47
      %s50 = sshll.u32 [#allocation4], 4
      %s51 = int_to_ptr.vmem [resolvable:$true] %s50
      %53 = dma.hbm_to_vmem [thread:$0]  %s5, 16, %s51, [#allocation5]
    $region25: #{_forward_impl.1} parent=1 // pred_fallthru
      _
    // Predicated region
    $region26: #{_forward_impl.1} parent=1 // pred_check
      _
    $region27: #{_forward_impl.1} parent=1 // pred_check_branch
      %55 = sbr.rel (0) target = $region29
    $region28: #{_forward_impl.1} parent=1 // pred_region
      %s57 = ssub.s32 16, 16
      %58 = vsyncadd [#allocation5], %s57
      %s60 = sshll.u32 [#allocation6], 4
      %s61 = int_to_ptr.vmem [resolvable:$true] %s60
      %63 = dma.hbm_to_vmem [thread:$0]  %s6, 16, %s61, [#allocation5]
    $region29: #{_forward_impl.1} parent=1 // pred_fallthru
      _
    // Predicated region
    $region30: #{_forward_impl.1} parent=1 // pred_check
      _
    $region31: #{_forward_impl.1} parent=1 // pred_check_branch
      %65 = sbr.rel (0) target = $region33
    $region32: #{_forward_impl.1} parent=1 // pred_region
      %s67 = ssub.s32 16, 16
      %68 = vsyncadd [#allocation8], %s67
      %s70 = sshll.u32 [#allocation7], 4
      %s71 = int_to_ptr.vmem [resolvable:$true] %s70
      %73 = dma.hbm_to_vmem [thread:$0]  %s7, 16, %s71, [#allocation8]
    $region33: #{_forward_impl.1} parent=1 // pred_fallthru
      _
    // Predicated region
    $region34: #{_forward_impl.1} parent=1 // pred_check
      _
    $region35: #{_forward_impl.1} parent=1 // pred_check_branch
      %75 = sbr.rel (0) target = $region37
    $region36: #{_forward_impl.1} parent=1 // pred_region
      _
    $region37: #{_forward_impl.1} parent=1 // pred_fallthru
      _
    // Predicated region
    $region38: #{_forward_impl.1} parent=1 // pred_check
      _
    $region39: #{_forward_impl.1} parent=1 // pred_check_branch
      %77 = sbr.rel (0) target = $region41
    $region40: #{_forward_impl.1} parent=1 // pred_region
      %s79 = ssub.s32 16, 16
      %80 = vsyncadd [#allocation8], %s79
      %s82 = sshll.u32 [#allocation9], 4
      %s83 = int_to_ptr.vmem [resolvable:$true] %s82
      %85 = dma.hbm_to_vmem [thread:$0]  %s9, 16, %s83, [#allocation8]
    $region41: #{_forward_impl.1} parent=1 // pred_fallthru
      _
    // Predicated region
    $region42: #{_forward_impl.1} parent=1 // pred_check
      _
    $region43: #{_forward_impl.1} parent=1 // pred_check_branch
      %87 = sbr.rel (0) target = $region45
    $region44: #{_forward_impl.1} parent=1 // pred_region
      _
    $region45: #{_forward_impl.1} parent=1 // pred_fallthru
      _
    // Predicated region
    $region46: #{_forward_impl.1} parent=1 // pred_check
      _
    $region47: #{_forward_impl.1} parent=1 // pred_check_branch
      %89 = sbr.rel (0) target = $region49
    $region48: #{_forward_impl.1} parent=1 // pred_region
      %s91 = ssub.s32 16, 16
      %92 = vsyncadd [#allocation11], %s91
      %s94 = sshll.u32 [#allocation10], 4
      %s95 = int_to_ptr.vmem [resolvable:$true] %s94
      %97 = dma.hbm_to_vmem [thread:$0]  %s11, 16, %s95, [#allocation11]
    $region49: #{_forward_impl.1} parent=1 // pred_fallthru
      _
    // Predicated region
    $region50: #{_forward_impl.1} parent=1 // pred_check
      _
    $region51: #{_forward_impl.1} parent=1 // pred_check_branch
      %99 = sbr.rel (0) target = $region53
    $region52: #{_forward_impl.1} parent=1 // pred_region
      %s101 = ssub.s32 16, 16
      %102 = vsyncadd [#allocation11], %s101
      %s104 = sshll.u32 [#allocation12], 4
      %s105 = int_to_ptr.vmem [resolvable:$true] %s104
      %107 = dma.hbm_to_vmem [thread:$0]  %s12, 16, %s105, [#allocation11]
    $region53: #{_forward_impl.1} parent=1 // pred_fallthru
      _
    // Predicated region
    $region54: #{_forward_impl.1} parent=1 // pred_check
      _
    $region55: #{_forward_impl.1} parent=1 // pred_check_branch
      %109 = sbr.rel (0) target = $region57
    $region56: #{_forward_impl.1} parent=1 // pred_region
      %s111 = ssub.s32 16, 16
      %112 = vsyncadd [#allocation14], %s111
      %s114 = sshll.u32 [#allocation13], 4
      %s115 = int_to_ptr.vmem [resolvable:$true] %s114
      %117 = dma.hbm_to_vmem [thread:$0]  %s13, 16, %s115, [#allocation14]
    $region57: #{_forward_impl.1} parent=1 // pred_fallthru
      _
    // Predicated region
    $region58: #{_forward_impl.1} parent=1 // pred_check
      _
    $region59: #{_forward_impl.1} parent=1 // pred_check_branch
      %119 = sbr.rel (0) target = $region61
    $region60: #{_forward_impl.1} parent=1 // pred_region
      %120 = dma.done [#allocation3], 128
    $region61: #{_forward_impl.1} parent=1 // pred_fallthru
      _
    // Predicated region
    $region62: #{_forward_impl.1} parent=1 // pred_check
      _
    $region63: #{_forward_impl.1} parent=1 // pred_check_branch
      %122 = sbr.rel (0) target = $region65
    $region64: #{_forward_impl.1} parent=1 // pred_region
      %123 = dma.done [#allocation5], 16
    $region65: #{_forward_impl.1} parent=1 // pred_fallthru
      _
    // Predicated region
    $region66: #{_forward_impl.1} parent=1 // pred_check
      _
    $region67: #{_forward_impl.1} parent=1 // pred_check_branch
      %125 = sbr.rel (0) target = $region69
    $region68: #{_forward_impl.1} parent=1 // pred_region
      %126 = dma.done [#allocation5], 16
    $region69: #{_forward_impl.1} parent=1 // pred_fallthru
      _
    // Predicated region
    $region70: #{_forward_impl.1} parent=1 // pred_check
      _
    $region71: #{_forward_impl.1} parent=1 // pred_check_branch
      %128 = sbr.rel (0) target = $region73
    $region72: #{_forward_impl.1} parent=1 // pred_region
      %129 = dma.done [#allocation8], 16
    $region73: #{_forward_impl.1} parent=1 // pred_fallthru
      _
    // Predicated region
    $region74: #{_forward_impl.1} parent=1 // pred_check
      _
    $region75: #{_forward_impl.1} parent=1 // pred_check_branch
      %131 = sbr.rel (0) target = $region77
    $region76: #{_forward_impl.1} parent=1 // pred_region
      %132 = dma.done [#allocation8], 16
    $region77: #{_forward_impl.1} parent=1 // pred_fallthru
      _
    // Predicated region
    $region78: #{_forward_impl.1} parent=1 // pred_check
      _
    $region79: #{_forward_impl.1} parent=1 // pred_check_branch
      %134 = sbr.rel (0) target = $region81
    $region80: #{_forward_impl.1} parent=1 // pred_region
      %135 = dma.done [#allocation11], 16
    $region81: #{_forward_impl.1} parent=1 // pred_fallthru
      _
    // Predicated region
    $region82: #{_forward_impl.1} parent=1 // pred_check
      _
    $region83: #{_forward_impl.1} parent=1 // pred_check_branch
      %137 = sbr.rel (0) target = $region85
    $region84: #{_forward_impl.1} parent=1 // pred_region
      %138 = dma.done [#allocation11], 16
    $region85: #{_forward_impl.1} parent=1 // pred_fallthru
      _
    // Predicated region
    $region86: #{_forward_impl.1} parent=1 // pred_check
      _
    $region87: #{_forward_impl.1} parent=1 // pred_check_branch
      %140 = sbr.rel (0) target = $region89
    $region88: #{_forward_impl.1} parent=1 // pred_region
      %141 = dma.done [#allocation14], 16
    $region89: #{_forward_impl.1} parent=1 // pred_fallthru
      _
    %v143 = vld [vmem:[%s0] sm:$0xf]
    %v144 = vld [vmem:[%s0 + $0x4] sm:$0xf]
    %v145 = vld [vmem:[#allocation2] sm:$0xf]
    %v146 = vld [vmem:[#allocation2 + $0x4] sm:$0xf]
    %v147 = vld [vmem:[%s2] sm:$0x1]
    %v149 = vlaneseq
    %v150 = vshrl.u32 %v149, 7
    %v151 = vsub.s32 0, %v150
    %v152 = vrot.slane %v147, %v151
    %v156 = vunpack.c.l.b16 %v143
    %v157 = vunpack.c.l.b16 %v144
    %v158 = vpack.c.b16 %v157, %v156
    %v161 = vunpack.c.l.b16 %v145
    %v162 = vunpack.c.l.b16 %v146
    %v163 = vpack.c.b16 %v162, %v161
    %vm165 = vcmask 130048
    %v167 = vsel %vm165, %v158, 0
    %169 = vmatprep.subr.bf16.mxu0 0
    %170 = vmatpush1.bf16.msra.mxu0 %v163
    %171 = vmatprep.subr.bf16.mxu0 0
    %172 = vmatpush1.bf16.msra.mxu0 0
    %173 = vmatprep.subr.bf16.mxu0 0
    %174 = vmatpush1.bf16.msra.mxu0 0
    %175 = vmatprep.subr.bf16.mxu0 0
    %176 = vmatpush1.bf16.msra.mxu0 0
    %177 = vmatprep.subr.bf16.mxu0 0
    %178 = vmatpush1.bf16.msra.mxu0 0
    %179 = vmatprep.subr.bf16.mxu0 0
    %180 = vmatpush1.bf16.msra.mxu0 0
    %181 = vmatprep.subr.bf16.mxu0 0
    %182 = vmatpush1.bf16.msra.mxu0 0
    %183 = vmatprep.subr.bf16.mxu0 0
    %184 = vmatpush1.bf16.msra.mxu0 0
    %185 = vmatprep.subr.bf16.mxu0 0
    %186 = vmatpush1.bf16.msra.mxu0 0
    %187 = vmatprep.subr.bf16.mxu0 0
    %188 = vmatpush1.bf16.msra.mxu0 0
    %189 = vmatprep.subr.bf16.mxu0 0
    %190 = vmatpush1.bf16.msra.mxu0 0
    %191 = vmatprep.subr.bf16.mxu0 0
    %192 = vmatpush1.bf16.msra.mxu0 0
    %193 = vmatprep.subr.bf16.mxu0 0
    %194 = vmatpush1.bf16.msra.mxu0 0
    %195 = vmatprep.subr.bf16.mxu0 0
    %196 = vmatpush1.bf16.msra.mxu0 0
    %197 = vmatprep.subr.bf16.mxu0 0
    %198 = vmatpush1.bf16.msra.mxu0 0
    %199 = vmatprep.subr.bf16.mxu0 0
    %200 = vmatpush1.bf16.msra.mxu0 0
    %201 = vmatprep.mubr.bf16.mxu0 0
    %202 = vmatmul.mubr.bf16.gmra.mrb[0].mxu0 %v167
    %v203 = vpop.f32.mrb[0].mxu0
    %v204 = vadd.f32 %v152, %v203
    %v205 = vpop.f32.mrb[0].mxu0
    %v206 = vpop.f32.mrb[0].mxu0
    %v207 = vadd.f32 %v152, %v206
    %v208 = vpop.f32.mrb[0].mxu0
    %209 = vdwg.mxu0
    %v210 = vpack.c.bf16 %v207, %v204
    %v211 = vld [vmem:[%s3] sm:$0xf]
    %v212 = vld [vmem:[%s3 + $0x4] sm:$0xf]
    %v213 = vld [vmem:[%s3 + $0x8] sm:$0xf]
    %v214 = vld [vmem:[%s3 + $0xc] sm:$0xf]
    %v219 = vunpack.c.l.b16 %v211
    %v220 = vunpack.c.l.b16 %v212
    %v221 = vunpack.c.l.b16 %v213
    %v222 = vunpack.c.l.b16 %v214
    %v223 = vpack.c.b16 %v220, %v219
    %v224 = vpack.c.b16 %v222, %v221
    %vm227 = vcmask 261120
    %v229 = vsel %vm227, %v210, 0
    %231 = vmatprep.subr.bf16.mxu0 0
    %232 = vmatpush1.bf16.msra.mxu0 %v223
    %233 = vmatprep.subr.bf16.mxu0 0
    %234 = vmatpush1.bf16.msra.mxu0 %v224
    %235 = vmatprep.subr.bf16.mxu0 0
    %236 = vmatpush1.bf16.msra.mxu0 0
    %237 = vmatprep.subr.bf16.mxu0 0
    %238 = vmatpush1.bf16.msra.mxu0 0
    %239 = vmatprep.subr.bf16.mxu0 0
    %240 = vmatpush1.bf16.msra.mxu0 0
    %241 = vmatprep.subr.bf16.mxu0 0
    %242 = vmatpush1.bf16.msra.mxu0 0
    %243 = vmatprep.subr.bf16.mxu0 0
    %244 = vmatpush1.bf16.msra.mxu0 0
    %245 = vmatprep.subr.bf16.mxu0 0
    %246 = vmatpush1.bf16.msra.mxu0 0
    %247 = vmatprep.subr.bf16.mxu0 0
    %248 = vmatpush1.bf16.msra.mxu0 0
    %249 = vmatprep.subr.bf16.mxu0 0
    %250 = vmatpush1.bf16.msra.mxu0 0
    %251 = vmatprep.subr.bf16.mxu0 0
    %252 = vmatpush1.bf16.msra.mxu0 0
    %253 = vmatprep.subr.bf16.mxu0 0
    %254 = vmatpush1.bf16.msra.mxu0 0
    %255 = vmatprep.subr.bf16.mxu0 0
    %256 = vmatpush1.bf16.msra.mxu0 0
    %257 = vmatprep.subr.bf16.mxu0 0
    %258 = vmatpush1.bf16.msra.mxu0 0
    %259 = vmatprep.subr.bf16.mxu0 0
    %260 = vmatpush1.bf16.msra.mxu0 0
    %261 = vmatprep.subr.bf16.mxu0 0
    %262 = vmatpush1.bf16.msra.mxu0 0
    %263 = vmatprep.mubr.bf16.mxu0 0
    %264 = vmatmul.mubr.bf16.gmra.mrb[0].mxu0 %v229
    %v265 = vpop.f32.mrb[0].mxu0
    %v266 = vadd.f32 0.0, %v265
    %v267 = vpop.f32.mrb[0].mxu0
    %v268 = vpop.f32.mrb[0].mxu0
    %v269 = vadd.f32 0.0, %v268
    %v270 = vpop.f32.mrb[0].mxu0
    %271 = vdwg.mxu0
    %v272 = vpack.c.bf16 %v269, %v266
    %v274 = vunpack.c.l.b16 %v272
    %v275 = vunpack.c.h.b16 %v272
    %v276 = vpack.c.b16 %v274, %v274
    %v277 = vpack.c.b16 %v275, %v275
    %vm280 = vcmask 31744
    %v282 = vsel %vm280, %v276, 0
    %284 = vmatprep.subr.bf16.mxu0 0
    %285 = vmatpush1.bf16.xpose.msra.mxu0 %v282
    %286 = vmatprep.subr.bf16.mxu0 0
    %287 = vmatpush1.bf16.xpose.msra.mxu0 0
    %288 = vmatprep.subr.bf16.mxu0 0
    %289 = vmatpush1.bf16.xpose.msra.mxu0 0
    %290 = vmatprep.subr.bf16.mxu0 0
    %291 = vmatpush1.bf16.xpose.msra.mxu0 0
    %292 = vmatprep.subr.bf16.mxu0 0
    %293 = vmatpush1.bf16.xpose.msra.mxu0 0
    %294 = vmatprep.subr.bf16.mxu0 0
    %295 = vmatpush1.bf16.xpose.msra.mxu0 0
    %296 = vmatprep.subr.bf16.mxu0 0
    %297 = vmatpush1.bf16.xpose.msra.mxu0 0
    %298 = vmatprep.subr.bf16.mxu0 0
    %299 = vmatpush1.bf16.xpose.msra.mxu0 0
    %300 = vmatprep.subr.bf16.mxu0 0
    %301 = vmatpush1.bf16.xpose.msra.mxu0 0
    %302 = vmatprep.subr.bf16.mxu0 0
    %303 = vmatpush1.bf16.xpose.msra.mxu0 0
    %304 = vmatprep.subr.bf16.mxu0 0
    %305 = vmatpush1.bf16.xpose.msra.mxu0 0
    %306 = vmatprep.subr.bf16.mxu0 0
    %307 = vmatpush1.bf16.xpose.msra.mxu0 0
    %308 = vmatprep.subr.bf16.mxu0 0
    %309 = vmatpush1.bf16.xpose.msra.mxu0 0
    %310 = vmatprep.subr.bf16.mxu0 0
    %311 = vmatpush1.bf16.xpose.msra.mxu0 0
    %312 = vmatprep.subr.bf16.mxu0 0
    %313 = vmatpush1.bf16.xpose.msra.mxu0 0
    %314 = vmatprep.subr.bf16.mxu0 0
    %315 = vmatpush1.bf16.xpose.msra.mxu0 0
    %316 = vmatprep.mubr.bf16.mxu0 0
    %317 = vmatmul.mubr.bf16.gmra.mrb[0].mxu0 %v282
    %v318 = vpop.f32.mrb[0].mxu0
    %v319 = vadd.f32 0.0, %v318
    %v320 = vpop.f32.mrb[0].mxu0
    %v321 = vpop.f32.mrb[0].mxu0
    %v322 = vpop.f32.mrb[0].mxu0
    %323 = vdwg.mxu0
    %v325 = vsel %vm280, %v277, 0
    %327 = vmatprep.subr.bf16.mxu0 0
    %328 = vmatpush1.bf16.xpose.msra.mxu0 %v325
    %329 = vmatprep.subr.bf16.mxu0 0
    %330 = vmatpush1.bf16.xpose.msra.mxu0 0
    %331 = vmatprep.subr.bf16.mxu0 0
    %332 = vmatpush1.bf16.xpose.msra.mxu0 0
    %333 = vmatprep.subr.bf16.mxu0 0
    %334 = vmatpush1.bf16.xpose.msra.mxu0 0
    %335 = vmatprep.subr.bf16.mxu0 0
    %336 = vmatpush1.bf16.xpose.msra.mxu0 0
    %337 = vmatprep.subr.bf16.mxu0 0
    %338 = vmatpush1.bf16.xpose.msra.mxu0 0
    %339 = vmatprep.subr.bf16.mxu0 0
    %340 = vmatpush1.bf16.xpose.msra.mxu0 0
    %341 = vmatprep.subr.bf16.mxu0 0
    %342 = vmatpush1.bf16.xpose.msra.mxu0 0
    %343 = vmatprep.subr.bf16.mxu0 0
    %344 = vmatpush1.bf16.xpose.msra.mxu0 0
    %345 = vmatprep.subr.bf16.mxu0 0
    %346 = vmatpush1.bf16.xpose.msra.mxu0 0
    %347 = vmatprep.subr.bf16.mxu0 0
    %348 = vmatpush1.bf16.xpose.msra.mxu0 0
    %349 = vmatprep.subr.bf16.mxu0 0
    %350 = vmatpush1.bf16.xpose.msra.mxu0 0
    %351 = vmatprep.subr.bf16.mxu0 0
    %352 = vmatpush1.bf16.xpose.msra.mxu0 0
    %353 = vmatprep.subr.bf16.mxu0 0
    %354 = vmatpush1.bf16.xpose.msra.mxu0 0
    %355 = vmatprep.subr.bf16.mxu0 0
    %356 = vmatpush1.bf16.xpose.msra.mxu0 0
    %357 = vmatprep.subr.bf16.mxu0 0
    %358 = vmatpush1.bf16.xpose.msra.mxu0 0
    %359 = vmatprep.mubr.bf16.mxu0 0
    %360 = vmatmul.mubr.bf16.gmra.mrb[0].mxu0 %v325
    %v361 = vpop.f32.mrb[0].mxu0
    %v362 = vadd.f32 0.0, %v361
    %v363 = vpop.f32.mrb[0].mxu0
    %v364 = vpop.f32.mrb[0].mxu0
    %v365 = vpop.f32.mrb[0].mxu0
    %366 = vdwg.mxu0
    %v367 = vunpack.c.l.bf16 %v276
    %v368 = vunpack.c.l.bf16 %v277
    %v369 = vmul.f32 %v367, %v367
    %v370 = vmul.f32 %v368, %v368
    %v371 = vsel %vm280, %v369, 0.0
    %372 = vadd.xlane.f32.xlu0 %v371
    %v373 = vpop.xlane.xlu0 %372
    %v374 = vsel %vm280, %v370, 0.0
    %375 = vadd.xlane.f32.xlu0 %v374
    %v376 = vpop.xlane.xlu0 %375
    %v377 = vmul.f32 %v319, 2.0
    %v378 = vmul.f32 %v362, 2.0
    %v381 = vlaneseq
    %v382 = vand.u32 %v381, 127
    %v383 = vlaneseq
    %v384 = vshrl.u32 %v383, 7
    %v385 = vsub.s32 %v382, %v384
    %v386 = vrot.slane %v373, %v385
    %v387 = vlaneseq
    %v388 = vshrl.u32 %v387, 7
    %v389 = vsub.s32 %v382, %v388
    %v390 = vrot.slane %v376, %v389
    %vm391 = vcmask 1042434
    %v392 = vsel %vm391, %v386, %v386
    %vm393 = vcmask 1043459
    %v394 = vsel %vm393, %v386, %v392
    %vm395 = vcmask 1044484
    %v396 = vsel %vm395, %v386, %v394
    %vm397 = vcmask 1045509
    %v398 = vsel %vm397, %v386, %v396
    %vm399 = vcmask 1046534
    %v400 = vsel %vm399, %v386, %v398
    %vm401 = vcmask 1047559
    %v402 = vsel %vm401, %v386, %v400
    %v403 = vsel %vm391, %v390, %v390
    %v404 = vsel %vm393, %v390, %v403
    %v405 = vsel %vm395, %v390, %v404
    %v406 = vsel %vm397, %v390, %v405
    %v407 = vsel %vm399, %v390, %v406
    %v408 = vsel %vm401, %v390, %v407
    %v411 = vsub.f32 %v377, %v402
    %v412 = vsub.f32 %v378, %v408
    %v413 = vsub.f32 %v411, %v373
    %v414 = vsub.f32 %v412, %v376
    %v415 = vmul.f32 %v413, 0.5
    %v416 = vmul.f32 %v414, 0.5
    %v417 = vmul.f32 %v415, 1.442695
    %v418 = vpow.pop %v417
    %v419 = vmul.f32 %v416, 1.442695
    %v420 = vpow.pop %v419
    %vm421 = vcmask 64512
    %v422 = vsel %vm421, %v418, 0.0
    %423 = vadd.xlane.f32.xlu0 %v422
    %v424 = vpop.xlane.xlu0 %423
    %v425 = vsel %vm421, %v420, 0.0
    %426 = vadd.xlane.f32.xlu0 %v425
    %v427 = vpop.xlane.xlu0 %426
    %v428 = vpack.c.bf16 %v418, %v418
    %v429 = vpack.c.bf16 %v420, %v420
    %v431 = vsel %vm421, %v428, 0
    %vm433 = vcmask 1043456
    %v434 = vsel %vm433, %v276, 0
    %436 = vmatprep.subr.bf16.mxu0 0
    %437 = vmatpush1.bf16.msra.mxu0 %v434
    %438 = vmatprep.subr.bf16.mxu0 0
    %439 = vmatpush1.bf16.msra.mxu0 0
    %440 = vmatprep.subr.bf16.mxu0 0
    %441 = vmatpush1.bf16.msra.mxu0 0
    %442 = vmatprep.subr.bf16.mxu0 0
    %443 = vmatpush1.bf16.msra.mxu0 0
    %444 = vmatprep.subr.bf16.mxu0 0
    %445 = vmatpush1.bf16.msra.mxu0 0
    %446 = vmatprep.subr.bf16.mxu0 0
    %447 = vmatpush1.bf16.msra.mxu0 0
    %448 = vmatprep.subr.bf16.mxu0 0
    %449 = vmatpush1.bf16.msra.mxu0 0
    %450 = vmatprep.subr.bf16.mxu0 0
    %451 = vmatpush1.bf16.msra.mxu0 0
    %452 = vmatprep.subr.bf16.mxu0 0
    %453 = vmatpush1.bf16.msra.mxu0 0
    %454 = vmatprep.subr.bf16.mxu0 0
    %455 = vmatpush1.bf16.msra.mxu0 0
    %456 = vmatprep.subr.bf16.mxu0 0
    %457 = vmatpush1.bf16.msra.mxu0 0
    %458 = vmatprep.subr.bf16.mxu0 0
    %459 = vmatpush1.bf16.msra.mxu0 0
    %460 = vmatprep.subr.bf16.mxu0 0
    %461 = vmatpush1.bf16.msra.mxu0 0
    %462 = vmatprep.subr.bf16.mxu0 0
    %463 = vmatpush1.bf16.msra.mxu0 0
    %464 = vmatprep.subr.bf16.mxu0 0
    %465 = vmatpush1.bf16.msra.mxu0 0
    %466 = vmatprep.subr.bf16.mxu0 0
    %467 = vmatpush1.bf16.msra.mxu0 0
    %468 = vmatprep.mubr.bf16.mxu0 0
    %469 = vmatmul.mubr.bf16.gmra.mrb[0].mxu0 %v431
    %v470 = vpop.f32.mrb[0].mxu0
    %v471 = vadd.f32 0.0, %v470
    %v472 = vpop.f32.mrb[0].mxu0
    %v473 = vpop.f32.mrb[0].mxu0
    %v474 = vpop.f32.mrb[0].mxu0
    %475 = vdwg.mxu0
    %v477 = vsel %vm421, %v429, 0
    %v479 = vsel %vm433, %v277, 0
    %481 = vmatprep.subr.bf16.mxu0 0
    %482 = vmatpush1.bf16.msra.mxu0 %v479
    %483 = vmatprep.subr.bf16.mxu0 0
    %484 = vmatpush1.bf16.msra.mxu0 0
    %485 = vmatprep.subr.bf16.mxu0 0
    %486 = vmatpush1.bf16.msra.mxu0 0
    %487 = vmatprep.subr.bf16.mxu0 0
    %488 = vmatpush1.bf16.msra.mxu0 0
    %489 = vmatprep.subr.bf16.mxu0 0
    %490 = vmatpush1.bf16.msra.mxu0 0
    %491 = vmatprep.subr.bf16.mxu0 0
    %492 = vmatpush1.bf16.msra.mxu0 0
    %493 = vmatprep.subr.bf16.mxu0 0
    %494 = vmatpush1.bf16.msra.mxu0 0
    %495 = vmatprep.subr.bf16.mxu0 0
    %496 = vmatpush1.bf16.msra.mxu0 0
    %497 = vmatprep.subr.bf16.mxu0 0
    %498 = vmatpush1.bf16.msra.mxu0 0
    %499 = vmatprep.subr.bf16.mxu0 0
    %500 = vmatpush1.bf16.msra.mxu0 0
    %501 = vmatprep.subr.bf16.mxu0 0
    %502 = vmatpush1.bf16.msra.mxu0 0
    %503 = vmatprep.subr.bf16.mxu0 0
    %504 = vmatpush1.bf16.msra.mxu0 0
    %505 = vmatprep.subr.bf16.mxu0 0
    %506 = vmatpush1.bf16.msra.mxu0 0
    %507 = vmatprep.subr.bf16.mxu0 0
    %508 = vmatpush1.bf16.msra.mxu0 0
    %509 = vmatprep.subr.bf16.mxu0 0
    %510 = vmatpush1.bf16.msra.mxu0 0
    %511 = vmatprep.subr.bf16.mxu0 0
    %512 = vmatpush1.bf16.msra.mxu0 0
    %513 = vmatprep.mubr.bf16.mxu0 0
    %514 = vmatmul.mubr.bf16.gmra.mrb[0].mxu0 %v477
    %v515 = vpop.f32.mrb[0].mxu0
    %v516 = vadd.f32 0.0, %v515
    %v517 = vpop.f32.mrb[0].mxu0
    %v518 = vpop.f32.mrb[0].mxu0
    %v519 = vpop.f32.mrb[0].mxu0
    %520 = vdwg.mxu0
    %v521 = vrcp.pop %v424
    %v522 = vrcp.pop %v427
    %v523 = vmul.f32 %v471, %v521
    %v524 = vmul.f32 %v516, %v522
    %525 = vrot.lane.b32.xlu0 %v276, 124
    %v526 = vpop.permute.xlu0 %525
    %v528 = vsel %vm280, %v526, 0
    %530 = vmatprep.subr.bf16.mxu0 0
    %531 = vmatpush1.bf16.xpose.msra.mxu0 %v528
    %532 = vmatprep.subr.bf16.mxu0 0
    %533 = vmatpush1.bf16.xpose.msra.mxu0 0
    %534 = vmatprep.subr.bf16.mxu0 0
    %535 = vmatpush1.bf16.xpose.msra.mxu0 0
    %536 = vmatprep.subr.bf16.mxu0 0
    %537 = vmatpush1.bf16.xpose.msra.mxu0 0
    %538 = vmatprep.subr.bf16.mxu0 0
    %539 = vmatpush1.bf16.xpose.msra.mxu0 0
    %540 = vmatprep.subr.bf16.mxu0 0
    %541 = vmatpush1.bf16.xpose.msra.mxu0 0
    %542 = vmatprep.subr.bf16.mxu0 0
    %543 = vmatpush1.bf16.xpose.msra.mxu0 0
    %544 = vmatprep.subr.bf16.mxu0 0
    %545 = vmatpush1.bf16.xpose.msra.mxu0 0
    %546 = vmatprep.subr.bf16.mxu0 0
    %547 = vmatpush1.bf16.xpose.msra.mxu0 0
    %548 = vmatprep.subr.bf16.mxu0 0
    %549 = vmatpush1.bf16.xpose.msra.mxu0 0
    %550 = vmatprep.subr.bf16.mxu0 0
    %551 = vmatpush1.bf16.xpose.msra.mxu0 0
    %552 = vmatprep.subr.bf16.mxu0 0
    %553 = vmatpush1.bf16.xpose.msra.mxu0 0
    %554 = vmatprep.subr.bf16.mxu0 0
    %555 = vmatpush1.bf16.xpose.msra.mxu0 0
    %556 = vmatprep.subr.bf16.mxu0 0
    %557 = vmatpush1.bf16.xpose.msra.mxu0 0
    %558 = vmatprep.subr.bf16.mxu0 0
    %559 = vmatpush1.bf16.xpose.msra.mxu0 0
    %560 = vmatprep.subr.bf16.mxu0 0
    %561 = vmatpush1.bf16.xpose.msra.mxu0 0
    %562 = vmatprep.mubr.bf16.mxu0 0
    %563 = vmatmul.mubr.bf16.gmra.mrb[0].mxu0 %v528
    %v564 = vpop.f32.mrb[0].mxu0
    %v565 = vadd.f32 0.0, %v564
    %v566 = vpop.f32.mrb[0].mxu0
    %v567 = vpop.f32.mrb[0].mxu0
    %v568 = vpop.f32.mrb[0].mxu0
    %569 = vdwg.mxu0
    %570 = vrot.lane.b32.xlu0 %v277, 124
    %v571 = vpop.permute.xlu0 %570
    %v573 = vsel %vm280, %v571, 0
    %575 = vmatprep.subr.bf16.mxu0 0
    %576 = vmatpush1.bf16.xpose.msra.mxu0 %v573
    %577 = vmatprep.subr.bf16.mxu0 0
    %578 = vmatpush1.bf16.xpose.msra.mxu0 0
    %579 = vmatprep.subr.bf16.mxu0 0
    %580 = vmatpush1.bf16.xpose.msra.mxu0 0
    %581 = vmatprep.subr.bf16.mxu0 0
    %582 = vmatpush1.bf16.xpose.msra.mxu0 0
    %583 = vmatprep.subr.bf16.mxu0 0
    %584 = vmatpush1.bf16.xpose.msra.mxu0 0
    %585 = vmatprep.subr.bf16.mxu0 0
    %586 = vmatpush1.bf16.xpose.msra.mxu0 0
    %587 = vmatprep.subr.bf16.mxu0 0
    %588 = vmatpush1.bf16.xpose.msra.mxu0 0
    %589 = vmatprep.subr.bf16.mxu0 0
    %590 = vmatpush1.bf16.xpose.msra.mxu0 0
    %591 = vmatprep.subr.bf16.mxu0 0
    %592 = vmatpush1.bf16.xpose.msra.mxu0 0
    %593 = vmatprep.subr.bf16.mxu0 0
    %594 = vmatpush1.bf16.xpose.msra.mxu0 0
    %595 = vmatprep.subr.bf16.mxu0 0
    %596 = vmatpush1.bf16.xpose.msra.mxu0 0
    %597 = vmatprep.subr.bf16.mxu0 0
    %598 = vmatpush1.bf16.xpose.msra.mxu0 0
    %599 = vmatprep.subr.bf16.mxu0 0
    %600 = vmatpush1.bf16.xpose.msra.mxu0 0
    %601 = vmatprep.subr.bf16.mxu0 0
    %602 = vmatpush1.bf16.xpose.msra.mxu0 0
    %603 = vmatprep.subr.bf16.mxu0 0
    %604 = vmatpush1.bf16.xpose.msra.mxu0 0
    %605 = vmatprep.subr.bf16.mxu0 0
    %606 = vmatpush1.bf16.xpose.msra.mxu0 0
    %607 = vmatprep.mubr.bf16.mxu0 0
    %608 = vmatmul.mubr.bf16.gmra.mrb[0].mxu0 %v573
    %v609 = vpop.f32.mrb[0].mxu0
    %v610 = vadd.f32 0.0, %v609
    %v611 = vpop.f32.mrb[0].mxu0
    %v612 = vpop.f32.mrb[0].mxu0
    %v613 = vpop.f32.mrb[0].mxu0
    %614 = vdwg.mxu0
    %617 = vrot.lane.b32.xlu0 %v369, 124
    %v618 = vpop.permute.xlu0 %617
    %619 = vrot.lane.b32.xlu0 %v370, 124
    %v620 = vpop.permute.xlu0 %619
    %v623 = vsel %vm280, %v618, 0.0
    %624 = vadd.xlane.f32.xlu0 %v623
    %v625 = vpop.xlane.xlu0 %624
    %v626 = vsel %vm280, %v620, 0.0
    %627 = vadd.xlane.f32.xlu0 %v626
    %v628 = vpop.xlane.xlu0 %627
    %v629 = vmul.f32 %v565, 2.0
    %v630 = vmul.f32 %v610, 2.0
    %v633 = vlaneseq
    %v634 = vshrl.u32 %v633, 7
    %v635 = vsub.s32 %v382, %v634
    %v636 = vrot.slane %v625, %v635
    %v637 = vlaneseq
    %v638 = vshrl.u32 %v637, 7
    %v639 = vsub.s32 %v382, %v638
    %v640 = vrot.slane %v628, %v639
    %v641 = vsel %vm391, %v636, %v636
    %v642 = vsel %vm393, %v636, %v641
    %v643 = vsel %vm395, %v636, %v642
    %v644 = vsel %vm397, %v636, %v643
    %v645 = vsel %vm399, %v636, %v644
    %v646 = vsel %vm401, %v636, %v645
    %v647 = vsel %vm391, %v640, %v640
    %v648 = vsel %vm393, %v640, %v647
    %v649 = vsel %vm395, %v640, %v648
    %v650 = vsel %vm397, %v640, %v649
    %v651 = vsel %vm399, %v640, %v650
    %v652 = vsel %vm401, %v640, %v651
    %v655 = vsub.f32 %v629, %v646
    %v656 = vsub.f32 %v630, %v652
    %v657 = vsub.f32 %v655, %v625
    %v658 = vsub.f32 %v656, %v628
    %v659 = vmul.f32 %v657, 0.5
    %v660 = vmul.f32 %v658, 0.5
    %v661 = vmul.f32 %v659, 1.442695
    %v662 = vpow.pop %v661
    %v663 = vmul.f32 %v660, 1.442695
    %v664 = vpow.pop %v663
    %v665 = vsel %vm421, %v662, 0.0
    %666 = vadd.xlane.f32.xlu0 %v665
    %v667 = vpop.xlane.xlu0 %666
    %v668 = vsel %vm421, %v664, 0.0
    %669 = vadd.xlane.f32.xlu0 %v668
    %v670 = vpop.xlane.xlu0 %669
    %v671 = vpack.c.bf16 %v662, %v662
    %v672 = vpack.c.bf16 %v664, %v664
    %v674 = vsel %vm421, %v671, 0
    %v676 = vsel %vm433, %v526, 0
    %678 = vmatprep.subr.bf16.mxu0 0
    %679 = vmatpush1.bf16.msra.mxu0 %v676
    %680 = vmatprep.subr.bf16.mxu0 0
    %681 = vmatpush1.bf16.msra.mxu0 0
    %682 = vmatprep.subr.bf16.mxu0 0
    %683 = vmatpush1.bf16.msra.mxu0 0
    %684 = vmatprep.subr.bf16.mxu0 0
    %685 = vmatpush1.bf16.msra.mxu0 0
    %686 = vmatprep.subr.bf16.mxu0 0
    %687 = vmatpush1.bf16.msra.mxu0 0
    %688 = vmatprep.subr.bf16.mxu0 0
    %689 = vmatpush1.bf16.msra.mxu0 0
    %690 = vmatprep.subr.bf16.mxu0 0
    %691 = vmatpush1.bf16.msra.mxu0 0
    %692 = vmatprep.subr.bf16.mxu0 0
    %693 = vmatpush1.bf16.msra.mxu0 0
    %694 = vmatprep.subr.bf16.mxu0 0
    %695 = vmatpush1.bf16.msra.mxu0 0
    %696 = vmatprep.subr.bf16.mxu0 0
    %697 = vmatpush1.bf16.msra.mxu0 0
    %698 = vmatprep.subr.bf16.mxu0 0
    %699 = vmatpush1.bf16.msra.mxu0 0
    %700 = vmatprep.subr.bf16.mxu0 0
    %701 = vmatpush1.bf16.msra.mxu0 0
    %702 = vmatprep.subr.bf16.mxu0 0
    %703 = vmatpush1.bf16.msra.mxu0 0
    %704 = vmatprep.subr.bf16.mxu0 0
    %705 = vmatpush1.bf16.msra.mxu0 0
    %706 = vmatprep.subr.bf16.mxu0 0
    %707 = vmatpush1.bf16.msra.mxu0 0
    %708 = vmatprep.subr.bf16.mxu0 0
    %709 = vmatpush1.bf16.msra.mxu0 0
    %710 = vmatprep.mubr.bf16.mxu0 0
    %711 = vmatmul.mubr.bf16.gmra.mrb[0].mxu0 %v674
    %v712 = vpop.f32.mrb[0].mxu0
    %v713 = vadd.f32 0.0, %v712
    %v714 = vpop.f32.mrb[0].mxu0
    %v715 = vpop.f32.mrb[0].mxu0
    %v716 = vpop.f32.mrb[0].mxu0
    %717 = vdwg.mxu0
    %v719 = vsel %vm421, %v672, 0
    %v721 = vsel %vm433, %v571, 0
    %723 = vmatprep.subr.bf16.mxu0 0
    %724 = vmatpush1.bf16.msra.mxu0 %v721
    %725 = vmatprep.subr.bf16.mxu0 0
    %726 = vmatpush1.bf16.msra.mxu0 0
    %727 = vmatprep.subr.bf16.mxu0 0
    %728 = vmatpush1.bf16.msra.mxu0 0
    %729 = vmatprep.subr.bf16.mxu0 0
    %730 = vmatpush1.bf16.msra.mxu0 0
    %731 = vmatprep.subr.bf16.mxu0 0
    %732 = vmatpush1.bf16.msra.mxu0 0
    %733 = vmatprep.subr.bf16.mxu0 0
    %734 = vmatpush1.bf16.msra.mxu0 0
    %735 = vmatprep.subr.bf16.mxu0 0
    %736 = vmatpush1.bf16.msra.mxu0 0
    %737 = vmatprep.subr.bf16.mxu0 0
    %738 = vmatpush1.bf16.msra.mxu0 0
    %739 = vmatprep.subr.bf16.mxu0 0
    %740 = vmatpush1.bf16.msra.mxu0 0
    %741 = vmatprep.subr.bf16.mxu0 0
    %742 = vmatpush1.bf16.msra.mxu0 0
    %743 = vmatprep.subr.bf16.mxu0 0
    %744 = vmatpush1.bf16.msra.mxu0 0
    %745 = vmatprep.subr.bf16.mxu0 0
    %746 = vmatpush1.bf16.msra.mxu0 0
    %747 = vmatprep.subr.bf16.mxu0 0
    %748 = vmatpush1.bf16.msra.mxu0 0
    %749 = vmatprep.subr.bf16.mxu0 0
    %750 = vmatpush1.bf16.msra.mxu0 0
    %751 = vmatprep.subr.bf16.mxu0 0
    %752 = vmatpush1.bf16.msra.mxu0 0
    %753 = vmatprep.subr.bf16.mxu0 0
    %754 = vmatpush1.bf16.msra.mxu0 0
    %755 = vmatprep.mubr.bf16.mxu0 0
    %756 = vmatmul.mubr.bf16.gmra.mrb[0].mxu0 %v719
    %v757 = vpop.f32.mrb[0].mxu0
    %v758 = vadd.f32 0.0, %v757
    %v759 = vpop.f32.mrb[0].mxu0
    %v760 = vpop.f32.mrb[0].mxu0
    %v761 = vpop.f32.mrb[0].mxu0
    %762 = vdwg.mxu0
    %v763 = vrcp.pop %v667
    %v764 = vrcp.pop %v670
    %v765 = vmul.f32 %v713, %v763
    %v766 = vmul.f32 %v758, %v764
    %767 = vrot.lane.b32.xlu0 %v276, 120
    %v768 = vpop.permute.xlu0 %767
    %v770 = vsel %vm280, %v768, 0
    %772 = vmatprep.subr.bf16.mxu0 0
    %773 = vmatpush1.bf16.xpose.msra.mxu0 %v770
    %774 = vmatprep.subr.bf16.mxu0 0
    %775 = vmatpush1.bf16.xpose.msra.mxu0 0
    %776 = vmatprep.subr.bf16.mxu0 0
    %777 = vmatpush1.bf16.xpose.msra.mxu0 0
    %778 = vmatprep.subr.bf16.mxu0 0
    %779 = vmatpush1.bf16.xpose.msra.mxu0 0
    %780 = vmatprep.subr.bf16.mxu0 0
    %781 = vmatpush1.bf16.xpose.msra.mxu0 0
    %782 = vmatprep.subr.bf16.mxu0 0
    %783 = vmatpush1.bf16.xpose.msra.mxu0 0
    %784 = vmatprep.subr.bf16.mxu0 0
    %785 = vmatpush1.bf16.xpose.msra.mxu0 0
    %786 = vmatprep.subr.bf16.mxu0 0
    %787 = vmatpush1.bf16.xpose.msra.mxu0 0
    %788 = vmatprep.subr.bf16.mxu0 0
    %789 = vmatpush1.bf16.xpose.msra.mxu0 0
    %790 = vmatprep.subr.bf16.mxu0 0
    %791 = vmatpush1.bf16.xpose.msra.mxu0 0
    %792 = vmatprep.subr.bf16.mxu0 0
    %793 = vmatpush1.bf16.xpose.msra.mxu0 0
    %794 = vmatprep.subr.bf16.mxu0 0
    %795 = vmatpush1.bf16.xpose.msra.mxu0 0
    %796 = vmatprep.subr.bf16.mxu0 0
    %797 = vmatpush1.bf16.xpose.msra.mxu0 0
    %798 = vmatprep.subr.bf16.mxu0 0
    %799 = vmatpush1.bf16.xpose.msra.mxu0 0
    %800 = vmatprep.subr.bf16.mxu0 0
    %801 = vmatpush1.bf16.xpose.msra.mxu0 0
    %802 = vmatprep.subr.bf16.mxu0 0
    %803 = vmatpush1.bf16.xpose.msra.mxu0 0
    %804 = vmatprep.mubr.bf16.mxu0 0
    %805 = vmatmul.mubr.bf16.gmra.mrb[0].mxu0 %v770
    %v806 = vpop.f32.mrb[0].mxu0
    %v807 = vadd.f32 0.0, %v806
    %v808 = vpop.f32.mrb[0].mxu0
    %v809 = vpop.f32.mrb[0].mxu0
    %v810 = vpop.f32.mrb[0].mxu0
    %811 = vdwg.mxu0
    %812 = vrot.lane.b32.xlu0 %v277, 120
    %v813 = vpop.permute.xlu0 %812
    %v815 = vsel %vm280, %v813, 0
    %817 = vmatprep.subr.bf16.mxu0 0
    %818 = vmatpush1.bf16.xpose.msra.mxu0 %v815
    %819 = vmatprep.subr.bf16.mxu0 0
    %820 = vmatpush1.bf16.xpose.msra.mxu0 0
    %821 = vmatprep.subr.bf16.mxu0 0
    %822 = vmatpush1.bf16.xpose.msra.mxu0 0
    %823 = vmatprep.subr.bf16.mxu0 0
    %824 = vmatpush1.bf16.xpose.msra.mxu0 0
    %825 = vmatprep.subr.bf16.mxu0 0
    %826 = vmatpush1.bf16.xpose.msra.mxu0 0
    %827 = vmatprep.subr.bf16.mxu0 0
    %828 = vmatpush1.bf16.xpose.msra.mxu0 0
    %829 = vmatprep.subr.bf16.mxu0 0
    %830 = vmatpush1.bf16.xpose.msra.mxu0 0
    %831 = vmatprep.subr.bf16.mxu0 0
    %832 = vmatpush1.bf16.xpose.msra.mxu0 0
    %833 = vmatprep.subr.bf16.mxu0 0
    %834 = vmatpush1.bf16.xpose.msra.mxu0 0
    %835 = vmatprep.subr.bf16.mxu0 0
    %836 = vmatpush1.bf16.xpose.msra.mxu0 0
    %837 = vmatprep.subr.bf16.mxu0 0
    %838 = vmatpush1.bf16.xpose.msra.mxu0 0
    %839 = vmatprep.subr.bf16.mxu0 0
    %840 = vmatpush1.bf16.xpose.msra.mxu0 0
    %841 = vmatprep.subr.bf16.mxu0 0
    %842 = vmatpush1.bf16.xpose.msra.mxu0 0
    %843 = vmatprep.subr.bf16.mxu0 0
    %844 = vmatpush1.bf16.xpose.msra.mxu0 0
    %845 = vmatprep.subr.bf16.mxu0 0
    %846 = vmatpush1.bf16.xpose.msra.mxu0 0
    %847 = vmatprep.subr.bf16.mxu0 0
    %848 = vmatpush1.bf16.xpose.msra.mxu0 0
    %849 = vmatprep.mubr.bf16.mxu0 0
    %850 = vmatmul.mubr.bf16.gmra.mrb[0].mxu0 %v815
    %v851 = vpop.f32.mrb[0].mxu0
    %v852 = vadd.f32 0.0, %v851
    %v853 = vpop.f32.mrb[0].mxu0
    %v854 = vpop.f32.mrb[0].mxu0
    %v855 = vpop.f32.mrb[0].mxu0
    %856 = vdwg.mxu0
    %857 = vrot.lane.b32.xlu0 %v369, 120
    %v858 = vpop.permute.xlu0 %857
    %859 = vrot.lane.b32.xlu0 %v370, 120
    %v860 = vpop.permute.xlu0 %859
    %v863 = vsel %vm280, %v858, 0.0
    %864 = vadd.xlane.f32.xlu0 %v863
    %v865 = vpop.xlane.xlu0 %864
    %v866 = vsel %vm280, %v860, 0.0
    %867 = vadd.xlane.f32.xlu0 %v866
    %v868 = vpop.xlane.xlu0 %867
    %v869 = vmul.f32 %v807, 2.0
    %v870 = vmul.f32 %v852, 2.0
    %v873 = vlaneseq
    %v874 = vshrl.u32 %v873, 7
    %v875 = vsub.s32 %v382, %v874
    %v876 = vrot.slane %v865, %v875
    %v877 = vlaneseq
    %v878 = vshrl.u32 %v877, 7
    %v879 = vsub.s32 %v382, %v878
    %v880 = vrot.slane %v868, %v879
    %v881 = vsel %vm391, %v876, %v876
    %v882 = vsel %vm393, %v876, %v881
    %v883 = vsel %vm395, %v876, %v882
    %v884 = vsel %vm397, %v876, %v883
    %v885 = vsel %vm399, %v876, %v884
    %v886 = vsel %vm401, %v876, %v885
    %v887 = vsel %vm391, %v880, %v880
    %v888 = vsel %vm393, %v880, %v887
    %v889 = vsel %vm395, %v880, %v888
    %v890 = vsel %vm397, %v880, %v889
    %v891 = vsel %vm399, %v880, %v890
    %v892 = vsel %vm401, %v880, %v891
    %v895 = vsub.f32 %v869, %v886
    %v896 = vsub.f32 %v870, %v892
    %v897 = vsub.f32 %v895, %v865
    %v898 = vsub.f32 %v896, %v868
    %v899 = vmul.f32 %v897, 0.5
    %v900 = vmul.f32 %v898, 0.5
    %v901 = vmul.f32 %v899, 1.442695
    %v902 = vpow.pop %v901
    %v903 = vmul.f32 %v900, 1.442695
    %v904 = vpow.pop %v903
    %v905 = vsel %vm421, %v902, 0.0
    %906 = vadd.xlane.f32.xlu0 %v905
    %v907 = vpop.xlane.xlu0 %906
    %v908 = vsel %vm421, %v904, 0.0
    %909 = vadd.xlane.f32.xlu0 %v908
    %v910 = vpop.xlane.xlu0 %909
    %v911 = vpack.c.bf16 %v902, %v902
    %v912 = vpack.c.bf16 %v904, %v904
    %v914 = vsel %vm421, %v911, 0
    %v916 = vsel %vm433, %v768, 0
    %918 = vmatprep.subr.bf16.mxu0 0
    %919 = vmatpush1.bf16.msra.mxu0 %v916
    %920 = vmatprep.subr.bf16.mxu0 0
    %921 = vmatpush1.bf16.msra.mxu0 0
    %922 = vmatprep.subr.bf16.mxu0 0
    %923 = vmatpush1.bf16.msra.mxu0 0
    %924 = vmatprep.subr.bf16.mxu0 0
    %925 = vmatpush1.bf16.msra.mxu0 0
    %926 = vmatprep.subr.bf16.mxu0 0
    %927 = vmatpush1.bf16.msra.mxu0 0
    %928 = vmatprep.subr.bf16.mxu0 0
    %929 = vmatpush1.bf16.msra.mxu0 0
    %930 = vmatprep.subr.bf16.mxu0 0
    %931 = vmatpush1.bf16.msra.mxu0 0
    %932 = vmatprep.subr.bf16.mxu0 0
    %933 = vmatpush1.bf16.msra.mxu0 0
    %934 = vmatprep.subr.bf16.mxu0 0
    %935 = vmatpush1.bf16.msra.mxu0 0
    %936 = vmatprep.subr.bf16.mxu0 0
    %937 = vmatpush1.bf16.msra.mxu0 0
    %938 = vmatprep.subr.bf16.mxu0 0
    %939 = vmatpush1.bf16.msra.mxu0 0
    %940 = vmatprep.subr.bf16.mxu0 0
    %941 = vmatpush1.bf16.msra.mxu0 0
    %942 = vmatprep.subr.bf16.mxu0 0
    %943 = vmatpush1.bf16.msra.mxu0 0
    %944 = vmatprep.subr.bf16.mxu0 0
    %945 = vmatpush1.bf16.msra.mxu0 0
    %946 = vmatprep.subr.bf16.mxu0 0
    %947 = vmatpush1.bf16.msra.mxu0 0
    %948 = vmatprep.subr.bf16.mxu0 0
    %949 = vmatpush1.bf16.msra.mxu0 0
    %950 = vmatprep.mubr.bf16.mxu0 0
    %951 = vmatmul.mubr.bf16.gmra.mrb[0].mxu0 %v914
    %v952 = vpop.f32.mrb[0].mxu0
    %v953 = vadd.f32 0.0, %v952
    %v954 = vpop.f32.mrb[0].mxu0
    %v955 = vpop.f32.mrb[0].mxu0
    %v956 = vpop.f32.mrb[0].mxu0
    %957 = vdwg.mxu0
    %v959 = vsel %vm421, %v912, 0
    %v961 = vsel %vm433, %v813, 0
    %963 = vmatprep.subr.bf16.mxu0 0
    %964 = vmatpush1.bf16.msra.mxu0 %v961
    %965 = vmatprep.subr.bf16.mxu0 0
    %966 = vmatpush1.bf16.msra.mxu0 0
    %967 = vmatprep.subr.bf16.mxu0 0
    %968 = vmatpush1.bf16.msra.mxu0 0
    %969 = vmatprep.subr.bf16.mxu0 0
    %970 = vmatpush1.bf16.msra.mxu0 0
    %971 = vmatprep.subr.bf16.mxu0 0
    %972 = vmatpush1.bf16.msra.mxu0 0
    %973 = vmatprep.subr.bf16.mxu0 0
    %974 = vmatpush1.bf16.msra.mxu0 0
    %975 = vmatprep.subr.bf16.mxu0 0
    %976 = vmatpush1.bf16.msra.mxu0 0
    %977 = vmatprep.subr.bf16.mxu0 0
    %978 = vmatpush1.bf16.msra.mxu0 0
    %979 = vmatprep.subr.bf16.mxu0 0
    %980 = vmatpush1.bf16.msra.mxu0 0
    %981 = vmatprep.subr.bf16.mxu0 0
    %982 = vmatpush1.bf16.msra.mxu0 0
    %983 = vmatprep.subr.bf16.mxu0 0
    %984 = vmatpush1.bf16.msra.mxu0 0
    %985 = vmatprep.subr.bf16.mxu0 0
    %986 = vmatpush1.bf16.msra.mxu0 0
    %987 = vmatprep.subr.bf16.mxu0 0
    %988 = vmatpush1.bf16.msra.mxu0 0
    %989 = vmatprep.subr.bf16.mxu0 0
    %990 = vmatpush1.bf16.msra.mxu0 0
    %991 = vmatprep.subr.bf16.mxu0 0
    %992 = vmatpush1.bf16.msra.mxu0 0
    %993 = vmatprep.subr.bf16.mxu0 0
    %994 = vmatpush1.bf16.msra.mxu0 0
    %995 = vmatprep.mubr.bf16.mxu0 0
    %996 = vmatmul.mubr.bf16.gmra.mrb[0].mxu0 %v959
    %v997 = vpop.f32.mrb[0].mxu0
    %v998 = vadd.f32 0.0, %v997
    %v999 = vpop.f32.mrb[0].mxu0
    %v1000 = vpop.f32.mrb[0].mxu0
    %v1001 = vpop.f32.mrb[0].mxu0
    %1002 = vdwg.mxu0
    %v1003 = vrcp.pop %v907
    %v1004 = vrcp.pop %v910
    %v1005 = vmul.f32 %v953, %v1003
    %v1006 = vmul.f32 %v998, %v1004
    %1007 = vrot.lane.b32.xlu0 %v276, 116
    %v1008 = vpop.permute.xlu0 %1007
    %v1010 = vsel %vm280, %v1008, 0
    %1012 = vmatprep.subr.bf16.mxu0 0
    %1013 = vmatpush1.bf16.xpose.msra.mxu0 %v1010
    %1014 = vmatprep.subr.bf16.mxu0 0
    %1015 = vmatpush1.bf16.xpose.msra.mxu0 0
    %1016 = vmatprep.subr.bf16.mxu0 0
    %1017 = vmatpush1.bf16.xpose.msra.mxu0 0
    %1018 = vmatprep.subr.bf16.mxu0 0
    %1019 = vmatpush1.bf16.xpose.msra.mxu0 0
    %1020 = vmatprep.subr.bf16.mxu0 0
    %1021 = vmatpush1.bf16.xpose.msra.mxu0 0
    %1022 = vmatprep.subr.bf16.mxu0 0
    %1023 = vmatpush1.bf16.xpose.msra.mxu0 0
    %1024 = vmatprep.subr.bf16.mxu0 0
    %1025 = vmatpush1.bf16.xpose.msra.mxu0 0
    %1026 = vmatprep.subr.bf16.mxu0 0
    %1027 = vmatpush1.bf16.xpose.msra.mxu0 0
    %1028 = vmatprep.subr.bf16.mxu0 0
    %1029 = vmatpush1.bf16.xpose.msra.mxu0 0
    %1030 = vmatprep.subr.bf16.mxu0 0
    %1031 = vmatpush1.bf16.xpose.msra.mxu0 0
    %1032 = vmatprep.subr.bf16.mxu0 0
    %1033 = vmatpush1.bf16.xpose.msra.mxu0 0
    %1034 = vmatprep.subr.bf16.mxu0 0
    %1035 = vmatpush1.bf16.xpose.msra.mxu0 0
    %1036 = vmatprep.subr.bf16.mxu0 0
    %1037 = vmatpush1.bf16.xpose.msra.mxu0 0
    %1038 = vmatprep.subr.bf16.mxu0 0
    %1039 = vmatpush1.bf16.xpose.msra.mxu0 0
    %1040 = vmatprep.subr.bf16.mxu0 0
    %1041 = vmatpush1.bf16.xpose.msra.mxu0 0
    %1042 = vmatprep.subr.bf16.mxu0 0
    %1043 = vmatpush1.bf16.xpose.msra.mxu0 0
    %1044 = vmatprep.mubr.bf16.mxu0 0
    %1045 = vmatmul.mubr.bf16.gmra.mrb[0].mxu0 %v1010
    %v1046 = vpop.f32.mrb[0].mxu0
    %v1047 = vadd.f32 0.0, %v1046
    %v1048 = vpop.f32.mrb[0].mxu0
    %v1049 = vpop.f32.mrb[0].mxu0
    %v1050 = vpop.f32.mrb[0].mxu0
    %1051 = vdwg.mxu0
    %1052 = vrot.lane.b32.xlu0 %v277, 116
    %v1053 = vpop.permute.xlu0 %1052
    %v1055 = vsel %vm280, %v1053, 0
    %1057 = vmatprep.subr.bf16.mxu0 0
    %1058 = vmatpush1.bf16.xpose.msra.mxu0 %v1055
    %1059 = vmatprep.subr.bf16.mxu0 0
    %1060 = vmatpush1.bf16.xpose.msra.mxu0 0
    %1061 = vmatprep.subr.bf16.mxu0 0
    %1062 = vmatpush1.bf16.xpose.msra.mxu0 0
    %1063 = vmatprep.subr.bf16.mxu0 0
    %1064 = vmatpush1.bf16.xpose.msra.mxu0 0
    %1065 = vmatprep.subr.bf16.mxu0 0
    %1066 = vmatpush1.bf16.xpose.msra.mxu0 0
    %1067 = vmatprep.subr.bf16.mxu0 0
    %1068 = vmatpush1.bf16.xpose.msra.mxu0 0
    %1069 = vmatprep.subr.bf16.mxu0 0
    %1070 = vmatpush1.bf16.xpose.msra.mxu0 0
    %1071 = vmatprep.subr.bf16.mxu0 0
    %1072 = vmatpush1.bf16.xpose.msra.mxu0 0
    %1073 = vmatprep.subr.bf16.mxu0 0
    %1074 = vmatpush1.bf16.xpose.msra.mxu0 0
    %1075 = vmatprep.subr.bf16.mxu0 0
    %1076 = vmatpush1.bf16.xpose.msra.mxu0 0
    %1077 = vmatprep.subr.bf16.mxu0 0
    %1078 = vmatpush1.bf16.xpose.msra.mxu0 0
    %1079 = vmatprep.subr.bf16.mxu0 0
    %1080 = vmatpush1.bf16.xpose.msra.mxu0 0
    %1081 = vmatprep.subr.bf16.mxu0 0
    %1082 = vmatpush1.bf16.xpose.msra.mxu0 0
    %1083 = vmatprep.subr.bf16.mxu0 0
    %1084 = vmatpush1.bf16.xpose.msra.mxu0 0
    %1085 = vmatprep.subr.bf16.mxu0 0
    %1086 = vmatpush1.bf16.xpose.msra.mxu0 0
    %1087 = vmatprep.subr.bf16.mxu0 0
    %1088 = vmatpush1.bf16.xpose.msra.mxu0 0
    %1089 = vmatprep.mubr.bf16.mxu0 0
    %1090 = vmatmul.mubr.bf16.gmra.mrb[0].mxu0 %v1055
    %v1091 = vpop.f32.mrb[0].mxu0
    %v1092 = vadd.f32 0.0, %v1091
    %v1093 = vpop.f32.mrb[0].mxu0
    %v1094 = vpop.f32.mrb[0].mxu0
    %v1095 = vpop.f32.mrb[0].mxu0
    %1096 = vdwg.mxu0
    %1097 = vrot.lane.b32.xlu0 %v369, 116
    %v1098 = vpop.permute.xlu0 %1097
    %1099 = vrot.lane.b32.xlu0 %v370, 116
    %v1100 = vpop.permute.xlu0 %1099
    %v1103 = vsel %vm280, %v1098, 0.0
    %1104 = vadd.xlane.f32.xlu0 %v1103
    %v1105 = vpop.xlane.xlu0 %1104
    %v1106 = vsel %vm280, %v1100, 0.0
    %1107 = vadd.xlane.f32.xlu0 %v1106
    %v1108 = vpop.xlane.xlu0 %1107
    %v1109 = vmul.f32 %v1047, 2.0
    %v1110 = vmul.f32 %v1092, 2.0
    %v1113 = vlaneseq
    %v1114 = vshrl.u32 %v1113, 7
    %v1115 = vsub.s32 %v382, %v1114
    %v1116 = vrot.slane %v1105, %v1115
    %v1117 = vlaneseq
    %v1118 = vshrl.u32 %v1117, 7
    %v1119 = vsub.s32 %v382, %v1118
    %v1120 = vrot.slane %v1108, %v1119
    %v1121 = vsel %vm391, %v1116, %v1116
    %v1122 = vsel %vm393, %v1116, %v1121
    %v1123 = vsel %vm395, %v1116, %v1122
    %v1124 = vsel %vm397, %v1116, %v1123
    %v1125 = vsel %vm399, %v1116, %v1124
    %v1126 = vsel %vm401, %v1116, %v1125
    %v1127 = vsel %vm391, %v1120, %v1120
    %v1128 = vsel %vm393, %v1120, %v1127
    %v1129 = vsel %vm395, %v1120, %v1128
    %v1130 = vsel %vm397, %v1120, %v1129
    %v1131 = vsel %vm399, %v1120, %v1130
    %v1132 = vsel %vm401, %v1120, %v1131
    %v1135 = vsub.f32 %v1109, %v1126
    %v1136 = vsub.f32 %v1110, %v1132
    %v1137 = vsub.f32 %v1135, %v1105
    %v1138 = vsub.f32 %v1136, %v1108
    %v1139 = vmul.f32 %v1137, 0.5
    %v1140 = vmul.f32 %v1138, 0.5
    %v1141 = vmul.f32 %v1139, 1.442695
    %v1142 = vpow.pop %v1141
    %v1143 = vmul.f32 %v1140, 1.442695
    %v1144 = vpow.pop %v1143
    %v1145 = vsel %vm421, %v1142, 0.0
    %1146 = vadd.xlane.f32.xlu0 %v1145
    %v1147 = vpop.xlane.xlu0 %1146
    %v1148 = vsel %vm421, %v1144, 0.0
    %1149 = vadd.xlane.f32.xlu0 %v1148
    %v1150 = vpop.xlane.xlu0 %1149
    %v1151 = vpack.c.bf16 %v1142, %v1142
    %v1152 = vpack.c.bf16 %v1144, %v1144
    %v1154 = vsel %vm421, %v1151, 0
    %v1156 = vsel %vm433, %v1008, 0
    %1158 = vmatprep.subr.bf16.mxu0 0
    %1159 = vmatpush1.bf16.msra.mxu0 %v1156
    %1160 = vmatprep.subr.bf16.mxu0 0
    %1161 = vmatpush1.bf16.msra.mxu0 0
    %1162 = vmatprep.subr.bf16.mxu0 0
    %1163 = vmatpush1.bf16.msra.mxu0 0
    %1164 = vmatprep.subr.bf16.mxu0 0
    %1165 = vmatpush1.bf16.msra.mxu0 0
    %1166 = vmatprep.subr.bf16.mxu0 0
    %1167 = vmatpush1.bf16.msra.mxu0 0
    %1168 = vmatprep.subr.bf16.mxu0 0
    %1169 = vmatpush1.bf16.msra.mxu0 0
    %1170 = vmatprep.subr.bf16.mxu0 0
    %1171 = vmatpush1.bf16.msra.mxu0 0
    %1172 = vmatprep.subr.bf16.mxu0 0
    %1173 = vmatpush1.bf16.msra.mxu0 0
    %1174 = vmatprep.subr.bf16.mxu0 0
    %1175 = vmatpush1.bf16.msra.mxu0 0
    %1176 = vmatprep.subr.bf16.mxu0 0
    %1177 = vmatpush1.bf16.msra.mxu0 0
    %1178 = vmatprep.subr.bf16.mxu0 0
    %1179 = vmatpush1.bf16.msra.mxu0 0
    %1180 = vmatprep.subr.bf16.mxu0 0
    %1181 = vmatpush1.bf16.msra.mxu0 0
    %1182 = vmatprep.subr.bf16.mxu0 0
    %1183 = vmatpush1.bf16.msra.mxu0 0
    %1184 = vmatprep.subr.bf16.mxu0 0
    %1185 = vmatpush1.bf16.msra.mxu0 0
    %1186 = vmatprep.subr.bf16.mxu0 0
    %1187 = vmatpush1.bf16.msra.mxu0 0
    %1188 = vmatprep.subr.bf16.mxu0 0
    %1189 = vmatpush1.bf16.msra.mxu0 0
    %1190 = vmatprep.mubr.bf16.mxu0 0
    %1191 = vmatmul.mubr.bf16.gmra.mrb[0].mxu0 %v1154
    %v1192 = vpop.f32.mrb[0].mxu0
    %v1193 = vadd.f32 0.0, %v1192
    %v1194 = vpop.f32.mrb[0].mxu0
    %v1195 = vpop.f32.mrb[0].mxu0
    %v1196 = vpop.f32.mrb[0].mxu0
    %1197 = vdwg.mxu0
    %v1199 = vsel %vm421, %v1152, 0
    %v1201 = vsel %vm433, %v1053, 0
    %1203 = vmatprep.subr.bf16.mxu0 0
    %1204 = vmatpush1.bf16.msra.mxu0 %v1201
    %1205 = vmatprep.subr.bf16.mxu0 0
    %1206 = vmatpush1.bf16.msra.mxu0 0
    %1207 = vmatprep.subr.bf16.mxu0 0
    %1208 = vmatpush1.bf16.msra.mxu0 0
    %1209 = vmatprep.subr.bf16.mxu0 0
    %1210 = vmatpush1.bf16.msra.mxu0 0
    %1211 = vmatprep.subr.bf16.mxu0 0
    %1212 = vmatpush1.bf16.msra.mxu0 0
    %1213 = vmatprep.subr.bf16.mxu0 0
    %1214 = vmatpush1.bf16.msra.mxu0 0
    %1215 = vmatprep.subr.bf16.mxu0 0
    %1216 = vmatpush1.bf16.msra.mxu0 0
    %1217 = vmatprep.subr.bf16.mxu0 0
    %1218 = vmatpush1.bf16.msra.mxu0 0
    %1219 = vmatprep.subr.bf16.mxu0 0
    %1220 = vmatpush1.bf16.msra.mxu0 0
    %1221 = vmatprep.subr.bf16.mxu0 0
    %1222 = vmatpush1.bf16.msra.mxu0 0
    %1223 = vmatprep.subr.bf16.mxu0 0
    %1224 = vmatpush1.bf16.msra.mxu0 0
    %1225 = vmatprep.subr.bf16.mxu0 0
    %1226 = vmatpush1.bf16.msra.mxu0 0
    %1227 = vmatprep.subr.bf16.mxu0 0
    %1228 = vmatpush1.bf16.msra.mxu0 0
    %1229 = vmatprep.subr.bf16.mxu0 0
    %1230 = vmatpush1.bf16.msra.mxu0 0
    %1231 = vmatprep.subr.bf16.mxu0 0
    %1232 = vmatpush1.bf16.msra.mxu0 0
    %1233 = vmatprep.subr.bf16.mxu0 0
    %1234 = vmatpush1.bf16.msra.mxu0 0
    %1235 = vmatprep.mubr.bf16.mxu0 0
    %1236 = vmatmul.mubr.bf16.gmra.mrb[0].mxu0 %v1199
    %v1237 = vpop.f32.mrb[0].mxu0
    %v1238 = vadd.f32 0.0, %v1237
    %v1239 = vpop.f32.mrb[0].mxu0
    %v1240 = vpop.f32.mrb[0].mxu0
    %v1241 = vpop.f32.mrb[0].mxu0
    %1242 = vdwg.mxu0
    %v1243 = vrcp.pop %v1147
    %v1244 = vrcp.pop %v1150
    %v1245 = vmul.f32 %v1193, %v1243
    %v1246 = vmul.f32 %v1238, %v1244
    %1247 = vrot.lane.b32.xlu0 %v276, 112
    %v1248 = vpop.permute.xlu0 %1247
    %v1250 = vsel %vm280, %v1248, 0
    %1252 = vmatprep.subr.bf16.mxu0 0
    %1253 = vmatpush1.bf16.xpose.msra.mxu0 %v1250
    %1254 = vmatprep.subr.bf16.mxu0 0
    %1255 = vmatpush1.bf16.xpose.msra.mxu0 0
    %1256 = vmatprep.subr.bf16.mxu0 0
    %1257 = vmatpush1.bf16.xpose.msra.mxu0 0
    %1258 = vmatprep.subr.bf16.mxu0 0
    %1259 = vmatpush1.bf16.xpose.msra.mxu0 0
    %1260 = vmatprep.subr.bf16.mxu0 0
    %1261 = vmatpush1.bf16.xpose.msra.mxu0 0
    %1262 = vmatprep.subr.bf16.mxu0 0
    %1263 = vmatpush1.bf16.xpose.msra.mxu0 0
    %1264 = vmatprep.subr.bf16.mxu0 0
    %1265 = vmatpush1.bf16.xpose.msra.mxu0 0
    %1266 = vmatprep.subr.bf16.mxu0 0
    %1267 = vmatpush1.bf16.xpose.msra.mxu0 0
    %1268 = vmatprep.subr.bf16.mxu0 0
    %1269 = vmatpush1.bf16.xpose.msra.mxu0 0
    %1270 = vmatprep.subr.bf16.mxu0 0
    %1271 = vmatpush1.bf16.xpose.msra.mxu0 0
    %1272 = vmatprep.subr.bf16.mxu0 0
    %1273 = vmatpush1.bf16.xpose.msra.mxu0 0
    %1274 = vmatprep.subr.bf16.mxu0 0
    %1275 = vmatpush1.bf16.xpose.msra.mxu0 0
    %1276 = vmatprep.subr.bf16.mxu0 0
    %1277 = vmatpush1.bf16.xpose.msra.mxu0 0
    %1278 = vmatprep.subr.bf16.mxu0 0
    %1279 = vmatpush1.bf16.xpose.msra.mxu0 0
    %1280 = vmatprep.subr.bf16.mxu0 0
    %1281 = vmatpush1.bf16.xpose.msra.mxu0 0
    %1282 = vmatprep.subr.bf16.mxu0 0
    %1283 = vmatpush1.bf16.xpose.msra.mxu0 0
    %1284 = vmatprep.mubr.bf16.mxu0 0
    %1285 = vmatmul.mubr.bf16.gmra.mrb[0].mxu0 %v1250
    %v1286 = vpop.f32.mrb[0].mxu0
    %v1287 = vadd.f32 0.0, %v1286
    %v1288 = vpop.f32.mrb[0].mxu0
    %v1289 = vpop.f32.mrb[0].mxu0
    %v1290 = vpop.f32.mrb[0].mxu0
    %1291 = vdwg.mxu0
    %1292 = vrot.lane.b32.xlu0 %v277, 112
    %v1293 = vpop.permute.xlu0 %1292
    %v1295 = vsel %vm280, %v1293, 0
    %1297 = vmatprep.subr.bf16.mxu0 0
    %1298 = vmatpush1.bf16.xpose.msra.mxu0 %v1295
    %1299 = vmatprep.subr.bf16.mxu0 0
    %1300 = vmatpush1.bf16.xpose.msra.mxu0 0
    %1301 = vmatprep.subr.bf16.mxu0 0
    %1302 = vmatpush1.bf16.xpose.msra.mxu0 0
    %1303 = vmatprep.subr.bf16.mxu0 0
    %1304 = vmatpush1.bf16.xpose.msra.mxu0 0
    %1305 = vmatprep.subr.bf16.mxu0 0
    %1306 = vmatpush1.bf16.xpose.msra.mxu0 0
    %1307 = vmatprep.subr.bf16.mxu0 0
    %1308 = vmatpush1.bf16.xpose.msra.mxu0 0
    %1309 = vmatprep.subr.bf16.mxu0 0
    %1310 = vmatpush1.bf16.xpose.msra.mxu0 0
    %1311 = vmatprep.subr.bf16.mxu0 0
    %1312 = vmatpush1.bf16.xpose.msra.mxu0 0
    %1313 = vmatprep.subr.bf16.mxu0 0
    %1314 = vmatpush1.bf16.xpose.msra.mxu0 0
    %1315 = vmatprep.subr.bf16.mxu0 0
    %1316 = vmatpush1.bf16.xpose.msra.mxu0 0
    %1317 = vmatprep.subr.bf16.mxu0 0
    %1318 = vmatpush1.bf16.xpose.msra.mxu0 0
    %1319 = vmatprep.subr.bf16.mxu0 0
    %1320 = vmatpush1.bf16.xpose.msra.mxu0 0
    %1321 = vmatprep.subr.bf16.mxu0 0
    %1322 = vmatpush1.bf16.xpose.msra.mxu0 0
    %1323 = vmatprep.subr.bf16.mxu0 0
    %1324 = vmatpush1.bf16.xpose.msra.mxu0 0
    %1325 = vmatprep.subr.bf16.mxu0 0
    %1326 = vmatpush1.bf16.xpose.msra.mxu0 0
    %1327 = vmatprep.subr.bf16.mxu0 0
    %1328 = vmatpush1.bf16.xpose.msra.mxu0 0
    %1329 = vmatprep.mubr.bf16.mxu0 0
    %1330 = vmatmul.mubr.bf16.gmra.mrb[0].mxu0 %v1295
    %v1331 = vpop.f32.mrb[0].mxu0
    %v1332 = vadd.f32 0.0, %v1331
    %v1333 = vpop.f32.mrb[0].mxu0
    %v1334 = vpop.f32.mrb[0].mxu0
    %v1335 = vpop.f32.mrb[0].mxu0
    %1336 = vdwg.mxu0
    %1337 = vrot.lane.b32.xlu0 %v369, 112
    %v1338 = vpop.permute.xlu0 %1337
    %1339 = vrot.lane.b32.xlu0 %v370, 112
    %v1340 = vpop.permute.xlu0 %1339
    %v1343 = vsel %vm280, %v1338, 0.0
    %1344 = vadd.xlane.f32.xlu0 %v1343
    %v1345 = vpop.xlane.xlu0 %1344
    %v1346 = vsel %vm280, %v1340, 0.0
    %1347 = vadd.xlane.f32.xlu0 %v1346
    %v1348 = vpop.xlane.xlu0 %1347
    %v1349 = vmul.f32 %v1287, 2.0
    %v1350 = vmul.f32 %v1332, 2.0
    %v1353 = vlaneseq
    %v1354 = vshrl.u32 %v1353, 7
    %v1355 = vsub.s32 %v382, %v1354
    %v1356 = vrot.slane %v1345, %v1355
    %v1357 = vlaneseq
    %v1358 = vshrl.u32 %v1357, 7
    %v1359 = vsub.s32 %v382, %v1358
    %v1360 = vrot.slane %v1348, %v1359
    %v1361 = vsel %vm391, %v1356, %v1356
    %v1362 = vsel %vm393, %v1356, %v1361
    %v1363 = vsel %vm395, %v1356, %v1362
    %v1364 = vsel %vm397, %v1356, %v1363
    %v1365 = vsel %vm399, %v1356, %v1364
    %v1366 = vsel %vm401, %v1356, %v1365
    %v1367 = vsel %vm391, %v1360, %v1360
    %v1368 = vsel %vm393, %v1360, %v1367
    %v1369 = vsel %vm395, %v1360, %v1368
    %v1370 = vsel %vm397, %v1360, %v1369
    %v1371 = vsel %vm399, %v1360, %v1370
    %v1372 = vsel %vm401, %v1360, %v1371
    %v1375 = vsub.f32 %v1349, %v1366
    %v1376 = vsub.f32 %v1350, %v1372
    %v1377 = vsub.f32 %v1375, %v1345
    %v1378 = vsub.f32 %v1376, %v1348
    %v1379 = vmul.f32 %v1377, 0.5
    %v1380 = vmul.f32 %v1378, 0.5
    %v1381 = vmul.f32 %v1379, 1.442695
    %v1382 = vpow.pop %v1381
    %v1383 = vmul.f32 %v1380, 1.442695
    %v1384 = vpow.pop %v1383
    %v1385 = vsel %vm421, %v1382, 0.0
    %1386 = vadd.xlane.f32.xlu0 %v1385
    %v1387 = vpop.xlane.xlu0 %1386
    %v1388 = vsel %vm421, %v1384, 0.0
    %1389 = vadd.xlane.f32.xlu0 %v1388
    %v1390 = vpop.xlane.xlu0 %1389
    %v1391 = vpack.c.bf16 %v1382, %v1382
    %v1392 = vpack.c.bf16 %v1384, %v1384
    %v1394 = vsel %vm421, %v1391, 0
    %v1396 = vsel %vm433, %v1248, 0
    %1398 = vmatprep.subr.bf16.mxu0 0
    %1399 = vmatpush1.bf16.msra.mxu0 %v1396
    %1400 = vmatprep.subr.bf16.mxu0 0
    %1401 = vmatpush1.bf16.msra.mxu0 0
    %1402 = vmatprep.subr.bf16.mxu0 0
    %1403 = vmatpush1.bf16.msra.mxu0 0
    %1404 = vmatprep.subr.bf16.mxu0 0
    %1405 = vmatpush1.bf16.msra.mxu0 0
    %1406 = vmatprep.subr.bf16.mxu0 0
    %1407 = vmatpush1.bf16.msra.mxu0 0
    %1408 = vmatprep.subr.bf16.mxu0 0
    %1409 = vmatpush1.bf16.msra.mxu0 0
    %1410 = vmatprep.subr.bf16.mxu0 0
    %1411 = vmatpush1.bf16.msra.mxu0 0
    %1412 = vmatprep.subr.bf16.mxu0 0
    %1413 = vmatpush1.bf16.msra.mxu0 0
    %1414 = vmatprep.subr.bf16.mxu0 0
    %1415 = vmatpush1.bf16.msra.mxu0 0
    %1416 = vmatprep.subr.bf16.mxu0 0
    %1417 = vmatpush1.bf16.msra.mxu0 0
    %1418 = vmatprep.subr.bf16.mxu0 0
    %1419 = vmatpush1.bf16.msra.mxu0 0
    %1420 = vmatprep.subr.bf16.mxu0 0
    %1421 = vmatpush1.bf16.msra.mxu0 0
    %1422 = vmatprep.subr.bf16.mxu0 0
    %1423 = vmatpush1.bf16.msra.mxu0 0
    %1424 = vmatprep.subr.bf16.mxu0 0
    %1425 = vmatpush1.bf16.msra.mxu0 0
    %1426 = vmatprep.subr.bf16.mxu0 0
    %1427 = vmatpush1.bf16.msra.mxu0 0
    %1428 = vmatprep.subr.bf16.mxu0 0
    %1429 = vmatpush1.bf16.msra.mxu0 0
    %1430 = vmatprep.mubr.bf16.mxu0 0
    %1431 = vmatmul.mubr.bf16.gmra.mrb[0].mxu0 %v1394
    %v1432 = vpop.f32.mrb[0].mxu0
    %v1433 = vadd.f32 0.0, %v1432
    %v1434 = vpop.f32.mrb[0].mxu0
    %v1435 = vpop.f32.mrb[0].mxu0
    %v1436 = vpop.f32.mrb[0].mxu0
    %1437 = vdwg.mxu0
    %v1439 = vsel %vm421, %v1392, 0
    %v1441 = vsel %vm433, %v1293, 0
    %1443 = vmatprep.subr.bf16.mxu0 0
    %1444 = vmatpush1.bf16.msra.mxu0 %v1441
    %1445 = vmatprep.subr.bf16.mxu0 0
    %1446 = vmatpush1.bf16.msra.mxu0 0
    %1447 = vmatprep.subr.bf16.mxu0 0
    %1448 = vmatpush1.bf16.msra.mxu0 0
    %1449 = vmatprep.subr.bf16.mxu0 0
    %1450 = vmatpush1.bf16.msra.mxu0 0
    %1451 = vmatprep.subr.bf16.mxu0 0
    %1452 = vmatpush1.bf16.msra.mxu0 0
    %1453 = vmatprep.subr.bf16.mxu0 0
    %1454 = vmatpush1.bf16.msra.mxu0 0
    %1455 = vmatprep.subr.bf16.mxu0 0
    %1456 = vmatpush1.bf16.msra.mxu0 0
    %1457 = vmatprep.subr.bf16.mxu0 0
    %1458 = vmatpush1.bf16.msra.mxu0 0
    %1459 = vmatprep.subr.bf16.mxu0 0
    %1460 = vmatpush1.bf16.msra.mxu0 0
    %1461 = vmatprep.subr.bf16.mxu0 0
    %1462 = vmatpush1.bf16.msra.mxu0 0
    %1463 = vmatprep.subr.bf16.mxu0 0
    %1464 = vmatpush1.bf16.msra.mxu0 0
    %1465 = vmatprep.subr.bf16.mxu0 0
    %1466 = vmatpush1.bf16.msra.mxu0 0
    %1467 = vmatprep.subr.bf16.mxu0 0
    %1468 = vmatpush1.bf16.msra.mxu0 0
    %1469 = vmatprep.subr.bf16.mxu0 0
    %1470 = vmatpush1.bf16.msra.mxu0 0
    %1471 = vmatprep.subr.bf16.mxu0 0
    %1472 = vmatpush1.bf16.msra.mxu0 0
    %1473 = vmatprep.subr.bf16.mxu0 0
    %1474 = vmatpush1.bf16.msra.mxu0 0
    %1475 = vmatprep.mubr.bf16.mxu0 0
    %1476 = vmatmul.mubr.bf16.gmra.mrb[0].mxu0 %v1439
    %v1477 = vpop.f32.mrb[0].mxu0
    %v1478 = vadd.f32 0.0, %v1477
    %v1479 = vpop.f32.mrb[0].mxu0
    %v1480 = vpop.f32.mrb[0].mxu0
    %v1481 = vpop.f32.mrb[0].mxu0
    %1482 = vdwg.mxu0
    %v1483 = vrcp.pop %v1387
    %v1484 = vrcp.pop %v1390
    %v1485 = vmul.f32 %v1433, %v1483
    %v1486 = vmul.f32 %v1478, %v1484
    %1487 = vrot.lane.b32.xlu0 %v276, 108
    %v1488 = vpop.permute.xlu0 %1487
    %v1490 = vsel %vm280, %v1488, 0
    %1492 = vmatprep.subr.bf16.mxu0 0
    %1493 = vmatpush1.bf16.xpose.msra.mxu0 %v1490
    %1494 = vmatprep.subr.bf16.mxu0 0
    %1495 = vmatpush1.bf16.xpose.msra.mxu0 0
    %1496 = vmatprep.subr.bf16.mxu0 0
    %1497 = vmatpush1.bf16.xpose.msra.mxu0 0
    %1498 = vmatprep.subr.bf16.mxu0 0
    %1499 = vmatpush1.bf16.xpose.msra.mxu0 0
    %1500 = vmatprep.subr.bf16.mxu0 0
    %1501 = vmatpush1.bf16.xpose.msra.mxu0 0
    %1502 = vmatprep.subr.bf16.mxu0 0
    %1503 = vmatpush1.bf16.xpose.msra.mxu0 0
    %1504 = vmatprep.subr.bf16.mxu0 0
    %1505 = vmatpush1.bf16.xpose.msra.mxu0 0
    %1506 = vmatprep.subr.bf16.mxu0 0
    %1507 = vmatpush1.bf16.xpose.msra.mxu0 0
    %1508 = vmatprep.subr.bf16.mxu0 0
    %1509 = vmatpush1.bf16.xpose.msra.mxu0 0
    %1510 = vmatprep.subr.bf16.mxu0 0
    %1511 = vmatpush1.bf16.xpose.msra.mxu0 0
    %1512 = vmatprep.subr.bf16.mxu0 0
    %1513 = vmatpush1.bf16.xpose.msra.mxu0 0
    %1514 = vmatprep.subr.bf16.mxu0 0
    %1515 = vmatpush1.bf16.xpose.msra.mxu0 0
    %1516 = vmatprep.subr.bf16.mxu0 0
    %1517 = vmatpush1.bf16.xpose.msra.mxu0 0
    %1518 = vmatprep.subr.bf16.mxu0 0
    %1519 = vmatpush1.bf16.xpose.msra.mxu0 0
    %1520 = vmatprep.subr.bf16.mxu0 0
    %1521 = vmatpush1.bf16.xpose.msra.mxu0 0
    %1522 = vmatprep.subr.bf16.mxu0 0
    %1523 = vmatpush1.bf16.xpose.msra.mxu0 0
    %1524 = vmatprep.mubr.bf16.mxu0 0
    %1525 = vmatmul.mubr.bf16.gmra.mrb[0].mxu0 %v1490
    %v1526 = vpop.f32.mrb[0].mxu0
    %v1527 = vadd.f32 0.0, %v1526
    %v1528 = vpop.f32.mrb[0].mxu0
    %v1529 = vpop.f32.mrb[0].mxu0
    %v1530 = vpop.f32.mrb[0].mxu0
    %1531 = vdwg.mxu0
    %1532 = vrot.lane.b32.xlu0 %v277, 108
    %v1533 = vpop.permute.xlu0 %1532
    %v1535 = vsel %vm280, %v1533, 0
    %1537 = vmatprep.subr.bf16.mxu0 0
    %1538 = vmatpush1.bf16.xpose.msra.mxu0 %v1535
    %1539 = vmatprep.subr.bf16.mxu0 0
    %1540 = vmatpush1.bf16.xpose.msra.mxu0 0
    %1541 = vmatprep.subr.bf16.mxu0 0
    %1542 = vmatpush1.bf16.xpose.msra.mxu0 0
    %1543 = vmatprep.subr.bf16.mxu0 0
    %1544 = vmatpush1.bf16.xpose.msra.mxu0 0
    %1545 = vmatprep.subr.bf16.mxu0 0
    %1546 = vmatpush1.bf16.xpose.msra.mxu0 0
    %1547 = vmatprep.subr.bf16.mxu0 0
    %1548 = vmatpush1.bf16.xpose.msra.mxu0 0
    %1549 = vmatprep.subr.bf16.mxu0 0
    %1550 = vmatpush1.bf16.xpose.msra.mxu0 0
    %1551 = vmatprep.subr.bf16.mxu0 0
    %1552 = vmatpush1.bf16.xpose.msra.mxu0 0
    %1553 = vmatprep.subr.bf16.mxu0 0
    %1554 = vmatpush1.bf16.xpose.msra.mxu0 0
    %1555 = vmatprep.subr.bf16.mxu0 0
    %1556 = vmatpush1.bf16.xpose.msra.mxu0 0
    %1557 = vmatprep.subr.bf16.mxu0 0
    %1558 = vmatpush1.bf16.xpose.msra.mxu0 0
    %1559 = vmatprep.subr.bf16.mxu0 0
    %1560 = vmatpush1.bf16.xpose.msra.mxu0 0
    %1561 = vmatprep.subr.bf16.mxu0 0
    %1562 = vmatpush1.bf16.xpose.msra.mxu0 0
    %1563 = vmatprep.subr.bf16.mxu0 0
    %1564 = vmatpush1.bf16.xpose.msra.mxu0 0
    %1565 = vmatprep.subr.bf16.mxu0 0
    %1566 = vmatpush1.bf16.xpose.msra.mxu0 0
    %1567 = vmatprep.subr.bf16.mxu0 0
    %1568 = vmatpush1.bf16.xpose.msra.mxu0 0
    %1569 = vmatprep.mubr.bf16.mxu0 0
    %1570 = vmatmul.mubr.bf16.gmra.mrb[0].mxu0 %v1535
    %v1571 = vpop.f32.mrb[0].mxu0
    %v1572 = vadd.f32 0.0, %v1571
    %v1573 = vpop.f32.mrb[0].mxu0
    %v1574 = vpop.f32.mrb[0].mxu0
    %v1575 = vpop.f32.mrb[0].mxu0
    %1576 = vdwg.mxu0
    %1577 = vrot.lane.b32.xlu0 %v369, 108
    %v1578 = vpop.permute.xlu0 %1577
    %1579 = vrot.lane.b32.xlu0 %v370, 108
    %v1580 = vpop.permute.xlu0 %1579
    %v1583 = vsel %vm280, %v1578, 0.0
    %1584 = vadd.xlane.f32.xlu0 %v1583
    %v1585 = vpop.xlane.xlu0 %1584
    %v1586 = vsel %vm280, %v1580, 0.0
    %1587 = vadd.xlane.f32.xlu0 %v1586
    %v1588 = vpop.xlane.xlu0 %1587
    %v1589 = vmul.f32 %v1527, 2.0
    %v1590 = vmul.f32 %v1572, 2.0
    %v1593 = vlaneseq
    %v1594 = vshrl.u32 %v1593, 7
    %v1595 = vsub.s32 %v382, %v1594
    %v1596 = vrot.slane %v1585, %v1595
    %v1597 = vlaneseq
    %v1598 = vshrl.u32 %v1597, 7
    %v1599 = vsub.s32 %v382, %v1598
    %v1600 = vrot.slane %v1588, %v1599
    %v1601 = vsel %vm391, %v1596, %v1596
    %v1602 = vsel %vm393, %v1596, %v1601
    %v1603 = vsel %vm395, %v1596, %v1602
    %v1604 = vsel %vm397, %v1596, %v1603
    %v1605 = vsel %vm399, %v1596, %v1604
    %v1606 = vsel %vm401, %v1596, %v1605
    %v1607 = vsel %vm391, %v1600, %v1600
    %v1608 = vsel %vm393, %v1600, %v1607
    %v1609 = vsel %vm395, %v1600, %v1608
    %v1610 = vsel %vm397, %v1600, %v1609
    %v1611 = vsel %vm399, %v1600, %v1610
    %v1612 = vsel %vm401, %v1600, %v1611
    %v1615 = vsub.f32 %v1589, %v1606
    %v1616 = vsub.f32 %v1590, %v1612
    %v1617 = vsub.f32 %v1615, %v1585
    %v1618 = vsub.f32 %v1616, %v1588
    %v1619 = vmul.f32 %v1617, 0.5
    %v1620 = vmul.f32 %v1618, 0.5
    %v1621 = vmul.f32 %v1619, 1.442695
    %v1622 = vpow.pop %v1621
    %v1623 = vmul.f32 %v1620, 1.442695
    %v1624 = vpow.pop %v1623
    %v1625 = vsel %vm421, %v1622, 0.0
    %1626 = vadd.xlane.f32.xlu0 %v1625
    %v1627 = vpop.xlane.xlu0 %1626
    %v1628 = vsel %vm421, %v1624, 0.0
    %1629 = vadd.xlane.f32.xlu0 %v1628
    %v1630 = vpop.xlane.xlu0 %1629
    %v1631 = vpack.c.bf16 %v1622, %v1622
    %v1632 = vpack.c.bf16 %v1624, %v1624
    %v1634 = vsel %vm421, %v1631, 0
    %v1636 = vsel %vm433, %v1488, 0
    %1638 = vmatprep.subr.bf16.mxu0 0
    %1639 = vmatpush1.bf16.msra.mxu0 %v1636
    %1640 = vmatprep.subr.bf16.mxu0 0
    %1641 = vmatpush1.bf16.msra.mxu0 0
    %1642 = vmatprep.subr.bf16.mxu0 0
    %1643 = vmatpush1.bf16.msra.mxu0 0
    %1644 = vmatprep.subr.bf16.mxu0 0
    %1645 = vmatpush1.bf16.msra.mxu0 0
    %1646 = vmatprep.subr.bf16.mxu0 0
    %1647 = vmatpush1.bf16.msra.mxu0 0
    %1648 = vmatprep.subr.bf16.mxu0 0
    %1649 = vmatpush1.bf16.msra.mxu0 0
    %1650 = vmatprep.subr.bf16.mxu0 0
    %1651 = vmatpush1.bf16.msra.mxu0 0
    %1652 = vmatprep.subr.bf16.mxu0 0
    %1653 = vmatpush1.bf16.msra.mxu0 0
    %1654 = vmatprep.subr.bf16.mxu0 0
    %1655 = vmatpush1.bf16.msra.mxu0 0
    %1656 = vmatprep.subr.bf16.mxu0 0
    %1657 = vmatpush1.bf16.msra.mxu0 0
    %1658 = vmatprep.subr.bf16.mxu0 0
    %1659 = vmatpush1.bf16.msra.mxu0 0
    %1660 = vmatprep.subr.bf16.mxu0 0
    %1661 = vmatpush1.bf16.msra.mxu0 0
    %1662 = vmatprep.subr.bf16.mxu0 0
    %1663 = vmatpush1.bf16.msra.mxu0 0
    %1664 = vmatprep.subr.bf16.mxu0 0
    %1665 = vmatpush1.bf16.msra.mxu0 0
    %1666 = vmatprep.subr.bf16.mxu0 0
    %1667 = vmatpush1.bf16.msra.mxu0 0
    %1668 = vmatprep.subr.bf16.mxu0 0
    %1669 = vmatpush1.bf16.msra.mxu0 0
    %1670 = vmatprep.mubr.bf16.mxu0 0
    %1671 = vmatmul.mubr.bf16.gmra.mrb[0].mxu0 %v1634
    %v1672 = vpop.f32.mrb[0].mxu0
    %v1673 = vadd.f32 0.0, %v1672
    %v1674 = vpop.f32.mrb[0].mxu0
    %v1675 = vpop.f32.mrb[0].mxu0
    %v1676 = vpop.f32.mrb[0].mxu0
    %1677 = vdwg.mxu0
    %v1679 = vsel %vm421, %v1632, 0
    %v1681 = vsel %vm433, %v1533, 0
    %1683 = vmatprep.subr.bf16.mxu0 0
    %1684 = vmatpush1.bf16.msra.mxu0 %v1681
    %1685 = vmatprep.subr.bf16.mxu0 0
    %1686 = vmatpush1.bf16.msra.mxu0 0
    %1687 = vmatprep.subr.bf16.mxu0 0
    %1688 = vmatpush1.bf16.msra.mxu0 0
    %1689 = vmatprep.subr.bf16.mxu0 0
    %1690 = vmatpush1.bf16.msra.mxu0 0
    %1691 = vmatprep.subr.bf16.mxu0 0
    %1692 = vmatpush1.bf16.msra.mxu0 0
    %1693 = vmatprep.subr.bf16.mxu0 0
    %1694 = vmatpush1.bf16.msra.mxu0 0
    %1695 = vmatprep.subr.bf16.mxu0 0
    %1696 = vmatpush1.bf16.msra.mxu0 0
    %1697 = vmatprep.subr.bf16.mxu0 0
    %1698 = vmatpush1.bf16.msra.mxu0 0
    %1699 = vmatprep.subr.bf16.mxu0 0
    %1700 = vmatpush1.bf16.msra.mxu0 0
    %1701 = vmatprep.subr.bf16.mxu0 0
    %1702 = vmatpush1.bf16.msra.mxu0 0
    %1703 = vmatprep.subr.bf16.mxu0 0
    %1704 = vmatpush1.bf16.msra.mxu0 0
    %1705 = vmatprep.subr.bf16.mxu0 0
    %1706 = vmatpush1.bf16.msra.mxu0 0
    %1707 = vmatprep.subr.bf16.mxu0 0
    %1708 = vmatpush1.bf16.msra.mxu0 0
    %1709 = vmatprep.subr.bf16.mxu0 0
    %1710 = vmatpush1.bf16.msra.mxu0 0
    %1711 = vmatprep.subr.bf16.mxu0 0
    %1712 = vmatpush1.bf16.msra.mxu0 0
    %1713 = vmatprep.subr.bf16.mxu0 0
    %1714 = vmatpush1.bf16.msra.mxu0 0
    %1715 = vmatprep.mubr.bf16.mxu0 0
    %1716 = vmatmul.mubr.bf16.gmra.mrb[0].mxu0 %v1679
    %v1717 = vpop.f32.mrb[0].mxu0
    %v1718 = vadd.f32 0.0, %v1717
    %v1719 = vpop.f32.mrb[0].mxu0
    %v1720 = vpop.f32.mrb[0].mxu0
    %v1721 = vpop.f32.mrb[0].mxu0
    %1722 = vdwg.mxu0
    %v1723 = vrcp.pop %v1627
    %v1724 = vrcp.pop %v1630
    %v1725 = vmul.f32 %v1673, %v1723
    %v1726 = vmul.f32 %v1718, %v1724
    %1727 = vrot.lane.b32.xlu0 %v276, 104
    %v1728 = vpop.permute.xlu0 %1727
    %v1730 = vsel %vm280, %v1728, 0
    %1732 = vmatprep.subr.bf16.mxu0 0
    %1733 = vmatpush1.bf16.xpose.msra.mxu0 %v1730
    %1734 = vmatprep.subr.bf16.mxu0 0
    %1735 = vmatpush1.bf16.xpose.msra.mxu0 0
    %1736 = vmatprep.subr.bf16.mxu0 0
    %1737 = vmatpush1.bf16.xpose.msra.mxu0 0
    %1738 = vmatprep.subr.bf16.mxu0 0
    %1739 = vmatpush1.bf16.xpose.msra.mxu0 0
    %1740 = vmatprep.subr.bf16.mxu0 0
    %1741 = vmatpush1.bf16.xpose.msra.mxu0 0
    %1742 = vmatprep.subr.bf16.mxu0 0
    %1743 = vmatpush1.bf16.xpose.msra.mxu0 0
    %1744 = vmatprep.subr.bf16.mxu0 0
    %1745 = vmatpush1.bf16.xpose.msra.mxu0 0
    %1746 = vmatprep.subr.bf16.mxu0 0
    %1747 = vmatpush1.bf16.xpose.msra.mxu0 0
    %1748 = vmatprep.subr.bf16.mxu0 0
    %1749 = vmatpush1.bf16.xpose.msra.mxu0 0
    %1750 = vmatprep.subr.bf16.mxu0 0
    %1751 = vmatpush1.bf16.xpose.msra.mxu0 0
    %1752 = vmatprep.subr.bf16.mxu0 0
    %1753 = vmatpush1.bf16.xpose.msra.mxu0 0
    %1754 = vmatprep.subr.bf16.mxu0 0
    %1755 = vmatpush1.bf16.xpose.msra.mxu0 0
    %1756 = vmatprep.subr.bf16.mxu0 0
    %1757 = vmatpush1.bf16.xpose.msra.mxu0 0
    %1758 = vmatprep.subr.bf16.mxu0 0
    %1759 = vmatpush1.bf16.xpose.msra.mxu0 0
    %1760 = vmatprep.subr.bf16.mxu0 0
    %1761 = vmatpush1.bf16.xpose.msra.mxu0 0
    %1762 = vmatprep.subr.bf16.mxu0 0
    %1763 = vmatpush1.bf16.xpose.msra.mxu0 0
    %1764 = vmatprep.mubr.bf16.mxu0 0
    %1765 = vmatmul.mubr.bf16.gmra.mrb[0].mxu0 %v1730
    %v1766 = vpop.f32.mrb[0].mxu0
    %v1767 = vadd.f32 0.0, %v1766
    %v1768 = vpop.f32.mrb[0].mxu0
    %v1769 = vpop.f32.mrb[0].mxu0
    %v1770 = vpop.f32.mrb[0].mxu0
    %1771 = vdwg.mxu0
    %1772 = vrot.lane.b32.xlu0 %v277, 104
    %v1773 = vpop.permute.xlu0 %1772
    %v1775 = vsel %vm280, %v1773, 0
    %1777 = vmatprep.subr.bf16.mxu0 0
    %1778 = vmatpush1.bf16.xpose.msra.mxu0 %v1775
    %1779 = vmatprep.subr.bf16.mxu0 0
    %1780 = vmatpush1.bf16.xpose.msra.mxu0 0
    %1781 = vmatprep.subr.bf16.mxu0 0
    %1782 = vmatpush1.bf16.xpose.msra.mxu0 0
    %1783 = vmatprep.subr.bf16.mxu0 0
    %1784 = vmatpush1.bf16.xpose.msra.mxu0 0
    %1785 = vmatprep.subr.bf16.mxu0 0
    %1786 = vmatpush1.bf16.xpose.msra.mxu0 0
    %1787 = vmatprep.subr.bf16.mxu0 0
    %1788 = vmatpush1.bf16.xpose.msra.mxu0 0
    %1789 = vmatprep.subr.bf16.mxu0 0
    %1790 = vmatpush1.bf16.xpose.msra.mxu0 0
    %1791 = vmatprep.subr.bf16.mxu0 0
    %1792 = vmatpush1.bf16.xpose.msra.mxu0 0
    %1793 = vmatprep.subr.bf16.mxu0 0
    %1794 = vmatpush1.bf16.xpose.msra.mxu0 0
    %1795 = vmatprep.subr.bf16.mxu0 0
    %1796 = vmatpush1.bf16.xpose.msra.mxu0 0
    %1797 = vmatprep.subr.bf16.mxu0 0
    %1798 = vmatpush1.bf16.xpose.msra.mxu0 0
    %1799 = vmatprep.subr.bf16.mxu0 0
    %1800 = vmatpush1.bf16.xpose.msra.mxu0 0
    %1801 = vmatprep.subr.bf16.mxu0 0
    %1802 = vmatpush1.bf16.xpose.msra.mxu0 0
    %1803 = vmatprep.subr.bf16.mxu0 0
    %1804 = vmatpush1.bf16.xpose.msra.mxu0 0
    %1805 = vmatprep.subr.bf16.mxu0 0
    %1806 = vmatpush1.bf16.xpose.msra.mxu0 0
    %1807 = vmatprep.subr.bf16.mxu0 0
    %1808 = vmatpush1.bf16.xpose.msra.mxu0 0
    %1809 = vmatprep.mubr.bf16.mxu0 0
    %1810 = vmatmul.mubr.bf16.gmra.mrb[0].mxu0 %v1775
    %v1811 = vpop.f32.mrb[0].mxu0
    %v1812 = vadd.f32 0.0, %v1811
    %v1813 = vpop.f32.mrb[0].mxu0
    %v1814 = vpop.f32.mrb[0].mxu0
    %v1815 = vpop.f32.mrb[0].mxu0
    %1816 = vdwg.mxu0
    %1817 = vrot.lane.b32.xlu0 %v369, 104
    %v1818 = vpop.permute.xlu0 %1817
    %1819 = vrot.lane.b32.xlu0 %v370, 104
    %v1820 = vpop.permute.xlu0 %1819
    %v1823 = vsel %vm280, %v1818, 0.0
    %1824 = vadd.xlane.f32.xlu0 %v1823
    %v1825 = vpop.xlane.xlu0 %1824
    %v1826 = vsel %vm280, %v1820, 0.0
    %1827 = vadd.xlane.f32.xlu0 %v1826
    %v1828 = vpop.xlane.xlu0 %1827
    %v1829 = vmul.f32 %v1767, 2.0
    %v1830 = vmul.f32 %v1812, 2.0
    %v1833 = vlaneseq
    %v1834 = vshrl.u32 %v1833, 7
    %v1835 = vsub.s32 %v382, %v1834
    %v1836 = vrot.slane %v1825, %v1835
    %v1837 = vlaneseq
    %v1838 = vshrl.u32 %v1837, 7
    %v1839 = vsub.s32 %v382, %v1838
    %v1840 = vrot.slane %v1828, %v1839
    %v1841 = vsel %vm391, %v1836, %v1836
    %v1842 = vsel %vm393, %v1836, %v1841
    %v1843 = vsel %vm395, %v1836, %v1842
    %v1844 = vsel %vm397, %v1836, %v1843
    %v1845 = vsel %vm399, %v1836, %v1844
    %v1846 = vsel %vm401, %v1836, %v1845
    %v1847 = vsel %vm391, %v1840, %v1840
    %v1848 = vsel %vm393, %v1840, %v1847
    %v1849 = vsel %vm395, %v1840, %v1848
    %v1850 = vsel %vm397, %v1840, %v1849
    %v1851 = vsel %vm399, %v1840, %v1850
    %v1852 = vsel %vm401, %v1840, %v1851
    %v1855 = vsub.f32 %v1829, %v1846
    %v1856 = vsub.f32 %v1830, %v1852
    %v1857 = vsub.f32 %v1855, %v1825
    %v1858 = vsub.f32 %v1856, %v1828
    %v1859 = vmul.f32 %v1857, 0.5
    %v1860 = vmul.f32 %v1858, 0.5
    %v1861 = vmul.f32 %v1859, 1.442695
    %v1862 = vpow.pop %v1861
    %v1863 = vmul.f32 %v1860, 1.442695
    %v1864 = vpow.pop %v1863
    %v1865 = vsel %vm421, %v1862, 0.0
    %1866 = vadd.xlane.f32.xlu0 %v1865
    %v1867 = vpop.xlane.xlu0 %1866
    %v1868 = vsel %vm421, %v1864, 0.0
    %1869 = vadd.xlane.f32.xlu0 %v1868
    %v1870 = vpop.xlane.xlu0 %1869
    %v1871 = vpack.c.bf16 %v1862, %v1862
    %v1872 = vpack.c.bf16 %v1864, %v1864
    %v1874 = vsel %vm421, %v1871, 0
    %v1876 = vsel %vm433, %v1728, 0
    %1878 = vmatprep.subr.bf16.mxu0 0
    %1879 = vmatpush1.bf16.msra.mxu0 %v1876
    %1880 = vmatprep.subr.bf16.mxu0 0
    %1881 = vmatpush1.bf16.msra.mxu0 0
    %1882 = vmatprep.subr.bf16.mxu0 0
    %1883 = vmatpush1.bf16.msra.mxu0 0
    %1884 = vmatprep.subr.bf16.mxu0 0
    %1885 = vmatpush1.bf16.msra.mxu0 0
    %1886 = vmatprep.subr.bf16.mxu0 0
    %1887 = vmatpush1.bf16.msra.mxu0 0
    %1888 = vmatprep.subr.bf16.mxu0 0
    %1889 = vmatpush1.bf16.msra.mxu0 0
    %1890 = vmatprep.subr.bf16.mxu0 0
    %1891 = vmatpush1.bf16.msra.mxu0 0
    %1892 = vmatprep.subr.bf16.mxu0 0
    %1893 = vmatpush1.bf16.msra.mxu0 0
    %1894 = vmatprep.subr.bf16.mxu0 0
    %1895 = vmatpush1.bf16.msra.mxu0 0
    %1896 = vmatprep.subr.bf16.mxu0 0
    %1897 = vmatpush1.bf16.msra.mxu0 0
    %1898 = vmatprep.subr.bf16.mxu0 0
    %1899 = vmatpush1.bf16.msra.mxu0 0
    %1900 = vmatprep.subr.bf16.mxu0 0
    %1901 = vmatpush1.bf16.msra.mxu0 0
    %1902 = vmatprep.subr.bf16.mxu0 0
    %1903 = vmatpush1.bf16.msra.mxu0 0
    %1904 = vmatprep.subr.bf16.mxu0 0
    %1905 = vmatpush1.bf16.msra.mxu0 0
    %1906 = vmatprep.subr.bf16.mxu0 0
    %1907 = vmatpush1.bf16.msra.mxu0 0
    %1908 = vmatprep.subr.bf16.mxu0 0
    %1909 = vmatpush1.bf16.msra.mxu0 0
    %1910 = vmatprep.mubr.bf16.mxu0 0
    %1911 = vmatmul.mubr.bf16.gmra.mrb[0].mxu0 %v1874
    %v1912 = vpop.f32.mrb[0].mxu0
    %v1913 = vadd.f32 0.0, %v1912
    %v1914 = vpop.f32.mrb[0].mxu0
    %v1915 = vpop.f32.mrb[0].mxu0
    %v1916 = vpop.f32.mrb[0].mxu0
    %1917 = vdwg.mxu0
    %v1919 = vsel %vm421, %v1872, 0
    %v1921 = vsel %vm433, %v1773, 0
    %1923 = vmatprep.subr.bf16.mxu0 0
    %1924 = vmatpush1.bf16.msra.mxu0 %v1921
    %1925 = vmatprep.subr.bf16.mxu0 0
    %1926 = vmatpush1.bf16.msra.mxu0 0
    %1927 = vmatprep.subr.bf16.mxu0 0
    %1928 = vmatpush1.bf16.msra.mxu0 0
    %1929 = vmatprep.subr.bf16.mxu0 0
    %1930 = vmatpush1.bf16.msra.mxu0 0
    %1931 = vmatprep.subr.bf16.mxu0 0
    %1932 = vmatpush1.bf16.msra.mxu0 0
    %1933 = vmatprep.subr.bf16.mxu0 0
    %1934 = vmatpush1.bf16.msra.mxu0 0
    %1935 = vmatprep.subr.bf16.mxu0 0
    %1936 = vmatpush1.bf16.msra.mxu0 0
    %1937 = vmatprep.subr.bf16.mxu0 0
    %1938 = vmatpush1.bf16.msra.mxu0 0
    %1939 = vmatprep.subr.bf16.mxu0 0
    %1940 = vmatpush1.bf16.msra.mxu0 0
    %1941 = vmatprep.subr.bf16.mxu0 0
    %1942 = vmatpush1.bf16.msra.mxu0 0
    %1943 = vmatprep.subr.bf16.mxu0 0
    %1944 = vmatpush1.bf16.msra.mxu0 0
    %1945 = vmatprep.subr.bf16.mxu0 0
    %1946 = vmatpush1.bf16.msra.mxu0 0
    %1947 = vmatprep.subr.bf16.mxu0 0
    %1948 = vmatpush1.bf16.msra.mxu0 0
    %1949 = vmatprep.subr.bf16.mxu0 0
    %1950 = vmatpush1.bf16.msra.mxu0 0
    %1951 = vmatprep.subr.bf16.mxu0 0
    %1952 = vmatpush1.bf16.msra.mxu0 0
    %1953 = vmatprep.subr.bf16.mxu0 0
    %1954 = vmatpush1.bf16.msra.mxu0 0
    %1955 = vmatprep.mubr.bf16.mxu0 0
    %1956 = vmatmul.mubr.bf16.gmra.mrb[0].mxu0 %v1919
    %v1957 = vpop.f32.mrb[0].mxu0
    %v1958 = vadd.f32 0.0, %v1957
    %v1959 = vpop.f32.mrb[0].mxu0
    %v1960 = vpop.f32.mrb[0].mxu0
    %v1961 = vpop.f32.mrb[0].mxu0
    %1962 = vdwg.mxu0
    %v1963 = vrcp.pop %v1867
    %v1964 = vrcp.pop %v1870
    %v1965 = vmul.f32 %v1913, %v1963
    %v1966 = vmul.f32 %v1958, %v1964
    %1967 = vrot.lane.b32.xlu0 %v276, 100
    %v1968 = vpop.permute.xlu0 %1967
    %v1970 = vsel %vm280, %v1968, 0
    %1972 = vmatprep.subr.bf16.mxu0 0
    %1973 = vmatpush1.bf16.xpose.msra.mxu0 %v1970
    %1974 = vmatprep.subr.bf16.mxu0 0
    %1975 = vmatpush1.bf16.xpose.msra.mxu0 0
    %1976 = vmatprep.subr.bf16.mxu0 0
    %1977 = vmatpush1.bf16.xpose.msra.mxu0 0
    %1978 = vmatprep.subr.bf16.mxu0 0
    %1979 = vmatpush1.bf16.xpose.msra.mxu0 0
    %1980 = vmatprep.subr.bf16.mxu0 0
    %1981 = vmatpush1.bf16.xpose.msra.mxu0 0
    %1982 = vmatprep.subr.bf16.mxu0 0
    %1983 = vmatpush1.bf16.xpose.msra.mxu0 0
    %1984 = vmatprep.subr.bf16.mxu0 0
    %1985 = vmatpush1.bf16.xpose.msra.mxu0 0
    %1986 = vmatprep.subr.bf16.mxu0 0
    %1987 = vmatpush1.bf16.xpose.msra.mxu0 0
    %1988 = vmatprep.subr.bf16.mxu0 0
    %1989 = vmatpush1.bf16.xpose.msra.mxu0 0
    %1990 = vmatprep.subr.bf16.mxu0 0
    %1991 = vmatpush1.bf16.xpose.msra.mxu0 0
    %1992 = vmatprep.subr.bf16.mxu0 0
    %1993 = vmatpush1.bf16.xpose.msra.mxu0 0
    %1994 = vmatprep.subr.bf16.mxu0 0
    %1995 = vmatpush1.bf16.xpose.msra.mxu0 0
    %1996 = vmatprep.subr.bf16.mxu0 0
    %1997 = vmatpush1.bf16.xpose.msra.mxu0 0
    %1998 = vmatprep.subr.bf16.mxu0 0
    %1999 = vmatpush1.bf16.xpose.msra.mxu0 0
    %2000 = vmatprep.subr.bf16.mxu0 0
    %2001 = vmatpush1.bf16.xpose.msra.mxu0 0
    %2002 = vmatprep.subr.bf16.mxu0 0
    %2003 = vmatpush1.bf16.xpose.msra.mxu0 0
    %2004 = vmatprep.mubr.bf16.mxu0 0
    %2005 = vmatmul.mubr.bf16.gmra.mrb[0].mxu0 %v1970
    %v2006 = vpop.f32.mrb[0].mxu0
    %v2007 = vadd.f32 0.0, %v2006
    %v2008 = vpop.f32.mrb[0].mxu0
    %v2009 = vpop.f32.mrb[0].mxu0
    %v2010 = vpop.f32.mrb[0].mxu0
    %2011 = vdwg.mxu0
    %2012 = vrot.lane.b32.xlu0 %v277, 100
    %v2013 = vpop.permute.xlu0 %2012
    %v2015 = vsel %vm280, %v2013, 0
    %2017 = vmatprep.subr.bf16.mxu0 0
    %2018 = vmatpush1.bf16.xpose.msra.mxu0 %v2015
    %2019 = vmatprep.subr.bf16.mxu0 0
    %2020 = vmatpush1.bf16.xpose.msra.mxu0 0
    %2021 = vmatprep.subr.bf16.mxu0 0
    %2022 = vmatpush1.bf16.xpose.msra.mxu0 0
    %2023 = vmatprep.subr.bf16.mxu0 0
    %2024 = vmatpush1.bf16.xpose.msra.mxu0 0
    %2025 = vmatprep.subr.bf16.mxu0 0
    %2026 = vmatpush1.bf16.xpose.msra.mxu0 0
    %2027 = vmatprep.subr.bf16.mxu0 0
    %2028 = vmatpush1.bf16.xpose.msra.mxu0 0
    %2029 = vmatprep.subr.bf16.mxu0 0
    %2030 = vmatpush1.bf16.xpose.msra.mxu0 0
    %2031 = vmatprep.subr.bf16.mxu0 0
    %2032 = vmatpush1.bf16.xpose.msra.mxu0 0
    %2033 = vmatprep.subr.bf16.mxu0 0
    %2034 = vmatpush1.bf16.xpose.msra.mxu0 0
    %2035 = vmatprep.subr.bf16.mxu0 0
    %2036 = vmatpush1.bf16.xpose.msra.mxu0 0
    %2037 = vmatprep.subr.bf16.mxu0 0
    %2038 = vmatpush1.bf16.xpose.msra.mxu0 0
    %2039 = vmatprep.subr.bf16.mxu0 0
    %2040 = vmatpush1.bf16.xpose.msra.mxu0 0
    %2041 = vmatprep.subr.bf16.mxu0 0
    %2042 = vmatpush1.bf16.xpose.msra.mxu0 0
    %2043 = vmatprep.subr.bf16.mxu0 0
    %2044 = vmatpush1.bf16.xpose.msra.mxu0 0
    %2045 = vmatprep.subr.bf16.mxu0 0
    %2046 = vmatpush1.bf16.xpose.msra.mxu0 0
    %2047 = vmatprep.subr.bf16.mxu0 0
    %2048 = vmatpush1.bf16.xpose.msra.mxu0 0
    %2049 = vmatprep.mubr.bf16.mxu0 0
    %2050 = vmatmul.mubr.bf16.gmra.mrb[0].mxu0 %v2015
    %v2051 = vpop.f32.mrb[0].mxu0
    %v2052 = vadd.f32 0.0, %v2051
    %v2053 = vpop.f32.mrb[0].mxu0
    %v2054 = vpop.f32.mrb[0].mxu0
    %v2055 = vpop.f32.mrb[0].mxu0
    %2056 = vdwg.mxu0
    %2057 = vrot.lane.b32.xlu0 %v369, 100
    %v2058 = vpop.permute.xlu0 %2057
    %2059 = vrot.lane.b32.xlu0 %v370, 100
    %v2060 = vpop.permute.xlu0 %2059
    %v2063 = vsel %vm280, %v2058, 0.0
    %2064 = vadd.xlane.f32.xlu0 %v2063
    %v2065 = vpop.xlane.xlu0 %2064
    %v2066 = vsel %vm280, %v2060, 0.0
    %2067 = vadd.xlane.f32.xlu0 %v2066
    %v2068 = vpop.xlane.xlu0 %2067
    %v2069 = vmul.f32 %v2007, 2.0
    %v2070 = vmul.f32 %v2052, 2.0
    %v2073 = vlaneseq
    %v2074 = vshrl.u32 %v2073, 7
    %v2075 = vsub.s32 %v382, %v2074
    %v2076 = vrot.slane %v2065, %v2075
    %v2077 = vlaneseq
    %v2078 = vshrl.u32 %v2077, 7
    %v2079 = vsub.s32 %v382, %v2078
    %v2080 = vrot.slane %v2068, %v2079
    %v2081 = vsel %vm391, %v2076, %v2076
    %v2082 = vsel %vm393, %v2076, %v2081
    %v2083 = vsel %vm395, %v2076, %v2082
    %v2084 = vsel %vm397, %v2076, %v2083
    %v2085 = vsel %vm399, %v2076, %v2084
    %v2086 = vsel %vm401, %v2076, %v2085
    %v2087 = vsel %vm391, %v2080, %v2080
    %v2088 = vsel %vm393, %v2080, %v2087
    %v2089 = vsel %vm395, %v2080, %v2088
    %v2090 = vsel %vm397, %v2080, %v2089
    %v2091 = vsel %vm399, %v2080, %v2090
    %v2092 = vsel %vm401, %v2080, %v2091
    %v2095 = vsub.f32 %v2069, %v2086
    %v2096 = vsub.f32 %v2070, %v2092
    %v2097 = vsub.f32 %v2095, %v2065
    %v2098 = vsub.f32 %v2096, %v2068
    %v2099 = vmul.f32 %v2097, 0.5
    %v2100 = vmul.f32 %v2098, 0.5
    %v2101 = vmul.f32 %v2099, 1.442695
    %v2102 = vpow.pop %v2101
    %v2103 = vmul.f32 %v2100, 1.442695
    %v2104 = vpow.pop %v2103
    %v2105 = vsel %vm421, %v2102, 0.0
    %2106 = vadd.xlane.f32.xlu0 %v2105
    %v2107 = vpop.xlane.xlu0 %2106
    %v2108 = vsel %vm421, %v2104, 0.0
    %2109 = vadd.xlane.f32.xlu0 %v2108
    %v2110 = vpop.xlane.xlu0 %2109
    %v2111 = vpack.c.bf16 %v2102, %v2102
    %v2112 = vpack.c.bf16 %v2104, %v2104
    %v2114 = vsel %vm421, %v2111, 0
    %v2116 = vsel %vm433, %v1968, 0
    %2118 = vmatprep.subr.bf16.mxu0 0
    %2119 = vmatpush1.bf16.msra.mxu0 %v2116
    %2120 = vmatprep.subr.bf16.mxu0 0
    %2121 = vmatpush1.bf16.msra.mxu0 0
    %2122 = vmatprep.subr.bf16.mxu0 0
    %2123 = vmatpush1.bf16.msra.mxu0 0
    %2124 = vmatprep.subr.bf16.mxu0 0
    %2125 = vmatpush1.bf16.msra.mxu0 0
    %2126 = vmatprep.subr.bf16.mxu0 0
    %2127 = vmatpush1.bf16.msra.mxu0 0
    %2128 = vmatprep.subr.bf16.mxu0 0
    %2129 = vmatpush1.bf16.msra.mxu0 0
    %2130 = vmatprep.subr.bf16.mxu0 0
    %2131 = vmatpush1.bf16.msra.mxu0 0
    %2132 = vmatprep.subr.bf16.mxu0 0
    %2133 = vmatpush1.bf16.msra.mxu0 0
    %2134 = vmatprep.subr.bf16.mxu0 0
    %2135 = vmatpush1.bf16.msra.mxu0 0
    %2136 = vmatprep.subr.bf16.mxu0 0
    %2137 = vmatpush1.bf16.msra.mxu0 0
    %2138 = vmatprep.subr.bf16.mxu0 0
    %2139 = vmatpush1.bf16.msra.mxu0 0
    %2140 = vmatprep.subr.bf16.mxu0 0
    %2141 = vmatpush1.bf16.msra.mxu0 0
    %2142 = vmatprep.subr.bf16.mxu0 0
    %2143 = vmatpush1.bf16.msra.mxu0 0
    %2144 = vmatprep.subr.bf16.mxu0 0
    %2145 = vmatpush1.bf16.msra.mxu0 0
    %2146 = vmatprep.subr.bf16.mxu0 0
    %2147 = vmatpush1.bf16.msra.mxu0 0
    %2148 = vmatprep.subr.bf16.mxu0 0
    %2149 = vmatpush1.bf16.msra.mxu0 0
    %2150 = vmatprep.mubr.bf16.mxu0 0
    %2151 = vmatmul.mubr.bf16.gmra.mrb[0].mxu0 %v2114
    %v2152 = vpop.f32.mrb[0].mxu0
    %v2153 = vadd.f32 0.0, %v2152
    %v2154 = vpop.f32.mrb[0].mxu0
    %v2155 = vpop.f32.mrb[0].mxu0
    %v2156 = vpop.f32.mrb[0].mxu0
    %2157 = vdwg.mxu0
    %v2159 = vsel %vm421, %v2112, 0
    %v2161 = vsel %vm433, %v2013, 0
    %2163 = vmatprep.subr.bf16.mxu0 0
    %2164 = vmatpush1.bf16.msra.mxu0 %v2161
    %2165 = vmatprep.subr.bf16.mxu0 0
    %2166 = vmatpush1.bf16.msra.mxu0 0
    %2167 = vmatprep.subr.bf16.mxu0 0
    %2168 = vmatpush1.bf16.msra.mxu0 0
    %2169 = vmatprep.subr.bf16.mxu0 0
    %2170 = vmatpush1.bf16.msra.mxu0 0
    %2171 = vmatprep.subr.bf16.mxu0 0
    %2172 = vmatpush1.bf16.msra.mxu0 0
    %2173 = vmatprep.subr.bf16.mxu0 0
    %2174 = vmatpush1.bf16.msra.mxu0 0
    %2175 = vmatprep.subr.bf16.mxu0 0
    %2176 = vmatpush1.bf16.msra.mxu0 0
    %2177 = vmatprep.subr.bf16.mxu0 0
    %2178 = vmatpush1.bf16.msra.mxu0 0
    %2179 = vmatprep.subr.bf16.mxu0 0
    %2180 = vmatpush1.bf16.msra.mxu0 0
    %2181 = vmatprep.subr.bf16.mxu0 0
    %2182 = vmatpush1.bf16.msra.mxu0 0
    %2183 = vmatprep.subr.bf16.mxu0 0
    %2184 = vmatpush1.bf16.msra.mxu0 0
    %2185 = vmatprep.subr.bf16.mxu0 0
    %2186 = vmatpush1.bf16.msra.mxu0 0
    %2187 = vmatprep.subr.bf16.mxu0 0
    %2188 = vmatpush1.bf16.msra.mxu0 0
    %2189 = vmatprep.subr.bf16.mxu0 0
    %2190 = vmatpush1.bf16.msra.mxu0 0
    %2191 = vmatprep.subr.bf16.mxu0 0
    %2192 = vmatpush1.bf16.msra.mxu0 0
    %2193 = vmatprep.subr.bf16.mxu0 0
    %2194 = vmatpush1.bf16.msra.mxu0 0
    %2195 = vmatprep.mubr.bf16.mxu0 0
    %2196 = vmatmul.mubr.bf16.gmra.mrb[0].mxu0 %v2159
    %v2197 = vpop.f32.mrb[0].mxu0
    %v2198 = vadd.f32 0.0, %v2197
    %v2199 = vpop.f32.mrb[0].mxu0
    %v2200 = vpop.f32.mrb[0].mxu0
    %v2201 = vpop.f32.mrb[0].mxu0
    %2202 = vdwg.mxu0
    %v2203 = vrcp.pop %v2107
    %v2204 = vrcp.pop %v2110
    %v2205 = vmul.f32 %v2153, %v2203
    %v2206 = vmul.f32 %v2198, %v2204
    %2209 = vrot.lane.b32.xlu0 %v765, 4
    %v2210 = vpop.permute.xlu0 %2209
    %2211 = vrot.lane.b32.xlu0 %v766, 4
    %v2212 = vpop.permute.xlu0 %2211
    %2217 = vrot.lane.b32.xlu0 %v1005, 8
    %v2218 = vpop.permute.xlu0 %2217
    %2219 = vrot.lane.b32.xlu0 %v1006, 8
    %v2220 = vpop.permute.xlu0 %2219
    %2225 = vrot.lane.b32.xlu0 %v1245, 12
    %v2226 = vpop.permute.xlu0 %2225
    %2227 = vrot.lane.b32.xlu0 %v1246, 12
    %v2228 = vpop.permute.xlu0 %2227
    %2233 = vrot.lane.b32.xlu0 %v1485, 16
    %v2234 = vpop.permute.xlu0 %2233
    %2235 = vrot.lane.b32.xlu0 %v1486, 16
    %v2236 = vpop.permute.xlu0 %2235
    %2241 = vrot.lane.b32.xlu0 %v1725, 20
    %v2242 = vpop.permute.xlu0 %2241
    %2243 = vrot.lane.b32.xlu0 %v1726, 20
    %v2244 = vpop.permute.xlu0 %2243
    %2249 = vrot.lane.b32.xlu0 %v1965, 24
    %v2250 = vpop.permute.xlu0 %2249
    %2251 = vrot.lane.b32.xlu0 %v1966, 24
    %v2252 = vpop.permute.xlu0 %2251
    %2257 = vrot.lane.b32.xlu0 %v2205, 28
    %v2258 = vpop.permute.xlu0 %2257
    %2259 = vrot.lane.b32.xlu0 %v2206, 28
    %v2260 = vpop.permute.xlu0 %2259
    %v2263 = vsel %vm280, %v523, %v2210
    %v2264 = vsel %vm280, %v524, %v2212
    %v2265 = vsel %vm421, %v2263, %v2218
    %v2266 = vsel %vm421, %v2264, %v2220
    %vm2267 = vcmask 97280
    %v2268 = vsel %vm2267, %v2265, %v2226
    %v2269 = vsel %vm2267, %v2266, %v2228
    %v2270 = vsel %vm165, %v2268, %v2234
    %v2271 = vsel %vm165, %v2269, %v2236
    %vm2272 = vcmask 162816
    %v2273 = vsel %vm2272, %v2270, %v2242
    %v2274 = vsel %vm2272, %v2271, %v2244
    %vm2275 = vcmask 195584
    %v2276 = vsel %vm2275, %v2273, %v2250
    %v2277 = vsel %vm2275, %v2274, %v2252
    %vm2278 = vcmask 228352
    %v2279 = vsel %vm2278, %v2276, %v2258
    %v2280 = vsel %vm2278, %v2277, %v2260
    %v2281 = vpack.c.bf16 %v2280, %v2279
    %v2282 = vld [vmem:[%s4] sm:$0xf]
    %v2283 = vld [vmem:[%s4 + $0x4] sm:$0xf]
    %v2284 = vld [vmem:[%s4 + $0x8] sm:$0xf]
    %v2285 = vld [vmem:[%s4 + $0xc] sm:$0xf]
    %v2286 = vld [vmem:[#allocation4] sm:$0x1]
    %v2288 = vlaneseq
    %v2289 = vshrl.u32 %v2288, 7
    %v2290 = vsub.s32 0, %v2289
    %v2291 = vrot.slane %v2286, %v2290
    %v2297 = vunpack.c.l.b16 %v2282
    %v2298 = vunpack.c.l.b16 %v2283
    %v2299 = vunpack.c.l.b16 %v2284
    %v2300 = vunpack.c.l.b16 %v2285
    %v2301 = vpack.c.b16 %v2298, %v2297
    %v2302 = vpack.c.b16 %v2300, %v2299
    %v2306 = vsel %vm227, %v2281, 0
    %2308 = vmatprep.subr.bf16.mxu0 0
    %2309 = vmatpush1.bf16.msra.mxu0 %v2301
    %2310 = vmatprep.subr.bf16.mxu0 0
    %2311 = vmatpush1.bf16.msra.mxu0 %v2302
    %2312 = vmatprep.subr.bf16.mxu0 0
    %2313 = vmatpush1.bf16.msra.mxu0 0
    %2314 = vmatprep.subr.bf16.mxu0 0
    %2315 = vmatpush1.bf16.msra.mxu0 0
    %2316 = vmatprep.subr.bf16.mxu0 0
    %2317 = vmatpush1.bf16.msra.mxu0 0
    %2318 = vmatprep.subr.bf16.mxu0 0
    %2319 = vmatpush1.bf16.msra.mxu0 0
    %2320 = vmatprep.subr.bf16.mxu0 0
    %2321 = vmatpush1.bf16.msra.mxu0 0
    %2322 = vmatprep.subr.bf16.mxu0 0
    %2323 = vmatpush1.bf16.msra.mxu0 0
    %2324 = vmatprep.subr.bf16.mxu0 0
    %2325 = vmatpush1.bf16.msra.mxu0 0
    %2326 = vmatprep.subr.bf16.mxu0 0
    %2327 = vmatpush1.bf16.msra.mxu0 0
    %2328 = vmatprep.subr.bf16.mxu0 0
    %2329 = vmatpush1.bf16.msra.mxu0 0
    %2330 = vmatprep.subr.bf16.mxu0 0
    %2331 = vmatpush1.bf16.msra.mxu0 0
    %2332 = vmatprep.subr.bf16.mxu0 0
    %2333 = vmatpush1.bf16.msra.mxu0 0
    %2334 = vmatprep.subr.bf16.mxu0 0
    %2335 = vmatpush1.bf16.msra.mxu0 0
    %2336 = vmatprep.subr.bf16.mxu0 0
    %2337 = vmatpush1.bf16.msra.mxu0 0
    %2338 = vmatprep.subr.bf16.mxu0 0
    %2339 = vmatpush1.bf16.msra.mxu0 0
    %2340 = vmatprep.mubr.bf16.mxu0 0
    %2341 = vmatmul.mubr.bf16.gmra.mrb[0].mxu0 %v2306
    %v2342 = vpop.f32.mrb[0].mxu0
    %v2343 = vadd.f32 %v2291, %v2342
    %v2344 = vpop.f32.mrb[0].mxu0
    %v2345 = vpop.f32.mrb[0].mxu0
    %v2346 = vadd.f32 %v2291, %v2345
    %v2347 = vpop.f32.mrb[0].mxu0
    %2348 = vdwg.mxu0
    %v2349 = vadd.f32 %v2343, %v204
    %v2350 = vadd.f32 %v2346, %v207
    %v2351 = vld [vmem:[#allocation6] sm:$0x1]
    %v2352 = vld [vmem:[#allocation7] sm:$0x1]
    %v2353 = vsel %vm227, %v2349, 0.0
    %2354 = vadd.xlane.f32.xlu0 %v2353
    %v2355 = vpop.xlane.xlu0 %2354
    %v2356 = vsel %vm227, %v2350, 0.0
    %2357 = vadd.xlane.f32.xlu0 %v2356
    %v2358 = vpop.xlane.xlu0 %2357
    %v2359 = vrcp.pop 32.0
    %v2360 = vmul.f32 %v2355, %v2359
    %v2361 = vmul.f32 %v2358, %v2359
    %v2362 = vsub.f32 %v2349, %v2360
    %v2363 = vsub.f32 %v2350, %v2361
    %v2364 = vmul.f32 %v2362, %v2362
    %v2365 = vmul.f32 %v2363, %v2363
    %v2366 = vsel %vm227, %v2364, 0.0
    %2367 = vadd.xlane.f32.xlu0 %v2366
    %v2368 = vpop.xlane.xlu0 %2367
    %v2369 = vsel %vm227, %v2365, 0.0
    %2370 = vadd.xlane.f32.xlu0 %v2369
    %v2371 = vpop.xlane.xlu0 %2370
    %v2372 = vmul.f32 %v2368, %v2359
    %v2373 = vmul.f32 %v2371, %v2359
    %v2374 = vadd.f32 %v2372, 1e-05
    %v2375 = vadd.f32 %v2373, 1e-05
    %v2376 = vrsqrt.pop %v2374
    %v2377 = vrsqrt.pop %v2375
    %v2378 = vmul.f32 %v2362, %v2376
    %v2379 = vmul.f32 %v2363, %v2377
    %v2381 = vlaneseq
    %v2382 = vshrl.u32 %v2381, 7
    %v2383 = vsub.s32 0, %v2382
    %v2384 = vrot.slane %v2351, %v2383
    %v2386 = vmul.f32 %v2378, %v2384
    %v2387 = vmul.f32 %v2379, %v2384
    %v2389 = vlaneseq
    %v2390 = vshrl.u32 %v2389, 7
    %v2391 = vsub.s32 0, %v2390
    %v2392 = vrot.slane %v2352, %v2391
    %v2394 = vadd.f32 %v2386, %v2392
    %v2395 = vadd.f32 %v2387, %v2392
    %v2396 = vmul.f32 %v2394, 0.5
    %v2397 = vmul.f32 %v2395, 0.5
    %v2398 = vmul.f32 %v2394, 0.70710677
    %v2399 = vmul.f32 %v2395, 0.70710677
    %v2400 = verf.f32.pop %v2398
    %v2401 = verf.f32.pop %v2399
    %v2402 = vadd.f32 %v2400, 1.0
    %v2403 = vadd.f32 %v2401, 1.0
    %v2404 = vmul.f32 %v2396, %v2402
    %v2405 = vmul.f32 %v2397, %v2403
    %v2406 = vpack.c.bf16 %v2405, %v2404
    %v2407 = vld [vmem:[%s8] sm:$0xf]
    %v2408 = vld [vmem:[%s8 + $0x4] sm:$0xf]
    %v2409 = vld [vmem:[%s8 + $0x8] sm:$0xf]
    %v2410 = vld [vmem:[%s8 + $0xc] sm:$0xf]
    %v2411 = vld [vmem:[#allocation9] sm:$0x1]
    %v2413 = vlaneseq
    %v2414 = vshrl.u32 %v2413, 7
    %v2415 = vsub.s32 0, %v2414
    %v2416 = vrot.slane %v2411, %v2415
    %v2422 = vunpack.c.l.b16 %v2407
    %v2423 = vunpack.c.l.b16 %v2408
    %v2424 = vunpack.c.l.b16 %v2409
    %v2425 = vunpack.c.l.b16 %v2410
    %v2426 = vpack.c.b16 %v2423, %v2422
    %v2427 = vpack.c.b16 %v2425, %v2424
    %v2431 = vsel %vm227, %v2406, 0
    %2433 = vmatprep.subr.bf16.mxu0 0
    %2434 = vmatpush1.bf16.msra.mxu0 %v2426
    %2435 = vmatprep.subr.bf16.mxu0 0
    %2436 = vmatpush1.bf16.msra.mxu0 %v2427
    %2437 = vmatprep.subr.bf16.mxu0 0
    %2438 = vmatpush1.bf16.msra.mxu0 0
    %2439 = vmatprep.subr.bf16.mxu0 0
    %2440 = vmatpush1.bf16.msra.mxu0 0
    %2441 = vmatprep.subr.bf16.mxu0 0
    %2442 = vmatpush1.bf16.msra.mxu0 0
    %2443 = vmatprep.subr.bf16.mxu0 0
    %2444 = vmatpush1.bf16.msra.mxu0 0
    %2445 = vmatprep.subr.bf16.mxu0 0
    %2446 = vmatpush1.bf16.msra.mxu0 0
    %2447 = vmatprep.subr.bf16.mxu0 0
    %2448 = vmatpush1.bf16.msra.mxu0 0
    %2449 = vmatprep.subr.bf16.mxu0 0
    %2450 = vmatpush1.bf16.msra.mxu0 0
    %2451 = vmatprep.subr.bf16.mxu0 0
    %2452 = vmatpush1.bf16.msra.mxu0 0
    %2453 = vmatprep.subr.bf16.mxu0 0
    %2454 = vmatpush1.bf16.msra.mxu0 0
    %2455 = vmatprep.subr.bf16.mxu0 0
    %2456 = vmatpush1.bf16.msra.mxu0 0
    %2457 = vmatprep.subr.bf16.mxu0 0
    %2458 = vmatpush1.bf16.msra.mxu0 0
    %2459 = vmatprep.subr.bf16.mxu0 0
    %2460 = vmatpush1.bf16.msra.mxu0 0
    %2461 = vmatprep.subr.bf16.mxu0 0
    %2462 = vmatpush1.bf16.msra.mxu0 0
    %2463 = vmatprep.subr.bf16.mxu0 0
    %2464 = vmatpush1.bf16.msra.mxu0 0
    %2465 = vmatprep.mubr.bf16.mxu0 0
    %2466 = vmatmul.mubr.bf16.gmra.mrb[0].mxu0 %v2431
    %v2467 = vpop.f32.mrb[0].mxu0
    %v2468 = vadd.f32 %v2416, %v2467
    %v2469 = vpop.f32.mrb[0].mxu0
    %v2470 = vpop.f32.mrb[0].mxu0
    %v2471 = vadd.f32 %v2416, %v2470
    %v2472 = vpop.f32.mrb[0].mxu0
    %2473 = vdwg.mxu0
    %v2474 = vmul.f32 %v2468, 0.5
    %v2475 = vmul.f32 %v2471, 0.5
    %v2476 = vmul.f32 %v2468, 0.70710677
    %v2477 = vmul.f32 %v2471, 0.70710677
    %v2478 = verf.f32.pop %v2476
    %v2479 = verf.f32.pop %v2477
    %v2480 = vadd.f32 %v2478, 1.0
    %v2481 = vadd.f32 %v2479, 1.0
    %v2482 = vmul.f32 %v2474, %v2480
    %v2483 = vmul.f32 %v2475, %v2481
    %v2484 = vpack.c.bf16 %v2483, %v2482
    %v2485 = vld [vmem:[%s10] sm:$0xf]
    %v2486 = vld [vmem:[%s10 + $0x4] sm:$0xf]
    %v2487 = vld [vmem:[%s10 + $0x8] sm:$0xf]
    %v2488 = vld [vmem:[%s10 + $0xc] sm:$0xf]
    %v2489 = vld [vmem:[#allocation10] sm:$0x1]
    %v2491 = vlaneseq
    %v2492 = vshrl.u32 %v2491, 7
    %v2493 = vsub.s32 0, %v2492
    %v2494 = vrot.slane %v2489, %v2493
    %v2500 = vunpack.c.l.b16 %v2485
    %v2501 = vunpack.c.l.b16 %v2486
    %v2502 = vunpack.c.l.b16 %v2487
    %v2503 = vunpack.c.l.b16 %v2488
    %v2504 = vpack.c.b16 %v2501, %v2500
    %v2505 = vpack.c.b16 %v2503, %v2502
    %v2509 = vsel %vm227, %v2484, 0
    %2511 = vmatprep.subr.bf16.mxu0 0
    %2512 = vmatpush1.bf16.msra.mxu0 %v2504
    %2513 = vmatprep.subr.bf16.mxu0 0
    %2514 = vmatpush1.bf16.msra.mxu0 %v2505
    %2515 = vmatprep.subr.bf16.mxu0 0
    %2516 = vmatpush1.bf16.msra.mxu0 0
    %2517 = vmatprep.subr.bf16.mxu0 0
    %2518 = vmatpush1.bf16.msra.mxu0 0
    %2519 = vmatprep.subr.bf16.mxu0 0
    %2520 = vmatpush1.bf16.msra.mxu0 0
    %2521 = vmatprep.subr.bf16.mxu0 0
    %2522 = vmatpush1.bf16.msra.mxu0 0
    %2523 = vmatprep.subr.bf16.mxu0 0
    %2524 = vmatpush1.bf16.msra.mxu0 0
    %2525 = vmatprep.subr.bf16.mxu0 0
    %2526 = vmatpush1.bf16.msra.mxu0 0
    %2527 = vmatprep.subr.bf16.mxu0 0
    %2528 = vmatpush1.bf16.msra.mxu0 0
    %2529 = vmatprep.subr.bf16.mxu0 0
    %2530 = vmatpush1.bf16.msra.mxu0 0
    %2531 = vmatprep.subr.bf16.mxu0 0
    %2532 = vmatpush1.bf16.msra.mxu0 0
    %2533 = vmatprep.subr.bf16.mxu0 0
    %2534 = vmatpush1.bf16.msra.mxu0 0
    %2535 = vmatprep.subr.bf16.mxu0 0
    %2536 = vmatpush1.bf16.msra.mxu0 0
    %2537 = vmatprep.subr.bf16.mxu0 0
    %2538 = vmatpush1.bf16.msra.mxu0 0
    %2539 = vmatprep.subr.bf16.mxu0 0
    %2540 = vmatpush1.bf16.msra.mxu0 0
    %2541 = vmatprep.subr.bf16.mxu0 0
    %2542 = vmatpush1.bf16.msra.mxu0 0
    %2543 = vmatprep.mubr.bf16.mxu0 0
    %2544 = vmatmul.mubr.bf16.gmra.mrb[0].mxu0 %v2509
    %v2545 = vpop.f32.mrb[0].mxu0
    %v2546 = vadd.f32 %v2494, %v2545
    %v2547 = vpop.f32.mrb[0].mxu0
    %v2548 = vpop.f32.mrb[0].mxu0
    %v2549 = vadd.f32 %v2494, %v2548
    %v2550 = vpop.f32.mrb[0].mxu0
    %2551 = vdwg.mxu0
    %v2552 = vadd.f32 %v2546, %v2394
    %v2553 = vadd.f32 %v2549, %v2395
    %v2554 = vld [vmem:[#allocation12] sm:$0x1]
    %v2555 = vld [vmem:[#allocation13] sm:$0x1]
    %v2556 = vsel %vm227, %v2552, 0.0
    %2557 = vadd.xlane.f32.xlu0 %v2556
    %v2558 = vpop.xlane.xlu0 %2557
    %v2559 = vsel %vm227, %v2553, 0.0
    %2560 = vadd.xlane.f32.xlu0 %v2559
    %v2561 = vpop.xlane.xlu0 %2560
    %v2562 = vmul.f32 %v2558, %v2359
    %v2563 = vmul.f32 %v2561, %v2359
    %v2564 = vsub.f32 %v2552, %v2562
    %v2565 = vsub.f32 %v2553, %v2563
    %v2566 = vmul.f32 %v2564, %v2564
    %v2567 = vmul.f32 %v2565, %v2565
    %v2568 = vsel %vm227, %v2566, 0.0
    %2569 = vadd.xlane.f32.xlu0 %v2568
    %v2570 = vpop.xlane.xlu0 %2569
    %v2571 = vsel %vm227, %v2567, 0.0
    %2572 = vadd.xlane.f32.xlu0 %v2571
    %v2573 = vpop.xlane.xlu0 %2572
    %v2574 = vmul.f32 %v2570, %v2359
    %v2575 = vmul.f32 %v2573, %v2359
    %v2576 = vadd.f32 %v2574, 1e-05
    %v2577 = vadd.f32 %v2575, 1e-05
    %v2578 = vrsqrt.pop %v2576
    %v2579 = vrsqrt.pop %v2577
    %v2580 = vmul.f32 %v2564, %v2578
    %v2581 = vmul.f32 %v2565, %v2579
    %v2583 = vlaneseq
    %v2584 = vshrl.u32 %v2583, 7
    %v2585 = vsub.s32 0, %v2584
    %v2586 = vrot.slane %v2554, %v2585
    %v2588 = vmul.f32 %v2580, %v2586
    %v2589 = vmul.f32 %v2581, %v2586
    %v2591 = vlaneseq
    %v2592 = vshrl.u32 %v2591, 7
    %v2593 = vsub.s32 0, %v2592
    %v2594 = vrot.slane %v2555, %v2593
    %v2596 = vadd.f32 %v2588, %v2594
    %v2597 = vadd.f32 %v2589, %v2594
    %2598 = vst.msk [vmem:[%s14] sm:$0xff] %vm227, %v2596
    %2599 = vst.msk [vmem:[%s14 + $0x8] sm:$0xff] %vm227, %v2597
    // Predicated region
    $region90: #{_forward_impl.1} parent=1 // pred_check
      _
    $region91: #{_forward_impl.1} parent=1 // pred_check_branch
      %2601 = sbr.rel (0) target = $region93
    $region92: #{_forward_impl.1} parent=1 // pred_region
      _
    $region93: #{_forward_impl.1} parent=1 // pred_fallthru
      _
    // Predicated region
    $region94: #{_forward_impl.1} parent=1 // pred_check
      _
    $region95: #{_forward_impl.1} parent=1 // pred_check_branch
      %2603 = sbr.rel (0) target = $region97
    $region96: #{_forward_impl.1} parent=1 // pred_region
      _
    $region97: #{_forward_impl.1} parent=1 // pred_fallthru
      _
    %2604 = vsyncpa [#allocation3], 1
    %2605 = vsyncpa [#allocation5], 1
    %2606 = vsyncpa [#allocation8], 1
    %2607 = vsyncpa [#allocation11], 1
    %2608 = vsyncpa [#allocation14], 1

// kernel: _forward_impl.1
$region0: #{_forward_impl.1}
  #allocation0 [shape = 'u32[]', space=smem, size = 0x4, offset = 0x4, fixed_abs, tag = 'smem constant byte address 0x4 - core index']
  #allocation1 [shape = 'u32[144,128]{1,0:T(1,128)}', space=vmem, size = 0x12000, scoped, tag = 'internal scratch']
  %s0 = inlined_call_operand.vmem [shape: bf16[2,8,16], index: 0, kind: input, shape index: {}]
  %s1 = inlined_call_operand.hbm [shape: bf16[16,32], index: 1, kind: input, shape index: {}]
  %s2 = inlined_call_operand.vmem [shape: f32[1,32], index: 2, kind: input, shape index: {}]
  %s3 = inlined_call_operand.vmem [shape: bf16[32,32], index: 3, kind: input, shape index: {}]
  %s4 = inlined_call_operand.vmem [shape: bf16[32,32], index: 4, kind: input, shape index: {}]
  %s5 = inlined_call_operand.hbm [shape: f32[1,32], index: 5, kind: input, shape index: {}]
  %s6 = inlined_call_operand.hbm [shape: f32[1,32], index: 6, kind: input, shape index: {}]
  %s7 = inlined_call_operand.hbm [shape: f32[1,32], index: 7, kind: input, shape index: {}]
  %s8 = inlined_call_operand.vmem [shape: bf16[32,32], index: 8, kind: input, shape index: {}]
  %s9 = inlined_call_operand.hbm [shape: f32[1,32], index: 9, kind: input, shape index: {}]
  %s10 = inlined_call_operand.vmem [shape: bf16[32,32], index: 10, kind: input, shape index: {}]
  %s11 = inlined_call_operand.hbm [shape: f32[1,32], index: 11, kind: input, shape index: {}]
  %s12 = inlined_call_operand.hbm [shape: f32[1,32], index: 12, kind: input, shape index: {}]
  %s13 = inlined_call_operand.hbm [shape: f32[1,32], index: 13, kind: input, shape index: {}]
  %s14 = inlined_call_operand.vmem [shape: f32[2,8,32], index: 14, kind: output, shape index: {}]
  %s15 = sld [smem:[#allocation0]]
  $region98: #{_forward_impl.1} parent=0
    _
  %s17 = ssub.s32 1, %s15
  %s18 = scalar_select 0, %s17, %s15
  $region1: #{_forward_impl.1} parent=0
    #allocation2 [shape = 'u8[4096]{0}', space=vmem, size = 0x1000, scoped, tag = 'input window, operand 1, single buffered']
    #allocation3 [shape = 's32[1]{0}', space=sflag, size = 0x4, scoped, tag = 'scoped memory for _forward_impl.1']
    #allocation4 [shape = 'u8[512]{0}', space=vmem, size = 0x400, scoped, tag = 'input window, operand 5, single buffered']
    #allocation5 [shape = 's32[1]{0}', space=sflag, size = 0x4, scoped, tag = 'scoped memory for _forward_impl.1']
    #allocation6 [shape = 'u8[512]{0}', space=vmem, size = 0x400, scoped, tag = 'input window, operand 6, single buffered']
    #allocation7 [shape = 'u8[512]{0}', space=vmem, size = 0x400, scoped, tag = 'input window, operand 7, single buffered']
    #allocation8 [shape = 's32[1]{0}', space=sflag, size = 0x4, scoped, tag = 'scoped memory for _forward_impl.1']
    #allocation9 [shape = 'u8[512]{0}', space=vmem, size = 0x400, scoped, tag = 'input window, operand 9, single buffered']
    #allocation10 [shape = 'u8[512]{0}', space=vmem, size = 0x400, scoped, tag = 'input window, operand 11, single buffered']
    #allocation11 [shape = 's32[1]{0}', space=sflag, size = 0x4, scoped, tag = 'scoped memory for _forward_impl.1']
    #allocation12 [shape = 'u8[512]{0}', space=vmem, size = 0x400, scoped, tag = 'input window, operand 12, single buffered']
    #allocation13 [shape = 'u8[512]{0}', space=vmem, size = 0x400, scoped, tag = 'input window, operand 13, single buffered']
    #allocation14 [shape = 's32[1]{0}', space=sflag, size = 0x4, scoped, tag = 'scoped memory for _forward_impl.1']
    %19 = vsyncpa [#allocation3], 0
    %20 = vsyncpa [#allocation5], 0
    %21 = vsyncpa [#allocation8], 0
    %22 = vsyncpa [#allocation11], 0
    %23 = vsyncpa [#allocation14], 0
    // Predicated region
    $region2: #{_forward_impl.1} parent=1 // pred_check
      _
    $region3: #{_forward_impl.1} parent=1 // pred_check_branch
      %25 = sbr.rel (0) target = $region5
    $region4: #{_forward_impl.1} parent=1 // pred_region
      _
    $region5: #{_forward_impl.1} parent=1 // pred_fallthru
      _
    // Predicated region
    $region6: #{_forward_impl.1} parent=1 // pred_check
      _
    $region7: #{_forward_impl.1} parent=1 // pred_check_branch
      %27 = sbr.rel (0) target = $region9
    $region8: #{_forward_impl.1} parent=1 // pred_region
      %s29 = ssub.s32 128, 128
      %30 = vsyncadd [#allocation3], %s29
      %s31 = sshll.u32 [#allocation2], 4
      %s32 = int_to_ptr.vmem [resolvable:$true] %s31
      %37 = dma.hbm_to_vmem [thread:$0]  %s1, 128, %s32, [#allocation3], 64, 64, 4
    $region9: #{_forward_impl.1} parent=1 // pred_fallthru
      _
    // Predicated region
    $region10: #{_forward_impl.1} parent=1 // pred_check
      _
    $region11: #{_forward_impl.1} parent=1 // pred_check_branch
      %39 = sbr.rel (0) target = $region13
    $region12: #{_forward_impl.1} parent=1 // pred_region
      _
    $region13: #{_forward_impl.1} parent=1 // pred_fallthru
      _
    // Predicated region
    $region14: #{_forward_impl.1} parent=1 // pred_check
      _
    $region15: #{_forward_impl.1} parent=1 // pred_check_branch
      %41 = sbr.rel (0) target = $region17
    $region16: #{_forward_impl.1} parent=1 // pred_region
      _
    $region17: #{_forward_impl.1} parent=1 // pred_fallthru
      _
    // Predicated region
    $region18: #{_forward_impl.1} parent=1 // pred_check
      _
    $region19: #{_forward_impl.1} parent=1 // pred_check_branch
      %43 = sbr.rel (0) target = $region21
    $region20: #{_forward_impl.1} parent=1 // pred_region
      _
    $region21: #{_forward_impl.1} parent=1 // pred_fallthru
      _
    // Predicated region
    $region22: #{_forward_impl.1} parent=1 // pred_check
      _
    $region23: #{_forward_impl.1} parent=1 // pred_check_branch
      %45 = sbr.rel (0) target = $region25
    $region24: #{_forward_impl.1} parent=1 // pred_region
      %s47 = ssub.s32 16, 16
      %48 = vsyncadd [#allocation5], %s47
      %s50 = sshll.u32 [#allocation4], 4
      %s51 = int_to_ptr.vmem [resolvable:$true] %s50
      %53 = dma.hbm_to_vmem [thread:$0]  %s5, 16, %s51, [#allocation5]
    $region25: #{_forward_impl.1} parent=1 // pred_fallthru
      _
    // Predicated region
    $region26: #{_forward_impl.1} parent=1 // pred_check
      _
    $region27: #{_forward_impl.1} parent=1 // pred_check_branch
      %55 = sbr.rel (0) target = $region29
    $region28: #{_forward_impl.1} parent=1 // pred_region
      %s57 = ssub.s32 16, 16
      %58 = vsyncadd [#allocation5], %s57
      %s60 = sshll.u32 [#allocation6], 4
      %s61 = int_to_ptr.vmem [resolvable:$true] %s60
      %63 = dma.hbm_to_vmem [thread:$0]  %s6, 16, %s61, [#allocation5]
    $region29: #{_forward_impl.1} parent=1 // pred_fallthru
      _
    // Predicated region
    $region30: #{_forward_impl.1} parent=1 // pred_check
      _
    $region31: #{_forward_impl.1} parent=1 // pred_check_branch
      %65 = sbr.rel (0) target = $region33
    $region32: #{_forward_impl.1} parent=1 // pred_region
      %s67 = ssub.s32 16, 16
      %68 = vsyncadd [#allocation8], %s67
      %s70 = sshll.u32 [#allocation7], 4
      %s71 = int_to_ptr.vmem [resolvable:$true] %s70
      %73 = dma.hbm_to_vmem [thread:$0]  %s7, 16, %s71, [#allocation8]
    $region33: #{_forward_impl.1} parent=1 // pred_fallthru
      _
    // Predicated region
    $region34: #{_forward_impl.1} parent=1 // pred_check
      _
    $region35: #{_forward_impl.1} parent=1 // pred_check_branch
      %75 = sbr.rel (0) target = $region37
    $region36: #{_forward_impl.1} parent=1 // pred_region
      _
    $region37: #{_forward_impl.1} parent=1 // pred_fallthru
      _
    // Predicated region
    $region38: #{_forward_impl.1} parent=1 // pred_check
      _
    $region39: #{_forward_impl.1} parent=1 // pred_check_branch
      %77 = sbr.rel (0) target = $region41
    $region40: #{_forward_impl.1} parent=1 // pred_region
      %s79 = ssub.s32 16, 16
      %80 = vsyncadd [#allocation8], %s79
      %s82 = sshll.u32 [#allocation9], 4
      %s83 = int_to_ptr.vmem [resolvable:$true] %s82
      %85 = dma.hbm_to_vmem [thread:$0]  %s9, 16, %s83, [#allocation8]
    $region41: #{_forward_impl.1} parent=1 // pred_fallthru
      _
    // Predicated region
    $region42: #{_forward_impl.1} parent=1 // pred_check
      _
    $region43: #{_forward_impl.1} parent=1 // pred_check_branch
      %87 = sbr.rel (0) target = $region45
    $region44: #{_forward_impl.1} parent=1 // pred_region
      _
    $region45: #{_forward_impl.1} parent=1 // pred_fallthru
      _
    // Predicated region
    $region46: #{_forward_impl.1} parent=1 // pred_check
      _
    $region47: #{_forward_impl.1} parent=1 // pred_check_branch
      %89 = sbr.rel (0) target = $region49
    $region48: #{_forward_impl.1} parent=1 // pred_region
      %s91 = ssub.s32 16, 16
      %92 = vsyncadd [#allocation11], %s91
      %s94 = sshll.u32 [#allocation10], 4
      %s95 = int_to_ptr.vmem [resolvable:$true] %s94
      %97 = dma.hbm_to_vmem [thread:$0]  %s11, 16, %s95, [#allocation11]
    $region49: #{_forward_impl.1} parent=1 // pred_fallthru
      _
    // Predicated region
    $region50: #{_forward_impl.1} parent=1 // pred_check
      _
    $region51: #{_forward_impl.1} parent=1 // pred_check_branch
      %99 = sbr.rel (0) target = $region53
    $region52: #{_forward_impl.1} parent=1 // pred_region
      %s101 = ssub.s32 16, 16
      %102 = vsyncadd [#allocation11], %s101
      %s104 = sshll.u32 [#allocation12], 4
      %s105 = int_to_ptr.vmem [resolvable:$true] %s104
      %107 = dma.hbm_to_vmem [thread:$0]  %s12, 16, %s105, [#allocation11]
    $region53: #{_forward_impl.1} parent=1 // pred_fallthru
      _
    // Predicated region
    $region54: #{_forward_impl.1} parent=1 // pred_check
      _
    $region55: #{_forward_impl.1} parent=1 // pred_check_branch
      %109 = sbr.rel (0) target = $region57
    $region56: #{_forward_impl.1} parent=1 // pred_region
      %s111 = ssub.s32 16, 16
      %112 = vsyncadd [#allocation14], %s111
      %s114 = sshll.u32 [#allocation13], 4
      %s115 = int_to_ptr.vmem [resolvable:$true] %s114
      %117 = dma.hbm_to_vmem [thread:$0]  %s13, 16, %s115, [#allocation14]
    $region57: #{_forward_impl.1} parent=1 // pred_fallthru
      _
    // Predicated region
    $region58: #{_forward_impl.1} parent=1 // pred_check
      _
    $region59: #{_forward_impl.1} parent=1 // pred_check_branch
      %119 = sbr.rel (0) target = $region61
    $region60: #{_forward_impl.1} parent=1 // pred_region
      %120 = dma.done [#allocation3], 128
    $region61: #{_forward_impl.1} parent=1 // pred_fallthru
      _
    // Predicated region
    $region62: #{_forward_impl.1} parent=1 // pred_check
      _
    $region63: #{_forward_impl.1} parent=1 // pred_check_branch
      %122 = sbr.rel (0) target = $region65
    $region64: #{_forward_impl.1} parent=1 // pred_region
      %123 = dma.done [#allocation5], 16
    $region65: #{_forward_impl.1} parent=1 // pred_fallthru
      _
    // Predicated region
    $region66: #{_forward_impl.1} parent=1 // pred_check
      _
    $region67: #{_forward_impl.1} parent=1 // pred_check_branch
      %125 = sbr.rel (0) target = $region69
    $region68: #{_forward_impl.1} parent=1 // pred_region
      %126 = dma.done [#allocation5], 16
    $region69: #{_forward_impl.1} parent=1 // pred_fallthru
      _
    // Predicated region
    $region70: #{_forward_impl.1} parent=1 // pred_check
      _
    $region71: #{_forward_impl.1} parent=1 // pred_check_branch
      %128 = sbr.rel (0) target = $region73
    $region72: #{_forward_impl.1} parent=1 // pred_region
      %129 = dma.done [#allocation8], 16
    $region73: #{_forward_impl.1} parent=1 // pred_fallthru
      _
    // Predicated region
    $region74: #{_forward_impl.1} parent=1 // pred_check
      _
    $region75: #{_forward_impl.1} parent=1 // pred_check_branch
      %131 = sbr.rel (0) target = $region77
    $region76: #{_forward_impl.1} parent=1 // pred_region
      %132 = dma.done [#allocation8], 16
    $region77: #{_forward_impl.1} parent=1 // pred_fallthru
      _
    // Predicated region
    $region78: #{_forward_impl.1} parent=1 // pred_check
      _
    $region79: #{_forward_impl.1} parent=1 // pred_check_branch
      %134 = sbr.rel (0) target = $region81
    $region80: #{_forward_impl.1} parent=1 // pred_region
      %135 = dma.done [#allocation11], 16
    $region81: #{_forward_impl.1} parent=1 // pred_fallthru
      _
    // Predicated region
    $region82: #{_forward_impl.1} parent=1 // pred_check
      _
    $region83: #{_forward_impl.1} parent=1 // pred_check_branch
      %137 = sbr.rel (0) target = $region85
    $region84: #{_forward_impl.1} parent=1 // pred_region
      %138 = dma.done [#allocation11], 16
    $region85: #{_forward_impl.1} parent=1 // pred_fallthru
      _
    // Predicated region
    $region86: #{_forward_impl.1} parent=1 // pred_check
      _
    $region87: #{_forward_impl.1} parent=1 // pred_check_branch
      %140 = sbr.rel (0) target = $region89
    $region88: #{_forward_impl.1} parent=1 // pred_region
      %141 = dma.done [#allocation14], 16
    $region89: #{_forward_impl.1} parent=1 // pred_fallthru
      _
    %v143 = vld [vmem:[%s0] sm:$0xf]
    %v144 = vld [vmem:[%s0 + $0x4] sm:$0xf]
    %v145 = vld [vmem:[#allocation2] sm:$0xf]
    %v146 = vld [vmem:[#allocation2 + $0x4] sm:$0xf]
    %v147 = vld [vmem:[%s2] sm:$0x1]
    %v149 = vlaneseq
    %v150 = vshrl.u32 %v149, 7
    %v151 = vsub.s32 0, %v150
    %v152 = vrot.slane %v147, %v151
    %v156 = vunpack.c.l.b16 %v143
    %v157 = vunpack.c.l.b16 %v144
    %v158 = vpack.c.b16 %v157, %v156
    %v161 = vunpack.c.l.b16 %v145
    %v162 = vunpack.c.l.b16 %v146
    %v163 = vpack.c.b16 %v162, %v161
    %vm165 = vcmask 130048
    %v167 = vsel %vm165, %v158, 0
    %169 = vmatprep.subr.bf16.mxu0 0
    %170 = vmatpush1.bf16.msra.mxu0 %v163
    %171 = vmatprep.subr.bf16.mxu0 0
    %172 = vmatpush1.bf16.msra.mxu0 0
    %173 = vmatprep.subr.bf16.mxu0 0
    %174 = vmatpush1.bf16.msra.mxu0 0
    %175 = vmatprep.subr.bf16.mxu0 0
    %176 = vmatpush1.bf16.msra.mxu0 0
    %177 = vmatprep.subr.bf16.mxu0 0
    %178 = vmatpush1.bf16.msra.mxu0 0
    %179 = vmatprep.subr.bf16.mxu0 0
    %180 = vmatpush1.bf16.msra.mxu0 0
    %181 = vmatprep.subr.bf16.mxu0 0
    %182 = vmatpush1.bf16.msra.mxu0 0
    %183 = vmatprep.subr.bf16.mxu0 0
    %184 = vmatpush1.bf16.msra.mxu0 0
    %185 = vmatprep.subr.bf16.mxu0 0
    %186 = vmatpush1.bf16.msra.mxu0 0
    %187 = vmatprep.subr.bf16.mxu0 0
    %188 = vmatpush1.bf16.msra.mxu0 0
    %189 = vmatprep.subr.bf16.mxu0 0
    %190 = vmatpush1.bf16.msra.mxu0 0
    %191 = vmatprep.subr.bf16.mxu0 0
    %192 = vmatpush1.bf16.msra.mxu0 0
    %193 = vmatprep.subr.bf16.mxu0 0
    %194 = vmatpush1.bf16.msra.mxu0 0
    %195 = vmatprep.subr.bf16.mxu0 0
    %196 = vmatpush1.bf16.msra.mxu0 0
    %197 = vmatprep.subr.bf16.mxu0 0
    %198 = vmatpush1.bf16.msra.mxu0 0
    %199 = vmatprep.subr.bf16.mxu0 0
    %200 = vmatpush1.bf16.msra.mxu0 0
    %201 = vmatprep.mubr.bf16.mxu0 0
    %202 = vmatmul.mubr.bf16.gmra.mrb[0].mxu0 %v167
    %v203 = vpop.f32.mrb[0].mxu0
    %v204 = vadd.f32 %v152, %v203
    %v205 = vpop.f32.mrb[0].mxu0
    %v206 = vpop.f32.mrb[0].mxu0
    %v207 = vadd.f32 %v152, %v206
    %v208 = vpop.f32.mrb[0].mxu0
    %209 = vdwg.mxu0
    %v210 = vpack.c.bf16 %v207, %v204
    %v211 = vld [vmem:[%s3] sm:$0xf]
    %v212 = vld [vmem:[%s3 + $0x4] sm:$0xf]
    %v213 = vld [vmem:[%s3 + $0x8] sm:$0xf]
    %v214 = vld [vmem:[%s3 + $0xc] sm:$0xf]
    %v219 = vunpack.c.l.b16 %v211
    %v220 = vunpack.c.l.b16 %v212
    %v221 = vunpack.c.l.b16 %v213
    %v222 = vunpack.c.l.b16 %v214
    %v223 = vpack.c.b16 %v220, %v219
    %v224 = vpack.c.b16 %v222, %v221
    %vm227 = vcmask 261120
    %v229 = vsel %vm227, %v210, 0
    %231 = vmatprep.subr.bf16.mxu0 0
    %232 = vmatpush1.bf16.msra.mxu0 %v223
    %233 = vmatprep.subr.bf16.mxu0 0
    %234 = vmatpush1.bf16.msra.mxu0 %v224
    %235 = vmatprep.subr.bf16.mxu0 0
    %236 = vmatpush1.bf16.msra.mxu0 0
    %237 = vmatprep.subr.bf16.mxu0 0
    %238 = vmatpush1.bf16.msra.mxu0 0
    %239 = vmatprep.subr.bf16.mxu0 0
    %240 = vmatpush1.bf16.msra.mxu0 0
    %241 = vmatprep.subr.bf16.mxu0 0
    %242 = vmatpush1.bf16.msra.mxu0 0
    %243 = vmatprep.subr.bf16.mxu0 0
    %244 = vmatpush1.bf16.msra.mxu0 0
    %245 = vmatprep.subr.bf16.mxu0 0
    %246 = vmatpush1.bf16.msra.mxu0 0
    %247 = vmatprep.subr.bf16.mxu0 0
    %248 = vmatpush1.bf16.msra.mxu0 0
    %249 = vmatprep.subr.bf16.mxu0 0
    %250 = vmatpush1.bf16.msra.mxu0 0
    %251 = vmatprep.subr.bf16.mxu0 0
    %252 = vmatpush1.bf16.msra.mxu0 0
    %253 = vmatprep.subr.bf16.mxu0 0
    %254 = vmatpush1.bf16.msra.mxu0 0
    %255 = vmatprep.subr.bf16.mxu0 0
    %256 = vmatpush1.bf16.msra.mxu0 0
    %257 = vmatprep.subr.bf16.mxu0 0
    %258 = vmatpush1.bf16.msra.mxu0 0
    %259 = vmatprep.subr.bf16.mxu0 0
    %260 = vmatpush1.bf16.msra.mxu0 0
    %261 = vmatprep.subr.bf16.mxu0 0
    %262 = vmatpush1.bf16.msra.mxu0 0
    %263 = vmatprep.mubr.bf16.mxu0 0
    %264 = vmatmul.mubr.bf16.gmra.mrb[0].mxu0 %v229
    %v265 = vpop.f32.mrb[0].mxu0
    %v266 = vadd.f32 0.0, %v265
    %v267 = vpop.f32.mrb[0].mxu0
    %v268 = vpop.f32.mrb[0].mxu0
    %v269 = vadd.f32 0.0, %v268
    %v270 = vpop.f32.mrb[0].mxu0
    %271 = vdwg.mxu0
    %v272 = vpack.c.bf16 %v269, %v266
    %v274 = vunpack.c.l.b16 %v272
    %v275 = vunpack.c.h.b16 %v272
    %v276 = vpack.c.b16 %v274, %v274
    %v277 = vpack.c.b16 %v275, %v275
    %vm280 = vcmask 31744
    %v282 = vsel %vm280, %v276, 0
    %284 = vmatprep.subr.bf16.mxu0 0
    %285 = vmatpush1.bf16.xpose.msra.mxu0 %v282
    %286 = vmatprep.subr.bf16.mxu0 0
    %287 = vmatpush1.bf16.xpose.msra.mxu0 0
    %288 = vmatprep.subr.bf16.mxu0 0
    %289 = vmatpush1.bf16.xpose.msra.mxu0 0
    %290 = vmatprep.subr.bf16.mxu0 0
    %291 = vmatpush1.bf16.xpose.msra.mxu0 0
    %292 = vmatprep.subr.bf16.mxu0 0
    %293 = vmatpush1.bf16.xpose.msra.mxu0 0
    %294 = vmatprep.subr.bf16.mxu0 0
    %295 = vmatpush1.bf16.xpose.msra.mxu0 0
    %296 = vmatprep.subr.bf16.mxu0 0
    %297 = vmatpush1.bf16.xpose.msra.mxu0 0
    %298 = vmatprep.subr.bf16.mxu0 0
    %299 = vmatpush1.bf16.xpose.msra.mxu0 0
    %300 = vmatprep.subr.bf16.mxu0 0
    %301 = vmatpush1.bf16.xpose.msra.mxu0 0
    %302 = vmatprep.subr.bf16.mxu0 0
    %303 = vmatpush1.bf16.xpose.msra.mxu0 0
    %304 = vmatprep.subr.bf16.mxu0 0
    %305 = vmatpush1.bf16.xpose.msra.mxu0 0
    %306 = vmatprep.subr.bf16.mxu0 0
    %307 = vmatpush1.bf16.xpose.msra.mxu0 0
    %308 = vmatprep.subr.bf16.mxu0 0
    %309 = vmatpush1.bf16.xpose.msra.mxu0 0
    %310 = vmatprep.subr.bf16.mxu0 0
    %311 = vmatpush1.bf16.xpose.msra.mxu0 0
    %312 = vmatprep.subr.bf16.mxu0 0
    %313 = vmatpush1.bf16.xpose.msra.mxu0 0
    %314 = vmatprep.subr.bf16.mxu0 0
    %315 = vmatpush1.bf16.xpose.msra.mxu0 0
    %316 = vmatprep.mubr.bf16.mxu0 0
    %317 = vmatmul.mubr.bf16.gmra.mrb[0].mxu0 %v282
    %v318 = vpop.f32.mrb[0].mxu0
    %v319 = vadd.f32 0.0, %v318
    %v320 = vpop.f32.mrb[0].mxu0
    %v321 = vpop.f32.mrb[0].mxu0
    %v322 = vpop.f32.mrb[0].mxu0
    %323 = vdwg.mxu0
    %v325 = vsel %vm280, %v277, 0
    %327 = vmatprep.subr.bf16.mxu0 0
    %328 = vmatpush1.bf16.xpose.msra.mxu0 %v325
    %329 = vmatprep.subr.bf16.mxu0 0
    %330 = vmatpush1.bf16.xpose.msra.mxu0 0
    %331 = vmatprep.subr.bf16.mxu0 0
    %332 = vmatpush1.bf16.xpose.msra.mxu0 0
    %333 = vmatprep.subr.bf16.mxu0 0
    %334 = vmatpush1.bf16.xpose.msra.mxu0 0
    %335 = vmatprep.subr.bf16.mxu0 0
    %336 = vmatpush1.bf16.xpose.msra.mxu0 0
    %337 = vmatprep.subr.bf16.mxu0 0
    %338 = vmatpush1.bf16.xpose.msra.mxu0 0
    %339 = vmatprep.subr.bf16.mxu0 0
    %340 = vmatpush1.bf16.xpose.msra.mxu0 0
    %341 = vmatprep.subr.bf16.mxu0 0
    %342 = vmatpush1.bf16.xpose.msra.mxu0 0
    %343 = vmatprep.subr.bf16.mxu0 0
    %344 = vmatpush1.bf16.xpose.msra.mxu0 0
    %345 = vmatprep.subr.bf16.mxu0 0
    %346 = vmatpush1.bf16.xpose.msra.mxu0 0
    %347 = vmatprep.subr.bf16.mxu0 0
    %348 = vmatpush1.bf16.xpose.msra.mxu0 0
    %349 = vmatprep.subr.bf16.mxu0 0
    %350 = vmatpush1.bf16.xpose.msra.mxu0 0
    %351 = vmatprep.subr.bf16.mxu0 0
    %352 = vmatpush1.bf16.xpose.msra.mxu0 0
    %353 = vmatprep.subr.bf16.mxu0 0
    %354 = vmatpush1.bf16.xpose.msra.mxu0 0
    %355 = vmatprep.subr.bf16.mxu0 0
    %356 = vmatpush1.bf16.xpose.msra.mxu0 0
    %357 = vmatprep.subr.bf16.mxu0 0
    %358 = vmatpush1.bf16.xpose.msra.mxu0 0
    %359 = vmatprep.mubr.bf16.mxu0 0
    %360 = vmatmul.mubr.bf16.gmra.mrb[0].mxu0 %v325
    %v361 = vpop.f32.mrb[0].mxu0
    %v362 = vadd.f32 0.0, %v361
    %v363 = vpop.f32.mrb[0].mxu0
    %v364 = vpop.f32.mrb[0].mxu0
    %v365 = vpop.f32.mrb[0].mxu0
    %366 = vdwg.mxu0
    %v367 = vunpack.c.l.bf16 %v276
    %v368 = vunpack.c.l.bf16 %v277
    %v369 = vmul.f32 %v367, %v367
    %v370 = vmul.f32 %v368, %v368
    %v371 = vsel %vm280, %v369, 0.0
    %372 = vadd.xlane.f32.xlu0 %v371
    %v373 = vpop.xlane.xlu0 %372
    %v374 = vsel %vm280, %v370, 0.0
    %375 = vadd.xlane.f32.xlu0 %v374
    %v376 = vpop.xlane.xlu0 %375
    %v377 = vmul.f32 %v319, 2.0
    %v378 = vmul.f32 %v362, 2.0
    %v381 = vlaneseq
    %v382 = vand.u32 %v381, 127
    %v383 = vlaneseq
    %v384 = vshrl.u32 %v383, 7
    %v385 = vsub.s32 %v382, %v384
    %v386 = vrot.slane %v373, %v385
    %v387 = vlaneseq
    %v388 = vshrl.u32 %v387, 7
    %v389 = vsub.s32 %v382, %v388
    %v390 = vrot.slane %v376, %v389
    %vm391 = vcmask 1042434
    %v392 = vsel %vm391, %v386, %v386
    %vm393 = vcmask 1043459
    %v394 = vsel %vm393, %v386, %v392
    %vm395 = vcmask 1044484
    %v396 = vsel %vm395, %v386, %v394
    %vm397 = vcmask 1045509
    %v398 = vsel %vm397, %v386, %v396
    %vm399 = vcmask 1046534
    %v400 = vsel %vm399, %v386, %v398
    %vm401 = vcmask 1047559
    %v402 = vsel %vm401, %v386, %v400
    %v403 = vsel %vm391, %v390, %v390
    %v404 = vsel %vm393, %v390, %v403
    %v405 = vsel %vm395, %v390, %v404
    %v406 = vsel %vm397, %v390, %v405
    %v407 = vsel %vm399, %v390, %v406
    %v408 = vsel %vm401, %v390, %v407
    %v411 = vsub.f32 %v377, %v402
    %v412 = vsub.f32 %v378, %v408
    %v413 = vsub.f32 %v411, %v373
    %v414 = vsub.f32 %v412, %v376
    %v415 = vmul.f32 %v413, 0.5
    %v416 = vmul.f32 %v414, 0.5
    %v417 = vmul.f32 %v415, 1.442695
    %v418 = vpow.pop %v417
    %v419 = vmul.f32 %v416, 1.442695
    %v420 = vpow.pop %v419
    %vm421 = vcmask 64512
    %v422 = vsel %vm421, %v418, 0.0
    %423 = vadd.xlane.f32.xlu0 %v422
    %v424 = vpop.xlane.xlu0 %423
    %v425 = vsel %vm421, %v420, 0.0
    %426 = vadd.xlane.f32.xlu0 %v425
    %v427 = vpop.xlane.xlu0 %426
    %v428 = vpack.c.bf16 %v418, %v418
    %v429 = vpack.c.bf16 %v420, %v420
    %v431 = vsel %vm421, %v428, 0
    %vm433 = vcmask 1043456
    %v434 = vsel %vm433, %v276, 0
    %436 = vmatprep.subr.bf16.mxu0 0
    %437 = vmatpush1.bf16.msra.mxu0 %v434
    %438 = vmatprep.subr.bf16.mxu0 0
    %439 = vmatpush1.bf16.msra.mxu0 0
    %440 = vmatprep.subr.bf16.mxu0 0
    %441 = vmatpush1.bf16.msra.mxu0 0
    %442 = vmatprep.subr.bf16.mxu0 0
    %443 = vmatpush1.bf16.msra.mxu0 0
    %444 = vmatprep.subr.bf16.mxu0 0
    %445 = vmatpush1.bf16.msra.mxu0 0
    %446 = vmatprep.subr.bf16.mxu0 0
    %447 = vmatpush1.bf16.msra.mxu0 0
    %448 = vmatprep.subr.bf16.mxu0 0
    %449 = vmatpush1.bf16.msra.mxu0 0
    %450 = vmatprep.subr.bf16.mxu0 0
    %451 = vmatpush1.bf16.msra.mxu0 0
    %452 = vmatprep.subr.bf16.mxu0 0
    %453 = vmatpush1.bf16.msra.mxu0 0
    %454 = vmatprep.subr.bf16.mxu0 0
    %455 = vmatpush1.bf16.msra.mxu0 0
    %456 = vmatprep.subr.bf16.mxu0 0
    %457 = vmatpush1.bf16.msra.mxu0 0
    %458 = vmatprep.subr.bf16.mxu0 0
    %459 = vmatpush1.bf16.msra.mxu0 0
    %460 = vmatprep.subr.bf16.mxu0 0
    %461 = vmatpush1.bf16.msra.mxu0 0
    %462 = vmatprep.subr.bf16.mxu0 0
    %463 = vmatpush1.bf16.msra.mxu0 0
    %464 = vmatprep.subr.bf16.mxu0 0
    %465 = vmatpush1.bf16.msra.mxu0 0
    %466 = vmatprep.subr.bf16.mxu0 0
    %467 = vmatpush1.bf16.msra.mxu0 0
    %468 = vmatprep.mubr.bf16.mxu0 0
    %469 = vmatmul.mubr.bf16.gmra.mrb[0].mxu0 %v431
    %v470 = vpop.f32.mrb[0].mxu0
    %v471 = vadd.f32 0.0, %v470
    %v472 = vpop.f32.mrb[0].mxu0
    %v473 = vpop.f32.mrb[0].mxu0
    %v474 = vpop.f32.mrb[0].mxu0
    %475 = vdwg.mxu0
    %v477 = vsel %vm421, %v429, 0
    %v479 = vsel %vm433, %v277, 0
    %481 = vmatprep.subr.bf16.mxu0 0
    %482 = vmatpush1.bf16.msra.mxu0 %v479
    %483 = vmatprep.subr.bf16.mxu0 0
    %484 = vmatpush1.bf16.msra.mxu0 0
    %485 = vmatprep.subr.bf16.mxu0 0
    %486 = vmatpush1.bf16.msra.mxu0 0
    %487 = vmatprep.subr.bf16.mxu0 0
    %488 = vmatpush1.bf16.msra.mxu0 0
    %489 = vmatprep.subr.bf16.mxu0 0
    %490 = vmatpush1.bf16.msra.mxu0 0
    %491 = vmatprep.subr.bf16.mxu0 0
    %492 = vmatpush1.bf16.msra.mxu0 0
    %493 = vmatprep.subr.bf16.mxu0 0
    %494 = vmatpush1.bf16.msra.mxu0 0
    %495 = vmatprep.subr.bf16.mxu0 0
    %496 = vmatpush1.bf16.msra.mxu0 0
    %497 = vmatprep.subr.bf16.mxu0 0
    %498 = vmatpush1.bf16.msra.mxu0 0
    %499 = vmatprep.subr.bf16.mxu0 0
    %500 = vmatpush1.bf16.msra.mxu0 0
    %501 = vmatprep.subr.bf16.mxu0 0
    %502 = vmatpush1.bf16.msra.mxu0 0
    %503 = vmatprep.subr.bf16.mxu0 0
    %504 = vmatpush1.bf16.msra.mxu0 0
    %505 = vmatprep.subr.bf16.mxu0 0
    %506 = vmatpush1.bf16.msra.mxu0 0
    %507 = vmatprep.subr.bf16.mxu0 0
    %508 = vmatpush1.bf16.msra.mxu0 0
    %509 = vmatprep.subr.bf16.mxu0 0
    %510 = vmatpush1.bf16.msra.mxu0 0
    %511 = vmatprep.subr.bf16.mxu0 0
    %512 = vmatpush1.bf16.msra.mxu0 0
    %513 = vmatprep.mubr.bf16.mxu0 0
    %514 = vmatmul.mubr.bf16.gmra.mrb[0].mxu0 %v477
    %v515 = vpop.f32.mrb[0].mxu0
    %v516 = vadd.f32 0.0, %v515
    %v517 = vpop.f32.mrb[0].mxu0
    %v518 = vpop.f32.mrb[0].mxu0
    %v519 = vpop.f32.mrb[0].mxu0
    %520 = vdwg.mxu0
    %v521 = vrcp.pop %v424
    %v522 = vrcp.pop %v427
    %v523 = vmul.f32 %v471, %v521
    %v524 = vmul.f32 %v516, %v522
    %525 = vrot.lane.b32.xlu0 %v276, 124
    %v526 = vpop.permute.xlu0 %525
    %v528 = vsel %vm280, %v526, 0
    %530 = vmatprep.subr.bf16.mxu0 0
    %531 = vmatpush1.bf16.xpose.msra.mxu0 %v528
    %532 = vmatprep.subr.bf16.mxu0 0
    %533 = vmatpush1.bf16.xpose.msra.mxu0 0
    %534 = vmatprep.subr.bf16.mxu0 0
    %535 = vmatpush1.bf16.xpose.msra.mxu0 0
    %536 = vmatprep.subr.bf16.mxu0 0
    %537 = vmatpush1.bf16.xpose.msra.mxu0 0
    %538 = vmatprep.subr.bf16.mxu0 0
    %539 = vmatpush1.bf16.xpose.msra.mxu0 0
    %540 = vmatprep.subr.bf16.mxu0 0
    %541 = vmatpush1.bf16.xpose.msra.mxu0 0
    %542 = vmatprep.subr.bf16.mxu0 0
    %543 = vmatpush1.bf16.xpose.msra.mxu0 0
    %544 = vmatprep.subr.bf16.mxu0 0
    %545 = vmatpush1.bf16.xpose.msra.mxu0 0
    %546 = vmatprep.subr.bf16.mxu0 0
    %547 = vmatpush1.bf16.xpose.msra.mxu0 0
    %548 = vmatprep.subr.bf16.mxu0 0
    %549 = vmatpush1.bf16.xpose.msra.mxu0 0
    %550 = vmatprep.subr.bf16.mxu0 0
    %551 = vmatpush1.bf16.xpose.msra.mxu0 0
    %552 = vmatprep.subr.bf16.mxu0 0
    %553 = vmatpush1.bf16.xpose.msra.mxu0 0
    %554 = vmatprep.subr.bf16.mxu0 0
    %555 = vmatpush1.bf16.xpose.msra.mxu0 0
    %556 = vmatprep.subr.bf16.mxu0 0
    %557 = vmatpush1.bf16.xpose.msra.mxu0 0
    %558 = vmatprep.subr.bf16.mxu0 0
    %559 = vmatpush1.bf16.xpose.msra.mxu0 0
    %560 = vmatprep.subr.bf16.mxu0 0
    %561 = vmatpush1.bf16.xpose.msra.mxu0 0
    %562 = vmatprep.mubr.bf16.mxu0 0
    %563 = vmatmul.mubr.bf16.gmra.mrb[0].mxu0 %v528
    %v564 = vpop.f32.mrb[0].mxu0
    %v565 = vadd.f32 0.0, %v564
    %v566 = vpop.f32.mrb[0].mxu0
    %v567 = vpop.f32.mrb[0].mxu0
    %v568 = vpop.f32.mrb[0].mxu0
    %569 = vdwg.mxu0
    %570 = vrot.lane.b32.xlu0 %v277, 124
    %v571 = vpop.permute.xlu0 %570
    %v573 = vsel %vm280, %v571, 0
    %575 = vmatprep.subr.bf16.mxu0 0
    %576 = vmatpush1.bf16.xpose.msra.mxu0 %v573
    %577 = vmatprep.subr.bf16.mxu0 0
    %578 = vmatpush1.bf16.xpose.msra.mxu0 0
    %579 = vmatprep.subr.bf16.mxu0 0
    %580 = vmatpush1.bf16.xpose.msra.mxu0 0
    %581 = vmatprep.subr.bf16.mxu0 0
    %582 = vmatpush1.bf16.xpose.msra.mxu0 0
    %583 = vmatprep.subr.bf16.mxu0 0
    %584 = vmatpush1.bf16.xpose.msra.mxu0 0
    %585 = vmatprep.subr.bf16.mxu0 0
    %586 = vmatpush1.bf16.xpose.msra.mxu0 0
    %587 = vmatprep.subr.bf16.mxu0 0
    %588 = vmatpush1.bf16.xpose.msra.mxu0 0
    %589 = vmatprep.subr.bf16.mxu0 0
    %590 = vmatpush1.bf16.xpose.msra.mxu0 0
    %591 = vmatprep.subr.bf16.mxu0 0
    %592 = vmatpush1.bf16.xpose.msra.mxu0 0
    %593 = vmatprep.subr.bf16.mxu0 0
    %594 = vmatpush1.bf16.xpose.msra.mxu0 0
    %595 = vmatprep.subr.bf16.mxu0 0
    %596 = vmatpush1.bf16.xpose.msra.mxu0 0
    %597 = vmatprep.subr.bf16.mxu0 0
    %598 = vmatpush1.bf16.xpose.msra.mxu0 0
    %599 = vmatprep.subr.bf16.mxu0 0
    %600 = vmatpush1.bf16.xpose.msra.mxu0 0
    %601 = vmatprep.subr.bf16.mxu0 0
    %602 = vmatpush1.bf16.xpose.msra.mxu0 0
    %603 = vmatprep.subr.bf16.mxu0 0
    %604 = vmatpush1.bf16.xpose.msra.mxu0 0
    %605 = vmatprep.subr.bf16.mxu0 0
    %606 = vmatpush1.bf16.xpose.msra.mxu0 0
    %607 = vmatprep.mubr.bf16.mxu0 0
    %608 = vmatmul.mubr.bf16.gmra.mrb[0].mxu0 %v573
    %v609 = vpop.f32.mrb[0].mxu0
    %v610 = vadd.f32 0.0, %v609
    %v611 = vpop.f32.mrb[0].mxu0
    %v612 = vpop.f32.mrb[0].mxu0
    %v613 = vpop.f32.mrb[0].mxu0
    %614 = vdwg.mxu0
    %617 = vrot.lane.b32.xlu0 %v369, 124
    %v618 = vpop.permute.xlu0 %617
    %619 = vrot.lane.b32.xlu0 %v370, 124
    %v620 = vpop.permute.xlu0 %619
    %v623 = vsel %vm280, %v618, 0.0
    %624 = vadd.xlane.f32.xlu0 %v623
    %v625 = vpop.xlane.xlu0 %624
    %v626 = vsel %vm280, %v620, 0.0
    %627 = vadd.xlane.f32.xlu0 %v626
    %v628 = vpop.xlane.xlu0 %627
    %v629 = vmul.f32 %v565, 2.0
    %v630 = vmul.f32 %v610, 2.0
    %v633 = vlaneseq
    %v634 = vshrl.u32 %v633, 7
    %v635 = vsub.s32 %v382, %v634
    %v636 = vrot.slane %v625, %v635
    %v637 = vlaneseq
    %v638 = vshrl.u32 %v637, 7
    %v639 = vsub.s32 %v382, %v638
    %v640 = vrot.slane %v628, %v639
    %v641 = vsel %vm391, %v636, %v636
    %v642 = vsel %vm393, %v636, %v641
    %v643 = vsel %vm395, %v636, %v642
    %v644 = vsel %vm397, %v636, %v643
    %v645 = vsel %vm399, %v636, %v644
    %v646 = vsel %vm401, %v636, %v645
    %v647 = vsel %vm391, %v640, %v640
    %v648 = vsel %vm393, %v640, %v647
    %v649 = vsel %vm395, %v640, %v648
    %v650 = vsel %vm397, %v640, %v649
    %v651 = vsel %vm399, %v640, %v650
    %v652 = vsel %vm401, %v640, %v651
    %v655 = vsub.f32 %v629, %v646
    %v656 = vsub.f32 %v630, %v652
    %v657 = vsub.f32 %v655, %v625
    %v658 = vsub.f32 %v656, %v628
    %v659 = vmul.f32 %v657, 0.5
    %v660 = vmul.f32 %v658, 0.5
    %v661 = vmul.f32 %v659, 1.442695
    %v662 = vpow.pop %v661
    %v663 = vmul.f32 %v660, 1.442695
    %v664 = vpow.pop %v663
    %v665 = vsel %vm421, %v662, 0.0
    %666 = vadd.xlane.f32.xlu0 %v665
    %v667 = vpop.xlane.xlu0 %666
    %v668 = vsel %vm421, %v664, 0.0
    %669 = vadd.xlane.f32.xlu0 %v668
    %v670 = vpop.xlane.xlu0 %669
    %v671 = vpack.c.bf16 %v662, %v662
    %v672 = vpack.c.bf16 %v664, %v664
    %v674 = vsel %vm421, %v671, 0
    %v676 = vsel %vm433, %v526, 0
    %678 = vmatprep.subr.bf16.mxu0 0
    %679 = vmatpush1.bf16.msra.mxu0 %v676
    %680 = vmatprep.subr.bf16.mxu0 0
    %681 = vmatpush1.bf16.msra.mxu0 0
    %682 = vmatprep.subr.bf16.mxu0 0
    %683 = vmatpush1.bf16.msra.mxu0 0
    %684 = vmatprep.subr.bf16.mxu0 0
    %685 = vmatpush1.bf16.msra.mxu0 0
    %686 = vmatprep.subr.bf16.mxu0 0
    %687 = vmatpush1.bf16.msra.mxu0 0
    %688 = vmatprep.subr.bf16.mxu0 0
    %689 = vmatpush1.bf16.msra.mxu0 0
    %690 = vmatprep.subr.bf16.mxu0 0
    %691 = vmatpush1.bf16.msra.mxu0 0
    %692 = vmatprep.subr.bf16.mxu0 0
    %693 = vmatpush1.bf16.msra.mxu0 0
    %694 = vmatprep.subr.bf16.mxu0 0
    %695 = vmatpush1.bf16.msra.mxu0 0
    %696 = vmatprep.subr.bf16.mxu0 0
    %697 = vmatpush1.bf16.msra.mxu0 0
    %698 = vmatprep.subr.bf16.mxu0 0
    %699 = vmatpush1.bf16.msra.mxu0 0
    %700 = vmatprep.subr.bf16.mxu0 0
    %701 = vmatpush1.bf16.msra.mxu0 0
    %702 = vmatprep.subr.bf16.mxu0 0
    %703 = vmatpush1.bf16.msra.mxu0 0
    %704 = vmatprep.subr.bf16.mxu0 0
    %705 = vmatpush1.bf16.msra.mxu0 0
    %706 = vmatprep.subr.bf16.mxu0 0
    %707 = vmatpush1.bf16.msra.mxu0 0
    %708 = vmatprep.subr.bf16.mxu0 0
    %709 = vmatpush1.bf16.msra.mxu0 0
    %710 = vmatprep.mubr.bf16.mxu0 0
    %711 = vmatmul.mubr.bf16.gmra.mrb[0].mxu0 %v674
    %v712 = vpop.f32.mrb[0].mxu0
    %v713 = vadd.f32 0.0, %v712
    %v714 = vpop.f32.mrb[0].mxu0
    %v715 = vpop.f32.mrb[0].mxu0
    %v716 = vpop.f32.mrb[0].mxu0
    %717 = vdwg.mxu0
    %v719 = vsel %vm421, %v672, 0
    %v721 = vsel %vm433, %v571, 0
    %723 = vmatprep.subr.bf16.mxu0 0
    %724 = vmatpush1.bf16.msra.mxu0 %v721
    %725 = vmatprep.subr.bf16.mxu0 0
    %726 = vmatpush1.bf16.msra.mxu0 0
    %727 = vmatprep.subr.bf16.mxu0 0
    %728 = vmatpush1.bf16.msra.mxu0 0
    %729 = vmatprep.subr.bf16.mxu0 0
    %730 = vmatpush1.bf16.msra.mxu0 0
    %731 = vmatprep.subr.bf16.mxu0 0
    %732 = vmatpush1.bf16.msra.mxu0 0
    %733 = vmatprep.subr.bf16.mxu0 0
    %734 = vmatpush1.bf16.msra.mxu0 0
    %735 = vmatprep.subr.bf16.mxu0 0
    %736 = vmatpush1.bf16.msra.mxu0 0
    %737 = vmatprep.subr.bf16.mxu0 0
    %738 = vmatpush1.bf16.msra.mxu0 0
    %739 = vmatprep.subr.bf16.mxu0 0
    %740 = vmatpush1.bf16.msra.mxu0 0
    %741 = vmatprep.subr.bf16.mxu0 0
    %742 = vmatpush1.bf16.msra.mxu0 0
    %743 = vmatprep.subr.bf16.mxu0 0
    %744 = vmatpush1.bf16.msra.mxu0 0
    %745 = vmatprep.subr.bf16.mxu0 0
    %746 = vmatpush1.bf16.msra.mxu0 0
    %747 = vmatprep.subr.bf16.mxu0 0
    %748 = vmatpush1.bf16.msra.mxu0 0
    %749 = vmatprep.subr.bf16.mxu0 0
    %750 = vmatpush1.bf16.msra.mxu0 0
    %751 = vmatprep.subr.bf16.mxu0 0
    %752 = vmatpush1.bf16.msra.mxu0 0
    %753 = vmatprep.subr.bf16.mxu0 0
    %754 = vmatpush1.bf16.msra.mxu0 0
    %755 = vmatprep.mubr.bf16.mxu0 0
    %756 = vmatmul.mubr.bf16.gmra.mrb[0].mxu0 %v719
    %v757 = vpop.f32.mrb[0].mxu0
    %v758 = vadd.f32 0.0, %v757
    %v759 = vpop.f32.mrb[0].mxu0
    %v760 = vpop.f32.mrb[0].mxu0
    %v761 = vpop.f32.mrb[0].mxu0
    %762 = vdwg.mxu0
    %v763 = vrcp.pop %v667
    %v764 = vrcp.pop %v670
    %v765 = vmul.f32 %v713, %v763
    %v766 = vmul.f32 %v758, %v764
    %767 = vrot.lane.b32.xlu0 %v276, 120
    %v768 = vpop.permute.xlu0 %767
    %v770 = vsel %vm280, %v768, 0
    %772 = vmatprep.subr.bf16.mxu0 0
    %773 = vmatpush1.bf16.xpose.msra.mxu0 %v770
    %774 = vmatprep.subr.bf16.mxu0 0
    %775 = vmatpush1.bf16.xpose.msra.mxu0 0
    %776 = vmatprep.subr.bf16.mxu0 0
    %777 = vmatpush1.bf16.xpose.msra.mxu0 0
    %778 = vmatprep.subr.bf16.mxu0 0
    %779 = vmatpush1.bf16.xpose.msra.mxu0 0
    %780 = vmatprep.subr.bf16.mxu0 0
    %781 = vmatpush1.bf16.xpose.msra.mxu0 0
    %782 = vmatprep.subr.bf16.mxu0 0
    %783 = vmatpush1.bf16.xpose.msra.mxu0 0
    %784 = vmatprep.subr.bf16.mxu0 0
    %785 = vmatpush1.bf16.xpose.msra.mxu0 0
    %786 = vmatprep.subr.bf16.mxu0 0
    %787 = vmatpush1.bf16.xpose.msra.mxu0 0
    %788 = vmatprep.subr.bf16.mxu0 0
    %789 = vmatpush1.bf16.xpose.msra.mxu0 0
    %790 = vmatprep.subr.bf16.mxu0 0
    %791 = vmatpush1.bf16.xpose.msra.mxu0 0
    %792 = vmatprep.subr.bf16.mxu0 0
    %793 = vmatpush1.bf16.xpose.msra.mxu0 0
    %794 = vmatprep.subr.bf16.mxu0 0
    %795 = vmatpush1.bf16.xpose.msra.mxu0 0
    %796 = vmatprep.subr.bf16.mxu0 0
    %797 = vmatpush1.bf16.xpose.msra.mxu0 0
    %798 = vmatprep.subr.bf16.mxu0 0
    %799 = vmatpush1.bf16.xpose.msra.mxu0 0
    %800 = vmatprep.subr.bf16.mxu0 0
    %801 = vmatpush1.bf16.xpose.msra.mxu0 0
    %802 = vmatprep.subr.bf16.mxu0 0
    %803 = vmatpush1.bf16.xpose.msra.mxu0 0
    %804 = vmatprep.mubr.bf16.mxu0 0
    %805 = vmatmul.mubr.bf16.gmra.mrb[0].mxu0 %v770
    %v806 = vpop.f32.mrb[0].mxu0
    %v807 = vadd.f32 0.0, %v806
    %v808 = vpop.f32.mrb[0].mxu0
    %v809 = vpop.f32.mrb[0].mxu0
    %v810 = vpop.f32.mrb[0].mxu0
    %811 = vdwg.mxu0
    %812 = vrot.lane.b32.xlu0 %v277, 120
    %v813 = vpop.permute.xlu0 %812
    %v815 = vsel %vm280, %v813, 0
    %817 = vmatprep.subr.bf16.mxu0 0
    %818 = vmatpush1.bf16.xpose.msra.mxu0 %v815
    %819 = vmatprep.subr.bf16.mxu0 0
    %820 = vmatpush1.bf16.xpose.msra.mxu0 0
    %821 = vmatprep.subr.bf16.mxu0 0
    %822 = vmatpush1.bf16.xpose.msra.mxu0 0
    %823 = vmatprep.subr.bf16.mxu0 0
    %824 = vmatpush1.bf16.xpose.msra.mxu0 0
    %825 = vmatprep.subr.bf16.mxu0 0
    %826 = vmatpush1.bf16.xpose.msra.mxu0 0
    %827 = vmatprep.subr.bf16.mxu0 0
    %828 = vmatpush1.bf16.xpose.msra.mxu0 0
    %829 = vmatprep.subr.bf16.mxu0 0
    %830 = vmatpush1.bf16.xpose.msra.mxu0 0
    %831 = vmatprep.subr.bf16.mxu0 0
    %832 = vmatpush1.bf16.xpose.msra.mxu0 0
    %833 = vmatprep.subr.bf16.mxu0 0
    %834 = vmatpush1.bf16.xpose.msra.mxu0 0
    %835 = vmatprep.subr.bf16.mxu0 0
    %836 = vmatpush1.bf16.xpose.msra.mxu0 0
    %837 = vmatprep.subr.bf16.mxu0 0
    %838 = vmatpush1.bf16.xpose.msra.mxu0 0
    %839 = vmatprep.subr.bf16.mxu0 0
    %840 = vmatpush1.bf16.xpose.msra.mxu0 0
    %841 = vmatprep.subr.bf16.mxu0 0
    %842 = vmatpush1.bf16.xpose.msra.mxu0 0
    %843 = vmatprep.subr.bf16.mxu0 0
    %844 = vmatpush1.bf16.xpose.msra.mxu0 0
    %845 = vmatprep.subr.bf16.mxu0 0
    %846 = vmatpush1.bf16.xpose.msra.mxu0 0
    %847 = vmatprep.subr.bf16.mxu0 0
    %848 = vmatpush1.bf16.xpose.msra.mxu0 0
    %849 = vmatprep.mubr.bf16.mxu0 0
    %850 = vmatmul.mubr.bf16.gmra.mrb[0].mxu0 %v815
    %v851 = vpop.f32.mrb[0].mxu0
    %v852 = vadd.f32 0.0, %v851
    %v853 = vpop.f32.mrb[0].mxu0
    %v854 = vpop.f32.mrb[0].mxu0
    %v855 = vpop.f32.mrb[0].mxu0
    %856 = vdwg.mxu0
    %857 = vrot.lane.b32.xlu0 %v369, 120
    %v858 = vpop.permute.xlu0 %857
    %859 = vrot.lane.b32.xlu0 %v370, 120
    %v860 = vpop.permute.xlu0 %859
    %v863 = vsel %vm280, %v858, 0.0
    %864 = vadd.xlane.f32.xlu0 %v863
    %v865 = vpop.xlane.xlu0 %864
    %v866 = vsel %vm280, %v860, 0.0
    %867 = vadd.xlane.f32.xlu0 %v866
    %v868 = vpop.xlane.xlu0 %867
    %v869 = vmul.f32 %v807, 2.0
    %v870 = vmul.f32 %v852, 2.0
    %v873 = vlaneseq
    %v874 = vshrl.u32 %v873, 7
    %v875 = vsub.s32 %v382, %v874
    %v876 = vrot.slane %v865, %v875
    %v877 = vlaneseq
    %v878 = vshrl.u32 %v877, 7
    %v879 = vsub.s32 %v382, %v878
    %v880 = vrot.slane %v868, %v879
    %v881 = vsel %vm391, %v876, %v876
    %v882 = vsel %vm393, %v876, %v881
    %v883 = vsel %vm395, %v876, %v882
    %v884 = vsel %vm397, %v876, %v883
    %v885 = vsel %vm399, %v876, %v884
    %v886 = vsel %vm401, %v876, %v885
    %v887 = vsel %vm391, %v880, %v880
    %v888 = vsel %vm393, %v880, %v887
    %v889 = vsel %vm395, %v880, %v888
    %v890 = vsel %vm397, %v880, %v889
    %v891 = vsel %vm399, %v880, %v890
    %v892 = vsel %vm401, %v880, %v891
    %v895 = vsub.f32 %v869, %v886
    %v896 = vsub.f32 %v870, %v892
    %v897 = vsub.f32 %v895, %v865
    %v898 = vsub.f32 %v896, %v868
    %v899 = vmul.f32 %v897, 0.5
    %v900 = vmul.f32 %v898, 0.5
    %v901 = vmul.f32 %v899, 1.442695
    %v902 = vpow.pop %v901
    %v903 = vmul.f32 %v900, 1.442695
    %v904 = vpow.pop %v903
    %v905 = vsel %vm421, %v902, 0.0
    %906 = vadd.xlane.f32.xlu0 %v905
    %v907 = vpop.xlane.xlu0 %906
    %v908 = vsel %vm421, %v904, 0.0
    %909 = vadd.xlane.f32.xlu0 %v908
    %v910 = vpop.xlane.xlu0 %909
    %v911 = vpack.c.bf16 %v902, %v902
    %v912 = vpack.c.bf16 %v904, %v904
    %v914 = vsel %vm421, %v911, 0
    %v916 = vsel %vm433, %v768, 0
    %918 = vmatprep.subr.bf16.mxu0 0
    %919 = vmatpush1.bf16.msra.mxu0 %v916
    %920 = vmatprep.subr.bf16.mxu0 0
    %921 = vmatpush1.bf16.msra.mxu0 0
    %922 = vmatprep.subr.bf16.mxu0 0
    %923 = vmatpush1.bf16.msra.mxu0 0
    %924 = vmatprep.subr.bf16.mxu0 0
    %925 = vmatpush1.bf16.msra.mxu0 0
    %926 = vmatprep.subr.bf16.mxu0 0
    %927 = vmatpush1.bf16.msra.mxu0 0
    %928 = vmatprep.subr.bf16.mxu0 0
    %929 = vmatpush1.bf16.msra.mxu0 0
    %930 = vmatprep.subr.bf16.mxu0 0
    %931 = vmatpush1.bf16.msra.mxu0 0
    %932 = vmatprep.subr.bf16.mxu0 0
    %933 = vmatpush1.bf16.msra.mxu0 0
    %934 = vmatprep.subr.bf16.mxu0 0
    %935 = vmatpush1.bf16.msra.mxu0 0
    %936 = vmatprep.subr.bf16.mxu0 0
    %937 = vmatpush1.bf16.msra.mxu0 0
    %938 = vmatprep.subr.bf16.mxu0 0
    %939 = vmatpush1.bf16.msra.mxu0 0
    %940 = vmatprep.subr.bf16.mxu0 0
    %941 = vmatpush1.bf16.msra.mxu0 0
    %942 = vmatprep.subr.bf16.mxu0 0
    %943 = vmatpush1.bf16.msra.mxu0 0
    %944 = vmatprep.subr.bf16.mxu0 0
    %945 = vmatpush1.bf16.msra.mxu0 0
    %946 = vmatprep.subr.bf16.mxu0 0
    %947 = vmatpush1.bf16.msra.mxu0 0
    %948 = vmatprep.subr.bf16.mxu0 0
    %949 = vmatpush1.bf16.msra.mxu0 0
    %950 = vmatprep.mubr.bf16.mxu0 0
    %951 = vmatmul.mubr.bf16.gmra.mrb[0].mxu0 %v914
    %v952 = vpop.f32.mrb[0].mxu0
    %v953 = vadd.f32 0.0, %v952
    %v954 = vpop.f32.mrb[0].mxu0
    %v955 = vpop.f32.mrb[0].mxu0
    %v956 = vpop.f32.mrb[0].mxu0
    %957 = vdwg.mxu0
    %v959 = vsel %vm421, %v912, 0
    %v961 = vsel %vm433, %v813, 0
    %963 = vmatprep.subr.bf16.mxu0 0
    %964 = vmatpush1.bf16.msra.mxu0 %v961
    %965 = vmatprep.subr.bf16.mxu0 0
    %966 = vmatpush1.bf16.msra.mxu0 0
    %967 = vmatprep.subr.bf16.mxu0 0
    %968 = vmatpush1.bf16.msra.mxu0 0
    %969 = vmatprep.subr.bf16.mxu0 0
    %970 = vmatpush1.bf16.msra.mxu0 0
    %971 = vmatprep.subr.bf16.mxu0 0
    %972 = vmatpush1.bf16.msra.mxu0 0
    %973 = vmatprep.subr.bf16.mxu0 0
    %974 = vmatpush1.bf16.msra.mxu0 0
    %975 = vmatprep.subr.bf16.mxu0 0
    %976 = vmatpush1.bf16.msra.mxu0 0
    %977 = vmatprep.subr.bf16.mxu0 0
    %978 = vmatpush1.bf16.msra.mxu0 0
    %979 = vmatprep.subr.bf16.mxu0 0
    %980 = vmatpush1.bf16.msra.mxu0 0
    %981 = vmatprep.subr.bf16.mxu0 0
    %982 = vmatpush1.bf16.msra.mxu0 0
    %983 = vmatprep.subr.bf16.mxu0 0
    %984 = vmatpush1.bf16.msra.mxu0 0
    %985 = vmatprep.subr.bf16.mxu0 0
    %986 = vmatpush1.bf16.msra.mxu0 0
    %987 = vmatprep.subr.bf16.mxu0 0
    %988 = vmatpush1.bf16.msra.mxu0 0
    %989 = vmatprep.subr.bf16.mxu0 0
    %990 = vmatpush1.bf16.msra.mxu0 0
    %991 = vmatprep.subr.bf16.mxu0 0
    %992 = vmatpush1.bf16.msra.mxu0 0
    %993 = vmatprep.subr.bf16.mxu0 0
    %994 = vmatpush1.bf16.msra.mxu0 0
    %995 = vmatprep.mubr.bf16.mxu0 0
    %996 = vmatmul.mubr.bf16.gmra.mrb[0].mxu0 %v959
    %v997 = vpop.f32.mrb[0].mxu0
    %v998 = vadd.f32 0.0, %v997
    %v999 = vpop.f32.mrb[0].mxu0
    %v1000 = vpop.f32.mrb[0].mxu0
    %v1001 = vpop.f32.mrb[0].mxu0
    %1002 = vdwg.mxu0
    %v1003 = vrcp.pop %v907
    %v1004 = vrcp.pop %v910
    %v1005 = vmul.f32 %v953, %v1003
    %v1006 = vmul.f32 %v998, %v1004
    %1007 = vrot.lane.b32.xlu0 %v276, 116
    %v1008 = vpop.permute.xlu0 %1007
    %v1010 = vsel %vm280, %v1008, 0
    %1012 = vmatprep.subr.bf16.mxu0 0
    %1013 = vmatpush1.bf16.xpose.msra.mxu0 %v1010
    %1014 = vmatprep.subr.bf16.mxu0 0
    %1015 = vmatpush1.bf16.xpose.msra.mxu0 0
    %1016 = vmatprep.subr.bf16.mxu0 0
    %1017 = vmatpush1.bf16.xpose.msra.mxu0 0
    %1018 = vmatprep.subr.bf16.mxu0 0
    %1019 = vmatpush1.bf16.xpose.msra.mxu0 0
    %1020 = vmatprep.subr.bf16.mxu0 0
    %1021 = vmatpush1.bf16.xpose.msra.mxu0 0
    %1022 = vmatprep.subr.bf16.mxu0 0
    %1023 = vmatpush1.bf16.xpose.msra.mxu0 0
    %1024 = vmatprep.subr.bf16.mxu0 0
    %1025 = vmatpush1.bf16.xpose.msra.mxu0 0
    %1026 = vmatprep.subr.bf16.mxu0 0
    %1027 = vmatpush1.bf16.xpose.msra.mxu0 0
    %1028 = vmatprep.subr.bf16.mxu0 0
    %1029 = vmatpush1.bf16.xpose.msra.mxu0 0
    %1030 = vmatprep.subr.bf16.mxu0 0
    %1031 = vmatpush1.bf16.xpose.msra.mxu0 0
    %1032 = vmatprep.subr.bf16.mxu0 0
    %1033 = vmatpush1.bf16.xpose.msra.mxu0 0
    %1034 = vmatprep.subr.bf16.mxu0 0
    %1035 = vmatpush1.bf16.xpose.msra.mxu0 0
    %1036 = vmatprep.subr.bf16.mxu0 0
    %1037 = vmatpush1.bf16.xpose.msra.mxu0 0
    %1038 = vmatprep.subr.bf16.mxu0 0
    %1039 = vmatpush1.bf16.xpose.msra.mxu0 0
    %1040 = vmatprep.subr.bf16.mxu0 0
    %1041 = vmatpush1.bf16.xpose.msra.mxu0 0
    %1042 = vmatprep.subr.bf16.mxu0 0
    %1043 = vmatpush1.bf16.xpose.msra.mxu0 0
    %1044 = vmatprep.mubr.bf16.mxu0 0
    %1045 = vmatmul.mubr.bf16.gmra.mrb[0].mxu0 %v1010
    %v1046 = vpop.f32.mrb[0].mxu0
    %v1047 = vadd.f32 0.0, %v1046
    %v1048 = vpop.f32.mrb[0].mxu0
    %v1049 = vpop.f32.mrb[0].mxu0
    %v1050 = vpop.f32.mrb[0].mxu0
    %1051 = vdwg.mxu0
    %1052 = vrot.lane.b32.xlu0 %v277, 116
    %v1053 = vpop.permute.xlu0 %1052
    %v1055 = vsel %vm280, %v1053, 0
    %1057 = vmatprep.subr.bf16.mxu0 0
    %1058 = vmatpush1.bf16.xpose.msra.mxu0 %v1055
    %1059 = vmatprep.subr.bf16.mxu0 0
    %1060 = vmatpush1.bf16.xpose.msra.mxu0 0
    %1061 = vmatprep.subr.bf16.mxu0 0
    %1062 = vmatpush1.bf16.xpose.msra.mxu0 0
    %1063 = vmatprep.subr.bf16.mxu0 0
    %1064 = vmatpush1.bf16.xpose.msra.mxu0 0
    %1065 = vmatprep.subr.bf16.mxu0 0
    %1066 = vmatpush1.bf16.xpose.msra.mxu0 0
    %1067 = vmatprep.subr.bf16.mxu0 0
    %1068 = vmatpush1.bf16.xpose.msra.mxu0 0
    %1069 = vmatprep.subr.bf16.mxu0 0
    %1070 = vmatpush1.bf16.xpose.msra.mxu0 0
    %1071 = vmatprep.subr.bf16.mxu0 0
    %1072 = vmatpush1.bf16.xpose.msra.mxu0 0
    %1073 = vmatprep.subr.bf16.mxu0 0
    %1074 = vmatpush1.bf16.xpose.msra.mxu0 0
    %1075 = vmatprep.subr.bf16.mxu0 0
    %1076 = vmatpush1.bf16.xpose.msra.mxu0 0
    %1077 = vmatprep.subr.bf16.mxu0 0
    %1078 = vmatpush1.bf16.xpose.msra.mxu0 0
    %1079 = vmatprep.subr.bf16.mxu0 0
    %1080 = vmatpush1.bf16.xpose.msra.mxu0 0
    %1081 = vmatprep.subr.bf16.mxu0 0
    %1082 = vmatpush1.bf16.xpose.msra.mxu0 0
    %1083 = vmatprep.subr.bf16.mxu0 0
    %1084 = vmatpush1.bf16.xpose.msra.mxu0 0
    %1085 = vmatprep.subr.bf16.mxu0 0
    %1086 = vmatpush1.bf16.xpose.msra.mxu0 0
    %1087 = vmatprep.subr.bf16.mxu0 0
    %1088 = vmatpush1.bf16.xpose.msra.mxu0 0
    %1089 = vmatprep.mubr.bf16.mxu0 0
    %1090 = vmatmul.mubr.bf16.gmra.mrb[0].mxu0 %v1055
    %v1091 = vpop.f32.mrb[0].mxu0
    %v1092 = vadd.f32 0.0, %v1091
    %v1093 = vpop.f32.mrb[0].mxu0
    %v1094 = vpop.f32.mrb[0].mxu0
    %v1095 = vpop.f32.mrb[0].mxu0
    %1096 = vdwg.mxu0
    %1097 = vrot.lane.b32.xlu0 %v369, 116
    %v1098 = vpop.permute.xlu0 %1097
    %1099 = vrot.lane.b32.xlu0 %v370, 116
    %v1100 = vpop.permute.xlu0 %1099
    %v1103 = vsel %vm280, %v1098, 0.0
    %1104 = vadd.xlane.f32.xlu0 %v1103
    %v1105 = vpop.xlane.xlu0 %1104
    %v1106 = vsel %vm280, %v1100, 0.0
    %1107 = vadd.xlane.f32.xlu0 %v1106
    %v1108 = vpop.xlane.xlu0 %1107
    %v1109 = vmul.f32 %v1047, 2.0
    %v1110 = vmul.f32 %v1092, 2.0
    %v1113 = vlaneseq
    %v1114 = vshrl.u32 %v1113, 7
    %v1115 = vsub.s32 %v382, %v1114
    %v1116 = vrot.slane %v1105, %v1115
    %v1117 = vlaneseq
    %v1118 = vshrl.u32 %v1117, 7
    %v1119 = vsub.s32 %v382, %v1118
    %v1120 = vrot.slane %v1108, %v1119
    %v1121 = vsel %vm391, %v1116, %v1116
    %v1122 = vsel %vm393, %v1116, %v1121
    %v1123 = vsel %vm395, %v1116, %v1122
    %v1124 = vsel %vm397, %v1116, %v1123
    %v1125 = vsel %vm399, %v1116, %v1124
    %v1126 = vsel %vm401, %v1116, %v1125
    %v1127 = vsel %vm391, %v1120, %v1120
    %v1128 = vsel %vm393, %v1120, %v1127
    %v1129 = vsel %vm395, %v1120, %v1128
    %v1130 = vsel %vm397, %v1120, %v1129
    %v1131 = vsel %vm399, %v1120, %v1130
    %v1132 = vsel %vm401, %v1120, %v1131
    %v1135 = vsub.f32 %v1109, %v1126
    %v1136 = vsub.f32 %v1110, %v1132
    %v1137 = vsub.f32 %v1135, %v1105
    %v1138 = vsub.f32 %v1136, %v1108
    %v1139 = vmul.f32 %v1137, 0.5
    %v1140 = vmul.f32 %v1138, 0.5
    %v1141 = vmul.f32 %v1139, 1.442695
    %v1142 = vpow.pop %v1141
    %v1143 = vmul.f32 %v1140, 1.442695
    %v1144 = vpow.pop %v1143
    %v1145 = vsel %vm421, %v1142, 0.0
    %1146 = vadd.xlane.f32.xlu0 %v1145
    %v1147 = vpop.xlane.xlu0 %1146
    %v1148 = vsel %vm421, %v1144, 0.0
    %1149 = vadd.xlane.f32.xlu0 %v1148
    %v1150 = vpop.xlane.xlu0 %1149
    %v1151 = vpack.c.bf16 %v1142, %v1142
    %v1152 = vpack.c.bf16 %v1144, %v1144
    %v1154 = vsel %vm421, %v1151, 0
    %v1156 = vsel %vm433, %v1008, 0
    %1158 = vmatprep.subr.bf16.mxu0 0
    %1159 = vmatpush1.bf16.msra.mxu0 %v1156
    %1160 = vmatprep.subr.bf16.mxu0 0
    %1161 = vmatpush1.bf16.msra.mxu0 0
    %1162 = vmatprep.subr.bf16.mxu0 0
    %1163 = vmatpush1.bf16.msra.mxu0 0
    %1164 = vmatprep.subr.bf16.mxu0 0
    %1165 = vmatpush1.bf16.msra.mxu0 0
    %1166 = vmatprep.subr.bf16.mxu0 0
    %1167 = vmatpush1.bf16.msra.mxu0 0
    %1168 = vmatprep.subr.bf16.mxu0 0
    %1169 = vmatpush1.bf16.msra.mxu0 0
    %1170 = vmatprep.subr.bf16.mxu0 0
    %1171 = vmatpush1.bf16.msra.mxu0 0
    %1172 = vmatprep.subr.bf16.mxu0 0
    %1173 = vmatpush1.bf16.msra.mxu0 0
    %1174 = vmatprep.subr.bf16.mxu0 0
    %1175 = vmatpush1.bf16.msra.mxu0 0
    %1176 = vmatprep.subr.bf16.mxu0 0
    %1177 = vmatpush1.bf16.msra.mxu0 0
    %1178 = vmatprep.subr.bf16.mxu0 0
    %1179 = vmatpush1.bf16.msra.mxu0 0
    %1180 = vmatprep.subr.bf16.mxu0 0
    %1181 = vmatpush1.bf16.msra.mxu0 0
    %1182 = vmatprep.subr.bf16.mxu0 0
    %1183 = vmatpush1.bf16.msra.mxu0 0
    %1184 = vmatprep.subr.bf16.mxu0 0
    %1185 = vmatpush1.bf16.msra.mxu0 0
    %1186 = vmatprep.subr.bf16.mxu0 0
    %1187 = vmatpush1.bf16.msra.mxu0 0
    %1188 = vmatprep.subr.bf16.mxu0 0
    %1189 = vmatpush1.bf16.msra.mxu0 0
    %1190 = vmatprep.mubr.bf16.mxu0 0
    %1191 = vmatmul.mubr.bf16.gmra.mrb[0].mxu0 %v1154
    %v1192 = vpop.f32.mrb[0].mxu0
    %v1193 = vadd.f32 0.0, %v1192
    %v1194 = vpop.f32.mrb[0].mxu0
    %v1195 = vpop.f32.mrb[0].mxu0
    %v1196 = vpop.f32.mrb[0].mxu0
    %1197 = vdwg.mxu0
    %v1199 = vsel %vm421, %v1152, 0
    %v1201 = vsel %vm433, %v1053, 0
    %1203 = vmatprep.subr.bf16.mxu0 0
    %1204 = vmatpush1.bf16.msra.mxu0 %v1201
    %1205 = vmatprep.subr.bf16.mxu0 0
    %1206 = vmatpush1.bf16.msra.mxu0 0
    %1207 = vmatprep.subr.bf16.mxu0 0
    %1208 = vmatpush1.bf16.msra.mxu0 0
    %1209 = vmatprep.subr.bf16.mxu0 0
    %1210 = vmatpush1.bf16.msra.mxu0 0
    %1211 = vmatprep.subr.bf16.mxu0 0
    %1212 = vmatpush1.bf16.msra.mxu0 0
    %1213 = vmatprep.subr.bf16.mxu0 0
    %1214 = vmatpush1.bf16.msra.mxu0 0
    %1215 = vmatprep.subr.bf16.mxu0 0
    %1216 = vmatpush1.bf16.msra.mxu0 0
    %1217 = vmatprep.subr.bf16.mxu0 0
    %1218 = vmatpush1.bf16.msra.mxu0 0
    %1219 = vmatprep.subr.bf16.mxu0 0
    %1220 = vmatpush1.bf16.msra.mxu0 0
    %1221 = vmatprep.subr.bf16.mxu0 0
    %1222 = vmatpush1.bf16.msra.mxu0 0
    %1223 = vmatprep.subr.bf16.mxu0 0
    %1224 = vmatpush1.bf16.msra.mxu0 0
    %1225 = vmatprep.subr.bf16.mxu0 0
    %1226 = vmatpush1.bf16.msra.mxu0 0
    %1227 = vmatprep.subr.bf16.mxu0 0
    %1228 = vmatpush1.bf16.msra.mxu0 0
    %1229 = vmatprep.subr.bf16.mxu0 0
    %1230 = vmatpush1.bf16.msra.mxu0 0
    %1231 = vmatprep.subr.bf16.mxu0 0
    %1232 = vmatpush1.bf16.msra.mxu0 0
    %1233 = vmatprep.subr.bf16.mxu0 0
    %1234 = vmatpush1.bf16.msra.mxu0 0
    %1235 = vmatprep.mubr.bf16.mxu0 0
    %1236 = vmatmul.mubr.bf16.gmra.mrb[0].mxu0 %v1199
    %v1237 = vpop.f32.mrb[0].mxu0
    %v1238 = vadd.f32 0.0, %v1237
    %v1239 = vpop.f32.mrb[0].mxu0
    %v1240 = vpop.f32.mrb[0].mxu0
    %v1241 = vpop.f32.mrb[0].mxu0
    %1242 = vdwg.mxu0
    %v1243 = vrcp.pop %v1147
    %v1244 = vrcp.pop %v1150
    %v1245 = vmul.f32 %v1193, %v1243
    %v1246 = vmul.f32 %v1238, %v1244
    %1247 = vrot.lane.b32.xlu0 %v276, 112
    %v1248 = vpop.permute.xlu0 %1247
    %v1250 = vsel %vm280, %v1248, 0
    %1252 = vmatprep.subr.bf16.mxu0 0
    %1253 = vmatpush1.bf16.xpose.msra.mxu0 %v1250
    %1254 = vmatprep.subr.bf16.mxu0 0
    %1255 = vmatpush1.bf16.xpose.msra.mxu0 0
    %1256 = vmatprep.subr.bf16.mxu0 0
    %1257 = vmatpush1.bf16.xpose.msra.mxu0 0
    %1258 = vmatprep.subr.bf16.mxu0 0
    %1259 = vmatpush1.bf16.xpose.msra.mxu0 0
    %1260 = vmatprep.subr.bf16.mxu0 0
    %1261 = vmatpush1.bf16.xpose.msra.mxu0 0
    %1262 = vmatprep.subr.bf16.mxu0 0
    %1263 = vmatpush1.bf16.xpose.msra.mxu0 0
    %1264 = vmatprep.subr.bf16.mxu0 0
    %1265 = vmatpush1.bf16.xpose.msra.mxu0 0
    %1266 = vmatprep.subr.bf16.mxu0 0
    %1267 = vmatpush1.bf16.xpose.msra.mxu0 0
    %1268 = vmatprep.subr.bf16.mxu0 0
    %1269 = vmatpush1.bf16.xpose.msra.mxu0 0
    %1270 = vmatprep.subr.bf16.mxu0 0
    %1271 = vmatpush1.bf16.xpose.msra.mxu0 0
    %1272 = vmatprep.subr.bf16.mxu0 0
    %1273 = vmatpush1.bf16.xpose.msra.mxu0 0
    %1274 = vmatprep.subr.bf16.mxu0 0
    %1275 = vmatpush1.bf16.xpose.msra.mxu0 0
    %1276 = vmatprep.subr.bf16.mxu0 0
    %1277 = vmatpush1.bf16.xpose.msra.mxu0 0
    %1278 = vmatprep.subr.bf16.mxu0 0
    %1279 = vmatpush1.bf16.xpose.msra.mxu0 0
    %1280 = vmatprep.subr.bf16.mxu0 0
    %1281 = vmatpush1.bf16.xpose.msra.mxu0 0
    %1282 = vmatprep.subr.bf16.mxu0 0
    %1283 = vmatpush1.bf16.xpose.msra.mxu0 0
    %1284 = vmatprep.mubr.bf16.mxu0 0
    %1285 = vmatmul.mubr.bf16.gmra.mrb[0].mxu0 %v1250
    %v1286 = vpop.f32.mrb[0].mxu0
    %v1287 = vadd.f32 0.0, %v1286
    %v1288 = vpop.f32.mrb[0].mxu0
    %v1289 = vpop.f32.mrb[0].mxu0
    %v1290 = vpop.f32.mrb[0].mxu0
    %1291 = vdwg.mxu0
    %1292 = vrot.lane.b32.xlu0 %v277, 112
    %v1293 = vpop.permute.xlu0 %1292
    %v1295 = vsel %vm280, %v1293, 0
    %1297 = vmatprep.subr.bf16.mxu0 0
    %1298 = vmatpush1.bf16.xpose.msra.mxu0 %v1295
    %1299 = vmatprep.subr.bf16.mxu0 0
    %1300 = vmatpush1.bf16.xpose.msra.mxu0 0
    %1301 = vmatprep.subr.bf16.mxu0 0
    %1302 = vmatpush1.bf16.xpose.msra.mxu0 0
    %1303 = vmatprep.subr.bf16.mxu0 0
    %1304 = vmatpush1.bf16.xpose.msra.mxu0 0
    %1305 = vmatprep.subr.bf16.mxu0 0
    %1306 = vmatpush1.bf16.xpose.msra.mxu0 0
    %1307 = vmatprep.subr.bf16.mxu0 0
    %1308 = vmatpush1.bf16.xpose.msra.mxu0 0
    %1309 = vmatprep.subr.bf16.mxu0 0
    %1310 = vmatpush1.bf16.xpose.msra.mxu0 0
    %1311 = vmatprep.subr.bf16.mxu0 0
    %1312 = vmatpush1.bf16.xpose.msra.mxu0 0
    %1313 = vmatprep.subr.bf16.mxu0 0
    %1314 = vmatpush1.bf16.xpose.msra.mxu0 0
    %1315 = vmatprep.subr.bf16.mxu0 0
    %1316 = vmatpush1.bf16.xpose.msra.mxu0 0
    %1317 = vmatprep.subr.bf16.mxu0 0
    %1318 = vmatpush1.bf16.xpose.msra.mxu0 0
    %1319 = vmatprep.subr.bf16.mxu0 0
    %1320 = vmatpush1.bf16.xpose.msra.mxu0 0
    %1321 = vmatprep.subr.bf16.mxu0 0
    %1322 = vmatpush1.bf16.xpose.msra.mxu0 0
    %1323 = vmatprep.subr.bf16.mxu0 0
    %1324 = vmatpush1.bf16.xpose.msra.mxu0 0
    %1325 = vmatprep.subr.bf16.mxu0 0
    %1326 = vmatpush1.bf16.xpose.msra.mxu0 0
    %1327 = vmatprep.subr.bf16.mxu0 0
    %1328 = vmatpush1.bf16.xpose.msra.mxu0 0
    %1329 = vmatprep.mubr.bf16.mxu0 0
    %1330 = vmatmul.mubr.bf16.gmra.mrb[0].mxu0 %v1295
    %v1331 = vpop.f32.mrb[0].mxu0
    %v1332 = vadd.f32 0.0, %v1331
    %v1333 = vpop.f32.mrb[0].mxu0
    %v1334 = vpop.f32.mrb[0].mxu0
    %v1335 = vpop.f32.mrb[0].mxu0
    %1336 = vdwg.mxu0
    %1337 = vrot.lane.b32.xlu0 %v369, 112
    %v1338 = vpop.permute.xlu0 %1337
    %1339 = vrot.lane.b32.xlu0 %v370, 112
    %v1340 = vpop.permute.xlu0 %1339
    %v1343 = vsel %vm280, %v1338, 0.0
    %1344 = vadd.xlane.f32.xlu0 %v1343
    %v1345 = vpop.xlane.xlu0 %1344
    %v1346 = vsel %vm280, %v1340, 0.0
    %1347 = vadd.xlane.f32.xlu0 %v1346
    %v1348 = vpop.xlane.xlu0 %1347
    %v1349 = vmul.f32 %v1287, 2.0
    %v1350 = vmul.f32 %v1332, 2.0
    %v1353 = vlaneseq
    %v1354 = vshrl.u32 %v1353, 7
    %v1355 = vsub.s32 %v382, %v1354
    %v1356 = vrot.slane %v1345, %v1355
    %v1357 = vlaneseq
    %v1358 = vshrl.u32 %v1357, 7
    %v1359 = vsub.s32 %v382, %v1358
    %v1360 = vrot.slane %v1348, %v1359
    %v1361 = vsel %vm391, %v1356, %v1356
    %v1362 = vsel %vm393, %v1356, %v1361
    %v1363 = vsel %vm395, %v1356, %v1362
    %v1364 = vsel %vm397, %v1356, %v1363
    %v1365 = vsel %vm399, %v1356, %v1364
    %v1366 = vsel %vm401, %v1356, %v1365
    %v1367 = vsel %vm391, %v1360, %v1360
    %v1368 = vsel %vm393, %v1360, %v1367
    %v1369 = vsel %vm395, %v1360, %v1368
    %v1370 = vsel %vm397, %v1360, %v1369
    %v1371 = vsel %vm399, %v1360, %v1370
    %v1372 = vsel %vm401, %v1360, %v1371
    %v1375 = vsub.f32 %v1349, %v1366
    %v1376 = vsub.f32 %v1350, %v1372
    %v1377 = vsub.f32 %v1375, %v1345
    %v1378 = vsub.f32 %v1376, %v1348
    %v1379 = vmul.f32 %v1377, 0.5
    %v1380 = vmul.f32 %v1378, 0.5
    %v1381 = vmul.f32 %v1379, 1.442695
    %v1382 = vpow.pop %v1381
    %v1383 = vmul.f32 %v1380, 1.442695
    %v1384 = vpow.pop %v1383
    %v1385 = vsel %vm421, %v1382, 0.0
    %1386 = vadd.xlane.f32.xlu0 %v1385
    %v1387 = vpop.xlane.xlu0 %1386
    %v1388 = vsel %vm421, %v1384, 0.0
    %1389 = vadd.xlane.f32.xlu0 %v1388
    %v1390 = vpop.xlane.xlu0 %1389
    %v1391 = vpack.c.bf16 %v1382, %v1382
    %v1392 = vpack.c.bf16 %v1384, %v1384
    %v1394 = vsel %vm421, %v1391, 0
    %v1396 = vsel %vm433, %v1248, 0
    %1398 = vmatprep.subr.bf16.mxu0 0
    %1399 = vmatpush1.bf16.msra.mxu0 %v1396
    %1400 = vmatprep.subr.bf16.mxu0 0
    %1401 = vmatpush1.bf16.msra.mxu0 0
    %1402 = vmatprep.subr.bf16.mxu0 0
    %1403 = vmatpush1.bf16.msra.mxu0 0
    %1404 = vmatprep.subr.bf16.mxu0 0
    %1405 = vmatpush1.bf16.msra.mxu0 0
    %1406 = vmatprep.subr.bf16.mxu0 0
    %1407 = vmatpush1.bf16.msra.mxu0 0
    %1408 = vmatprep.subr.bf16.mxu0 0
    %1409 = vmatpush1.bf16.msra.mxu0 0
    %1410 = vmatprep.subr.bf16.mxu0 0
    %1411 = vmatpush1.bf16.msra.mxu0 0
    %1412 = vmatprep.subr.bf16.mxu0 0
    %1413 = vmatpush1.bf16.msra.mxu0 0
    %1414 = vmatprep.subr.bf16.mxu0 0
    %1415 = vmatpush1.bf16.msra.mxu0 0
    %1416 = vmatprep.subr.bf16.mxu0 0
    %1417 = vmatpush1.bf16.msra.mxu0 0
    %1418 = vmatprep.subr.bf16.mxu0 0
    %1419 = vmatpush1.bf16.msra.mxu0 0
    %1420 = vmatprep.subr.bf16.mxu0 0
    %1421 = vmatpush1.bf16.msra.mxu0 0
    %1422 = vmatprep.subr.bf16.mxu0 0
    %1423 = vmatpush1.bf16.msra.mxu0 0
    %1424 = vmatprep.subr.bf16.mxu0 0
    %1425 = vmatpush1.bf16.msra.mxu0 0
    %1426 = vmatprep.subr.bf16.mxu0 0
    %1427 = vmatpush1.bf16.msra.mxu0 0
    %1428 = vmatprep.subr.bf16.mxu0 0
    %1429 = vmatpush1.bf16.msra.mxu0 0
    %1430 = vmatprep.mubr.bf16.mxu0 0
    %1431 = vmatmul.mubr.bf16.gmra.mrb[0].mxu0 %v1394
    %v1432 = vpop.f32.mrb[0].mxu0
    %v1433 = vadd.f32 0.0, %v1432
    %v1434 = vpop.f32.mrb[0].mxu0
    %v1435 = vpop.f32.mrb[0].mxu0
    %v1436 = vpop.f32.mrb[0].mxu0
    %1437 = vdwg.mxu0
    %v1439 = vsel %vm421, %v1392, 0
    %v1441 = vsel %vm433, %v1293, 0
    %1443 = vmatprep.subr.bf16.mxu0 0
    %1444 = vmatpush1.bf16.msra.mxu0 %v1441
    %1445 = vmatprep.subr.bf16.mxu0 0
    %1446 = vmatpush1.bf16.msra.mxu0 0
    %1447 = vmatprep.subr.bf16.mxu0 0
    %1448 = vmatpush1.bf16.msra.mxu0 0
    %1449 = vmatprep.subr.bf16.mxu0 0
    %1450 = vmatpush1.bf16.msra.mxu0 0
    %1451 = vmatprep.subr.bf16.mxu0 0
    %1452 = vmatpush1.bf16.msra.mxu0 0
    %1453 = vmatprep.subr.bf16.mxu0 0
    %1454 = vmatpush1.bf16.msra.mxu0 0
    %1455 = vmatprep.subr.bf16.mxu0 0
    %1456 = vmatpush1.bf16.msra.mxu0 0
    %1457 = vmatprep.subr.bf16.mxu0 0
    %1458 = vmatpush1.bf16.msra.mxu0 0
    %1459 = vmatprep.subr.bf16.mxu0 0
    %1460 = vmatpush1.bf16.msra.mxu0 0
    %1461 = vmatprep.subr.bf16.mxu0 0
    %1462 = vmatpush1.bf16.msra.mxu0 0
    %1463 = vmatprep.subr.bf16.mxu0 0
    %1464 = vmatpush1.bf16.msra.mxu0 0
    %1465 = vmatprep.subr.bf16.mxu0 0
    %1466 = vmatpush1.bf16.msra.mxu0 0
    %1467 = vmatprep.subr.bf16.mxu0 0
    %1468 = vmatpush1.bf16.msra.mxu0 0
    %1469 = vmatprep.subr.bf16.mxu0 0
    %1470 = vmatpush1.bf16.msra.mxu0 0
    %1471 = vmatprep.subr.bf16.mxu0 0
    %1472 = vmatpush1.bf16.msra.mxu0 0
    %1473 = vmatprep.subr.bf16.mxu0 0
    %1474 = vmatpush1.bf16.msra.mxu0 0
    %1475 = vmatprep.mubr.bf16.mxu0 0
    %1476 = vmatmul.mubr.bf16.gmra.mrb[0].mxu0 %v1439
    %v1477 = vpop.f32.mrb[0].mxu0
    %v1478 = vadd.f32 0.0, %v1477
    %v1479 = vpop.f32.mrb[0].mxu0
    %v1480 = vpop.f32.mrb[0].mxu0
    %v1481 = vpop.f32.mrb[0].mxu0
    %1482 = vdwg.mxu0
    %v1483 = vrcp.pop %v1387
    %v1484 = vrcp.pop %v1390
    %v1485 = vmul.f32 %v1433, %v1483
    %v1486 = vmul.f32 %v1478, %v1484
    %1487 = vrot.lane.b32.xlu0 %v276, 108
    %v1488 = vpop.permute.xlu0 %1487
    %v1490 = vsel %vm280, %v1488, 0
    %1492 = vmatprep.subr.bf16.mxu0 0
    %1493 = vmatpush1.bf16.xpose.msra.mxu0 %v1490
    %1494 = vmatprep.subr.bf16.mxu0 0
    %1495 = vmatpush1.bf16.xpose.msra.mxu0 0
    %1496 = vmatprep.subr.bf16.mxu0 0
    %1497 = vmatpush1.bf16.xpose.msra.mxu0 0
    %1498 = vmatprep.subr.bf16.mxu0 0
    %1499 = vmatpush1.bf16.xpose.msra.mxu0 0
    %1500 = vmatprep.subr.bf16.mxu0 0
    %1501 = vmatpush1.bf16.xpose.msra.mxu0 0
    %1502 = vmatprep.subr.bf16.mxu0 0
    %1503 = vmatpush1.bf16.xpose.msra.mxu0 0
    %1504 = vmatprep.subr.bf16.mxu0 0
    %1505 = vmatpush1.bf16.xpose.msra.mxu0 0
    %1506 = vmatprep.subr.bf16.mxu0 0
    %1507 = vmatpush1.bf16.xpose.msra.mxu0 0
    %1508 = vmatprep.subr.bf16.mxu0 0
    %1509 = vmatpush1.bf16.xpose.msra.mxu0 0
    %1510 = vmatprep.subr.bf16.mxu0 0
    %1511 = vmatpush1.bf16.xpose.msra.mxu0 0
    %1512 = vmatprep.subr.bf16.mxu0 0
    %1513 = vmatpush1.bf16.xpose.msra.mxu0 0
    %1514 = vmatprep.subr.bf16.mxu0 0
    %1515 = vmatpush1.bf16.xpose.msra.mxu0 0
    %1516 = vmatprep.subr.bf16.mxu0 0
    %1517 = vmatpush1.bf16.xpose.msra.mxu0 0
    %1518 = vmatprep.subr.bf16.mxu0 0
    %1519 = vmatpush1.bf16.xpose.msra.mxu0 0
    %1520 = vmatprep.subr.bf16.mxu0 0
    %1521 = vmatpush1.bf16.xpose.msra.mxu0 0
    %1522 = vmatprep.subr.bf16.mxu0 0
    %1523 = vmatpush1.bf16.xpose.msra.mxu0 0
    %1524 = vmatprep.mubr.bf16.mxu0 0
    %1525 = vmatmul.mubr.bf16.gmra.mrb[0].mxu0 %v1490
    %v1526 = vpop.f32.mrb[0].mxu0
    %v1527 = vadd.f32 0.0, %v1526
    %v1528 = vpop.f32.mrb[0].mxu0
    %v1529 = vpop.f32.mrb[0].mxu0
    %v1530 = vpop.f32.mrb[0].mxu0
    %1531 = vdwg.mxu0
    %1532 = vrot.lane.b32.xlu0 %v277, 108
    %v1533 = vpop.permute.xlu0 %1532
    %v1535 = vsel %vm280, %v1533, 0
    %1537 = vmatprep.subr.bf16.mxu0 0
    %1538 = vmatpush1.bf16.xpose.msra.mxu0 %v1535
    %1539 = vmatprep.subr.bf16.mxu0 0
    %1540 = vmatpush1.bf16.xpose.msra.mxu0 0
    %1541 = vmatprep.subr.bf16.mxu0 0
    %1542 = vmatpush1.bf16.xpose.msra.mxu0 0
    %1543 = vmatprep.subr.bf16.mxu0 0
    %1544 = vmatpush1.bf16.xpose.msra.mxu0 0
    %1545 = vmatprep.subr.bf16.mxu0 0
    %1546 = vmatpush1.bf16.xpose.msra.mxu0 0
    %1547 = vmatprep.subr.bf16.mxu0 0
    %1548 = vmatpush1.bf16.xpose.msra.mxu0 0
    %1549 = vmatprep.subr.bf16.mxu0 0
    %1550 = vmatpush1.bf16.xpose.msra.mxu0 0
    %1551 = vmatprep.subr.bf16.mxu0 0
    %1552 = vmatpush1.bf16.xpose.msra.mxu0 0
    %1553 = vmatprep.subr.bf16.mxu0 0
    %1554 = vmatpush1.bf16.xpose.msra.mxu0 0
    %1555 = vmatprep.subr.bf16.mxu0 0
    %1556 = vmatpush1.bf16.xpose.msra.mxu0 0
    %1557 = vmatprep.subr.bf16.mxu0 0
    %1558 = vmatpush1.bf16.xpose.msra.mxu0 0
    %1559 = vmatprep.subr.bf16.mxu0 0
    %1560 = vmatpush1.bf16.xpose.msra.mxu0 0
    %1561 = vmatprep.subr.bf16.mxu0 0
    %1562 = vmatpush1.bf16.xpose.msra.mxu0 0
    %1563 = vmatprep.subr.bf16.mxu0 0
    %1564 = vmatpush1.bf16.xpose.msra.mxu0 0
    %1565 = vmatprep.subr.bf16.mxu0 0
    %1566 = vmatpush1.bf16.xpose.msra.mxu0 0
    %1567 = vmatprep.subr.bf16.mxu0 0
    %1568 = vmatpush1.bf16.xpose.msra.mxu0 0
    %1569 = vmatprep.mubr.bf16.mxu0 0
    %1570 = vmatmul.mubr.bf16.gmra.mrb[0].mxu0 %v1535
    %v1571 = vpop.f32.mrb[0].mxu0
    %v1572 = vadd.f32 0.0, %v1571
    %v1573 = vpop.f32.mrb[0].mxu0
    %v1574 = vpop.f32.mrb[0].mxu0
    %v1575 = vpop.f32.mrb[0].mxu0
    %1576 = vdwg.mxu0
    %1577 = vrot.lane.b32.xlu0 %v369, 108
    %v1578 = vpop.permute.xlu0 %1577
    %1579 = vrot.lane.b32.xlu0 %v370, 108
    %v1580 = vpop.permute.xlu0 %1579
    %v1583 = vsel %vm280, %v1578, 0.0
    %1584 = vadd.xlane.f32.xlu0 %v1583
    %v1585 = vpop.xlane.xlu0 %1584
    %v1586 = vsel %vm280, %v1580, 0.0
    %1587 = vadd.xlane.f32.xlu0 %v1586
    %v1588 = vpop.xlane.xlu0 %1587
    %v1589 = vmul.f32 %v1527, 2.0
    %v1590 = vmul.f32 %v1572, 2.0
    %v1593 = vlaneseq
    %v1594 = vshrl.u32 %v1593, 7
    %v1595 = vsub.s32 %v382, %v1594
    %v1596 = vrot.slane %v1585, %v1595
    %v1597 = vlaneseq
    %v1598 = vshrl.u32 %v1597, 7
    %v1599 = vsub.s32 %v382, %v1598
    %v1600 = vrot.slane %v1588, %v1599
    %v1601 = vsel %vm391, %v1596, %v1596
    %v1602 = vsel %vm393, %v1596, %v1601
    %v1603 = vsel %vm395, %v1596, %v1602
    %v1604 = vsel %vm397, %v1596, %v1603
    %v1605 = vsel %vm399, %v1596, %v1604
    %v1606 = vsel %vm401, %v1596, %v1605
    %v1607 = vsel %vm391, %v1600, %v1600
    %v1608 = vsel %vm393, %v1600, %v1607
    %v1609 = vsel %vm395, %v1600, %v1608
    %v1610 = vsel %vm397, %v1600, %v1609
    %v1611 = vsel %vm399, %v1600, %v1610
    %v1612 = vsel %vm401, %v1600, %v1611
    %v1615 = vsub.f32 %v1589, %v1606
    %v1616 = vsub.f32 %v1590, %v1612
    %v1617 = vsub.f32 %v1615, %v1585
    %v1618 = vsub.f32 %v1616, %v1588
    %v1619 = vmul.f32 %v1617, 0.5
    %v1620 = vmul.f32 %v1618, 0.5
    %v1621 = vmul.f32 %v1619, 1.442695
    %v1622 = vpow.pop %v1621
    %v1623 = vmul.f32 %v1620, 1.442695
    %v1624 = vpow.pop %v1623
    %v1625 = vsel %vm421, %v1622, 0.0
    %1626 = vadd.xlane.f32.xlu0 %v1625
    %v1627 = vpop.xlane.xlu0 %1626
    %v1628 = vsel %vm421, %v1624, 0.0
    %1629 = vadd.xlane.f32.xlu0 %v1628
    %v1630 = vpop.xlane.xlu0 %1629
    %v1631 = vpack.c.bf16 %v1622, %v1622
    %v1632 = vpack.c.bf16 %v1624, %v1624
    %v1634 = vsel %vm421, %v1631, 0
    %v1636 = vsel %vm433, %v1488, 0
    %1638 = vmatprep.subr.bf16.mxu0 0
    %1639 = vmatpush1.bf16.msra.mxu0 %v1636
    %1640 = vmatprep.subr.bf16.mxu0 0
    %1641 = vmatpush1.bf16.msra.mxu0 0
    %1642 = vmatprep.subr.bf16.mxu0 0
    %1643 = vmatpush1.bf16.msra.mxu0 0
    %1644 = vmatprep.subr.bf16.mxu0 0
    %1645 = vmatpush1.bf16.msra.mxu0 0
    %1646 = vmatprep.subr.bf16.mxu0 0
    %1647 = vmatpush1.bf16.msra.mxu0 0
    %1648 = vmatprep.subr.bf16.mxu0 0
    %1649 = vmatpush1.bf16.msra.mxu0 0
    %1650 = vmatprep.subr.bf16.mxu0 0
    %1651 = vmatpush1.bf16.msra.mxu0 0
    %1652 = vmatprep.subr.bf16.mxu0 0
    %1653 = vmatpush1.bf16.msra.mxu0 0
    %1654 = vmatprep.subr.bf16.mxu0 0
    %1655 = vmatpush1.bf16.msra.mxu0 0
    %1656 = vmatprep.subr.bf16.mxu0 0
    %1657 = vmatpush1.bf16.msra.mxu0 0
    %1658 = vmatprep.subr.bf16.mxu0 0
    %1659 = vmatpush1.bf16.msra.mxu0 0
    %1660 = vmatprep.subr.bf16.mxu0 0
    %1661 = vmatpush1.bf16.msra.mxu0 0
    %1662 = vmatprep.subr.bf16.mxu0 0
    %1663 = vmatpush1.bf16.msra.mxu0 0
    %1664 = vmatprep.subr.bf16.mxu0 0
    %1665 = vmatpush1.bf16.msra.mxu0 0
    %1666 = vmatprep.subr.bf16.mxu0 0
    %1667 = vmatpush1.bf16.msra.mxu0 0
    %1668 = vmatprep.subr.bf16.mxu0 0
    %1669 = vmatpush1.bf16.msra.mxu0 0
    %1670 = vmatprep.mubr.bf16.mxu0 0
    %1671 = vmatmul.mubr.bf16.gmra.mrb[0].mxu0 %v1634
    %v1672 = vpop.f32.mrb[0].mxu0
    %v1673 = vadd.f32 0.0, %v1672
    %v1674 = vpop.f32.mrb[0].mxu0
    %v1675 = vpop.f32.mrb[0].mxu0
    %v1676 = vpop.f32.mrb[0].mxu0
    %1677 = vdwg.mxu0
    %v1679 = vsel %vm421, %v1632, 0
    %v1681 = vsel %vm433, %v1533, 0
    %1683 = vmatprep.subr.bf16.mxu0 0
    %1684 = vmatpush1.bf16.msra.mxu0 %v1681
    %1685 = vmatprep.subr.bf16.mxu0 0
    %1686 = vmatpush1.bf16.msra.mxu0 0
    %1687 = vmatprep.subr.bf16.mxu0 0
    %1688 = vmatpush1.bf16.msra.mxu0 0
    %1689 = vmatprep.subr.bf16.mxu0 0
    %1690 = vmatpush1.bf16.msra.mxu0 0
    %1691 = vmatprep.subr.bf16.mxu0 0
    %1692 = vmatpush1.bf16.msra.mxu0 0
    %1693 = vmatprep.subr.bf16.mxu0 0
    %1694 = vmatpush1.bf16.msra.mxu0 0
    %1695 = vmatprep.subr.bf16.mxu0 0
    %1696 = vmatpush1.bf16.msra.mxu0 0
    %1697 = vmatprep.subr.bf16.mxu0 0
    %1698 = vmatpush1.bf16.msra.mxu0 0
    %1699 = vmatprep.subr.bf16.mxu0 0
    %1700 = vmatpush1.bf16.msra.mxu0 0
    %1701 = vmatprep.subr.bf16.mxu0 0
    %1702 = vmatpush1.bf16.msra.mxu0 0
    %1703 = vmatprep.subr.bf16.mxu0 0
    %1704 = vmatpush1.bf16.msra.mxu0 0
    %1705 = vmatprep.subr.bf16.mxu0 0
    %1706 = vmatpush1.bf16.msra.mxu0 0
    %1707 = vmatprep.subr.bf16.mxu0 0
    %1708 = vmatpush1.bf16.msra.mxu0 0
    %1709 = vmatprep.subr.bf16.mxu0 0
    %1710 = vmatpush1.bf16.msra.mxu0 0
    %1711 = vmatprep.subr.bf16.mxu0 0
    %1712 = vmatpush1.bf16.msra.mxu0 0
    %1713 = vmatprep.subr.bf16.mxu0 0
    %1714 = vmatpush1.bf16.msra.mxu0 0
    %1715 = vmatprep.mubr.bf16.mxu0 0
    %1716 = vmatmul.mubr.bf16.gmra.mrb[0].mxu0 %v1679
    %v1717 = vpop.f32.mrb[0].mxu0
    %v1718 = vadd.f32 0.0, %v1717
    %v1719 = vpop.f32.mrb[0].mxu0
    %v1720 = vpop.f32.mrb[0].mxu0
    %v1721 = vpop.f32.mrb[0].mxu0
    %1722 = vdwg.mxu0
    %v1723 = vrcp.pop %v1627
    %v1724 = vrcp.pop %v1630
    %v1725 = vmul.f32 %v1673, %v1723
    %v1726 = vmul.f32 %v1718, %v1724
    %1727 = vrot.lane.b32.xlu0 %v276, 104
    %v1728 = vpop.permute.xlu0 %1727
    %v1730 = vsel %vm280, %v1728, 0
    %1732 = vmatprep.subr.bf16.mxu0 0
    %1733 = vmatpush1.bf16.xpose.msra.mxu0 %v1730
    %1734 = vmatprep.subr.bf16.mxu0 0
    %1735 = vmatpush1.bf16.xpose.msra.mxu0 0
    %1736 = vmatprep.subr.bf16.mxu0 0
    %1737 = vmatpush1.bf16.xpose.msra.mxu0 0
    %1738 = vmatprep.subr.bf16.mxu0 0
    %1739 = vmatpush1.bf16.xpose.msra.mxu0 0
    %1740 = vmatprep.subr.bf16.mxu0 0
    %1741 = vmatpush1.bf16.xpose.msra.mxu0 0
    %1742 = vmatprep.subr.bf16.mxu0 0
    %1743 = vmatpush1.bf16.xpose.msra.mxu0 0
    %1744 = vmatprep.subr.bf16.mxu0 0
    %1745 = vmatpush1.bf16.xpose.msra.mxu0 0
    %1746 = vmatprep.subr.bf16.mxu0 0
    %1747 = vmatpush1.bf16.xpose.msra.mxu0 0
    %1748 = vmatprep.subr.bf16.mxu0 0
    %1749 = vmatpush1.bf16.xpose.msra.mxu0 0
    %1750 = vmatprep.subr.bf16.mxu0 0
    %1751 = vmatpush1.bf16.xpose.msra.mxu0 0
    %1752 = vmatprep.subr.bf16.mxu0 0
    %1753 = vmatpush1.bf16.xpose.msra.mxu0 0
    %1754 = vmatprep.subr.bf16.mxu0 0
    %1755 = vmatpush1.bf16.xpose.msra.mxu0 0
    %1756 = vmatprep.subr.bf16.mxu0 0
    %1757 = vmatpush1.bf16.xpose.msra.mxu0 0
    %1758 = vmatprep.subr.bf16.mxu0 0
    %1759 = vmatpush1.bf16.xpose.msra.mxu0 0
    %1760 = vmatprep.subr.bf16.mxu0 0
    %1761 = vmatpush1.bf16.xpose.msra.mxu0 0
    %1762 = vmatprep.subr.bf16.mxu0 0
    %1763 = vmatpush1.bf16.xpose.msra.mxu0 0
    %1764 = vmatprep.mubr.bf16.mxu0 0
    %1765 = vmatmul.mubr.bf16.gmra.mrb[0].mxu0 %v1730
    %v1766 = vpop.f32.mrb[0].mxu0
    %v1767 = vadd.f32 0.0, %v1766
    %v1768 = vpop.f32.mrb[0].mxu0
    %v1769 = vpop.f32.mrb[0].mxu0
    %v1770 = vpop.f32.mrb[0].mxu0
    %1771 = vdwg.mxu0
    %1772 = vrot.lane.b32.xlu0 %v277, 104
    %v1773 = vpop.permute.xlu0 %1772
    %v1775 = vsel %vm280, %v1773, 0
    %1777 = vmatprep.subr.bf16.mxu0 0
    %1778 = vmatpush1.bf16.xpose.msra.mxu0 %v1775
    %1779 = vmatprep.subr.bf16.mxu0 0
    %1780 = vmatpush1.bf16.xpose.msra.mxu0 0
    %1781 = vmatprep.subr.bf16.mxu0 0
    %1782 = vmatpush1.bf16.xpose.msra.mxu0 0
    %1783 = vmatprep.subr.bf16.mxu0 0
    %1784 = vmatpush1.bf16.xpose.msra.mxu0 0
    %1785 = vmatprep.subr.bf16.mxu0 0
    %1786 = vmatpush1.bf16.xpose.msra.mxu0 0
    %1787 = vmatprep.subr.bf16.mxu0 0
    %1788 = vmatpush1.bf16.xpose.msra.mxu0 0
    %1789 = vmatprep.subr.bf16.mxu0 0
    %1790 = vmatpush1.bf16.xpose.msra.mxu0 0
    %1791 = vmatprep.subr.bf16.mxu0 0
    %1792 = vmatpush1.bf16.xpose.msra.mxu0 0
    %1793 = vmatprep.subr.bf16.mxu0 0
    %1794 = vmatpush1.bf16.xpose.msra.mxu0 0
    %1795 = vmatprep.subr.bf16.mxu0 0
    %1796 = vmatpush1.bf16.xpose.msra.mxu0 0
    %1797 = vmatprep.subr.bf16.mxu0 0
    %1798 = vmatpush1.bf16.xpose.msra.mxu0 0
    %1799 = vmatprep.subr.bf16.mxu0 0
    %1800 = vmatpush1.bf16.xpose.msra.mxu0 0
    %1801 = vmatprep.subr.bf16.mxu0 0
    %1802 = vmatpush1.bf16.xpose.msra.mxu0 0
    %1803 = vmatprep.subr.bf16.mxu0 0
    %1804 = vmatpush1.bf16.xpose.msra.mxu0 0
    %1805 = vmatprep.subr.bf16.mxu0 0
    %1806 = vmatpush1.bf16.xpose.msra.mxu0 0
    %1807 = vmatprep.subr.bf16.mxu0 0
    %1808 = vmatpush1.bf16.xpose.msra.mxu0 0
    %1809 = vmatprep.mubr.bf16.mxu0 0
    %1810 = vmatmul.mubr.bf16.gmra.mrb[0].mxu0 %v1775
    %v1811 = vpop.f32.mrb[0].mxu0
    %v1812 = vadd.f32 0.0, %v1811
    %v1813 = vpop.f32.mrb[0].mxu0
    %v1814 = vpop.f32.mrb[0].mxu0
    %v1815 = vpop.f32.mrb[0].mxu0
    %1816 = vdwg.mxu0
    %1817 = vrot.lane.b32.xlu0 %v369, 104
    %v1818 = vpop.permute.xlu0 %1817
    %1819 = vrot.lane.b32.xlu0 %v370, 104
    %v1820 = vpop.permute.xlu0 %1819
    %v1823 = vsel %vm280, %v1818, 0.0
    %1824 = vadd.xlane.f32.xlu0 %v1823
    %v1825 = vpop.xlane.xlu0 %1824
    %v1826 = vsel %vm280, %v1820, 0.0
    %1827 = vadd.xlane.f32.xlu0 %v1826
    %v1828 = vpop.xlane.xlu0 %1827
    %v1829 = vmul.f32 %v1767, 2.0
    %v1830 = vmul.f32 %v1812, 2.0
    %v1833 = vlaneseq
    %v1834 = vshrl.u32 %v1833, 7
    %v1835 = vsub.s32 %v382, %v1834
    %v1836 = vrot.slane %v1825, %v1835
    %v1837 = vlaneseq
    %v1838 = vshrl.u32 %v1837, 7
    %v1839 = vsub.s32 %v382, %v1838
    %v1840 = vrot.slane %v1828, %v1839
    %v1841 = vsel %vm391, %v1836, %v1836
    %v1842 = vsel %vm393, %v1836, %v1841
    %v1843 = vsel %vm395, %v1836, %v1842
    %v1844 = vsel %vm397, %v1836, %v1843
    %v1845 = vsel %vm399, %v1836, %v1844
    %v1846 = vsel %vm401, %v1836, %v1845
    %v1847 = vsel %vm391, %v1840, %v1840
    %v1848 = vsel %vm393, %v1840, %v1847
    %v1849 = vsel %vm395, %v1840, %v1848
    %v1850 = vsel %vm397, %v1840, %v1849
    %v1851 = vsel %vm399, %v1840, %v1850
    %v1852 = vsel %vm401, %v1840, %v1851
    %v1855 = vsub.f32 %v1829, %v1846
    %v1856 = vsub.f32 %v1830, %v1852
    %v1857 = vsub.f32 %v1855, %v1825
    %v1858 = vsub.f32 %v1856, %v1828
    %v1859 = vmul.f32 %v1857, 0.5
    %v1860 = vmul.f32 %v1858, 0.5
    %v1861 = vmul.f32 %v1859, 1.442695
    %v1862 = vpow.pop %v1861
    %v1863 = vmul.f32 %v1860, 1.442695
    %v1864 = vpow.pop %v1863
    %v1865 = vsel %vm421, %v1862, 0.0
    %1866 = vadd.xlane.f32.xlu0 %v1865
    %v1867 = vpop.xlane.xlu0 %1866
    %v1868 = vsel %vm421, %v1864, 0.0
    %1869 = vadd.xlane.f32.xlu0 %v1868
    %v1870 = vpop.xlane.xlu0 %1869
    %v1871 = vpack.c.bf16 %v1862, %v1862
    %v1872 = vpack.c.bf16 %v1864, %v1864
    %v1874 = vsel %vm421, %v1871, 0
    %v1876 = vsel %vm433, %v1728, 0
    %1878 = vmatprep.subr.bf16.mxu0 0
    %1879 = vmatpush1.bf16.msra.mxu0 %v1876
    %1880 = vmatprep.subr.bf16.mxu0 0
    %1881 = vmatpush1.bf16.msra.mxu0 0
    %1882 = vmatprep.subr.bf16.mxu0 0
    %1883 = vmatpush1.bf16.msra.mxu0 0
    %1884 = vmatprep.subr.bf16.mxu0 0
    %1885 = vmatpush1.bf16.msra.mxu0 0
    %1886 = vmatprep.subr.bf16.mxu0 0
    %1887 = vmatpush1.bf16.msra.mxu0 0
    %1888 = vmatprep.subr.bf16.mxu0 0
    %1889 = vmatpush1.bf16.msra.mxu0 0
    %1890 = vmatprep.subr.bf16.mxu0 0
    %1891 = vmatpush1.bf16.msra.mxu0 0
    %1892 = vmatprep.subr.bf16.mxu0 0
    %1893 = vmatpush1.bf16.msra.mxu0 0
    %1894 = vmatprep.subr.bf16.mxu0 0
    %1895 = vmatpush1.bf16.msra.mxu0 0
    %1896 = vmatprep.subr.bf16.mxu0 0
    %1897 = vmatpush1.bf16.msra.mxu0 0
    %1898 = vmatprep.subr.bf16.mxu0 0
    %1899 = vmatpush1.bf16.msra.mxu0 0
    %1900 = vmatprep.subr.bf16.mxu0 0
    %1901 = vmatpush1.bf16.msra.mxu0 0
    %1902 = vmatprep.subr.bf16.mxu0 0
    %1903 = vmatpush1.bf16.msra.mxu0 0
    %1904 = vmatprep.subr.bf16.mxu0 0
    %1905 = vmatpush1.bf16.msra.mxu0 0
    %1906 = vmatprep.subr.bf16.mxu0 0
    %1907 = vmatpush1.bf16.msra.mxu0 0
    %1908 = vmatprep.subr.bf16.mxu0 0
    %1909 = vmatpush1.bf16.msra.mxu0 0
    %1910 = vmatprep.mubr.bf16.mxu0 0
    %1911 = vmatmul.mubr.bf16.gmra.mrb[0].mxu0 %v1874
    %v1912 = vpop.f32.mrb[0].mxu0
    %v1913 = vadd.f32 0.0, %v1912
    %v1914 = vpop.f32.mrb[0].mxu0
    %v1915 = vpop.f32.mrb[0].mxu0
    %v1916 = vpop.f32.mrb[0].mxu0
    %1917 = vdwg.mxu0
    %v1919 = vsel %vm421, %v1872, 0
    %v1921 = vsel %vm433, %v1773, 0
    %1923 = vmatprep.subr.bf16.mxu0 0
    %1924 = vmatpush1.bf16.msra.mxu0 %v1921
    %1925 = vmatprep.subr.bf16.mxu0 0
    %1926 = vmatpush1.bf16.msra.mxu0 0
    %1927 = vmatprep.subr.bf16.mxu0 0
    %1928 = vmatpush1.bf16.msra.mxu0 0
    %1929 = vmatprep.subr.bf16.mxu0 0
    %1930 = vmatpush1.bf16.msra.mxu0 0
    %1931 = vmatprep.subr.bf16.mxu0 0
    %1932 = vmatpush1.bf16.msra.mxu0 0
    %1933 = vmatprep.subr.bf16.mxu0 0
    %1934 = vmatpush1.bf16.msra.mxu0 0
    %1935 = vmatprep.subr.bf16.mxu0 0
    %1936 = vmatpush1.bf16.msra.mxu0 0
    %1937 = vmatprep.subr.bf16.mxu0 0
    %1938 = vmatpush1.bf16.msra.mxu0 0
    %1939 = vmatprep.subr.bf16.mxu0 0
    %1940 = vmatpush1.bf16.msra.mxu0 0
    %1941 = vmatprep.subr.bf16.mxu0 0
    %1942 = vmatpush1.bf16.msra.mxu0 0
    %1943 = vmatprep.subr.bf16.mxu0 0
    %1944 = vmatpush1.bf16.msra.mxu0 0
    %1945 = vmatprep.subr.bf16.mxu0 0
    %1946 = vmatpush1.bf16.msra.mxu0 0
    %1947 = vmatprep.subr.bf16.mxu0 0
    %1948 = vmatpush1.bf16.msra.mxu0 0
    %1949 = vmatprep.subr.bf16.mxu0 0
    %1950 = vmatpush1.bf16.msra.mxu0 0
    %1951 = vmatprep.subr.bf16.mxu0 0
    %1952 = vmatpush1.bf16.msra.mxu0 0
    %1953 = vmatprep.subr.bf16.mxu0 0
    %1954 = vmatpush1.bf16.msra.mxu0 0
    %1955 = vmatprep.mubr.bf16.mxu0 0
    %1956 = vmatmul.mubr.bf16.gmra.mrb[0].mxu0 %v1919
    %v1957 = vpop.f32.mrb[0].mxu0
    %v1958 = vadd.f32 0.0, %v1957
    %v1959 = vpop.f32.mrb[0].mxu0
    %v1960 = vpop.f32.mrb[0].mxu0
    %v1961 = vpop.f32.mrb[0].mxu0
    %1962 = vdwg.mxu0
    %v1963 = vrcp.pop %v1867
    %v1964 = vrcp.pop %v1870
    %v1965 = vmul.f32 %v1913, %v1963
    %v1966 = vmul.f32 %v1958, %v1964
    %1967 = vrot.lane.b32.xlu0 %v276, 100
    %v1968 = vpop.permute.xlu0 %1967
    %v1970 = vsel %vm280, %v1968, 0
    %1972 = vmatprep.subr.bf16.mxu0 0
    %1973 = vmatpush1.bf16.xpose.msra.mxu0 %v1970
    %1974 = vmatprep.subr.bf16.mxu0 0
    %1975 = vmatpush1.bf16.xpose.msra.mxu0 0
    %1976 = vmatprep.subr.bf16.mxu0 0
    %1977 = vmatpush1.bf16.xpose.msra.mxu0 0
    %1978 = vmatprep.subr.bf16.mxu0 0
    %1979 = vmatpush1.bf16.xpose.msra.mxu0 0
    %1980 = vmatprep.subr.bf16.mxu0 0
    %1981 = vmatpush1.bf16.xpose.msra.mxu0 0
    %1982 = vmatprep.subr.bf16.mxu0 0
    %1983 = vmatpush1.bf16.xpose.msra.mxu0 0
    %1984 = vmatprep.subr.bf16.mxu0 0
    %1985 = vmatpush1.bf16.xpose.msra.mxu0 0
    %1986 = vmatprep.subr.bf16.mxu0 0
    %1987 = vmatpush1.bf16.xpose.msra.mxu0 0
    %1988 = vmatprep.subr.bf16.mxu0 0
    %1989 = vmatpush1.bf16.xpose.msra.mxu0 0
    %1990 = vmatprep.subr.bf16.mxu0 0
    %1991 = vmatpush1.bf16.xpose.msra.mxu0 0
    %1992 = vmatprep.subr.bf16.mxu0 0
    %1993 = vmatpush1.bf16.xpose.msra.mxu0 0
    %1994 = vmatprep.subr.bf16.mxu0 0
    %1995 = vmatpush1.bf16.xpose.msra.mxu0 0
    %1996 = vmatprep.subr.bf16.mxu0 0
    %1997 = vmatpush1.bf16.xpose.msra.mxu0 0
    %1998 = vmatprep.subr.bf16.mxu0 0
    %1999 = vmatpush1.bf16.xpose.msra.mxu0 0
    %2000 = vmatprep.subr.bf16.mxu0 0
    %2001 = vmatpush1.bf16.xpose.msra.mxu0 0
    %2002 = vmatprep.subr.bf16.mxu0 0
    %2003 = vmatpush1.bf16.xpose.msra.mxu0 0
    %2004 = vmatprep.mubr.bf16.mxu0 0
    %2005 = vmatmul.mubr.bf16.gmra.mrb[0].mxu0 %v1970
    %v2006 = vpop.f32.mrb[0].mxu0
    %v2007 = vadd.f32 0.0, %v2006
    %v2008 = vpop.f32.mrb[0].mxu0
    %v2009 = vpop.f32.mrb[0].mxu0
    %v2010 = vpop.f32.mrb[0].mxu0
    %2011 = vdwg.mxu0
    %2012 = vrot.lane.b32.xlu0 %v277, 100
    %v2013 = vpop.permute.xlu0 %2012
    %v2015 = vsel %vm280, %v2013, 0
    %2017 = vmatprep.subr.bf16.mxu0 0
    %2018 = vmatpush1.bf16.xpose.msra.mxu0 %v2015
    %2019 = vmatprep.subr.bf16.mxu0 0
    %2020 = vmatpush1.bf16.xpose.msra.mxu0 0
    %2021 = vmatprep.subr.bf16.mxu0 0
    %2022 = vmatpush1.bf16.xpose.msra.mxu0 0
    %2023 = vmatprep.subr.bf16.mxu0 0
    %2024 = vmatpush1.bf16.xpose.msra.mxu0 0
    %2025 = vmatprep.subr.bf16.mxu0 0
    %2026 = vmatpush1.bf16.xpose.msra.mxu0 0
    %2027 = vmatprep.subr.bf16.mxu0 0
    %2028 = vmatpush1.bf16.xpose.msra.mxu0 0
    %2029 = vmatprep.subr.bf16.mxu0 0
    %2030 = vmatpush1.bf16.xpose.msra.mxu0 0
    %2031 = vmatprep.subr.bf16.mxu0 0
    %2032 = vmatpush1.bf16.xpose.msra.mxu0 0
    %2033 = vmatprep.subr.bf16.mxu0 0
    %2034 = vmatpush1.bf16.xpose.msra.mxu0 0
    %2035 = vmatprep.subr.bf16.mxu0 0
    %2036 = vmatpush1.bf16.xpose.msra.mxu0 0
    %2037 = vmatprep.subr.bf16.mxu0 0
    %2038 = vmatpush1.bf16.xpose.msra.mxu0 0
    %2039 = vmatprep.subr.bf16.mxu0 0
    %2040 = vmatpush1.bf16.xpose.msra.mxu0 0
    %2041 = vmatprep.subr.bf16.mxu0 0
    %2042 = vmatpush1.bf16.xpose.msra.mxu0 0
    %2043 = vmatprep.subr.bf16.mxu0 0
    %2044 = vmatpush1.bf16.xpose.msra.mxu0 0
    %2045 = vmatprep.subr.bf16.mxu0 0
    %2046 = vmatpush1.bf16.xpose.msra.mxu0 0
    %2047 = vmatprep.subr.bf16.mxu0 0
    %2048 = vmatpush1.bf16.xpose.msra.mxu0 0
    %2049 = vmatprep.mubr.bf16.mxu0 0
    %2050 = vmatmul.mubr.bf16.gmra.mrb[0].mxu0 %v2015
    %v2051 = vpop.f32.mrb[0].mxu0
    %v2052 = vadd.f32 0.0, %v2051
    %v2053 = vpop.f32.mrb[0].mxu0
    %v2054 = vpop.f32.mrb[0].mxu0
    %v2055 = vpop.f32.mrb[0].mxu0
    %2056 = vdwg.mxu0
    %2057 = vrot.lane.b32.xlu0 %v369, 100
    %v2058 = vpop.permute.xlu0 %2057
    %2059 = vrot.lane.b32.xlu0 %v370, 100
    %v2060 = vpop.permute.xlu0 %2059
    %v2063 = vsel %vm280, %v2058, 0.0
    %2064 = vadd.xlane.f32.xlu0 %v2063
    %v2065 = vpop.xlane.xlu0 %2064
    %v2066 = vsel %vm280, %v2060, 0.0
    %2067 = vadd.xlane.f32.xlu0 %v2066
    %v2068 = vpop.xlane.xlu0 %2067
    %v2069 = vmul.f32 %v2007, 2.0
    %v2070 = vmul.f32 %v2052, 2.0
    %v2073 = vlaneseq
    %v2074 = vshrl.u32 %v2073, 7
    %v2075 = vsub.s32 %v382, %v2074
    %v2076 = vrot.slane %v2065, %v2075
    %v2077 = vlaneseq
    %v2078 = vshrl.u32 %v2077, 7
    %v2079 = vsub.s32 %v382, %v2078
    %v2080 = vrot.slane %v2068, %v2079
    %v2081 = vsel %vm391, %v2076, %v2076
    %v2082 = vsel %vm393, %v2076, %v2081
    %v2083 = vsel %vm395, %v2076, %v2082
    %v2084 = vsel %vm397, %v2076, %v2083
    %v2085 = vsel %vm399, %v2076, %v2084
    %v2086 = vsel %vm401, %v2076, %v2085
    %v2087 = vsel %vm391, %v2080, %v2080
    %v2088 = vsel %vm393, %v2080, %v2087
    %v2089 = vsel %vm395, %v2080, %v2088
    %v2090 = vsel %vm397, %v2080, %v2089
    %v2091 = vsel %vm399, %v2080, %v2090
    %v2092 = vsel %vm401, %v2080, %v2091
    %v2095 = vsub.f32 %v2069, %v2086
    %v2096 = vsub.f32 %v2070, %v2092
    %v2097 = vsub.f32 %v2095, %v2065
    %v2098 = vsub.f32 %v2096, %v2068
    %v2099 = vmul.f32 %v2097, 0.5
    %v2100 = vmul.f32 %v2098, 0.5
    %v2101 = vmul.f32 %v2099, 1.442695
    %v2102 = vpow.pop %v2101
    %v2103 = vmul.f32 %v2100, 1.442695
    %v2104 = vpow.pop %v2103
    %v2105 = vsel %vm421, %v2102, 0.0
    %2106 = vadd.xlane.f32.xlu0 %v2105
    %v2107 = vpop.xlane.xlu0 %2106
    %v2108 = vsel %vm421, %v2104, 0.0
    %2109 = vadd.xlane.f32.xlu0 %v2108
    %v2110 = vpop.xlane.xlu0 %2109
    %v2111 = vpack.c.bf16 %v2102, %v2102
    %v2112 = vpack.c.bf16 %v2104, %v2104
    %v2114 = vsel %vm421, %v2111, 0
    %v2116 = vsel %vm433, %v1968, 0
    %2118 = vmatprep.subr.bf16.mxu0 0
    %2119 = vmatpush1.bf16.msra.mxu0 %v2116
    %2120 = vmatprep.subr.bf16.mxu0 0
    %2121 = vmatpush1.bf16.msra.mxu0 0
    %2122 = vmatprep.subr.bf16.mxu0 0
    %2123 = vmatpush1.bf16.msra.mxu0 0
    %2124 = vmatprep.subr.bf16.mxu0 0
    %2125 = vmatpush1.bf16.msra.mxu0 0
    %2126 = vmatprep.subr.bf16.mxu0 0
    %2127 = vmatpush1.bf16.msra.mxu0 0
    %2128 = vmatprep.subr.bf16.mxu0 0
    %2129 = vmatpush1.bf16.msra.mxu0 0
    %2130 = vmatprep.subr.bf16.mxu0 0
    %2131 = vmatpush1.bf16.msra.mxu0 0
    %2132 = vmatprep.subr.bf16.mxu0 0
    %2133 = vmatpush1.bf16.msra.mxu0 0
    %2134 = vmatprep.subr.bf16.mxu0 0
    %2135 = vmatpush1.bf16.msra.mxu0 0
    %2136 = vmatprep.subr.bf16.mxu0 0
    %2137 = vmatpush1.bf16.msra.mxu0 0
    %2138 = vmatprep.subr.bf16.mxu0 0
    %2139 = vmatpush1.bf16.msra.mxu0 0
    %2140 = vmatprep.subr.bf16.mxu0 0
    %2141 = vmatpush1.bf16.msra.mxu0 0
    %2142 = vmatprep.subr.bf16.mxu0 0
    %2143 = vmatpush1.bf16.msra.mxu0 0
    %2144 = vmatprep.subr.bf16.mxu0 0
    %2145 = vmatpush1.bf16.msra.mxu0 0
    %2146 = vmatprep.subr.bf16.mxu0 0
    %2147 = vmatpush1.bf16.msra.mxu0 0
    %2148 = vmatprep.subr.bf16.mxu0 0
    %2149 = vmatpush1.bf16.msra.mxu0 0
    %2150 = vmatprep.mubr.bf16.mxu0 0
    %2151 = vmatmul.mubr.bf16.gmra.mrb[0].mxu0 %v2114
    %v2152 = vpop.f32.mrb[0].mxu0
    %v2153 = vadd.f32 0.0, %v2152
    %v2154 = vpop.f32.mrb[0].mxu0
    %v2155 = vpop.f32.mrb[0].mxu0
    %v2156 = vpop.f32.mrb[0].mxu0
    %2157 = vdwg.mxu0
    %v2159 = vsel %vm421, %v2112, 0
    %v2161 = vsel %vm433, %v2013, 0
    %2163 = vmatprep.subr.bf16.mxu0 0
    %2164 = vmatpush1.bf16.msra.mxu0 %v2161
    %2165 = vmatprep.subr.bf16.mxu0 0
    %2166 = vmatpush1.bf16.msra.mxu0 0
    %2167 = vmatprep.subr.bf16.mxu0 0
    %2168 = vmatpush1.bf16.msra.mxu0 0
    %2169 = vmatprep.subr.bf16.mxu0 0
    %2170 = vmatpush1.bf16.msra.mxu0 0
    %2171 = vmatprep.subr.bf16.mxu0 0
    %2172 = vmatpush1.bf16.msra.mxu0 0
    %2173 = vmatprep.subr.bf16.mxu0 0
    %2174 = vmatpush1.bf16.msra.mxu0 0
    %2175 = vmatprep.subr.bf16.mxu0 0
    %2176 = vmatpush1.bf16.msra.mxu0 0
    %2177 = vmatprep.subr.bf16.mxu0 0
    %2178 = vmatpush1.bf16.msra.mxu0 0
    %2179 = vmatprep.subr.bf16.mxu0 0
    %2180 = vmatpush1.bf16.msra.mxu0 0
    %2181 = vmatprep.subr.bf16.mxu0 0
    %2182 = vmatpush1.bf16.msra.mxu0 0
    %2183 = vmatprep.subr.bf16.mxu0 0
    %2184 = vmatpush1.bf16.msra.mxu0 0
    %2185 = vmatprep.subr.bf16.mxu0 0
    %2186 = vmatpush1.bf16.msra.mxu0 0
    %2187 = vmatprep.subr.bf16.mxu0 0
    %2188 = vmatpush1.bf16.msra.mxu0 0
    %2189 = vmatprep.subr.bf16.mxu0 0
    %2190 = vmatpush1.bf16.msra.mxu0 0
    %2191 = vmatprep.subr.bf16.mxu0 0
    %2192 = vmatpush1.bf16.msra.mxu0 0
    %2193 = vmatprep.subr.bf16.mxu0 0
    %2194 = vmatpush1.bf16.msra.mxu0 0
    %2195 = vmatprep.mubr.bf16.mxu0 0
    %2196 = vmatmul.mubr.bf16.gmra.mrb[0].mxu0 %v2159
    %v2197 = vpop.f32.mrb[0].mxu0
    %v2198 = vadd.f32 0.0, %v2197
    %v2199 = vpop.f32.mrb[0].mxu0
    %v2200 = vpop.f32.mrb[0].mxu0
    %v2201 = vpop.f32.mrb[0].mxu0
    %2202 = vdwg.mxu0
    %v2203 = vrcp.pop %v2107
    %v2204 = vrcp.pop %v2110
    %v2205 = vmul.f32 %v2153, %v2203
    %v2206 = vmul.f32 %v2198, %v2204
    %2209 = vrot.lane.b32.xlu0 %v765, 4
    %v2210 = vpop.permute.xlu0 %2209
    %2211 = vrot.lane.b32.xlu0 %v766, 4
    %v2212 = vpop.permute.xlu0 %2211
    %2217 = vrot.lane.b32.xlu0 %v1005, 8
    %v2218 = vpop.permute.xlu0 %2217
    %2219 = vrot.lane.b32.xlu0 %v1006, 8
    %v2220 = vpop.permute.xlu0 %2219
    %2225 = vrot.lane.b32.xlu0 %v1245, 12
    %v2226 = vpop.permute.xlu0 %2225
    %2227 = vrot.lane.b32.xlu0 %v1246, 12
    %v2228 = vpop.permute.xlu0 %2227
    %2233 = vrot.lane.b32.xlu0 %v1485, 16
    %v2234 = vpop.permute.xlu0 %2233
    %2235 = vrot.lane.b32.xlu0 %v1486, 16
    %v2236 = vpop.permute.xlu0 %2235
    %2241 = vrot.lane.b32.xlu0 %v1725, 20
    %v2242 = vpop.permute.xlu0 %2241
    %2243 = vrot.lane.b32.xlu0 %v1726, 20
    %v2244 = vpop.permute.xlu0 %2243
    %2249 = vrot.lane.b32.xlu0 %v1965, 24
    %v2250 = vpop.permute.xlu0 %2249
    %2251 = vrot.lane.b32.xlu0 %v1966, 24
    %v2252 = vpop.permute.xlu0 %2251
    %2257 = vrot.lane.b32.xlu0 %v2205, 28
    %v2258 = vpop.permute.xlu0 %2257
    %2259 = vrot.lane.b32.xlu0 %v2206, 28
    %v2260 = vpop.permute.xlu0 %2259
    %v2263 = vsel %vm280, %v523, %v2210
    %v2264 = vsel %vm280, %v524, %v2212
    %v2265 = vsel %vm421, %v2263, %v2218
    %v2266 = vsel %vm421, %v2264, %v2220
    %vm2267 = vcmask 97280
    %v2268 = vsel %vm2267, %v2265, %v2226
    %v2269 = vsel %vm2267, %v2266, %v2228
    %v2270 = vsel %vm165, %v2268, %v2234
    %v2271 = vsel %vm165, %v2269, %v2236
    %vm2272 = vcmask 162816
    %v2273 = vsel %vm2272, %v2270, %v2242
    %v2274 = vsel %vm2272, %v2271, %v2244
    %vm2275 = vcmask 195584
    %v2276 = vsel %vm2275, %v2273, %v2250
    %v2277 = vsel %vm2275, %v2274, %v2252
    %vm2278 = vcmask 228352
    %v2279 = vsel %vm2278, %v2276, %v2258
    %v2280 = vsel %vm2278, %v2277, %v2260
    %v2281 = vpack.c.bf16 %v2280, %v2279
    %v2282 = vld [vmem:[%s4] sm:$0xf]
    %v2283 = vld [vmem:[%s4 + $0x4] sm:$0xf]
    %v2284 = vld [vmem:[%s4 + $0x8] sm:$0xf]
    %v2285 = vld [vmem:[%s4 + $0xc] sm:$0xf]
    %v2286 = vld [vmem:[#allocation4] sm:$0x1]
    %v2288 = vlaneseq
    %v2289 = vshrl.u32 %v2288, 7
    %v2290 = vsub.s32 0, %v2289
    %v2291 = vrot.slane %v2286, %v2290
    %v2297 = vunpack.c.l.b16 %v2282
    %v2298 = vunpack.c.l.b16 %v2283
    %v2299 = vunpack.c.l.b16 %v2284
    %v2300 = vunpack.c.l.b16 %v2285
    %v2301 = vpack.c.b16 %v2298, %v2297
    %v2302 = vpack.c.b16 %v2300, %v2299
    %v2306 = vsel %vm227, %v2281, 0
    %2308 = vmatprep.subr.bf16.mxu0 0
    %2309 = vmatpush1.bf16.msra.mxu0 %v2301
    %2310 = vmatprep.subr.bf16.mxu0 0
    %2311 = vmatpush1.bf16.msra.mxu0 %v2302
    %2312 = vmatprep.subr.bf16.mxu0 0
    %2313 = vmatpush1.bf16.msra.mxu0 0
    %2314 = vmatprep.subr.bf16.mxu0 0
    %2315 = vmatpush1.bf16.msra.mxu0 0
    %2316 = vmatprep.subr.bf16.mxu0 0
    %2317 = vmatpush1.bf16.msra.mxu0 0
    %2318 = vmatprep.subr.bf16.mxu0 0
    %2319 = vmatpush1.bf16.msra.mxu0 0
    %2320 = vmatprep.subr.bf16.mxu0 0
    %2321 = vmatpush1.bf16.msra.mxu0 0
    %2322 = vmatprep.subr.bf16.mxu0 0
    %2323 = vmatpush1.bf16.msra.mxu0 0
    %2324 = vmatprep.subr.bf16.mxu0 0
    %2325 = vmatpush1.bf16.msra.mxu0 0
    %2326 = vmatprep.subr.bf16.mxu0 0
    %2327 = vmatpush1.bf16.msra.mxu0 0
    %2328 = vmatprep.subr.bf16.mxu0 0
    %2329 = vmatpush1.bf16.msra.mxu0 0
    %2330 = vmatprep.subr.bf16.mxu0 0
    %2331 = vmatpush1.bf16.msra.mxu0 0
    %2332 = vmatprep.subr.bf16.mxu0 0
    %2333 = vmatpush1.bf16.msra.mxu0 0
    %2334 = vmatprep.subr.bf16.mxu0 0
    %2335 = vmatpush1.bf16.msra.mxu0 0
    %2336 = vmatprep.subr.bf16.mxu0 0
    %2337 = vmatpush1.bf16.msra.mxu0 0
    %2338 = vmatprep.subr.bf16.mxu0 0
    %2339 = vmatpush1.bf16.msra.mxu0 0
    %2340 = vmatprep.mubr.bf16.mxu0 0
    %2341 = vmatmul.mubr.bf16.gmra.mrb[0].mxu0 %v2306
    %v2342 = vpop.f32.mrb[0].mxu0
    %v2343 = vadd.f32 %v2291, %v2342
    %v2344 = vpop.f32.mrb[0].mxu0
    %v2345 = vpop.f32.mrb[0].mxu0
    %v2346 = vadd.f32 %v2291, %v2345
    %v2347 = vpop.f32.mrb[0].mxu0
    %2348 = vdwg.mxu0
    %v2349 = vadd.f32 %v2343, %v204
    %v2350 = vadd.f32 %v2346, %v207
    %v2351 = vld [vmem:[#allocation6] sm:$0x1]
    %v2352 = vld [vmem:[#allocation7] sm:$0x1]
    %v2353 = vsel %vm227, %v2349, 0.0
    %2354 = vadd.xlane.f32.xlu0 %v2353
    %v2355 = vpop.xlane.xlu0 %2354
    %v2356 = vsel %vm227, %v2350, 0.0
    %2357 = vadd.xlane.f32.xlu0 %v2356
    %v2358 = vpop.xlane.xlu0 %2357
    %v2359 = vrcp.pop 32.0
    %v2360 = vmul.f32 %v2355, %v2359
    %v2361 = vmul.f32 %v2358, %v2359
    %v2362 = vsub.f32 %v2349, %v2360
    %v2363 = vsub.f32 %v2350, %v2361
    %v2364 = vmul.f32 %v2362, %v2362
    %v2365 = vmul.f32 %v2363, %v2363
    %v2366 = vsel %vm227, %v2364, 0.0
    %2367 = vadd.xlane.f32.xlu0 %v2366
    %v2368 = vpop.xlane.xlu0 %2367
    %v2369 = vsel %vm227, %v2365, 0.0
    %2370 = vadd.xlane.f32.xlu0 %v2369
    %v2371 = vpop.xlane.xlu0 %2370
    %v2372 = vmul.f32 %v2368, %v2359
    %v2373 = vmul.f32 %v2371, %v2359
    %v2374 = vadd.f32 %v2372, 1e-05
    %v2375 = vadd.f32 %v2373, 1e-05
    %v2376 = vrsqrt.pop %v2374
    %v2377 = vrsqrt.pop %v2375
    %v2378 = vmul.f32 %v2362, %v2376
    %v2379 = vmul.f32 %v2363, %v2377
    %v2381 = vlaneseq
    %v2382 = vshrl.u32 %v2381, 7
    %v2383 = vsub.s32 0, %v2382
    %v2384 = vrot.slane %v2351, %v2383
    %v2386 = vmul.f32 %v2378, %v2384
    %v2387 = vmul.f32 %v2379, %v2384
    %v2389 = vlaneseq
    %v2390 = vshrl.u32 %v2389, 7
    %v2391 = vsub.s32 0, %v2390
    %v2392 = vrot.slane %v2352, %v2391
    %v2394 = vadd.f32 %v2386, %v2392
    %v2395 = vadd.f32 %v2387, %v2392
    %v2396 = vmul.f32 %v2394, 0.5
    %v2397 = vmul.f32 %v2395, 0.5
    %v2398 = vmul.f32 %v2394, 0.70710677
    %v2399 = vmul.f32 %v2395, 0.70710677
    %v2400 = verf.f32.pop %v2398
    %v2401 = verf.f32.pop %v2399
    %v2402 = vadd.f32 %v2400, 1.0
    %v2403 = vadd.f32 %v2401, 1.0
    %v2404 = vmul.f32 %v2396, %v2402
    %v2405 = vmul.f32 %v2397, %v2403
    %v2406 = vpack.c.bf16 %v2405, %v2404
    %v2407 = vld [vmem:[%s8] sm:$0xf]
    %v2408 = vld [vmem:[%s8 + $0x4] sm:$0xf]
    %v2409 = vld [vmem:[%s8 + $0x8] sm:$0xf]
    %v2410 = vld [vmem:[%s8 + $0xc] sm:$0xf]
    %v2411 = vld [vmem:[#allocation9] sm:$0x1]
    %v2413 = vlaneseq
    %v2414 = vshrl.u32 %v2413, 7
    %v2415 = vsub.s32 0, %v2414
    %v2416 = vrot.slane %v2411, %v2415
    %v2422 = vunpack.c.l.b16 %v2407
    %v2423 = vunpack.c.l.b16 %v2408
    %v2424 = vunpack.c.l.b16 %v2409
    %v2425 = vunpack.c.l.b16 %v2410
    %v2426 = vpack.c.b16 %v2423, %v2422
    %v2427 = vpack.c.b16 %v2425, %v2424
    %v2431 = vsel %vm227, %v2406, 0
    %2433 = vmatprep.subr.bf16.mxu0 0
    %2434 = vmatpush1.bf16.msra.mxu0 %v2426
    %2435 = vmatprep.subr.bf16.mxu0 0
    %2436 = vmatpush1.bf16.msra.mxu0 %v2427
    %2437 = vmatprep.subr.bf16.mxu0 0
    %2438 = vmatpush1.bf16.msra.mxu0 0
    %2439 = vmatprep.subr.bf16.mxu0 0
    %2440 = vmatpush1.bf16.msra.mxu0 0
    %2441 = vmatprep.subr.bf16.mxu0 0
    %2442 = vmatpush1.bf16.msra.mxu0 0
    %2443 = vmatprep.subr.bf16.mxu0 0
    %2444 = vmatpush1.bf16.msra.mxu0 0
    %2445 = vmatprep.subr.bf16.mxu0 0
    %2446 = vmatpush1.bf16.msra.mxu0 0
    %2447 = vmatprep.subr.bf16.mxu0 0
    %2448 = vmatpush1.bf16.msra.mxu0 0
    %2449 = vmatprep.subr.bf16.mxu0 0
    %2450 = vmatpush1.bf16.msra.mxu0 0
    %2451 = vmatprep.subr.bf16.mxu0 0
    %2452 = vmatpush1.bf16.msra.mxu0 0
    %2453 = vmatprep.subr.bf16.mxu0 0
    %2454 = vmatpush1.bf16.msra.mxu0 0
    %2455 = vmatprep.subr.bf16.mxu0 0
    %2456 = vmatpush1.bf16.msra.mxu0 0
    %2457 = vmatprep.subr.bf16.mxu0 0
    %2458 = vmatpush1.bf16.msra.mxu0 0
    %2459 = vmatprep.subr.bf16.mxu0 0
    %2460 = vmatpush1.bf16.msra.mxu0 0
    %2461 = vmatprep.subr.bf16.mxu0 0
    %2462 = vmatpush1.bf16.msra.mxu0 0
    %2463 = vmatprep.subr.bf16.mxu0 0
    %2464 = vmatpush1.bf16.msra.mxu0 0
    %2465 = vmatprep.mubr.bf16.mxu0 0
    %2466 = vmatmul.mubr.bf16.gmra.mrb[0].mxu0 %v2431
    %v2467 = vpop.f32.mrb[0].mxu0
    %v2468 = vadd.f32 %v2416, %v2467
    %v2469 = vpop.f32.mrb[0].mxu0
    %v2470 = vpop.f32.mrb[0].mxu0
    %v2471 = vadd.f32 %v2416, %v2470
    %v2472 = vpop.f32.mrb[0].mxu0
    %2473 = vdwg.mxu0
    %v2474 = vmul.f32 %v2468, 0.5
    %v2475 = vmul.f32 %v2471, 0.5
    %v2476 = vmul.f32 %v2468, 0.70710677
    %v2477 = vmul.f32 %v2471, 0.70710677
    %v2478 = verf.f32.pop %v2476
    %v2479 = verf.f32.pop %v2477
    %v2480 = vadd.f32 %v2478, 1.0
    %v2481 = vadd.f32 %v2479, 1.0
    %v2482 = vmul.f32 %v2474, %v2480
    %v2483 = vmul.f32 %v2475, %v2481
    %v2484 = vpack.c.bf16 %v2483, %v2482
    %v2485 = vld [vmem:[%s10] sm:$0xf]
    %v2486 = vld [vmem:[%s10 + $0x4] sm:$0xf]
    %v2487 = vld [vmem:[%s10 + $0x8] sm:$0xf]
    %v2488 = vld [vmem:[%s10 + $0xc] sm:$0xf]
    %v2489 = vld [vmem:[#allocation10] sm:$0x1]
    %v2491 = vlaneseq
    %v2492 = vshrl.u32 %v2491, 7
    %v2493 = vsub.s32 0, %v2492
    %v2494 = vrot.slane %v2489, %v2493
    %v2500 = vunpack.c.l.b16 %v2485
    %v2501 = vunpack.c.l.b16 %v2486
    %v2502 = vunpack.c.l.b16 %v2487
    %v2503 = vunpack.c.l.b16 %v2488
    %v2504 = vpack.c.b16 %v2501, %v2500
    %v2505 = vpack.c.b16 %v2503, %v2502
    %v2509 = vsel %vm227, %v2484, 0
    %2511 = vmatprep.subr.bf16.mxu0 0
    %2512 = vmatpush1.bf16.msra.mxu0 %v2504
    %2513 = vmatprep.subr.bf16.mxu0 0
    %2514 = vmatpush1.bf16.msra.mxu0 %v2505
    %2515 = vmatprep.subr.bf16.mxu0 0
    %2516 = vmatpush1.bf16.msra.mxu0 0
    %2517 = vmatprep.subr.bf16.mxu0 0
    %2518 = vmatpush1.bf16.msra.mxu0 0
    %2519 = vmatprep.subr.bf16.mxu0 0
    %2520 = vmatpush1.bf16.msra.mxu0 0
    %2521 = vmatprep.subr.bf16.mxu0 0
    %2522 = vmatpush1.bf16.msra.mxu0 0
    %2523 = vmatprep.subr.bf16.mxu0 0
    %2524 = vmatpush1.bf16.msra.mxu0 0
    %2525 = vmatprep.subr.bf16.mxu0 0
    %2526 = vmatpush1.bf16.msra.mxu0 0
    %2527 = vmatprep.subr.bf16.mxu0 0
    %2528 = vmatpush1.bf16.msra.mxu0 0
    %2529 = vmatprep.subr.bf16.mxu0 0
    %2530 = vmatpush1.bf16.msra.mxu0 0
    %2531 = vmatprep.subr.bf16.mxu0 0
    %2532 = vmatpush1.bf16.msra.mxu0 0
    %2533 = vmatprep.subr.bf16.mxu0 0
    %2534 = vmatpush1.bf16.msra.mxu0 0
    %2535 = vmatprep.subr.bf16.mxu0 0
    %2536 = vmatpush1.bf16.msra.mxu0 0
    %2537 = vmatprep.subr.bf16.mxu0 0
    %2538 = vmatpush1.bf16.msra.mxu0 0
    %2539 = vmatprep.subr.bf16.mxu0 0
    %2540 = vmatpush1.bf16.msra.mxu0 0
    %2541 = vmatprep.subr.bf16.mxu0 0
    %2542 = vmatpush1.bf16.msra.mxu0 0
    %2543 = vmatprep.mubr.bf16.mxu0 0
    %2544 = vmatmul.mubr.bf16.gmra.mrb[0].mxu0 %v2509
    %v2545 = vpop.f32.mrb[0].mxu0
    %v2546 = vadd.f32 %v2494, %v2545
    %v2547 = vpop.f32.mrb[0].mxu0
    %v2548 = vpop.f32.mrb[0].mxu0
    %v2549 = vadd.f32 %v2494, %v2548
    %v2550 = vpop.f32.mrb[0].mxu0
    %2551 = vdwg.mxu0
    %v2552 = vadd.f32 %v2546, %v2394
    %v2553 = vadd.f32 %v2549, %v2395
    %v2554 = vld [vmem:[#allocation12] sm:$0x1]
    %v2555 = vld [vmem:[#allocation13] sm:$0x1]
    %v2556 = vsel %vm227, %v2552, 0.0
    %2557 = vadd.xlane.f32.xlu0 %v2556
    %v2558 = vpop.xlane.xlu0 %2557
    %v2559 = vsel %vm227, %v2553, 0.0
    %2560 = vadd.xlane.f32.xlu0 %v2559
    %v2561 = vpop.xlane.xlu0 %2560
    %v2562 = vmul.f32 %v2558, %v2359
    %v2563 = vmul.f32 %v2561, %v2359
    %v2564 = vsub.f32 %v2552, %v2562
    %v2565 = vsub.f32 %v2553, %v2563
    %v2566 = vmul.f32 %v2564, %v2564
    %v2567 = vmul.f32 %v2565, %v2565
    %v2568 = vsel %vm227, %v2566, 0.0
    %2569 = vadd.xlane.f32.xlu0 %v2568
    %v2570 = vpop.xlane.xlu0 %2569
    %v2571 = vsel %vm227, %v2567, 0.0
    %2572 = vadd.xlane.f32.xlu0 %v2571
    %v2573 = vpop.xlane.xlu0 %2572
    %v2574 = vmul.f32 %v2570, %v2359
    %v2575 = vmul.f32 %v2573, %v2359
    %v2576 = vadd.f32 %v2574, 1e-05
    %v2577 = vadd.f32 %v2575, 1e-05
    %v2578 = vrsqrt.pop %v2576
    %v2579 = vrsqrt.pop %v2577
    %v2580 = vmul.f32 %v2564, %v2578
    %v2581 = vmul.f32 %v2565, %v2579
    %v2583 = vlaneseq
    %v2584 = vshrl.u32 %v2583, 7
    %v2585 = vsub.s32 0, %v2584
    %v2586 = vrot.slane %v2554, %v2585
    %v2588 = vmul.f32 %v2580, %v2586
    %v2589 = vmul.f32 %v2581, %v2586
    %v2591 = vlaneseq
    %v2592 = vshrl.u32 %v2591, 7
    %v2593 = vsub.s32 0, %v2592
    %v2594 = vrot.slane %v2555, %v2593
    %v2596 = vadd.f32 %v2588, %v2594
    %v2597 = vadd.f32 %v2589, %v2594
    %2598 = vst.msk [vmem:[%s14] sm:$0xff] %vm227, %v2596
    %2599 = vst.msk [vmem:[%s14 + $0x8] sm:$0xff] %vm227, %v2597
    // Predicated region
    $region90: #{_forward_impl.1} parent=1 // pred_check
      _
    $region91: #{_forward_impl.1} parent=1 // pred_check_branch
      %2601 = sbr.rel (0) target = $region93
    $region92: #{_forward_impl.1} parent=1 // pred_region
      _
    $region93: #{_forward_impl.1} parent=1 // pred_fallthru
      _
    // Predicated region
    $region94: #{_forward_impl.1} parent=1 // pred_check
      _
    $region95: #{_forward_impl.1} parent=1 // pred_check_branch
      %2603 = sbr.rel (0) target = $region97
    $region96: #{_forward_impl.1} parent=1 // pred_region
      _
    $region97: #{_forward_impl.1} parent=1 // pred_fallthru
      _
    %2604 = vsyncpa [#allocation3], 1
    %2605 = vsyncpa [#allocation5], 1
    %2606 = vsyncpa [#allocation8], 1
    %2607 = vsyncpa [#allocation11], 1
    %2608 = vsyncpa [#allocation14], 1

</llo_original>
